<compile_context>
chip_gen: v6e
topology: v6e:2x2x1
jax: 0.10.0
libtpu: 0.0.40
codegen_flags: <defaults>
</compile_context>

<pallas_src>
import functools

import jax
import jax.numpy as jnp
from jax import lax
from jax.experimental import pallas as pl
from jax.experimental.pallas import tpu as pltpu


# ----------------------------------------------------------------------------
# Fused MHA kernel: one grid step = one block of Bt batch elements.
# ----------------------------------------------------------------------------
def _mha_kernel(x_ref, wqkv_ref, bqkv_ref, wout_ref, bout_ref, o_ref,
                qkv_ref, ctx_ref, *, num_heads):
    bt, N, C = x_ref.shape
    hd = C // num_heads
    rows = bt * N

    # ---- qkv projection: one (Bt*N, C) @ (C, 3C) MXU matmul, f32 accumulation.
    # Query scaling is already folded into the q columns of wqkv/bqkv.
    x = x_ref[...].reshape(rows, C)                                   # bf16
    qkv = jnp.dot(x, wqkv_ref[...], preferred_element_type=jnp.float32)
    qkv_ref[...] = (qkv + bqkv_ref[...]).astype(jnp.bfloat16)         # bf16 scratch

    # ---- per (batch-in-block, head) attention.
    # qkv column layout matches PyTorch's reshape(b, n, 3, H, hd):
    #   q -> [0, C), k -> [C, 2C), v -> [2C, 3C); head h at offset h*hd.
    # Each head's context is written into a lane-dense (rows, C) ctx scratch
    # slice (no concatenate, no per-head output projection).
    # TODO(synk): for N in the hundreds+, replace this body with a KV-blocked
    # online-softmax loop (flash) and a lax.fori_loop over heads.
    for bi in range(bt):
        r0 = bi * N
        for h in range(num_heads):
            lo = h * hd
            q = qkv_ref[r0:r0 + N, lo:lo + hd]                        # (N, hd) bf16, pre-scaled
            k = qkv_ref[r0:r0 + N, C + lo:C + lo + hd]                # (N, hd) bf16
            v = qkv_ref[r0:r0 + N, 2 * C + lo:2 * C + lo + hd]        # (N, hd) bf16

            # scores = q @ k^T via dot_general contracting the last dims
            # (no explicit transpose materialized), f32 accumulation.
            s = lax.dot_general(q, k, (((1,), (1,)), ((), ())),
                                preferred_element_type=jnp.float32)   # (N, N) f32

            # Numerically stable softmax in f32; attn_dropout(p=0.0) -> identity.
            s = s - jnp.max(s, axis=-1, keepdims=True)
            p = jnp.exp(s)
            p = p * pl.reciprocal(jnp.sum(p, axis=-1, keepdims=True), approx=True)

            ctx_ref[r0:r0 + N, lo:lo + hd] = jnp.dot(
                p.astype(jnp.bfloat16), v,
                preferred_element_type=jnp.float32).astype(jnp.bfloat16)

    # ---- output projection for the whole block: (Bt*N, C) @ (C, C) + bias.
    out = jnp.dot(ctx_ref[...], wout_ref[...],
                  preferred_element_type=jnp.float32) + bout_ref[...]
    o_ref[...] = out.reshape(bt, N, C).astype(o_ref.dtype)


# ----------------------------------------------------------------------------
# Batch-block size heuristic: make the projections MXU-tile sized (>=128 rows)
# while keeping >= 2 grid steps when possible (v7x has 2 TensorCores).
# ----------------------------------------------------------------------------
def _pick_block_batch(B, N, target_rows=128):
    divs = [d for d in range(1, B + 1) if B % d == 0]
    cands = [d for d in divs if d * N >= target_rows] or [divs[-1]]
    bt = cands[0]
    if B // bt < 2:
        smaller = [d for d in divs if d < bt and B // d >= 2]
        if smaller:
            bt = smaller[-1]
    return bt


# ----------------------------------------------------------------------------
# Wrapper: one pallas_call over the whole module forward.
# ----------------------------------------------------------------------------
def multi_head_attention(x, w_qkv, b_qkv, w_out, b_out, num_heads):
    """Pallas forward matching MultiHeadAttention.forward.

    x     : (B, N, C) float32
    w_qkv : (3C, C)   (nn.Linear layout: (out, in)),  b_qkv: (3C,)
    w_out : (C, C),                                    b_out: (C,)
    """
    B, N, C = x.shape
    hd = C // num_heads
    scaling = hd ** (-0.5)
    bt = _pick_block_batch(B, N)
    rows = bt * N

    # bf16 operands for the MXU (f32 accumulation happens in-kernel).
    # Fold the query scaling into the q columns of W_qkv^T and b_qkv once here,
    # removing the per-head scale multiply from the kernel.
    x_bf = x.astype(jnp.bfloat16)
    wqkv_t = jnp.transpose(w_qkv)                                  # (C, 3C)
    wqkv_t = wqkv_t.at[:, :C].multiply(scaling).astype(jnp.bfloat16)
    bqkv = b_qkv.at[:C].multiply(scaling).reshape(1, 3 * C).astype(jnp.float32)
    wout_t = jnp.transpose(w_out).astype(jnp.bfloat16)             # (C, C)
    bout = b_out.reshape(1, C).astype(jnp.float32)

    kernel = functools.partial(_mha_kernel, num_heads=num_heads)

    def _call(single_buffer_weights):
        # Pinned operands (constant index map). pl.Buffered(1) disables the
        # default double-buffering for them -> halves pinned-weight VMEM.
        pinned = {"pipeline_mode": pl.Buffered(1)} if single_buffer_weights else {}
        return pl.pallas_call(
            kernel,
            out_shape=jax.ShapeDtypeStruct((B, N, C), jnp.float32),
            grid=(B // bt,),
            in_specs=[
                pl.BlockSpec((bt, N, C), lambda b: (b, 0, 0)),            # x tile
                pl.BlockSpec((C, 3 * C), lambda b: (0, 0), **pinned),     # W_qkv^T (pinned)
                pl.BlockSpec((1, 3 * C), lambda b: (0, 0), **pinned),     # b_qkv   (pinned)
                pl.BlockSpec((C, C), lambda b: (0, 0), **pinned),         # W_out^T (pinned)
                pl.BlockSpec((1, C), lambda b: (0, 0), **pinned),         # b_out   (pinned)
            ],
            out_specs=pl.BlockSpec((bt, N, C), lambda b: (b, 0, 0)),
            scratch_shapes=[
                pltpu.VMEM((rows, 3 * C), jnp.bfloat16),   # qkv kept on-chip (bf16)
                pltpu.VMEM((rows, C), jnp.bfloat16),       # lane-dense per-head context
            ],
            compiler_params=pltpu.CompilerParams(
                # Batch blocks are independent -> shards across v7x's 2 TCs
                # (no effect on single-TC v5e/v6e).
                dimension_semantics=("parallel",),
                vmem_limit_bytes=32 * 1024 * 1024,
            ),
        )(x_bf, wqkv_t, bqkv, wout_t, bout)

    try:
        return _call(True)
    except Exception:
        # Fallback for jax versions where BlockSpec(pipeline_mode=...) /
        # Buffered(1) is not accepted; identical math, default buffering.
        return _call(False)


# ----------------------------------------------------------------------------
# Pure-JAX f32 reference (mirrors the PyTorch module exactly).
# ----------------------------------------------------------------------------
def reference_mha(x, w_qkv, b_qkv, w_out, b_out, num_heads):
    B, N, C = x.shape
    hd = C // num_heads
    qkv = x @ w_qkv.T + b_qkv
    qkv = qkv.reshape(B, N, 3, num_heads, hd)
    qkv = jnp.transpose(qkv, (0, 3, 2, 1, 4))
    q, k, v = qkv[:, :, 0], qkv[:, :, 1], qkv[:, :, 2]
    q = q * (hd ** -0.5)
    attn = jax.nn.softmax(jnp.einsum("bhqd,bhkd->bhqk", q, k), axis=-1)
    out = jnp.einsum("bhqk,bhkd->bhqd", attn, v)
    out = jnp.transpose(out, (0, 2, 1, 3)).reshape(B, N, C)
    return out @ w_out.T + b_out


if __name__ == "__main__":
    # Small but MXU-friendly MobileViT-like shapes: (batch, n_patches, embed_dim).
    # Bt=2 -> 128-row projection slabs, grid=(2,) (both v7x TCs busy),
    # C=128 -> lane-dense (unmasked) output stores.
    B, N, C, H = 4, 64, 128, 4

    key = jax.random.PRNGKey(0)
    kx, k1, k2, k3, k4 = jax.random.split(key, 5)

    x = jax.random.normal(kx, (B, N, C), dtype=jnp.float32)

    # nn.Linear parameter shapes: weight=(out, in), bias=(out,)
    w_qkv = 0.05 * jax.random.normal(k1, (3 * C, C), dtype=jnp.float32)
    b_qkv = 0.01 * jax.random.normal(k2, (3 * C,), dtype=jnp.float32)
    w_out = 0.05 * jax.random.normal(k3, (C, C), dtype=jnp.float32)
    b_out = 0.01 * jax.random.normal(k4, (C,), dtype=jnp.float32)

    out = multi_head_attention(x, w_qkv, b_qkv, w_out, b_out, H)
    out = jax.block_until_ready(out)

    ref = reference_mha(x, w_qkv, b_qkv, w_out, b_out, H)
    assert out.shape == (B, N, C)
    # bf16 MXU inputs + approx-reciprocal softmax -> compare at bf16-level
    # tolerance against the exact f32 reference (observed error ~1e-3).
    assert jnp.allclose(out, ref, atol=2e-2, rtol=2e-2), "mismatch vs reference"

    print("KERNEL_OK")
</pallas_src>

<mosaic_0001>
module attributes {stable_mosaic.version = 11 : i64} {
  func.func @_mha_kernel(%arg0: i32, %arg1: memref<2x64x128xbf16, #tpu.memory_space<vmem>>, %arg2: memref<128x384xbf16, #tpu.memory_space<vmem>>, %arg3: memref<1x384xf32, #tpu.memory_space<vmem>>, %arg4: memref<128x128xbf16, #tpu.memory_space<vmem>>, %arg5: memref<1x128xf32, #tpu.memory_space<vmem>>, %arg6: memref<2x64x128xf32, #tpu.memory_space<vmem>>, %arg7: memref<128x384xbf16, #tpu.memory_space<vmem>>, %arg8: memref<128x128xbf16, #tpu.memory_space<vmem>>) attributes {dimension_semantics = [#tpu.dimension_semantics<parallel>], iteration_bounds = array<i64: 2>, scalar_prefetch = 0 : i64, scratch_operands = 2 : i64, tpu.core_type = #tpu.core_type<tc>, window_params = [{transform_indices = @transform_0, window_bounds = array<i64: 2, 64, 128>}, {pipeline_mode = #tpu.pipeline_mode<synchronous>, transform_indices = @transform_1, window_bounds = array<i64: 128, 384>}, {pipeline_mode = #tpu.pipeline_mode<synchronous>, transform_indices = @transform_2, window_bounds = array<i64: 1, 384>}, {pipeline_mode = #tpu.pipeline_mode<synchronous>, transform_indices = @transform_3, window_bounds = array<i64: 128, 128>}, {pipeline_mode = #tpu.pipeline_mode<synchronous>, transform_indices = @transform_4, window_bounds = array<i64: 1, 128>}, {transform_indices = @transform_5, window_bounds = array<i64: 2, 64, 128>}]} {
    %c0 = arith.constant 0 : index
    %c0_0 = arith.constant 0 : index
    %c0_1 = arith.constant 0 : index
    %0 = vector.load %arg1[%c0, %c0_0, %c0_1] : memref<2x64x128xbf16, #tpu.memory_space<vmem>>, vector<2x64x128xbf16>
    %1 = vector.shape_cast %0 : vector<2x64x128xbf16> to vector<128x128xbf16>
    %c0_2 = arith.constant 0 : index
    %c0_3 = arith.constant 0 : index
    %2 = vector.load %arg2[%c0_2, %c0_3] : memref<128x384xbf16, #tpu.memory_space<vmem>>, vector<128x384xbf16>
    %cst = arith.constant dense<0.000000e+00> : vector<128x384xf32>
    %3 = tpu.matmul %1, %2, %cst {dimension_numbers = #tpu.dot_dimension_numbers<[1], [0], [0], [1], [0, 0, 1, 1], [], []>} : vector<128x128xbf16>, vector<128x384xbf16>, vector<128x384xf32> -> vector<128x384xf32>
    %c0_4 = arith.constant 0 : index
    %c0_5 = arith.constant 0 : index
    %4 = vector.load %arg3[%c0_4, %c0_5] : memref<1x384xf32, #tpu.memory_space<vmem>>, vector<1x384xf32>
    %5 = vector.broadcast %4 : vector<1x384xf32> to vector<128x384xf32>
    %6 = arith.addf %3, %5 : vector<128x384xf32>
    %7 = arith.truncf %6 : vector<128x384xf32> to vector<128x384xbf16>
    %c0_6 = arith.constant 0 : index
    %c0_7 = arith.constant 0 : index
    %8 = vector.load %arg7[%c0_6, %c0_7] : memref<128x384xbf16, #tpu.memory_space<vmem>>, vector<128x384xbf16>
    tpu.vector_store %arg7[%c0_6, %c0_7], %7 {strides = array<i32>} : memref<128x384xbf16, #tpu.memory_space<vmem>>, vector<128x384xbf16>,
    %c0_8 = arith.constant 0 : index
    %c0_9 = arith.constant 0 : index
    %9 = vector.load %arg7[%c0_8, %c0_9] : memref<128x384xbf16, #tpu.memory_space<vmem>>, vector<64x32xbf16>
    %c0_10 = arith.constant 0 : index
    %c128 = arith.constant 128 : index
    %10 = vector.load %arg7[%c0_10, %c128] : memref<128x384xbf16, #tpu.memory_space<vmem>>, vector<64x32xbf16>
    %c0_11 = arith.constant 0 : index
    %c256 = arith.constant 256 : index
    %11 = vector.load %arg7[%c0_11, %c256] : memref<128x384xbf16, #tpu.memory_space<vmem>>, vector<64x32xbf16>
    %cst_12 = arith.constant dense<0.000000e+00> : vector<64x64xf32>
    %12 = tpu.matmul %9, %10, %cst_12 {dimension_numbers = #tpu.dot_dimension_numbers<[1], [1], [0], [0], [0, 0, 1, 0], [], []>} : vector<64x32xbf16>, vector<64x32xbf16>, vector<64x64xf32> -> vector<64x64xf32>
    %cst_13 = arith.constant dense<0xFF800000> : vector<64xf32>
    %13 = vector.multi_reduction <maximumf>, %12, %cst_13 [1] : vector<64x64xf32> to vector<64xf32>
    %14 = vector.shape_cast %13 : vector<64xf32> to vector<64x1xf32>
    %15 = vector.broadcast %14 : vector<64x1xf32> to vector<64x64xf32>
    %16 = arith.subf %12, %15 : vector<64x64xf32>
    %17 = math.exp %16 : vector<64x64xf32>
    %cst_14 = arith.constant dense<0.000000e+00> : vector<64xf32>
    %18 = vector.multi_reduction <add>, %17, %cst_14 [1] : vector<64x64xf32> to vector<64xf32>
    %19 = vector.shape_cast %18 : vector<64xf32> to vector<64x1xf32>
    %20 = tpu.reciprocal %19 {approx = true} : vector<64x1xf32> -> vector<64x1xf32>
    %21 = vector.broadcast %20 : vector<64x1xf32> to vector<64x64xf32>
    %22 = arith.mulf %17, %21 : vector<64x64xf32>
    %23 = arith.truncf %22 : vector<64x64xf32> to vector<64x64xbf16>
    %cst_15 = arith.constant dense<0.000000e+00> : vector<64x32xf32>
    %24 = tpu.matmul %23, %11, %cst_15 {dimension_numbers = #tpu.dot_dimension_numbers<[1], [0], [0], [1], [0, 0, 1, 1], [], []>} : vector<64x64xbf16>, vector<64x32xbf16>, vector<64x32xf32> -> vector<64x32xf32>
    %25 = arith.truncf %24 : vector<64x32xf32> to vector<64x32xbf16>
    %c0_16 = arith.constant 0 : index
    %c0_17 = arith.constant 0 : index
    %26 = vector.load %arg8[%c0_16, %c0_17] : memref<128x128xbf16, #tpu.memory_space<vmem>>, vector<64x32xbf16>
    tpu.vector_store %arg8[%c0_16, %c0_17], %25 {strides = array<i32>} : memref<128x128xbf16, #tpu.memory_space<vmem>>, vector<64x32xbf16>,
    %c0_18 = arith.constant 0 : index
    %c32 = arith.constant 32 : index
    %27 = vector.load %arg7[%c0_18, %c32] : memref<128x384xbf16, #tpu.memory_space<vmem>>, vector<64x32xbf16>
    %c0_19 = arith.constant 0 : index
    %c160 = arith.constant 160 : index
    %28 = vector.load %arg7[%c0_19, %c160] : memref<128x384xbf16, #tpu.memory_space<vmem>>, vector<64x32xbf16>
    %c0_20 = arith.constant 0 : index
    %c288 = arith.constant 288 : index
    %29 = vector.load %arg7[%c0_20, %c288] : memref<128x384xbf16, #tpu.memory_space<vmem>>, vector<64x32xbf16>
    %cst_21 = arith.constant dense<0.000000e+00> : vector<64x64xf32>
    %30 = tpu.matmul %27, %28, %cst_21 {dimension_numbers = #tpu.dot_dimension_numbers<[1], [1], [0], [0], [0, 0, 1, 0], [], []>} : vector<64x32xbf16>, vector<64x32xbf16>, vector<64x64xf32> -> vector<64x64xf32>
    %cst_22 = arith.constant dense<0xFF800000> : vector<64xf32>
    %31 = vector.multi_reduction <maximumf>, %30, %cst_22 [1] : vector<64x64xf32> to vector<64xf32>
    %32 = vector.shape_cast %31 : vector<64xf32> to vector<64x1xf32>
    %33 = vector.broadcast %32 : vector<64x1xf32> to vector<64x64xf32>
    %34 = arith.subf %30, %33 : vector<64x64xf32>
    %35 = math.exp %34 : vector<64x64xf32>
    %cst_23 = arith.constant dense<0.000000e+00> : vector<64xf32>
    %36 = vector.multi_reduction <add>, %35, %cst_23 [1] : vector<64x64xf32> to vector<64xf32>
    %37 = vector.shape_cast %36 : vector<64xf32> to vector<64x1xf32>
    %38 = tpu.reciprocal %37 {approx = true} : vector<64x1xf32> -> vector<64x1xf32>
    %39 = vector.broadcast %38 : vector<64x1xf32> to vector<64x64xf32>
    %40 = arith.mulf %35, %39 : vector<64x64xf32>
    %41 = arith.truncf %40 : vector<64x64xf32> to vector<64x64xbf16>
    %cst_24 = arith.constant dense<0.000000e+00> : vector<64x32xf32>
    %42 = tpu.matmul %41, %29, %cst_24 {dimension_numbers = #tpu.dot_dimension_numbers<[1], [0], [0], [1], [0, 0, 1, 1], [], []>} : vector<64x64xbf16>, vector<64x32xbf16>, vector<64x32xf32> -> vector<64x32xf32>
    %43 = arith.truncf %42 : vector<64x32xf32> to vector<64x32xbf16>
    %c0_25 = arith.constant 0 : index
    %c32_26 = arith.constant 32 : index
    %44 = vector.load %arg8[%c0_25, %c32_26] : memref<128x128xbf16, #tpu.memory_space<vmem>>, vector<64x32xbf16>
    tpu.vector_store %arg8[%c0_25, %c32_26], %43 {strides = array<i32>} : memref<128x128xbf16, #tpu.memory_space<vmem>>, vector<64x32xbf16>,
    %c0_27 = arith.constant 0 : index
    %c64 = arith.constant 64 : index
    %45 = vector.load %arg7[%c0_27, %c64] : memref<128x384xbf16, #tpu.memory_space<vmem>>, vector<64x32xbf16>
    %c0_28 = arith.constant 0 : index
    %c192 = arith.constant 192 : index
    %46 = vector.load %arg7[%c0_28, %c192] : memref<128x384xbf16, #tpu.memory_space<vmem>>, vector<64x32xbf16>
    %c0_29 = arith.constant 0 : index
    %c320 = arith.constant 320 : index
    %47 = vector.load %arg7[%c0_29, %c320] : memref<128x384xbf16, #tpu.memory_space<vmem>>, vector<64x32xbf16>
    %cst_30 = arith.constant dense<0.000000e+00> : vector<64x64xf32>
    %48 = tpu.matmul %45, %46, %cst_30 {dimension_numbers = #tpu.dot_dimension_numbers<[1], [1], [0], [0], [0, 0, 1, 0], [], []>} : vector<64x32xbf16>, vector<64x32xbf16>, vector<64x64xf32> -> vector<64x64xf32>
    %cst_31 = arith.constant dense<0xFF800000> : vector<64xf32>
    %49 = vector.multi_reduction <maximumf>, %48, %cst_31 [1] : vector<64x64xf32> to vector<64xf32>
    %50 = vector.shape_cast %49 : vector<64xf32> to vector<64x1xf32>
    %51 = vector.broadcast %50 : vector<64x1xf32> to vector<64x64xf32>
    %52 = arith.subf %48, %51 : vector<64x64xf32>
    %53 = math.exp %52 : vector<64x64xf32>
    %cst_32 = arith.constant dense<0.000000e+00> : vector<64xf32>
    %54 = vector.multi_reduction <add>, %53, %cst_32 [1] : vector<64x64xf32> to vector<64xf32>
    %55 = vector.shape_cast %54 : vector<64xf32> to vector<64x1xf32>
    %56 = tpu.reciprocal %55 {approx = true} : vector<64x1xf32> -> vector<64x1xf32>
    %57 = vector.broadcast %56 : vector<64x1xf32> to vector<64x64xf32>
    %58 = arith.mulf %53, %57 : vector<64x64xf32>
    %59 = arith.truncf %58 : vector<64x64xf32> to vector<64x64xbf16>
    %cst_33 = arith.constant dense<0.000000e+00> : vector<64x32xf32>
    %60 = tpu.matmul %59, %47, %cst_33 {dimension_numbers = #tpu.dot_dimension_numbers<[1], [0], [0], [1], [0, 0, 1, 1], [], []>} : vector<64x64xbf16>, vector<64x32xbf16>, vector<64x32xf32> -> vector<64x32xf32>
    %61 = arith.truncf %60 : vector<64x32xf32> to vector<64x32xbf16>
    %c0_34 = arith.constant 0 : index
    %c64_35 = arith.constant 64 : index
    %62 = vector.load %arg8[%c0_34, %c64_35] : memref<128x128xbf16, #tpu.memory_space<vmem>>, vector<64x32xbf16>
    tpu.vector_store %arg8[%c0_34, %c64_35], %61 {strides = array<i32>} : memref<128x128xbf16, #tpu.memory_space<vmem>>, vector<64x32xbf16>,
    %c0_36 = arith.constant 0 : index
    %c96 = arith.constant 96 : index
    %63 = vector.load %arg7[%c0_36, %c96] : memref<128x384xbf16, #tpu.memory_space<vmem>>, vector<64x32xbf16>
    %c0_37 = arith.constant 0 : index
    %c224 = arith.constant 224 : index
    %64 = vector.load %arg7[%c0_37, %c224] : memref<128x384xbf16, #tpu.memory_space<vmem>>, vector<64x32xbf16>
    %c0_38 = arith.constant 0 : index
    %c352 = arith.constant 352 : index
    %65 = vector.load %arg7[%c0_38, %c352] : memref<128x384xbf16, #tpu.memory_space<vmem>>, vector<64x32xbf16>
    %cst_39 = arith.constant dense<0.000000e+00> : vector<64x64xf32>
    %66 = tpu.matmul %63, %64, %cst_39 {dimension_numbers = #tpu.dot_dimension_numbers<[1], [1], [0], [0], [0, 0, 1, 0], [], []>} : vector<64x32xbf16>, vector<64x32xbf16>, vector<64x64xf32> -> vector<64x64xf32>
    %cst_40 = arith.constant dense<0xFF800000> : vector<64xf32>
    %67 = vector.multi_reduction <maximumf>, %66, %cst_40 [1] : vector<64x64xf32> to vector<64xf32>
    %68 = vector.shape_cast %67 : vector<64xf32> to vector<64x1xf32>
    %69 = vector.broadcast %68 : vector<64x1xf32> to vector<64x64xf32>
    %70 = arith.subf %66, %69 : vector<64x64xf32>
    %71 = math.exp %70 : vector<64x64xf32>
    %cst_41 = arith.constant dense<0.000000e+00> : vector<64xf32>
    %72 = vector.multi_reduction <add>, %71, %cst_41 [1] : vector<64x64xf32> to vector<64xf32>
    %73 = vector.shape_cast %72 : vector<64xf32> to vector<64x1xf32>
    %74 = tpu.reciprocal %73 {approx = true} : vector<64x1xf32> -> vector<64x1xf32>
    %75 = vector.broadcast %74 : vector<64x1xf32> to vector<64x64xf32>
    %76 = arith.mulf %71, %75 : vector<64x64xf32>
    %77 = arith.truncf %76 : vector<64x64xf32> to vector<64x64xbf16>
    %cst_42 = arith.constant dense<0.000000e+00> : vector<64x32xf32>
    %78 = tpu.matmul %77, %65, %cst_42 {dimension_numbers = #tpu.dot_dimension_numbers<[1], [0], [0], [1], [0, 0, 1, 1], [], []>} : vector<64x64xbf16>, vector<64x32xbf16>, vector<64x32xf32> -> vector<64x32xf32>
    %79 = arith.truncf %78 : vector<64x32xf32> to vector<64x32xbf16>
    %c0_43 = arith.constant 0 : index
    %c96_44 = arith.constant 96 : index
    %80 = vector.load %arg8[%c0_43, %c96_44] : memref<128x128xbf16, #tpu.memory_space<vmem>>, vector<64x32xbf16>
    tpu.vector_store %arg8[%c0_43, %c96_44], %79 {strides = array<i32>} : memref<128x128xbf16, #tpu.memory_space<vmem>>, vector<64x32xbf16>,
    %c64_45 = arith.constant 64 : index
    %c0_46 = arith.constant 0 : index
    %81 = vector.load %arg7[%c64_45, %c0_46] : memref<128x384xbf16, #tpu.memory_space<vmem>>, vector<64x32xbf16>
    %c64_47 = arith.constant 64 : index
    %c128_48 = arith.constant 128 : index
    %82 = vector.load %arg7[%c64_47, %c128_48] : memref<128x384xbf16, #tpu.memory_space<vmem>>, vector<64x32xbf16>
    %c64_49 = arith.constant 64 : index
    %c256_50 = arith.constant 256 : index
    %83 = vector.load %arg7[%c64_49, %c256_50] : memref<128x384xbf16, #tpu.memory_space<vmem>>, vector<64x32xbf16>
    %cst_51 = arith.constant dense<0.000000e+00> : vector<64x64xf32>
    %84 = tpu.matmul %81, %82, %cst_51 {dimension_numbers = #tpu.dot_dimension_numbers<[1], [1], [0], [0], [0, 0, 1, 0], [], []>} : vector<64x32xbf16>, vector<64x32xbf16>, vector<64x64xf32> -> vector<64x64xf32>
    %cst_52 = arith.constant dense<0xFF800000> : vector<64xf32>
    %85 = vector.multi_reduction <maximumf>, %84, %cst_52 [1] : vector<64x64xf32> to vector<64xf32>
    %86 = vector.shape_cast %85 : vector<64xf32> to vector<64x1xf32>
    %87 = vector.broadcast %86 : vector<64x1xf32> to vector<64x64xf32>
    %88 = arith.subf %84, %87 : vector<64x64xf32>
    %89 = math.exp %88 : vector<64x64xf32>
    %cst_53 = arith.constant dense<0.000000e+00> : vector<64xf32>
    %90 = vector.multi_reduction <add>, %89, %cst_53 [1] : vector<64x64xf32> to vector<64xf32>
    %91 = vector.shape_cast %90 : vector<64xf32> to vector<64x1xf32>
    %92 = tpu.reciprocal %91 {approx = true} : vector<64x1xf32> -> vector<64x1xf32>
    %93 = vector.broadcast %92 : vector<64x1xf32> to vector<64x64xf32>
    %94 = arith.mulf %89, %93 : vector<64x64xf32>
    %95 = arith.truncf %94 : vector<64x64xf32> to vector<64x64xbf16>
    %cst_54 = arith.constant dense<0.000000e+00> : vector<64x32xf32>
    %96 = tpu.matmul %95, %83, %cst_54 {dimension_numbers = #tpu.dot_dimension_numbers<[1], [0], [0], [1], [0, 0, 1, 1], [], []>} : vector<64x64xbf16>, vector<64x32xbf16>, vector<64x32xf32> -> vector<64x32xf32>
    %97 = arith.truncf %96 : vector<64x32xf32> to vector<64x32xbf16>
    %c64_55 = arith.constant 64 : index
    %c0_56 = arith.constant 0 : index
    %98 = vector.load %arg8[%c64_55, %c0_56] : memref<128x128xbf16, #tpu.memory_space<vmem>>, vector<64x32xbf16>
    tpu.vector_store %arg8[%c64_55, %c0_56], %97 {strides = array<i32>} : memref<128x128xbf16, #tpu.memory_space<vmem>>, vector<64x32xbf16>,
    %c64_57 = arith.constant 64 : index
    %c32_58 = arith.constant 32 : index
    %99 = vector.load %arg7[%c64_57, %c32_58] : memref<128x384xbf16, #tpu.memory_space<vmem>>, vector<64x32xbf16>
    %c64_59 = arith.constant 64 : index
    %c160_60 = arith.constant 160 : index
    %100 = vector.load %arg7[%c64_59, %c160_60] : memref<128x384xbf16, #tpu.memory_space<vmem>>, vector<64x32xbf16>
    %c64_61 = arith.constant 64 : index
    %c288_62 = arith.constant 288 : index
    %101 = vector.load %arg7[%c64_61, %c288_62] : memref<128x384xbf16, #tpu.memory_space<vmem>>, vector<64x32xbf16>
    %cst_63 = arith.constant dense<0.000000e+00> : vector<64x64xf32>
    %102 = tpu.matmul %99, %100, %cst_63 {dimension_numbers = #tpu.dot_dimension_numbers<[1], [1], [0], [0], [0, 0, 1, 0], [], []>} : vector<64x32xbf16>, vector<64x32xbf16>, vector<64x64xf32> -> vector<64x64xf32>
    %cst_64 = arith.constant dense<0xFF800000> : vector<64xf32>
    %103 = vector.multi_reduction <maximumf>, %102, %cst_64 [1] : vector<64x64xf32> to vector<64xf32>
    %104 = vector.shape_cast %103 : vector<64xf32> to vector<64x1xf32>
    %105 = vector.broadcast %104 : vector<64x1xf32> to vector<64x64xf32>
    %106 = arith.subf %102, %105 : vector<64x64xf32>
    %107 = math.exp %106 : vector<64x64xf32>
    %cst_65 = arith.constant dense<0.000000e+00> : vector<64xf32>
    %108 = vector.multi_reduction <add>, %107, %cst_65 [1] : vector<64x64xf32> to vector<64xf32>
    %109 = vector.shape_cast %108 : vector<64xf32> to vector<64x1xf32>
    %110 = tpu.reciprocal %109 {approx = true} : vector<64x1xf32> -> vector<64x1xf32>
    %111 = vector.broadcast %110 : vector<64x1xf32> to vector<64x64xf32>
    %112 = arith.mulf %107, %111 : vector<64x64xf32>
    %113 = arith.truncf %112 : vector<64x64xf32> to vector<64x64xbf16>
    %cst_66 = arith.constant dense<0.000000e+00> : vector<64x32xf32>
    %114 = tpu.matmul %113, %101, %cst_66 {dimension_numbers = #tpu.dot_dimension_numbers<[1], [0], [0], [1], [0, 0, 1, 1], [], []>} : vector<64x64xbf16>, vector<64x32xbf16>, vector<64x32xf32> -> vector<64x32xf32>
    %115 = arith.truncf %114 : vector<64x32xf32> to vector<64x32xbf16>
    %c64_67 = arith.constant 64 : index
    %c32_68 = arith.constant 32 : index
    %116 = vector.load %arg8[%c64_67, %c32_68] : memref<128x128xbf16, #tpu.memory_space<vmem>>, vector<64x32xbf16>
    tpu.vector_store %arg8[%c64_67, %c32_68], %115 {strides = array<i32>} : memref<128x128xbf16, #tpu.memory_space<vmem>>, vector<64x32xbf16>,
    %c64_69 = arith.constant 64 : index
    %c64_70 = arith.constant 64 : index
    %117 = vector.load %arg7[%c64_69, %c64_70] : memref<128x384xbf16, #tpu.memory_space<vmem>>, vector<64x32xbf16>
    %c64_71 = arith.constant 64 : index
    %c192_72 = arith.constant 192 : index
    %118 = vector.load %arg7[%c64_71, %c192_72] : memref<128x384xbf16, #tpu.memory_space<vmem>>, vector<64x32xbf16>
    %c64_73 = arith.constant 64 : index
    %c320_74 = arith.constant 320 : index
    %119 = vector.load %arg7[%c64_73, %c320_74] : memref<128x384xbf16, #tpu.memory_space<vmem>>, vector<64x32xbf16>
    %cst_75 = arith.constant dense<0.000000e+00> : vector<64x64xf32>
    %120 = tpu.matmul %117, %118, %cst_75 {dimension_numbers = #tpu.dot_dimension_numbers<[1], [1], [0], [0], [0, 0, 1, 0], [], []>} : vector<64x32xbf16>, vector<64x32xbf16>, vector<64x64xf32> -> vector<64x64xf32>
    %cst_76 = arith.constant dense<0xFF800000> : vector<64xf32>
    %121 = vector.multi_reduction <maximumf>, %120, %cst_76 [1] : vector<64x64xf32> to vector<64xf32>
    %122 = vector.shape_cast %121 : vector<64xf32> to vector<64x1xf32>
    %123 = vector.broadcast %122 : vector<64x1xf32> to vector<64x64xf32>
    %124 = arith.subf %120, %123 : vector<64x64xf32>
    %125 = math.exp %124 : vector<64x64xf32>
    %cst_77 = arith.constant dense<0.000000e+00> : vector<64xf32>
    %126 = vector.multi_reduction <add>, %125, %cst_77 [1] : vector<64x64xf32> to vector<64xf32>
    %127 = vector.shape_cast %126 : vector<64xf32> to vector<64x1xf32>
    %128 = tpu.reciprocal %127 {approx = true} : vector<64x1xf32> -> vector<64x1xf32>
    %129 = vector.broadcast %128 : vector<64x1xf32> to vector<64x64xf32>
    %130 = arith.mulf %125, %129 : vector<64x64xf32>
    %131 = arith.truncf %130 : vector<64x64xf32> to vector<64x64xbf16>
    %cst_78 = arith.constant dense<0.000000e+00> : vector<64x32xf32>
    %132 = tpu.matmul %131, %119, %cst_78 {dimension_numbers = #tpu.dot_dimension_numbers<[1], [0], [0], [1], [0, 0, 1, 1], [], []>} : vector<64x64xbf16>, vector<64x32xbf16>, vector<64x32xf32> -> vector<64x32xf32>
    %133 = arith.truncf %132 : vector<64x32xf32> to vector<64x32xbf16>
    %c64_79 = arith.constant 64 : index
    %c64_80 = arith.constant 64 : index
    %134 = vector.load %arg8[%c64_79, %c64_80] : memref<128x128xbf16, #tpu.memory_space<vmem>>, vector<64x32xbf16>
    tpu.vector_store %arg8[%c64_79, %c64_80], %133 {strides = array<i32>} : memref<128x128xbf16, #tpu.memory_space<vmem>>, vector<64x32xbf16>,
    %c64_81 = arith.constant 64 : index
    %c96_82 = arith.constant 96 : index
    %135 = vector.load %arg7[%c64_81, %c96_82] : memref<128x384xbf16, #tpu.memory_space<vmem>>, vector<64x32xbf16>
    %c64_83 = arith.constant 64 : index
    %c224_84 = arith.constant 224 : index
    %136 = vector.load %arg7[%c64_83, %c224_84] : memref<128x384xbf16, #tpu.memory_space<vmem>>, vector<64x32xbf16>
    %c64_85 = arith.constant 64 : index
    %c352_86 = arith.constant 352 : index
    %137 = vector.load %arg7[%c64_85, %c352_86] : memref<128x384xbf16, #tpu.memory_space<vmem>>, vector<64x32xbf16>
    %cst_87 = arith.constant dense<0.000000e+00> : vector<64x64xf32>
    %138 = tpu.matmul %135, %136, %cst_87 {dimension_numbers = #tpu.dot_dimension_numbers<[1], [1], [0], [0], [0, 0, 1, 0], [], []>} : vector<64x32xbf16>, vector<64x32xbf16>, vector<64x64xf32> -> vector<64x64xf32>
    %cst_88 = arith.constant dense<0xFF800000> : vector<64xf32>
    %139 = vector.multi_reduction <maximumf>, %138, %cst_88 [1] : vector<64x64xf32> to vector<64xf32>
    %140 = vector.shape_cast %139 : vector<64xf32> to vector<64x1xf32>
    %141 = vector.broadcast %140 : vector<64x1xf32> to vector<64x64xf32>
    %142 = arith.subf %138, %141 : vector<64x64xf32>
    %143 = math.exp %142 : vector<64x64xf32>
    %cst_89 = arith.constant dense<0.000000e+00> : vector<64xf32>
    %144 = vector.multi_reduction <add>, %143, %cst_89 [1] : vector<64x64xf32> to vector<64xf32>
    %145 = vector.shape_cast %144 : vector<64xf32> to vector<64x1xf32>
    %146 = tpu.reciprocal %145 {approx = true} : vector<64x1xf32> -> vector<64x1xf32>
    %147 = vector.broadcast %146 : vector<64x1xf32> to vector<64x64xf32>
    %148 = arith.mulf %143, %147 : vector<64x64xf32>
    %149 = arith.truncf %148 : vector<64x64xf32> to vector<64x64xbf16>
    %cst_90 = arith.constant dense<0.000000e+00> : vector<64x32xf32>
    %150 = tpu.matmul %149, %137, %cst_90 {dimension_numbers = #tpu.dot_dimension_numbers<[1], [0], [0], [1], [0, 0, 1, 1], [], []>} : vector<64x64xbf16>, vector<64x32xbf16>, vector<64x32xf32> -> vector<64x32xf32>
    %151 = arith.truncf %150 : vector<64x32xf32> to vector<64x32xbf16>
    %c64_91 = arith.constant 64 : index
    %c96_92 = arith.constant 96 : index
    %152 = vector.load %arg8[%c64_91, %c96_92] : memref<128x128xbf16, #tpu.memory_space<vmem>>, vector<64x32xbf16>
    tpu.vector_store %arg8[%c64_91, %c96_92], %151 {strides = array<i32>} : memref<128x128xbf16, #tpu.memory_space<vmem>>, vector<64x32xbf16>,
    %c0_93 = arith.constant 0 : index
    %c0_94 = arith.constant 0 : index
    %153 = vector.load %arg8[%c0_93, %c0_94] : memref<128x128xbf16, #tpu.memory_space<vmem>>, vector<128x128xbf16>
    %c0_95 = arith.constant 0 : index
    %c0_96 = arith.constant 0 : index
    %154 = vector.load %arg4[%c0_95, %c0_96] : memref<128x128xbf16, #tpu.memory_space<vmem>>, vector<128x128xbf16>
    %cst_97 = arith.constant dense<0.000000e+00> : vector<128x128xf32>
    %155 = tpu.matmul %153, %154, %cst_97 {dimension_numbers = #tpu.dot_dimension_numbers<[1], [0], [0], [1], [0, 0, 1, 1], [], []>} : vector<128x128xbf16>, vector<128x128xbf16>, vector<128x128xf32> -> vector<128x128xf32>
    %c0_98 = arith.constant 0 : index
    %c0_99 = arith.constant 0 : index
    %156 = vector.load %arg5[%c0_98, %c0_99] : memref<1x128xf32, #tpu.memory_space<vmem>>, vector<1x128xf32>
    %157 = vector.broadcast %156 : vector<1x128xf32> to vector<128x128xf32>
    %158 = arith.addf %155, %157 : vector<128x128xf32>
    %159 = vector.shape_cast %158 : vector<128x128xf32> to vector<2x64x128xf32>
    %c0_100 = arith.constant 0 : index
    %c0_101 = arith.constant 0 : index
    %c0_102 = arith.constant 0 : index
    %160 = vector.load %arg6[%c0_100, %c0_101, %c0_102] : memref<2x64x128xf32, #tpu.memory_space<vmem>>, vector<2x64x128xf32>
    tpu.vector_store %arg6[%c0_100, %c0_101, %c0_102], %159 {strides = array<i32>} : memref<2x64x128xf32, #tpu.memory_space<vmem>>, vector<2x64x128xf32>,
    return
  }
  func.func @transform_0(%arg0: i32) -> (i32, i32, i32) {
    %c0_i32 = arith.constant 0 : i32
    %c0_i32_0 = arith.constant 0 : i32
    %c0_i32_1 = arith.constant 0 : i32
    return %arg0, %c0_i32, %c0_i32_0 : i32, i32, i32
  }
  func.func @transform_1(%arg0: i32) -> (i32, i32) {
    %c0_i32 = arith.constant 0 : i32
    %c0_i32_0 = arith.constant 0 : i32
    %c0_i32_1 = arith.constant 0 : i32
    return %c0_i32, %c0_i32_0 : i32, i32
  }
  func.func @transform_2(%arg0: i32) -> (i32, i32) {
    %c0_i32 = arith.constant 0 : i32
    %c0_i32_0 = arith.constant 0 : i32
    %c0_i32_1 = arith.constant 0 : i32
    return %c0_i32, %c0_i32_0 : i32, i32
  }
  func.func @transform_3(%arg0: i32) -> (i32, i32) {
    %c0_i32 = arith.constant 0 : i32
    %c0_i32_0 = arith.constant 0 : i32
    %c0_i32_1 = arith.constant 0 : i32
    return %c0_i32, %c0_i32_0 : i32, i32
  }
  func.func @transform_4(%arg0: i32) -> (i32, i32) {
    %c0_i32 = arith.constant 0 : i32
    %c0_i32_0 = arith.constant 0 : i32
    %c0_i32_1 = arith.constant 0 : i32
    return %c0_i32, %c0_i32_0 : i32, i32
  }
  func.func @transform_5(%arg0: i32) -> (i32, i32, i32) {
    %c0_i32 = arith.constant 0 : i32
    %c0_i32_0 = arith.constant 0 : i32
    %c0_i32_1 = arith.constant 0 : i32
    return %arg0, %c0_i32, %c0_i32_0 : i32, i32, i32
  }
}

module attributes {stable_mosaic.version = 11 : i64} {
  func.func @_mha_kernel(%arg0: i32, %arg1: memref<2x64x128xbf16, #tpu.memory_space<vmem>>, %arg2: memref<128x384xbf16, #tpu.memory_space<vmem>>, %arg3: memref<1x384xf32, #tpu.memory_space<vmem>>, %arg4: memref<128x128xbf16, #tpu.memory_space<vmem>>, %arg5: memref<1x128xf32, #tpu.memory_space<vmem>>, %arg6: memref<2x64x128xf32, #tpu.memory_space<vmem>>, %arg7: memref<128x384xbf16, #tpu.memory_space<vmem>>, %arg8: memref<128x128xbf16, #tpu.memory_space<vmem>>) attributes {dimension_semantics = [#tpu.dimension_semantics<parallel>], iteration_bounds = array<i64: 2>, scalar_prefetch = 0 : i64, scratch_operands = 2 : i64, tpu.core_type = #tpu.core_type<tc>, window_params = [{transform_indices = @transform_0, window_bounds = array<i64: 2, 64, 128>}, {pipeline_mode = #tpu.pipeline_mode<synchronous>, transform_indices = @transform_1, window_bounds = array<i64: 128, 384>}, {pipeline_mode = #tpu.pipeline_mode<synchronous>, transform_indices = @transform_2, window_bounds = array<i64: 1, 384>}, {pipeline_mode = #tpu.pipeline_mode<synchronous>, transform_indices = @transform_3, window_bounds = array<i64: 128, 128>}, {pipeline_mode = #tpu.pipeline_mode<synchronous>, transform_indices = @transform_4, window_bounds = array<i64: 1, 128>}, {transform_indices = @transform_5, window_bounds = array<i64: 2, 64, 128>}]} {
    %c0 = arith.constant 0 : index
    %c0_0 = arith.constant 0 : index
    %c0_1 = arith.constant 0 : index
    %0 = vector.load %arg1[%c0, %c0_0, %c0_1] : memref<2x64x128xbf16, #tpu.memory_space<vmem>>, vector<2x64x128xbf16>
    %1 = vector.shape_cast %0 : vector<2x64x128xbf16> to vector<128x128xbf16>
    %c0_2 = arith.constant 0 : index
    %c0_3 = arith.constant 0 : index
    %2 = vector.load %arg2[%c0_2, %c0_3] : memref<128x384xbf16, #tpu.memory_space<vmem>>, vector<128x384xbf16>
    %cst = arith.constant dense<0.000000e+00> : vector<128x384xf32>
    %3 = tpu.matmul %1, %2, %cst {dimension_numbers = #tpu.dot_dimension_numbers<[1], [0], [0], [1], [0, 0, 1, 1], [], []>} : vector<128x128xbf16>, vector<128x384xbf16>, vector<128x384xf32> -> vector<128x384xf32>
    %c0_4 = arith.constant 0 : index
    %c0_5 = arith.constant 0 : index
    %4 = vector.load %arg3[%c0_4, %c0_5] : memref<1x384xf32, #tpu.memory_space<vmem>>, vector<1x384xf32>
    %5 = vector.broadcast %4 : vector<1x384xf32> to vector<128x384xf32>
    %6 = arith.addf %3, %5 : vector<128x384xf32>
    %7 = arith.truncf %6 : vector<128x384xf32> to vector<128x384xbf16>
    %c0_6 = arith.constant 0 : index
    %c0_7 = arith.constant 0 : index
    %8 = vector.load %arg7[%c0_6, %c0_7] : memref<128x384xbf16, #tpu.memory_space<vmem>>, vector<128x384xbf16>
    tpu.vector_store %arg7[%c0_6, %c0_7], %7 {strides = array<i32>} : memref<128x384xbf16, #tpu.memory_space<vmem>>, vector<128x384xbf16>,
    %c0_8 = arith.constant 0 : index
    %c0_9 = arith.constant 0 : index
    %9 = vector.load %arg7[%c0_8, %c0_9] : memref<128x384xbf16, #tpu.memory_space<vmem>>, vector<64x32xbf16>
    %c0_10 = arith.constant 0 : index
    %c128 = arith.constant 128 : index
    %10 = vector.load %arg7[%c0_10, %c128] : memref<128x384xbf16, #tpu.memory_space<vmem>>, vector<64x32xbf16>
    %c0_11 = arith.constant 0 : index
    %c256 = arith.constant 256 : index
    %11 = vector.load %arg7[%c0_11, %c256] : memref<128x384xbf16, #tpu.memory_space<vmem>>, vector<64x32xbf16>
    %cst_12 = arith.constant dense<0.000000e+00> : vector<64x64xf32>
    %12 = tpu.matmul %9, %10, %cst_12 {dimension_numbers = #tpu.dot_dimension_numbers<[1], [1], [0], [0], [0, 0, 1, 0], [], []>} : vector<64x32xbf16>, vector<64x32xbf16>, vector<64x64xf32> -> vector<64x64xf32>
    %cst_13 = arith.constant dense<0xFF800000> : vector<64xf32>
    %13 = vector.multi_reduction <maximumf>, %12, %cst_13 [1] : vector<64x64xf32> to vector<64xf32>
    %14 = vector.shape_cast %13 : vector<64xf32> to vector<64x1xf32>
    %15 = vector.broadcast %14 : vector<64x1xf32> to vector<64x64xf32>
    %16 = arith.subf %12, %15 : vector<64x64xf32>
    %17 = math.exp %16 : vector<64x64xf32>
    %cst_14 = arith.constant dense<0.000000e+00> : vector<64xf32>
    %18 = vector.multi_reduction <add>, %17, %cst_14 [1] : vector<64x64xf32> to vector<64xf32>
    %19 = vector.shape_cast %18 : vector<64xf32> to vector<64x1xf32>
    %20 = tpu.reciprocal %19 {approx = true} : vector<64x1xf32> -> vector<64x1xf32>
    %21 = vector.broadcast %20 : vector<64x1xf32> to vector<64x64xf32>
    %22 = arith.mulf %17, %21 : vector<64x64xf32>
    %23 = arith.truncf %22 : vector<64x64xf32> to vector<64x64xbf16>
    %cst_15 = arith.constant dense<0.000000e+00> : vector<64x32xf32>
    %24 = tpu.matmul %23, %11, %cst_15 {dimension_numbers = #tpu.dot_dimension_numbers<[1], [0], [0], [1], [0, 0, 1, 1], [], []>} : vector<64x64xbf16>, vector<64x32xbf16>, vector<64x32xf32> -> vector<64x32xf32>
    %25 = arith.truncf %24 : vector<64x32xf32> to vector<64x32xbf16>
    %c0_16 = arith.constant 0 : index
    %c0_17 = arith.constant 0 : index
    %26 = vector.load %arg8[%c0_16, %c0_17] : memref<128x128xbf16, #tpu.memory_space<vmem>>, vector<64x32xbf16>
    tpu.vector_store %arg8[%c0_16, %c0_17], %25 {strides = array<i32>} : memref<128x128xbf16, #tpu.memory_space<vmem>>, vector<64x32xbf16>,
    %c0_18 = arith.constant 0 : index
    %c32 = arith.constant 32 : index
    %27 = vector.load %arg7[%c0_18, %c32] : memref<128x384xbf16, #tpu.memory_space<vmem>>, vector<64x32xbf16>
    %c0_19 = arith.constant 0 : index
    %c160 = arith.constant 160 : index
    %28 = vector.load %arg7[%c0_19, %c160] : memref<128x384xbf16, #tpu.memory_space<vmem>>, vector<64x32xbf16>
    %c0_20 = arith.constant 0 : index
    %c288 = arith.constant 288 : index
    %29 = vector.load %arg7[%c0_20, %c288] : memref<128x384xbf16, #tpu.memory_space<vmem>>, vector<64x32xbf16>
    %cst_21 = arith.constant dense<0.000000e+00> : vector<64x64xf32>
    %30 = tpu.matmul %27, %28, %cst_21 {dimension_numbers = #tpu.dot_dimension_numbers<[1], [1], [0], [0], [0, 0, 1, 0], [], []>} : vector<64x32xbf16>, vector<64x32xbf16>, vector<64x64xf32> -> vector<64x64xf32>
    %cst_22 = arith.constant dense<0xFF800000> : vector<64xf32>
    %31 = vector.multi_reduction <maximumf>, %30, %cst_22 [1] : vector<64x64xf32> to vector<64xf32>
    %32 = vector.shape_cast %31 : vector<64xf32> to vector<64x1xf32>
    %33 = vector.broadcast %32 : vector<64x1xf32> to vector<64x64xf32>
    %34 = arith.subf %30, %33 : vector<64x64xf32>
    %35 = math.exp %34 : vector<64x64xf32>
    %cst_23 = arith.constant dense<0.000000e+00> : vector<64xf32>
    %36 = vector.multi_reduction <add>, %35, %cst_23 [1] : vector<64x64xf32> to vector<64xf32>
    %37 = vector.shape_cast %36 : vector<64xf32> to vector<64x1xf32>
    %38 = tpu.reciprocal %37 {approx = true} : vector<64x1xf32> -> vector<64x1xf32>
    %39 = vector.broadcast %38 : vector<64x1xf32> to vector<64x64xf32>
    %40 = arith.mulf %35, %39 : vector<64x64xf32>
    %41 = arith.truncf %40 : vector<64x64xf32> to vector<64x64xbf16>
    %cst_24 = arith.constant dense<0.000000e+00> : vector<64x32xf32>
    %42 = tpu.matmul %41, %29, %cst_24 {dimension_numbers = #tpu.dot_dimension_numbers<[1], [0], [0], [1], [0, 0, 1, 1], [], []>} : vector<64x64xbf16>, vector<64x32xbf16>, vector<64x32xf32> -> vector<64x32xf32>
    %43 = arith.truncf %42 : vector<64x32xf32> to vector<64x32xbf16>
    %c0_25 = arith.constant 0 : index
    %c32_26 = arith.constant 32 : index
    %44 = vector.load %arg8[%c0_25, %c32_26] : memref<128x128xbf16, #tpu.memory_space<vmem>>, vector<64x32xbf16>
    tpu.vector_store %arg8[%c0_25, %c32_26], %43 {strides = array<i32>} : memref<128x128xbf16, #tpu.memory_space<vmem>>, vector<64x32xbf16>,
    %c0_27 = arith.constant 0 : index
    %c64 = arith.constant 64 : index
    %45 = vector.load %arg7[%c0_27, %c64] : memref<128x384xbf16, #tpu.memory_space<vmem>>, vector<64x32xbf16>
    %c0_28 = arith.constant 0 : index
    %c192 = arith.constant 192 : index
    %46 = vector.load %arg7[%c0_28, %c192] : memref<128x384xbf16, #tpu.memory_space<vmem>>, vector<64x32xbf16>
    %c0_29 = arith.constant 0 : index
    %c320 = arith.constant 320 : index
    %47 = vector.load %arg7[%c0_29, %c320] : memref<128x384xbf16, #tpu.memory_space<vmem>>, vector<64x32xbf16>
    %cst_30 = arith.constant dense<0.000000e+00> : vector<64x64xf32>
    %48 = tpu.matmul %45, %46, %cst_30 {dimension_numbers = #tpu.dot_dimension_numbers<[1], [1], [0], [0], [0, 0, 1, 0], [], []>} : vector<64x32xbf16>, vector<64x32xbf16>, vector<64x64xf32> -> vector<64x64xf32>
    %cst_31 = arith.constant dense<0xFF800000> : vector<64xf32>
    %49 = vector.multi_reduction <maximumf>, %48, %cst_31 [1] : vector<64x64xf32> to vector<64xf32>
    %50 = vector.shape_cast %49 : vector<64xf32> to vector<64x1xf32>
    %51 = vector.broadcast %50 : vector<64x1xf32> to vector<64x64xf32>
    %52 = arith.subf %48, %51 : vector<64x64xf32>
    %53 = math.exp %52 : vector<64x64xf32>
    %cst_32 = arith.constant dense<0.000000e+00> : vector<64xf32>
    %54 = vector.multi_reduction <add>, %53, %cst_32 [1] : vector<64x64xf32> to vector<64xf32>
    %55 = vector.shape_cast %54 : vector<64xf32> to vector<64x1xf32>
    %56 = tpu.reciprocal %55 {approx = true} : vector<64x1xf32> -> vector<64x1xf32>
    %57 = vector.broadcast %56 : vector<64x1xf32> to vector<64x64xf32>
    %58 = arith.mulf %53, %57 : vector<64x64xf32>
    %59 = arith.truncf %58 : vector<64x64xf32> to vector<64x64xbf16>
    %cst_33 = arith.constant dense<0.000000e+00> : vector<64x32xf32>
    %60 = tpu.matmul %59, %47, %cst_33 {dimension_numbers = #tpu.dot_dimension_numbers<[1], [0], [0], [1], [0, 0, 1, 1], [], []>} : vector<64x64xbf16>, vector<64x32xbf16>, vector<64x32xf32> -> vector<64x32xf32>
    %61 = arith.truncf %60 : vector<64x32xf32> to vector<64x32xbf16>
    %c0_34 = arith.constant 0 : index
    %c64_35 = arith.constant 64 : index
    %62 = vector.load %arg8[%c0_34, %c64_35] : memref<128x128xbf16, #tpu.memory_space<vmem>>, vector<64x32xbf16>
    tpu.vector_store %arg8[%c0_34, %c64_35], %61 {strides = array<i32>} : memref<128x128xbf16, #tpu.memory_space<vmem>>, vector<64x32xbf16>,
    %c0_36 = arith.constant 0 : index
    %c96 = arith.constant 96 : index
    %63 = vector.load %arg7[%c0_36, %c96] : memref<128x384xbf16, #tpu.memory_space<vmem>>, vector<64x32xbf16>
    %c0_37 = arith.constant 0 : index
    %c224 = arith.constant 224 : index
    %64 = vector.load %arg7[%c0_37, %c224] : memref<128x384xbf16, #tpu.memory_space<vmem>>, vector<64x32xbf16>
    %c0_38 = arith.constant 0 : index
    %c352 = arith.constant 352 : index
    %65 = vector.load %arg7[%c0_38, %c352] : memref<128x384xbf16, #tpu.memory_space<vmem>>, vector<64x32xbf16>
    %cst_39 = arith.constant dense<0.000000e+00> : vector<64x64xf32>
    %66 = tpu.matmul %63, %64, %cst_39 {dimension_numbers = #tpu.dot_dimension_numbers<[1], [1], [0], [0], [0, 0, 1, 0], [], []>} : vector<64x32xbf16>, vector<64x32xbf16>, vector<64x64xf32> -> vector<64x64xf32>
    %cst_40 = arith.constant dense<0xFF800000> : vector<64xf32>
    %67 = vector.multi_reduction <maximumf>, %66, %cst_40 [1] : vector<64x64xf32> to vector<64xf32>
    %68 = vector.shape_cast %67 : vector<64xf32> to vector<64x1xf32>
    %69 = vector.broadcast %68 : vector<64x1xf32> to vector<64x64xf32>
    %70 = arith.subf %66, %69 : vector<64x64xf32>
    %71 = math.exp %70 : vector<64x64xf32>
    %cst_41 = arith.constant dense<0.000000e+00> : vector<64xf32>
    %72 = vector.multi_reduction <add>, %71, %cst_41 [1] : vector<64x64xf32> to vector<64xf32>
    %73 = vector.shape_cast %72 : vector<64xf32> to vector<64x1xf32>
    %74 = tpu.reciprocal %73 {approx = true} : vector<64x1xf32> -> vector<64x1xf32>
    %75 = vector.broadcast %74 : vector<64x1xf32> to vector<64x64xf32>
    %76 = arith.mulf %71, %75 : vector<64x64xf32>
    %77 = arith.truncf %76 : vector<64x64xf32> to vector<64x64xbf16>
    %cst_42 = arith.constant dense<0.000000e+00> : vector<64x32xf32>
    %78 = tpu.matmul %77, %65, %cst_42 {dimension_numbers = #tpu.dot_dimension_numbers<[1], [0], [0], [1], [0, 0, 1, 1], [], []>} : vector<64x64xbf16>, vector<64x32xbf16>, vector<64x32xf32> -> vector<64x32xf32>
    %79 = arith.truncf %78 : vector<64x32xf32> to vector<64x32xbf16>
    %c0_43 = arith.constant 0 : index
    %c96_44 = arith.constant 96 : index
    %80 = vector.load %arg8[%c0_43, %c96_44] : memref<128x128xbf16, #tpu.memory_space<vmem>>, vector<64x32xbf16>
    tpu.vector_store %arg8[%c0_43, %c96_44], %79 {strides = array<i32>} : memref<128x128xbf16, #tpu.memory_space<vmem>>, vector<64x32xbf16>,
    %c64_45 = arith.constant 64 : index
    %c0_46 = arith.constant 0 : index
    %81 = vector.load %arg7[%c64_45, %c0_46] : memref<128x384xbf16, #tpu.memory_space<vmem>>, vector<64x32xbf16>
    %c64_47 = arith.constant 64 : index
    %c128_48 = arith.constant 128 : index
    %82 = vector.load %arg7[%c64_47, %c128_48] : memref<128x384xbf16, #tpu.memory_space<vmem>>, vector<64x32xbf16>
    %c64_49 = arith.constant 64 : index
    %c256_50 = arith.constant 256 : index
    %83 = vector.load %arg7[%c64_49, %c256_50] : memref<128x384xbf16, #tpu.memory_space<vmem>>, vector<64x32xbf16>
    %cst_51 = arith.constant dense<0.000000e+00> : vector<64x64xf32>
    %84 = tpu.matmul %81, %82, %cst_51 {dimension_numbers = #tpu.dot_dimension_numbers<[1], [1], [0], [0], [0, 0, 1, 0], [], []>} : vector<64x32xbf16>, vector<64x32xbf16>, vector<64x64xf32> -> vector<64x64xf32>
    %cst_52 = arith.constant dense<0xFF800000> : vector<64xf32>
    %85 = vector.multi_reduction <maximumf>, %84, %cst_52 [1] : vector<64x64xf32> to vector<64xf32>
    %86 = vector.shape_cast %85 : vector<64xf32> to vector<64x1xf32>
    %87 = vector.broadcast %86 : vector<64x1xf32> to vector<64x64xf32>
    %88 = arith.subf %84, %87 : vector<64x64xf32>
    %89 = math.exp %88 : vector<64x64xf32>
    %cst_53 = arith.constant dense<0.000000e+00> : vector<64xf32>
    %90 = vector.multi_reduction <add>, %89, %cst_53 [1] : vector<64x64xf32> to vector<64xf32>
    %91 = vector.shape_cast %90 : vector<64xf32> to vector<64x1xf32>
    %92 = tpu.reciprocal %91 {approx = true} : vector<64x1xf32> -> vector<64x1xf32>
    %93 = vector.broadcast %92 : vector<64x1xf32> to vector<64x64xf32>
    %94 = arith.mulf %89, %93 : vector<64x64xf32>
    %95 = arith.truncf %94 : vector<64x64xf32> to vector<64x64xbf16>
    %cst_54 = arith.constant dense<0.000000e+00> : vector<64x32xf32>
    %96 = tpu.matmul %95, %83, %cst_54 {dimension_numbers = #tpu.dot_dimension_numbers<[1], [0], [0], [1], [0, 0, 1, 1], [], []>} : vector<64x64xbf16>, vector<64x32xbf16>, vector<64x32xf32> -> vector<64x32xf32>
    %97 = arith.truncf %96 : vector<64x32xf32> to vector<64x32xbf16>
    %c64_55 = arith.constant 64 : index
    %c0_56 = arith.constant 0 : index
    %98 = vector.load %arg8[%c64_55, %c0_56] : memref<128x128xbf16, #tpu.memory_space<vmem>>, vector<64x32xbf16>
    tpu.vector_store %arg8[%c64_55, %c0_56], %97 {strides = array<i32>} : memref<128x128xbf16, #tpu.memory_space<vmem>>, vector<64x32xbf16>,
    %c64_57 = arith.constant 64 : index
    %c32_58 = arith.constant 32 : index
    %99 = vector.load %arg7[%c64_57, %c32_58] : memref<128x384xbf16, #tpu.memory_space<vmem>>, vector<64x32xbf16>
    %c64_59 = arith.constant 64 : index
    %c160_60 = arith.constant 160 : index
    %100 = vector.load %arg7[%c64_59, %c160_60] : memref<128x384xbf16, #tpu.memory_space<vmem>>, vector<64x32xbf16>
    %c64_61 = arith.constant 64 : index
    %c288_62 = arith.constant 288 : index
    %101 = vector.load %arg7[%c64_61, %c288_62] : memref<128x384xbf16, #tpu.memory_space<vmem>>, vector<64x32xbf16>
    %cst_63 = arith.constant dense<0.000000e+00> : vector<64x64xf32>
    %102 = tpu.matmul %99, %100, %cst_63 {dimension_numbers = #tpu.dot_dimension_numbers<[1], [1], [0], [0], [0, 0, 1, 0], [], []>} : vector<64x32xbf16>, vector<64x32xbf16>, vector<64x64xf32> -> vector<64x64xf32>
    %cst_64 = arith.constant dense<0xFF800000> : vector<64xf32>
    %103 = vector.multi_reduction <maximumf>, %102, %cst_64 [1] : vector<64x64xf32> to vector<64xf32>
    %104 = vector.shape_cast %103 : vector<64xf32> to vector<64x1xf32>
    %105 = vector.broadcast %104 : vector<64x1xf32> to vector<64x64xf32>
    %106 = arith.subf %102, %105 : vector<64x64xf32>
    %107 = math.exp %106 : vector<64x64xf32>
    %cst_65 = arith.constant dense<0.000000e+00> : vector<64xf32>
    %108 = vector.multi_reduction <add>, %107, %cst_65 [1] : vector<64x64xf32> to vector<64xf32>
    %109 = vector.shape_cast %108 : vector<64xf32> to vector<64x1xf32>
    %110 = tpu.reciprocal %109 {approx = true} : vector<64x1xf32> -> vector<64x1xf32>
    %111 = vector.broadcast %110 : vector<64x1xf32> to vector<64x64xf32>
    %112 = arith.mulf %107, %111 : vector<64x64xf32>
    %113 = arith.truncf %112 : vector<64x64xf32> to vector<64x64xbf16>
    %cst_66 = arith.constant dense<0.000000e+00> : vector<64x32xf32>
    %114 = tpu.matmul %113, %101, %cst_66 {dimension_numbers = #tpu.dot_dimension_numbers<[1], [0], [0], [1], [0, 0, 1, 1], [], []>} : vector<64x64xbf16>, vector<64x32xbf16>, vector<64x32xf32> -> vector<64x32xf32>
    %115 = arith.truncf %114 : vector<64x32xf32> to vector<64x32xbf16>
    %c64_67 = arith.constant 64 : index
    %c32_68 = arith.constant 32 : index
    %116 = vector.load %arg8[%c64_67, %c32_68] : memref<128x128xbf16, #tpu.memory_space<vmem>>, vector<64x32xbf16>
    tpu.vector_store %arg8[%c64_67, %c32_68], %115 {strides = array<i32>} : memref<128x128xbf16, #tpu.memory_space<vmem>>, vector<64x32xbf16>,
    %c64_69 = arith.constant 64 : index
    %c64_70 = arith.constant 64 : index
    %117 = vector.load %arg7[%c64_69, %c64_70] : memref<128x384xbf16, #tpu.memory_space<vmem>>, vector<64x32xbf16>
    %c64_71 = arith.constant 64 : index
    %c192_72 = arith.constant 192 : index
    %118 = vector.load %arg7[%c64_71, %c192_72] : memref<128x384xbf16, #tpu.memory_space<vmem>>, vector<64x32xbf16>
    %c64_73 = arith.constant 64 : index
    %c320_74 = arith.constant 320 : index
    %119 = vector.load %arg7[%c64_73, %c320_74] : memref<128x384xbf16, #tpu.memory_space<vmem>>, vector<64x32xbf16>
    %cst_75 = arith.constant dense<0.000000e+00> : vector<64x64xf32>
    %120 = tpu.matmul %117, %118, %cst_75 {dimension_numbers = #tpu.dot_dimension_numbers<[1], [1], [0], [0], [0, 0, 1, 0], [], []>} : vector<64x32xbf16>, vector<64x32xbf16>, vector<64x64xf32> -> vector<64x64xf32>
    %cst_76 = arith.constant dense<0xFF800000> : vector<64xf32>
    %121 = vector.multi_reduction <maximumf>, %120, %cst_76 [1] : vector<64x64xf32> to vector<64xf32>
    %122 = vector.shape_cast %121 : vector<64xf32> to vector<64x1xf32>
    %123 = vector.broadcast %122 : vector<64x1xf32> to vector<64x64xf32>
    %124 = arith.subf %120, %123 : vector<64x64xf32>
    %125 = math.exp %124 : vector<64x64xf32>
    %cst_77 = arith.constant dense<0.000000e+00> : vector<64xf32>
    %126 = vector.multi_reduction <add>, %125, %cst_77 [1] : vector<64x64xf32> to vector<64xf32>
    %127 = vector.shape_cast %126 : vector<64xf32> to vector<64x1xf32>
    %128 = tpu.reciprocal %127 {approx = true} : vector<64x1xf32> -> vector<64x1xf32>
    %129 = vector.broadcast %128 : vector<64x1xf32> to vector<64x64xf32>
    %130 = arith.mulf %125, %129 : vector<64x64xf32>
    %131 = arith.truncf %130 : vector<64x64xf32> to vector<64x64xbf16>
    %cst_78 = arith.constant dense<0.000000e+00> : vector<64x32xf32>
    %132 = tpu.matmul %131, %119, %cst_78 {dimension_numbers = #tpu.dot_dimension_numbers<[1], [0], [0], [1], [0, 0, 1, 1], [], []>} : vector<64x64xbf16>, vector<64x32xbf16>, vector<64x32xf32> -> vector<64x32xf32>
    %133 = arith.truncf %132 : vector<64x32xf32> to vector<64x32xbf16>
    %c64_79 = arith.constant 64 : index
    %c64_80 = arith.constant 64 : index
    %134 = vector.load %arg8[%c64_79, %c64_80] : memref<128x128xbf16, #tpu.memory_space<vmem>>, vector<64x32xbf16>
    tpu.vector_store %arg8[%c64_79, %c64_80], %133 {strides = array<i32>} : memref<128x128xbf16, #tpu.memory_space<vmem>>, vector<64x32xbf16>,
    %c64_81 = arith.constant 64 : index
    %c96_82 = arith.constant 96 : index
    %135 = vector.load %arg7[%c64_81, %c96_82] : memref<128x384xbf16, #tpu.memory_space<vmem>>, vector<64x32xbf16>
    %c64_83 = arith.constant 64 : index
    %c224_84 = arith.constant 224 : index
    %136 = vector.load %arg7[%c64_83, %c224_84] : memref<128x384xbf16, #tpu.memory_space<vmem>>, vector<64x32xbf16>
    %c64_85 = arith.constant 64 : index
    %c352_86 = arith.constant 352 : index
    %137 = vector.load %arg7[%c64_85, %c352_86] : memref<128x384xbf16, #tpu.memory_space<vmem>>, vector<64x32xbf16>
    %cst_87 = arith.constant dense<0.000000e+00> : vector<64x64xf32>
    %138 = tpu.matmul %135, %136, %cst_87 {dimension_numbers = #tpu.dot_dimension_numbers<[1], [1], [0], [0], [0, 0, 1, 0], [], []>} : vector<64x32xbf16>, vector<64x32xbf16>, vector<64x64xf32> -> vector<64x64xf32>
    %cst_88 = arith.constant dense<0xFF800000> : vector<64xf32>
    %139 = vector.multi_reduction <maximumf>, %138, %cst_88 [1] : vector<64x64xf32> to vector<64xf32>
    %140 = vector.shape_cast %139 : vector<64xf32> to vector<64x1xf32>
    %141 = vector.broadcast %140 : vector<64x1xf32> to vector<64x64xf32>
    %142 = arith.subf %138, %141 : vector<64x64xf32>
    %143 = math.exp %142 : vector<64x64xf32>
    %cst_89 = arith.constant dense<0.000000e+00> : vector<64xf32>
    %144 = vector.multi_reduction <add>, %143, %cst_89 [1] : vector<64x64xf32> to vector<64xf32>
    %145 = vector.shape_cast %144 : vector<64xf32> to vector<64x1xf32>
    %146 = tpu.reciprocal %145 {approx = true} : vector<64x1xf32> -> vector<64x1xf32>
    %147 = vector.broadcast %146 : vector<64x1xf32> to vector<64x64xf32>
    %148 = arith.mulf %143, %147 : vector<64x64xf32>
    %149 = arith.truncf %148 : vector<64x64xf32> to vector<64x64xbf16>
    %cst_90 = arith.constant dense<0.000000e+00> : vector<64x32xf32>
    %150 = tpu.matmul %149, %137, %cst_90 {dimension_numbers = #tpu.dot_dimension_numbers<[1], [0], [0], [1], [0, 0, 1, 1], [], []>} : vector<64x64xbf16>, vector<64x32xbf16>, vector<64x32xf32> -> vector<64x32xf32>
    %151 = arith.truncf %150 : vector<64x32xf32> to vector<64x32xbf16>
    %c64_91 = arith.constant 64 : index
    %c96_92 = arith.constant 96 : index
    %152 = vector.load %arg8[%c64_91, %c96_92] : memref<128x128xbf16, #tpu.memory_space<vmem>>, vector<64x32xbf16>
    tpu.vector_store %arg8[%c64_91, %c96_92], %151 {strides = array<i32>} : memref<128x128xbf16, #tpu.memory_space<vmem>>, vector<64x32xbf16>,
    %c0_93 = arith.constant 0 : index
    %c0_94 = arith.constant 0 : index
    %153 = vector.load %arg8[%c0_93, %c0_94] : memref<128x128xbf16, #tpu.memory_space<vmem>>, vector<128x128xbf16>
    %c0_95 = arith.constant 0 : index
    %c0_96 = arith.constant 0 : index
    %154 = vector.load %arg4[%c0_95, %c0_96] : memref<128x128xbf16, #tpu.memory_space<vmem>>, vector<128x128xbf16>
    %cst_97 = arith.constant dense<0.000000e+00> : vector<128x128xf32>
    %155 = tpu.matmul %153, %154, %cst_97 {dimension_numbers = #tpu.dot_dimension_numbers<[1], [0], [0], [1], [0, 0, 1, 1], [], []>} : vector<128x128xbf16>, vector<128x128xbf16>, vector<128x128xf32> -> vector<128x128xf32>
    %c0_98 = arith.constant 0 : index
    %c0_99 = arith.constant 0 : index
    %156 = vector.load %arg5[%c0_98, %c0_99] : memref<1x128xf32, #tpu.memory_space<vmem>>, vector<1x128xf32>
    %157 = vector.broadcast %156 : vector<1x128xf32> to vector<128x128xf32>
    %158 = arith.addf %155, %157 : vector<128x128xf32>
    %159 = vector.shape_cast %158 : vector<128x128xf32> to vector<2x64x128xf32>
    %c0_100 = arith.constant 0 : index
    %c0_101 = arith.constant 0 : index
    %c0_102 = arith.constant 0 : index
    %160 = vector.load %arg6[%c0_100, %c0_101, %c0_102] : memref<2x64x128xf32, #tpu.memory_space<vmem>>, vector<2x64x128xf32>
    tpu.vector_store %arg6[%c0_100, %c0_101, %c0_102], %159 {strides = array<i32>} : memref<2x64x128xf32, #tpu.memory_space<vmem>>, vector<2x64x128xf32>,
    return
  }
  func.func @transform_0(%arg0: i32) -> (i32, i32, i32) {
    %c0_i32 = arith.constant 0 : i32
    %c0_i32_0 = arith.constant 0 : i32
    %c0_i32_1 = arith.constant 0 : i32
    return %arg0, %c0_i32, %c0_i32_0 : i32, i32, i32
  }
  func.func @transform_1(%arg0: i32) -> (i32, i32) {
    %c0_i32 = arith.constant 0 : i32
    %c0_i32_0 = arith.constant 0 : i32
    %c0_i32_1 = arith.constant 0 : i32
    return %c0_i32, %c0_i32_0 : i32, i32
  }
  func.func @transform_2(%arg0: i32) -> (i32, i32) {
    %c0_i32 = arith.constant 0 : i32
    %c0_i32_0 = arith.constant 0 : i32
    %c0_i32_1 = arith.constant 0 : i32
    return %c0_i32, %c0_i32_0 : i32, i32
  }
  func.func @transform_3(%arg0: i32) -> (i32, i32) {
    %c0_i32 = arith.constant 0 : i32
    %c0_i32_0 = arith.constant 0 : i32
    %c0_i32_1 = arith.constant 0 : i32
    return %c0_i32, %c0_i32_0 : i32, i32
  }
  func.func @transform_4(%arg0: i32) -> (i32, i32) {
    %c0_i32 = arith.constant 0 : i32
    %c0_i32_0 = arith.constant 0 : i32
    %c0_i32_1 = arith.constant 0 : i32
    return %c0_i32, %c0_i32_0 : i32, i32
  }
  func.func @transform_5(%arg0: i32) -> (i32, i32, i32) {
    %c0_i32 = arith.constant 0 : i32
    %c0_i32_0 = arith.constant 0 : i32
    %c0_i32_1 = arith.constant 0 : i32
    return %arg0, %c0_i32, %c0_i32_0 : i32, i32, i32
  }
}

</mosaic_0001>

<llo_original>
// kernel: tpu_custom_call.1
$region0: #{tpu_custom_call.1}
  #allocation0 [shape = 'u32[]', space=smem, size = 0x4, offset = 0x4, fixed_abs, tag = 'smem constant byte address 0x4 - core index']
  #allocation1 [shape = 'u32[144,128]{1,0:T(1,128)}', space=vmem, size = 0x12000, scoped, tag = 'internal scratch']
  #allocation2 [shape = 'bf16[128,384]{1,0:T(8,128)(2,1)}', space=vmem, size = 0x18000, scoped, tag = 'scratch operand']
  #allocation3 [shape = 'bf16[128,128]{1,0:T(8,128)(2,1)}', space=vmem, size = 0x8000, scoped, tag = 'scratch operand']
  %s0 = inlined_call_operand.hbm [shape: bf16[4,64,128], index: 0, kind: input, shape index: {}]
  %s1 = inlined_call_operand.hbm [shape: bf16[128,384], index: 1, kind: input, shape index: {}]
  %s2 = inlined_call_operand.vmem [shape: f32[1,384], index: 2, kind: input, shape index: {}]
  %s3 = inlined_call_operand.hbm [shape: bf16[128,128], index: 3, kind: input, shape index: {}]
  %s4 = inlined_call_operand.vmem [shape: f32[1,128], index: 4, kind: input, shape index: {}]
  %s5 = inlined_call_operand.hbm [shape: f32[4,64,128], index: 5, kind: output, shape index: {}]
  %s6 = sld [smem:[#allocation0]]
  $region65: #{tpu_custom_call.1} parent=0
    _
  %s8 = ssub.s32 1, %s6
  %s9 = scalar_select 0, %s8, %s6
  $region1: #{tpu_custom_call.1} parent=0
    #allocation4 [shape = 'u8[65536]{0}', space=vmem, size = 0x10000, scoped, tag = 'input window, operand 0']
    #allocation5 [shape = 's32[2]{0}', space=sflag, size = 0x8, scoped, tag = 'scoped memory for tpu_custom_call.1']
    #allocation6 [shape = 's32[2]{0}', space=sflag, size = 0x8, scoped, tag = 'scoped memory for tpu_custom_call.1']
    #allocation7 [shape = 'u8[98304]{0}', space=vmem, size = 0x18000, scoped, tag = 'input window, operand 1, single buffered']
    #allocation8 [shape = 's32[1]{0}', space=sflag, size = 0x4, scoped, tag = 'scoped memory for tpu_custom_call.1']
    #allocation9 [shape = 'u8[32768]{0}', space=vmem, size = 0x8000, scoped, tag = 'input window, operand 3, single buffered']
    #allocation10 [shape = 'u8[131072]{0}', space=vmem, size = 0x20000, scoped, tag = 'output window, operand 0']
    %10 = vsyncpa [#allocation5], 0
    %s11 = scalar_lea.sflag [#allocation5], 1
    %12 = vsyncpa %s11, 0
    %13 = vsyncpa [#allocation8], 0
    %14 = vsyncpa [#allocation6], 0
    %s15 = scalar_lea.sflag [#allocation6], 1
    %16 = vsyncpa %s15, 0
    loop: start=0, step=1, limit=4
    $region2: #{tpu_custom_call.1} parent=1 // loop_pre_header
      _
    $region3: #{tpu_custom_call.1} parent=1 // loop_header
      %s18 = sphi 0, %s22
      %p19 = scmp.ge.s32.totalorder %s18, 4
      %s28 = sphi 0, %s30
      %s31 = sphi 0, %s28
      %s32 = sphi 0, %s31
      %s48 = sphi 0, %s32
      %s52 = sphi 0, %s52
      %s54 = sphi 0, %s52
      %s55 = sphi 0, %s54
      %s69 = sphi 0, %s55
      %s73 = sphi 0, %s73
      %s75 = sphi 0, %s73
      %s76 = sphi 0, %s75
      %s90 = sphi 0, %s76
      %s94 = sphi 0, %s94
      %s96 = sphi 0, %s94
      %s97 = sphi 0, %s96
      %s111 = sphi 0, %s97
      %s115 = sphi 0, %s115
      %s117 = sphi 0, %s115
      %s118 = sphi 0, %s117
      %s132 = sphi 0, %s118
      %s138 = sphi 0, %s140
      %s141 = sphi 0, %s138
      %s142 = sphi 0, %s141
      %s158 = sphi 0, %s142
    $region4: #{tpu_custom_call.1} parent=1 // loop_header_branch
      %21 = sbr.rel (%p19) target = $region8
    $region5: #{tpu_custom_call.1} parent=1 // loop_body
      %s23 = ssub.s32 %s18, 1
      %s24 = ssub.s32 %s18, 2
      %s25 = sadd.s32 %s18, 1
      %s26 = ssub.s32 %s18, %s25
      %p27 = scmp.eq.s32.totalorder %s26, 0
      %s29 = sadd.s32 %s28, 1
      %s30 = scalar_select %p27, %s28, %s29
      %p33 = pneg %p27
      %p34 = scmp.eq.s32.totalorder %s18, 1
      %p35 = por %p33, %p34
      %p36 = scmp.ne.s32.totalorder %s28, %s31
      %p37 = scmp.eq.s32.totalorder %s18, 0
      %p38 = por %p36, %p37
      %p39 = scmp.ne.s32.totalorder %s28, %s31
      %p40 = scmp.eq.s32.totalorder %s23, 1
      %p41 = por %p39, %p40
      %p42 = scmp.ne.s32.totalorder %s31, %s32
      %p43 = scmp.eq.s32.totalorder %s23, 0
      %p44 = por %p42, %p43
      %p45 = scmp.ne.s32.totalorder %s31, %s32
      %p46 = scmp.eq.s32.totalorder %s24, 1
      %p47 = por %p45, %p46
      %p49 = scmp.ne.s32.totalorder %s32, %s48
      %p50 = scmp.eq.s32.totalorder %s24, 0
      %p51 = por %p49, %p50
      %s53 = sadd.s32 %s52, 1
      %p56 = scmp.eq.s32.totalorder %s18, 1
      %p57 = scmp.ne.s32.totalorder %s52, %s54
      %p58 = scmp.eq.s32.totalorder %s18, 0
      %p59 = por %p57, %p58
      %p60 = scmp.ne.s32.totalorder %s52, %s54
      %p61 = scmp.eq.s32.totalorder %s23, 1
      %p62 = por %p60, %p61
      %p63 = scmp.ne.s32.totalorder %s54, %s55
      %p64 = scmp.eq.s32.totalorder %s23, 0
      %p65 = por %p63, %p64
      %p66 = scmp.ne.s32.totalorder %s54, %s55
      %p67 = scmp.eq.s32.totalorder %s24, 1
      %p68 = por %p66, %p67
      %p70 = scmp.ne.s32.totalorder %s55, %s69
      %p71 = scmp.eq.s32.totalorder %s24, 0
      %p72 = por %p70, %p71
      %s74 = sadd.s32 %s73, 1
      %p77 = scmp.eq.s32.totalorder %s18, 1
      %p78 = scmp.ne.s32.totalorder %s73, %s75
      %p79 = scmp.eq.s32.totalorder %s18, 0
      %p80 = por %p78, %p79
      %p81 = scmp.ne.s32.totalorder %s73, %s75
      %p82 = scmp.eq.s32.totalorder %s23, 1
      %p83 = por %p81, %p82
      %p84 = scmp.ne.s32.totalorder %s75, %s76
      %p85 = scmp.eq.s32.totalorder %s23, 0
      %p86 = por %p84, %p85
      %p87 = scmp.ne.s32.totalorder %s75, %s76
      %p88 = scmp.eq.s32.totalorder %s24, 1
      %p89 = por %p87, %p88
      %p91 = scmp.ne.s32.totalorder %s76, %s90
      %p92 = scmp.eq.s32.totalorder %s24, 0
      %p93 = por %p91, %p92
      %s95 = sadd.s32 %s94, 1
      %p98 = scmp.eq.s32.totalorder %s18, 1
      %p99 = scmp.ne.s32.totalorder %s94, %s96
      %p100 = scmp.eq.s32.totalorder %s18, 0
      %p101 = por %p99, %p100
      %p102 = scmp.ne.s32.totalorder %s94, %s96
      %p103 = scmp.eq.s32.totalorder %s23, 1
      %p104 = por %p102, %p103
      %p105 = scmp.ne.s32.totalorder %s96, %s97
      %p106 = scmp.eq.s32.totalorder %s23, 0
      %p107 = por %p105, %p106
      %p108 = scmp.ne.s32.totalorder %s96, %s97
      %p109 = scmp.eq.s32.totalorder %s24, 1
      %p110 = por %p108, %p109
      %p112 = scmp.ne.s32.totalorder %s97, %s111
      %p113 = scmp.eq.s32.totalorder %s24, 0
      %p114 = por %p112, %p113
      %s116 = sadd.s32 %s115, 1
      %p119 = scmp.eq.s32.totalorder %s18, 1
      %p120 = scmp.ne.s32.totalorder %s115, %s117
      %p121 = scmp.eq.s32.totalorder %s18, 0
      %p122 = por %p120, %p121
      %p123 = scmp.ne.s32.totalorder %s115, %s117
      %p124 = scmp.eq.s32.totalorder %s23, 1
      %p125 = por %p123, %p124
      %p126 = scmp.ne.s32.totalorder %s117, %s118
      %p127 = scmp.eq.s32.totalorder %s23, 0
      %p128 = por %p126, %p127
      %p129 = scmp.ne.s32.totalorder %s117, %s118
      %p130 = scmp.eq.s32.totalorder %s24, 1
      %p131 = por %p129, %p130
      %p133 = scmp.ne.s32.totalorder %s118, %s132
      %p134 = scmp.eq.s32.totalorder %s24, 0
      %p135 = por %p133, %p134
      %s136 = ssub.s32 %s18, %s25
      %p137 = scmp.eq.s32.totalorder %s136, 0
      %s139 = sadd.s32 %s138, 1
      %s140 = scalar_select %p137, %s138, %s139
      %p143 = pneg %p137
      %p144 = scmp.eq.s32.totalorder %s18, 1
      %p145 = por %p143, %p144
      %p146 = scmp.ne.s32.totalorder %s138, %s141
      %p147 = scmp.eq.s32.totalorder %s18, 0
      %p148 = por %p146, %p147
      %p149 = scmp.ne.s32.totalorder %s138, %s141
      %p150 = scmp.eq.s32.totalorder %s23, 1
      %p151 = por %p149, %p150
      %p152 = scmp.ne.s32.totalorder %s141, %s142
      %p153 = scmp.eq.s32.totalorder %s23, 0
      %p154 = por %p152, %p153
      %p155 = scmp.ne.s32.totalorder %s141, %s142
      %p156 = scmp.eq.s32.totalorder %s24, 1
      %p157 = por %p155, %p156
      %p159 = scmp.ne.s32.totalorder %s142, %s158
      %p160 = scmp.eq.s32.totalorder %s24, 0
      %p161 = por %p159, %p160
      %p162 = scmp.le.s32.totalorder 1, %s18
      %p163 = scmp.lt.s32.totalorder %s18, 3
      %p164 = pnand %p162, %p163
      %p165 = pneg %p164
      // Predicated region
      $region9: #{tpu_custom_call.1} parent=5 // pred_check
        _
      $region10: #{tpu_custom_call.1} parent=5 // pred_check_branch
        %167 = sbr.rel (%p164) target = $region12
      $region11: #{tpu_custom_call.1} parent=5 // pred_region
        %s168 = ssub.s32 %s18, 1
        // Predicated region
        $region13: #{tpu_custom_call.1} parent=11 // pred_check
          %p169 = pneg %p65
        $region14: #{tpu_custom_call.1} parent=11 // pred_check_branch
          %171 = sbr.rel (%p169) target = $region16
        $region15: #{tpu_custom_call.1} parent=11 // pred_region
          %s173 = ssub.s32 3072, 3072
          %174 = vsyncadd [#allocation8], %s173
          %s175 = sshll.u32 [#allocation7], 4
          %s176 = int_to_ptr.vmem [resolvable:$true] %s175
          %181 = dma.hbm_to_vmem [thread:$0]  %s1, 3072, %s176, [#allocation8], 192, 192, 12
        $region16: #{tpu_custom_call.1} parent=11 // pred_fallthru
          _
        // Predicated region
        $region17: #{tpu_custom_call.1} parent=11 // pred_check
          %p182 = pneg %p86
        $region18: #{tpu_custom_call.1} parent=11 // pred_check_branch
          %184 = sbr.rel (%p182) target = $region20
        $region19: #{tpu_custom_call.1} parent=11 // pred_region
          _
        $region20: #{tpu_custom_call.1} parent=11 // pred_fallthru
          _
        // Predicated region
        $region21: #{tpu_custom_call.1} parent=11 // pred_check
          %p185 = pneg %p107
        $region22: #{tpu_custom_call.1} parent=11 // pred_check_branch
          %187 = sbr.rel (%p185) target = $region24
        $region23: #{tpu_custom_call.1} parent=11 // pred_region
          %s189 = ssub.s32 1024, 1024
          %190 = vsyncadd [#allocation8], %s189
          %s191 = sshll.u32 [#allocation9], 4
          %s192 = int_to_ptr.vmem [resolvable:$true] %s191
          %197 = dma.hbm_to_vmem [thread:$0]  %s3, 1024, %s192, [#allocation8], 64, 64, 4
        $region24: #{tpu_custom_call.1} parent=11 // pred_fallthru
          _
        // Predicated region
        $region25: #{tpu_custom_call.1} parent=11 // pred_check
          %p198 = pneg %p128
        $region26: #{tpu_custom_call.1} parent=11 // pred_check_branch
          %200 = sbr.rel (%p198) target = $region28
        $region27: #{tpu_custom_call.1} parent=11 // pred_region
          _
        $region28: #{tpu_custom_call.1} parent=11 // pred_fallthru
          _
      $region12: #{tpu_custom_call.1} parent=5 // pred_fallthru
        _
      %p201 = scmp.lt.s32.totalorder %s18, 2
      // Predicated region
      $region29: #{tpu_custom_call.1} parent=5 // pred_check
        %p202 = pneg %p201
      $region30: #{tpu_custom_call.1} parent=5 // pred_check_branch
        %204 = sbr.rel (%p202) target = $region32
      $region31: #{tpu_custom_call.1} parent=5 // pred_region
        // Predicated region
        $region33: #{tpu_custom_call.1} parent=31 // pred_check
          %p205 = pneg %p38
        $region34: #{tpu_custom_call.1} parent=31 // pred_check_branch
          %207 = sbr.rel (%p205) target = $region36
        $region35: #{tpu_custom_call.1} parent=31 // pred_region
          %s208 = sand.u32 %s28, 1
          %s209 = scalar_lea.sflag [#allocation5], %s208
          %s210 = sand.u32 %s28, 1
          %s211 = smul.addr %s210, 64
          %s212 = scalar_lea.vmem [#allocation4], %s211
          %s213 = smul.u32 2, %s18
          %s215 = ssub.s32 1024, 1024
          %216 = vsyncadd %s209, %s215
          %s217 = smul.addr %s213, 8
          %s218 = smul.addr %s217, 64
          %s219 = scalar_lea.hbm %s0, %s218
          %s220 = sshll.u32 %s212, 4
          %s221 = int_to_ptr.vmem [resolvable:$true] %s220
          %226 = dma.hbm_to_vmem [thread:$0]  %s219, 1024, %s221, %s209, 64, 64, 4
        $region36: #{tpu_custom_call.1} parent=31 // pred_fallthru
          _
      $region32: #{tpu_custom_call.1} parent=5 // pred_fallthru
        _
      %p227 = scmp.le.s32.totalorder 1, %s18
      %p228 = scmp.lt.s32.totalorder %s18, 3
      %p229 = pnand %p227, %p228
      %p230 = pneg %p229
      // Predicated region
      $region37: #{tpu_custom_call.1} parent=5 // pred_check
        _
      $region38: #{tpu_custom_call.1} parent=5 // pred_check_branch
        %232 = sbr.rel (%p229) target = $region40
      $region39: #{tpu_custom_call.1} parent=5 // pred_region
        %s233 = ssub.s32 %s18, 1
        %s234 = sand.u32 %s31, 1
        %s235 = scalar_lea.sflag [#allocation5], %s234
        %s236 = sand.u32 %s31, 1
        %s237 = smul.addr %s236, 64
        %s238 = scalar_lea.vmem [#allocation4], %s237
        // Predicated region
        $region41: #{tpu_custom_call.1} parent=39 // pred_check
          %p239 = pneg %p44
        $region42: #{tpu_custom_call.1} parent=39 // pred_check_branch
          %241 = sbr.rel (%p239) target = $region44
        $region43: #{tpu_custom_call.1} parent=39 // pred_region
          %242 = dma.done %s235, 1024
        $region44: #{tpu_custom_call.1} parent=39 // pred_fallthru
          _
        // Predicated region
        $region45: #{tpu_custom_call.1} parent=39 // pred_check
          %p243 = pneg %p65
        $region46: #{tpu_custom_call.1} parent=39 // pred_check_branch
          %245 = sbr.rel (%p243) target = $region48
        $region47: #{tpu_custom_call.1} parent=39 // pred_region
          %246 = dma.done [#allocation8], 3072
        $region48: #{tpu_custom_call.1} parent=39 // pred_fallthru
          _
        // Predicated region
        $region49: #{tpu_custom_call.1} parent=39 // pred_check
          %p247 = pneg %p107
        $region50: #{tpu_custom_call.1} parent=39 // pred_check_branch
          %249 = sbr.rel (%p247) target = $region52
        $region51: #{tpu_custom_call.1} parent=39 // pred_region
          %250 = dma.done [#allocation8], 1024
        $region52: #{tpu_custom_call.1} parent=39 // pred_fallthru
          _
        %s251 = sand.u32 %s31, 1
        %s252 = scalar_lea.sflag [#allocation5], %s251
        %s253 = sand.u32 %s31, 1
        %s254 = smul.addr %s253, 64
        %s255 = scalar_lea.vmem [#allocation4], %s254
        %p256 = pneg %p44
        %p257 = pneg %p41
        %p258 = pneg %p65
        %p259 = pneg %p62
        %p260 = pneg %p86
        %p261 = pneg %p83
        %p262 = pneg %p107
        %p263 = pneg %p104
        %p264 = pneg %p128
        %p265 = pneg %p125
        %p266 = pneg %p154
        %p267 = pneg %p151
        %s268 = sand.u32 %s141, 1
        %s269 = scalar_lea.sflag [#allocation6], %s268
        %s270 = sand.u32 %s141, 1
        %s271 = smul.addr %s270, 128
        %s272 = scalar_lea.vmem [#allocation10], %s271
        %s273 = smul.u32 2, %s23
        %s274 = smul.u32 2, %s23
        %v276 = vld [vmem:[%s238] sm:$0xf]
        %v277 = vld [vmem:[%s238 + $0x4] sm:$0xf]
        %v278 = vld [vmem:[%s238 + $0x8] sm:$0xf]
        %v279 = vld [vmem:[%s238 + $0xc] sm:$0xf]
        %v280 = vld [vmem:[%s238 + $0x10] sm:$0xf]
        %v281 = vld [vmem:[%s238 + $0x14] sm:$0xf]
        %v282 = vld [vmem:[%s238 + $0x18] sm:$0xf]
        %v283 = vld [vmem:[%s238 + $0x1c] sm:$0xf]
        %v284 = vld [vmem:[%s238 + $0x20] sm:$0xf]
        %v285 = vld [vmem:[%s238 + $0x24] sm:$0xf]
        %v286 = vld [vmem:[%s238 + $0x28] sm:$0xf]
        %v287 = vld [vmem:[%s238 + $0x2c] sm:$0xf]
        %v288 = vld [vmem:[%s238 + $0x30] sm:$0xf]
        %v289 = vld [vmem:[%s238 + $0x34] sm:$0xf]
        %v290 = vld [vmem:[%s238 + $0x38] sm:$0xf]
        %v291 = vld [vmem:[%s238 + $0x3c] sm:$0xf]
        %v292 = vld [vmem:[#allocation7] sm:$0xff]
        %v293 = vld [vmem:[#allocation7 + $0x8] sm:$0xf]
        %v294 = vld [vmem:[#allocation7 + $0xc] sm:$0xff]
        %v295 = vld [vmem:[#allocation7 + $0x14] sm:$0xf]
        %v296 = vld [vmem:[#allocation7 + $0x18] sm:$0xff]
        %v297 = vld [vmem:[#allocation7 + $0x20] sm:$0xf]
        %v298 = vld [vmem:[#allocation7 + $0x24] sm:$0xff]
        %v299 = vld [vmem:[#allocation7 + $0x2c] sm:$0xf]
        %v300 = vld [vmem:[#allocation7 + $0x30] sm:$0xff]
        %v301 = vld [vmem:[#allocation7 + $0x38] sm:$0xf]
        %v302 = vld [vmem:[#allocation7 + $0x3c] sm:$0xff]
        %v303 = vld [vmem:[#allocation7 + $0x44] sm:$0xf]
        %v304 = vld [vmem:[#allocation7 + $0x48] sm:$0xff]
        %v305 = vld [vmem:[#allocation7 + $0x50] sm:$0xf]
        %v306 = vld [vmem:[#allocation7 + $0x54] sm:$0xff]
        %v307 = vld [vmem:[#allocation7 + $0x5c] sm:$0xf]
        %v308 = vld [vmem:[#allocation7 + $0x60] sm:$0xff]
        %v309 = vld [vmem:[#allocation7 + $0x68] sm:$0xf]
        %v310 = vld [vmem:[#allocation7 + $0x6c] sm:$0xff]
        %v311 = vld [vmem:[#allocation7 + $0x74] sm:$0xf]
        %v312 = vld [vmem:[#allocation7 + $0x78] sm:$0xff]
        %v313 = vld [vmem:[#allocation7 + $0x80] sm:$0xf]
        %v314 = vld [vmem:[#allocation7 + $0x84] sm:$0xff]
        %v315 = vld [vmem:[#allocation7 + $0x8c] sm:$0xf]
        %v316 = vld [vmem:[#allocation7 + $0x90] sm:$0xff]
        %v317 = vld [vmem:[#allocation7 + $0x98] sm:$0xf]
        %v318 = vld [vmem:[#allocation7 + $0x9c] sm:$0xff]
        %v319 = vld [vmem:[#allocation7 + $0xa4] sm:$0xf]
        %v320 = vld [vmem:[#allocation7 + $0xa8] sm:$0xff]
        %v321 = vld [vmem:[#allocation7 + $0xb0] sm:$0xf]
        %v322 = vld [vmem:[#allocation7 + $0xb4] sm:$0xff]
        %v323 = vld [vmem:[#allocation7 + $0xbc] sm:$0xf]
        %v324 = vld [vmem:[%s2] sm:$0x7]
        %v326 = vlaneseq
        %v327 = vshrl.u32 %v326, 7
        %v328 = vsub.s32 0, %v327
        %v329 = vrot.slane %v324, %v328
        %v330 = vlaneseq
        %v331 = vshrl.u32 %v330, 7
        %v332 = vsub.s32 1, %v331
        %v333 = vrot.slane %v324, %v332
        %v334 = vlaneseq
        %v335 = vshrl.u32 %v334, 7
        %v336 = vsub.s32 2, %v335
        %v337 = vrot.slane %v324, %v336
        %v357 = vunpack.c.l.b16 %v276
        %v358 = vunpack.c.l.b16 %v277
        %v359 = vunpack.c.l.b16 %v278
        %v360 = vunpack.c.l.b16 %v279
        %v361 = vunpack.c.l.b16 %v280
        %v362 = vunpack.c.l.b16 %v281
        %v363 = vunpack.c.l.b16 %v282
        %v364 = vunpack.c.l.b16 %v283
        %v365 = vunpack.c.l.b16 %v284
        %v366 = vunpack.c.l.b16 %v285
        %v367 = vunpack.c.l.b16 %v286
        %v368 = vunpack.c.l.b16 %v287
        %v369 = vunpack.c.l.b16 %v288
        %v370 = vunpack.c.l.b16 %v289
        %v371 = vunpack.c.l.b16 %v290
        %v372 = vunpack.c.l.b16 %v291
        %v373 = vpack.c.b16 %v358, %v357
        %v374 = vpack.c.b16 %v360, %v359
        %v375 = vpack.c.b16 %v362, %v361
        %v376 = vpack.c.b16 %v364, %v363
        %v377 = vpack.c.b16 %v366, %v365
        %v378 = vpack.c.b16 %v368, %v367
        %v379 = vpack.c.b16 %v370, %v369
        %v380 = vpack.c.b16 %v372, %v371
        %v421 = vunpack.c.l.b16 %v292
        %v422 = vunpack.c.h.b16 %v292
        %v423 = vunpack.c.l.b16 %v293
        %v424 = vunpack.c.l.b16 %v294
        %v425 = vunpack.c.h.b16 %v294
        %v426 = vunpack.c.l.b16 %v295
        %v427 = vunpack.c.l.b16 %v296
        %v428 = vunpack.c.h.b16 %v296
        %v429 = vunpack.c.l.b16 %v297
        %v430 = vunpack.c.l.b16 %v298
        %v431 = vunpack.c.h.b16 %v298
        %v432 = vunpack.c.l.b16 %v299
        %v433 = vunpack.c.l.b16 %v300
        %v434 = vunpack.c.h.b16 %v300
        %v435 = vunpack.c.l.b16 %v301
        %v436 = vunpack.c.l.b16 %v302
        %v437 = vunpack.c.h.b16 %v302
        %v438 = vunpack.c.l.b16 %v303
        %v439 = vunpack.c.l.b16 %v304
        %v440 = vunpack.c.h.b16 %v304
        %v441 = vunpack.c.l.b16 %v305
        %v442 = vunpack.c.l.b16 %v306
        %v443 = vunpack.c.h.b16 %v306
        %v444 = vunpack.c.l.b16 %v307
        %v445 = vunpack.c.l.b16 %v308
        %v446 = vunpack.c.h.b16 %v308
        %v447 = vunpack.c.l.b16 %v309
        %v448 = vunpack.c.l.b16 %v310
        %v449 = vunpack.c.h.b16 %v310
        %v450 = vunpack.c.l.b16 %v311
        %v451 = vunpack.c.l.b16 %v312
        %v452 = vunpack.c.h.b16 %v312
        %v453 = vunpack.c.l.b16 %v313
        %v454 = vunpack.c.l.b16 %v314
        %v455 = vunpack.c.h.b16 %v314
        %v456 = vunpack.c.l.b16 %v315
        %v457 = vunpack.c.l.b16 %v316
        %v458 = vunpack.c.h.b16 %v316
        %v459 = vunpack.c.l.b16 %v317
        %v460 = vunpack.c.l.b16 %v318
        %v461 = vunpack.c.h.b16 %v318
        %v462 = vunpack.c.l.b16 %v319
        %v463 = vunpack.c.l.b16 %v320
        %v464 = vunpack.c.h.b16 %v320
        %v465 = vunpack.c.l.b16 %v321
        %v466 = vunpack.c.l.b16 %v322
        %v467 = vunpack.c.h.b16 %v322
        %v468 = vunpack.c.l.b16 %v323
        %v469 = vpack.c.b16 %v424, %v421
        %v470 = vpack.c.b16 %v425, %v422
        %v471 = vpack.c.b16 %v426, %v423
        %v472 = vpack.c.b16 %v430, %v427
        %v473 = vpack.c.b16 %v431, %v428
        %v474 = vpack.c.b16 %v432, %v429
        %v475 = vpack.c.b16 %v436, %v433
        %v476 = vpack.c.b16 %v437, %v434
        %v477 = vpack.c.b16 %v438, %v435
        %v478 = vpack.c.b16 %v442, %v439
        %v479 = vpack.c.b16 %v443, %v440
        %v480 = vpack.c.b16 %v444, %v441
        %v481 = vpack.c.b16 %v448, %v445
        %v482 = vpack.c.b16 %v449, %v446
        %v483 = vpack.c.b16 %v450, %v447
        %v484 = vpack.c.b16 %v454, %v451
        %v485 = vpack.c.b16 %v455, %v452
        %v486 = vpack.c.b16 %v456, %v453
        %v487 = vpack.c.b16 %v460, %v457
        %v488 = vpack.c.b16 %v461, %v458
        %v489 = vpack.c.b16 %v462, %v459
        %v490 = vpack.c.b16 %v466, %v463
        %v491 = vpack.c.b16 %v467, %v464
        %v492 = vpack.c.b16 %v468, %v465
        %517 = vmatprep.subr.bf16.mxu0 %v491
        %518 = vmatpush1.bf16.msra.mxu0 %v490
        %519 = vmatprep.subr.bf16.mxu0 %v488
        %520 = vmatpush1.bf16.msra.mxu0 %v487
        %521 = vmatprep.subr.bf16.mxu0 %v485
        %522 = vmatpush1.bf16.msra.mxu0 %v484
        %523 = vmatprep.subr.bf16.mxu0 %v482
        %524 = vmatpush1.bf16.msra.mxu0 %v481
        %525 = vmatprep.subr.bf16.mxu0 %v479
        %526 = vmatpush1.bf16.msra.mxu0 %v478
        %527 = vmatprep.subr.bf16.mxu0 %v476
        %528 = vmatpush1.bf16.msra.mxu0 %v475
        %529 = vmatprep.subr.bf16.mxu0 %v473
        %530 = vmatpush1.bf16.msra.mxu0 %v472
        %531 = vmatprep.subr.bf16.mxu0 %v470
        %532 = vmatpush1.bf16.msra.mxu0 %v469
        %533 = vmatprep.subr.bf16.mxu0 0
        %534 = vmatpush2.bf16.msra.mxu0 0
        %535 = vmatprep.subr.bf16.mxu0 0
        %536 = vmatpush2.bf16.msra.mxu0 0
        %537 = vmatprep.subr.bf16.mxu0 0
        %538 = vmatpush2.bf16.msra.mxu0 0
        %539 = vmatprep.subr.bf16.mxu0 0
        %540 = vmatpush2.bf16.msra.mxu0 0
        %541 = vmatprep.subr.bf16.mxu0 0
        %542 = vmatpush2.bf16.msra.mxu0 0
        %543 = vmatprep.subr.bf16.mxu0 0
        %544 = vmatpush2.bf16.msra.mxu0 0
        %545 = vmatprep.subr.bf16.mxu0 0
        %546 = vmatpush2.bf16.msra.mxu0 0
        %547 = vmatprep.subr.bf16.mxu0 0
        %548 = vmatpush2.bf16.msra.mxu0 0
        %549 = vmatprep.mubr.bf16.mxu0 0
        %550 = vmatmul.mubr.bf16.gmra.mxu0 %v373
        %v551 = vpop.f32.mrf.mxu0
        %v552 = vadd.f32 %v329, %v551
        %v553 = vpop.f32.mrf.mxu0
        %v554 = vadd.f32 %v333, %v553
        %v555 = vpop.f32.mrf.mxu0
        %v556 = vadd.f32 %v329, %v555
        %v557 = vpop.f32.mrf.mxu0
        %v558 = vadd.f32 %v333, %v557
        %559 = vmatprep.mubr.bf16.mxu0 0
        %560 = vmatmul.mubr.bf16.gmra.mxu0 %v374
        %v561 = vpop.f32.mrf.mxu0
        %v562 = vadd.f32 %v329, %v561
        %v563 = vpop.f32.mrf.mxu0
        %v564 = vadd.f32 %v333, %v563
        %v565 = vpop.f32.mrf.mxu0
        %v566 = vadd.f32 %v329, %v565
        %v567 = vpop.f32.mrf.mxu0
        %v568 = vadd.f32 %v333, %v567
        %569 = vmatprep.mubr.bf16.mxu0 0
        %570 = vmatmul.mubr.bf16.gmra.mxu0 %v375
        %v571 = vpop.f32.mrf.mxu0
        %v572 = vadd.f32 %v329, %v571
        %v573 = vpop.f32.mrf.mxu0
        %v574 = vadd.f32 %v333, %v573
        %v575 = vpop.f32.mrf.mxu0
        %v576 = vadd.f32 %v329, %v575
        %v577 = vpop.f32.mrf.mxu0
        %v578 = vadd.f32 %v333, %v577
        %579 = vmatprep.mubr.bf16.mxu0 0
        %580 = vmatmul.mubr.bf16.gmra.mxu0 %v376
        %v581 = vpop.f32.mrf.mxu0
        %v582 = vadd.f32 %v329, %v581
        %v583 = vpop.f32.mrf.mxu0
        %v584 = vadd.f32 %v333, %v583
        %v585 = vpop.f32.mrf.mxu0
        %v586 = vadd.f32 %v329, %v585
        %v587 = vpop.f32.mrf.mxu0
        %v588 = vadd.f32 %v333, %v587
        %589 = vmatprep.mubr.bf16.mxu0 0
        %590 = vmatmul.mubr.bf16.gmra.mxu0 %v377
        %v591 = vpop.f32.mrf.mxu0
        %v592 = vadd.f32 %v329, %v591
        %v593 = vpop.f32.mrf.mxu0
        %v594 = vadd.f32 %v333, %v593
        %v595 = vpop.f32.mrf.mxu0
        %v596 = vadd.f32 %v329, %v595
        %v597 = vpop.f32.mrf.mxu0
        %v598 = vadd.f32 %v333, %v597
        %599 = vmatprep.mubr.bf16.mxu0 0
        %600 = vmatmul.mubr.bf16.gmra.mxu0 %v378
        %v601 = vpop.f32.mrf.mxu0
        %v602 = vadd.f32 %v329, %v601
        %v603 = vpop.f32.mrf.mxu0
        %v604 = vadd.f32 %v333, %v603
        %v605 = vpop.f32.mrf.mxu0
        %v606 = vadd.f32 %v329, %v605
        %v607 = vpop.f32.mrf.mxu0
        %v608 = vadd.f32 %v333, %v607
        %609 = vmatprep.mubr.bf16.mxu0 0
        %610 = vmatmul.mubr.bf16.gmra.mxu0 %v379
        %v611 = vpop.f32.mrf.mxu0
        %v612 = vadd.f32 %v329, %v611
        %v613 = vpop.f32.mrf.mxu0
        %v614 = vadd.f32 %v333, %v613
        %v615 = vpop.f32.mrf.mxu0
        %v616 = vadd.f32 %v329, %v615
        %v617 = vpop.f32.mrf.mxu0
        %v618 = vadd.f32 %v333, %v617
        %619 = vmatprep.mubr.bf16.mxu0 0
        %620 = vmatmul.mubr.bf16.gmra.mxu0 %v380
        %v621 = vpop.f32.mrf.mxu0
        %v622 = vadd.f32 %v329, %v621
        %v623 = vpop.f32.mrf.mxu0
        %v624 = vadd.f32 %v333, %v623
        %v625 = vpop.f32.mrf.mxu0
        %v626 = vadd.f32 %v329, %v625
        %v627 = vpop.f32.mrf.mxu0
        %v628 = vadd.f32 %v333, %v627
        %629 = vdwg.mxu0
        %630 = vmatprep.subr.bf16.mxu0 0
        %631 = vmatpush1.bf16.msra.mxu0 %v492
        %632 = vmatprep.subr.bf16.mxu0 0
        %633 = vmatpush1.bf16.msra.mxu0 %v489
        %634 = vmatprep.subr.bf16.mxu0 0
        %635 = vmatpush1.bf16.msra.mxu0 %v486
        %636 = vmatprep.subr.bf16.mxu0 0
        %637 = vmatpush1.bf16.msra.mxu0 %v483
        %638 = vmatprep.subr.bf16.mxu0 0
        %639 = vmatpush1.bf16.msra.mxu0 %v480
        %640 = vmatprep.subr.bf16.mxu0 0
        %641 = vmatpush1.bf16.msra.mxu0 %v477
        %642 = vmatprep.subr.bf16.mxu0 0
        %643 = vmatpush1.bf16.msra.mxu0 %v474
        %644 = vmatprep.subr.bf16.mxu0 0
        %645 = vmatpush1.bf16.msra.mxu0 %v471
        %646 = vmatprep.subr.bf16.mxu0 0
        %647 = vmatpush2.bf16.msra.mxu0 0
        %648 = vmatprep.subr.bf16.mxu0 0
        %649 = vmatpush2.bf16.msra.mxu0 0
        %650 = vmatprep.subr.bf16.mxu0 0
        %651 = vmatpush2.bf16.msra.mxu0 0
        %652 = vmatprep.subr.bf16.mxu0 0
        %653 = vmatpush2.bf16.msra.mxu0 0
        %654 = vmatprep.subr.bf16.mxu0 0
        %655 = vmatpush2.bf16.msra.mxu0 0
        %656 = vmatprep.subr.bf16.mxu0 0
        %657 = vmatpush2.bf16.msra.mxu0 0
        %658 = vmatprep.subr.bf16.mxu0 0
        %659 = vmatpush2.bf16.msra.mxu0 0
        %660 = vmatprep.subr.bf16.mxu0 0
        %661 = vmatpush2.bf16.msra.mxu0 0
        %662 = vmatprep.mubr.bf16.mxu0 0
        %663 = vmatmul.mubr.bf16.gmra.mxu0 %v373
        %v664 = vpop.f32.mrf.mxu0
        %v665 = vadd.f32 %v337, %v664
        %v666 = vpop.f32.mrf.mxu0
        %v667 = vpop.f32.mrf.mxu0
        %v668 = vadd.f32 %v337, %v667
        %v669 = vpop.f32.mrf.mxu0
        %670 = vmatprep.mubr.bf16.mxu0 0
        %671 = vmatmul.mubr.bf16.gmra.mxu0 %v374
        %v672 = vpop.f32.mrf.mxu0
        %v673 = vadd.f32 %v337, %v672
        %v674 = vpop.f32.mrf.mxu0
        %v675 = vpop.f32.mrf.mxu0
        %v676 = vadd.f32 %v337, %v675
        %v677 = vpop.f32.mrf.mxu0
        %678 = vmatprep.mubr.bf16.mxu0 0
        %679 = vmatmul.mubr.bf16.gmra.mxu0 %v375
        %v680 = vpop.f32.mrf.mxu0
        %v681 = vadd.f32 %v337, %v680
        %v682 = vpop.f32.mrf.mxu0
        %v683 = vpop.f32.mrf.mxu0
        %v684 = vadd.f32 %v337, %v683
        %v685 = vpop.f32.mrf.mxu0
        %686 = vmatprep.mubr.bf16.mxu0 0
        %687 = vmatmul.mubr.bf16.gmra.mxu0 %v376
        %v688 = vpop.f32.mrf.mxu0
        %v689 = vadd.f32 %v337, %v688
        %v690 = vpop.f32.mrf.mxu0
        %v691 = vpop.f32.mrf.mxu0
        %v692 = vadd.f32 %v337, %v691
        %v693 = vpop.f32.mrf.mxu0
        %694 = vmatprep.mubr.bf16.mxu0 0
        %695 = vmatmul.mubr.bf16.gmra.mxu0 %v377
        %v696 = vpop.f32.mrf.mxu0
        %v697 = vadd.f32 %v337, %v696
        %v698 = vpop.f32.mrf.mxu0
        %v699 = vpop.f32.mrf.mxu0
        %v700 = vadd.f32 %v337, %v699
        %v701 = vpop.f32.mrf.mxu0
        %702 = vmatprep.mubr.bf16.mxu0 0
        %703 = vmatmul.mubr.bf16.gmra.mxu0 %v378
        %v704 = vpop.f32.mrf.mxu0
        %v705 = vadd.f32 %v337, %v704
        %v706 = vpop.f32.mrf.mxu0
        %v707 = vpop.f32.mrf.mxu0
        %v708 = vadd.f32 %v337, %v707
        %v709 = vpop.f32.mrf.mxu0
        %710 = vmatprep.mubr.bf16.mxu0 0
        %711 = vmatmul.mubr.bf16.gmra.mxu0 %v379
        %v712 = vpop.f32.mrf.mxu0
        %v713 = vadd.f32 %v337, %v712
        %v714 = vpop.f32.mrf.mxu0
        %v715 = vpop.f32.mrf.mxu0
        %v716 = vadd.f32 %v337, %v715
        %v717 = vpop.f32.mrf.mxu0
        %718 = vmatprep.mubr.bf16.mxu0 0
        %719 = vmatmul.mubr.bf16.gmra.mxu0 %v380
        %v720 = vpop.f32.mrf.mxu0
        %v721 = vadd.f32 %v337, %v720
        %v722 = vpop.f32.mrf.mxu0
        %v723 = vpop.f32.mrf.mxu0
        %v724 = vadd.f32 %v337, %v723
        %v725 = vpop.f32.mrf.mxu0
        %726 = vdwg.mxu0
        %v727 = vpack.c.bf16 %v556, %v552
        %v728 = vpack.c.bf16 %v558, %v554
        %v729 = vpack.c.bf16 %v668, %v665
        %v730 = vpack.c.bf16 %v566, %v562
        %v731 = vpack.c.bf16 %v568, %v564
        %v732 = vpack.c.bf16 %v676, %v673
        %v733 = vpack.c.bf16 %v576, %v572
        %v734 = vpack.c.bf16 %v578, %v574
        %v735 = vpack.c.bf16 %v684, %v681
        %v736 = vpack.c.bf16 %v586, %v582
        %v737 = vpack.c.bf16 %v588, %v584
        %v738 = vpack.c.bf16 %v692, %v689
        %v739 = vpack.c.bf16 %v596, %v592
        %v740 = vpack.c.bf16 %v598, %v594
        %v741 = vpack.c.bf16 %v700, %v697
        %v742 = vpack.c.bf16 %v606, %v602
        %v743 = vpack.c.bf16 %v608, %v604
        %v744 = vpack.c.bf16 %v708, %v705
        %v745 = vpack.c.bf16 %v616, %v612
        %v746 = vpack.c.bf16 %v618, %v614
        %v747 = vpack.c.bf16 %v716, %v713
        %v748 = vpack.c.bf16 %v626, %v622
        %v749 = vpack.c.bf16 %v628, %v624
        %v750 = vpack.c.bf16 %v724, %v721
        %v775 = vunpack.c.l.b16 %v727
        %v776 = vunpack.c.l.b16 %v728
        %v777 = vunpack.c.l.b16 %v729
        %v778 = vunpack.c.h.b16 %v727
        %v779 = vunpack.c.h.b16 %v728
        %v780 = vunpack.c.h.b16 %v729
        %v781 = vunpack.c.l.b16 %v730
        %v782 = vunpack.c.l.b16 %v731
        %v783 = vunpack.c.l.b16 %v732
        %v784 = vunpack.c.h.b16 %v730
        %v785 = vunpack.c.h.b16 %v731
        %v786 = vunpack.c.h.b16 %v732
        %v787 = vunpack.c.l.b16 %v733
        %v788 = vunpack.c.l.b16 %v734
        %v789 = vunpack.c.l.b16 %v735
        %v790 = vunpack.c.h.b16 %v733
        %v791 = vunpack.c.h.b16 %v734
        %v792 = vunpack.c.h.b16 %v735
        %v793 = vunpack.c.l.b16 %v736
        %v794 = vunpack.c.l.b16 %v737
        %v795 = vunpack.c.l.b16 %v738
        %v796 = vunpack.c.h.b16 %v736
        %v797 = vunpack.c.h.b16 %v737
        %v798 = vunpack.c.h.b16 %v738
        %v799 = vunpack.c.l.b16 %v739
        %v800 = vunpack.c.l.b16 %v740
        %v801 = vunpack.c.l.b16 %v741
        %v802 = vunpack.c.h.b16 %v739
        %v803 = vunpack.c.h.b16 %v740
        %v804 = vunpack.c.h.b16 %v741
        %v805 = vunpack.c.l.b16 %v742
        %v806 = vunpack.c.l.b16 %v743
        %v807 = vunpack.c.l.b16 %v744
        %v808 = vunpack.c.h.b16 %v742
        %v809 = vunpack.c.h.b16 %v743
        %v810 = vunpack.c.h.b16 %v744
        %v811 = vunpack.c.l.b16 %v745
        %v812 = vunpack.c.l.b16 %v746
        %v813 = vunpack.c.l.b16 %v747
        %v814 = vunpack.c.h.b16 %v745
        %v815 = vunpack.c.h.b16 %v746
        %v816 = vunpack.c.h.b16 %v747
        %v817 = vunpack.c.l.b16 %v748
        %v818 = vunpack.c.l.b16 %v749
        %v819 = vunpack.c.l.b16 %v750
        %v820 = vunpack.c.h.b16 %v748
        %v821 = vunpack.c.h.b16 %v749
        %v822 = vunpack.c.h.b16 %v750
        %v823 = vpack.c.b16 %v776, %v775
        %v824 = vpack.c.b16 %v777, %v777
        %v825 = vpack.c.b16 %v779, %v778
        %v826 = vpack.c.b16 %v780, %v780
        %v827 = vpack.c.b16 %v782, %v781
        %v828 = vpack.c.b16 %v783, %v783
        %v829 = vpack.c.b16 %v785, %v784
        %v830 = vpack.c.b16 %v786, %v786
        %v831 = vpack.c.b16 %v788, %v787
        %v832 = vpack.c.b16 %v789, %v789
        %v833 = vpack.c.b16 %v791, %v790
        %v834 = vpack.c.b16 %v792, %v792
        %v835 = vpack.c.b16 %v794, %v793
        %v836 = vpack.c.b16 %v795, %v795
        %v837 = vpack.c.b16 %v797, %v796
        %v838 = vpack.c.b16 %v798, %v798
        %v839 = vpack.c.b16 %v800, %v799
        %v840 = vpack.c.b16 %v801, %v801
        %v841 = vpack.c.b16 %v803, %v802
        %v842 = vpack.c.b16 %v804, %v804
        %v843 = vpack.c.b16 %v806, %v805
        %v844 = vpack.c.b16 %v807, %v807
        %v845 = vpack.c.b16 %v809, %v808
        %v846 = vpack.c.b16 %v810, %v810
        %v847 = vpack.c.b16 %v812, %v811
        %v848 = vpack.c.b16 %v813, %v813
        %v849 = vpack.c.b16 %v815, %v814
        %v850 = vpack.c.b16 %v816, %v816
        %v851 = vpack.c.b16 %v818, %v817
        %v852 = vpack.c.b16 %v819, %v819
        %v853 = vpack.c.b16 %v821, %v820
        %v854 = vpack.c.b16 %v822, %v822
        %887 = vst [vmem:[#allocation2] sm:$0xff] %v823
        %888 = vst [vmem:[#allocation2 + $0x8] sm:$0xf] %v824
        %889 = vst [vmem:[#allocation2 + $0xc] sm:$0xff] %v825
        %890 = vst [vmem:[#allocation2 + $0x14] sm:$0xf] %v826
        %891 = vst [vmem:[#allocation2 + $0x18] sm:$0xff] %v827
        %892 = vst [vmem:[#allocation2 + $0x20] sm:$0xf] %v828
        %893 = vst [vmem:[#allocation2 + $0x24] sm:$0xff] %v829
        %894 = vst [vmem:[#allocation2 + $0x2c] sm:$0xf] %v830
        %895 = vst [vmem:[#allocation2 + $0x30] sm:$0xff] %v831
        %896 = vst [vmem:[#allocation2 + $0x38] sm:$0xf] %v832
        %897 = vst [vmem:[#allocation2 + $0x3c] sm:$0xff] %v833
        %898 = vst [vmem:[#allocation2 + $0x44] sm:$0xf] %v834
        %899 = vst [vmem:[#allocation2 + $0x48] sm:$0xff] %v835
        %900 = vst [vmem:[#allocation2 + $0x50] sm:$0xf] %v836
        %901 = vst [vmem:[#allocation2 + $0x54] sm:$0xff] %v837
        %902 = vst [vmem:[#allocation2 + $0x5c] sm:$0xf] %v838
        %903 = vst [vmem:[#allocation2 + $0x60] sm:$0xff] %v839
        %904 = vst [vmem:[#allocation2 + $0x68] sm:$0xf] %v840
        %905 = vst [vmem:[#allocation2 + $0x6c] sm:$0xff] %v841
        %906 = vst [vmem:[#allocation2 + $0x74] sm:$0xf] %v842
        %907 = vst [vmem:[#allocation2 + $0x78] sm:$0xff] %v843
        %908 = vst [vmem:[#allocation2 + $0x80] sm:$0xf] %v844
        %909 = vst [vmem:[#allocation2 + $0x84] sm:$0xff] %v845
        %910 = vst [vmem:[#allocation2 + $0x8c] sm:$0xf] %v846
        %911 = vst [vmem:[#allocation2 + $0x90] sm:$0xff] %v847
        %912 = vst [vmem:[#allocation2 + $0x98] sm:$0xf] %v848
        %913 = vst [vmem:[#allocation2 + $0x9c] sm:$0xff] %v849
        %914 = vst [vmem:[#allocation2 + $0xa4] sm:$0xf] %v850
        %915 = vst [vmem:[#allocation2 + $0xa8] sm:$0xff] %v851
        %916 = vst [vmem:[#allocation2 + $0xb0] sm:$0xf] %v852
        %917 = vst [vmem:[#allocation2 + $0xb4] sm:$0xff] %v853
        %918 = vst [vmem:[#allocation2 + $0xbc] sm:$0xf] %v854
        %v919 = vld [vmem:[#allocation2] sm:$0xf]
        %v920 = vld [vmem:[#allocation2 + $0xc] sm:$0xf]
        %v921 = vld [vmem:[#allocation2 + $0x18] sm:$0xf]
        %v922 = vld [vmem:[#allocation2 + $0x24] sm:$0xf]
        %v923 = vld [vmem:[#allocation2 + $0x30] sm:$0xf]
        %v924 = vld [vmem:[#allocation2 + $0x3c] sm:$0xf]
        %v925 = vld [vmem:[#allocation2 + $0x48] sm:$0xf]
        %v926 = vld [vmem:[#allocation2 + $0x54] sm:$0xf]
        %v927 = vld [vmem:[#allocation2 + $0x4] sm:$0xf]
        %v928 = vld [vmem:[#allocation2 + $0x10] sm:$0xf]
        %v929 = vld [vmem:[#allocation2 + $0x1c] sm:$0xf]
        %v930 = vld [vmem:[#allocation2 + $0x28] sm:$0xf]
        %v931 = vld [vmem:[#allocation2 + $0x34] sm:$0xf]
        %v932 = vld [vmem:[#allocation2 + $0x40] sm:$0xf]
        %v933 = vld [vmem:[#allocation2 + $0x4c] sm:$0xf]
        %v934 = vld [vmem:[#allocation2 + $0x58] sm:$0xf]
        %v935 = vld [vmem:[#allocation2 + $0x8] sm:$0xf]
        %v936 = vld [vmem:[#allocation2 + $0x14] sm:$0xf]
        %v937 = vld [vmem:[#allocation2 + $0x20] sm:$0xf]
        %v938 = vld [vmem:[#allocation2 + $0x2c] sm:$0xf]
        %v939 = vld [vmem:[#allocation2 + $0x38] sm:$0xf]
        %v940 = vld [vmem:[#allocation2 + $0x44] sm:$0xf]
        %v941 = vld [vmem:[#allocation2 + $0x50] sm:$0xf]
        %v942 = vld [vmem:[#allocation2 + $0x5c] sm:$0xf]
        %v951 = vunpack.c.l.b16 %v919
        %v952 = vunpack.c.l.b16 %v920
        %v953 = vunpack.c.l.b16 %v921
        %v954 = vunpack.c.l.b16 %v922
        %v955 = vunpack.c.l.b16 %v923
        %v956 = vunpack.c.l.b16 %v924
        %v957 = vunpack.c.l.b16 %v925
        %v958 = vunpack.c.l.b16 %v926
        %v959 = vpack.c.b16 %v952, %v951
        %v960 = vpack.c.b16 %v954, %v953
        %v961 = vpack.c.b16 %v956, %v955
        %v962 = vpack.c.b16 %v958, %v957
        %v971 = vunpack.c.l.b16 %v927
        %v972 = vunpack.c.l.b16 %v928
        %v973 = vunpack.c.l.b16 %v929
        %v974 = vunpack.c.l.b16 %v930
        %v975 = vunpack.c.l.b16 %v931
        %v976 = vunpack.c.l.b16 %v932
        %v977 = vunpack.c.l.b16 %v933
        %v978 = vunpack.c.l.b16 %v934
        %v979 = vpack.c.b16 %v972, %v971
        %v980 = vpack.c.b16 %v974, %v973
        %v981 = vpack.c.b16 %v976, %v975
        %v982 = vpack.c.b16 %v978, %v977
        %vm983 = vcmask 261120
        %v985 = vsel %vm983, %v959, 0
        %v988 = vsel %vm983, %v960, 0
        %v991 = vsel %vm983, %v961, 0
        %v994 = vsel %vm983, %v962, 0
        %v997 = vsel %vm983, %v979, 0
        %v1000 = vsel %vm983, %v980, 0
        %v1003 = vsel %vm983, %v981, 0
        %v1006 = vsel %vm983, %v982, 0
        %1008 = vmatprep.subr.bf16.mxu0 0
        %1009 = vmatpush1.bf16.xpose.msra.mxu0 0
        %1010 = vmatprep.subr.bf16.mxu0 0
        %1011 = vmatpush1.bf16.xpose.msra.mxu0 0
        %1012 = vmatprep.subr.bf16.mxu0 0
        %1013 = vmatpush1.bf16.xpose.msra.mxu0 0
        %1014 = vmatprep.subr.bf16.mxu0 0
        %1015 = vmatpush1.bf16.xpose.msra.mxu0 0
        %1016 = vmatprep.subr.bf16.mxu0 0
        %1017 = vmatpush1.bf16.xpose.msra.mxu0 %v1006
        %1018 = vmatprep.subr.bf16.mxu0 0
        %1019 = vmatpush1.bf16.xpose.msra.mxu0 %v1003
        %1020 = vmatprep.subr.bf16.mxu0 0
        %1021 = vmatpush1.bf16.xpose.msra.mxu0 %v1000
        %1022 = vmatprep.subr.bf16.mxu0 0
        %1023 = vmatpush1.bf16.xpose.msra.mxu0 %v997
        %1024 = vmatprep.subr.bf16.mxu0 0
        %1025 = vmatpush2.bf16.xpose.msra.mxu0 0
        %1026 = vmatprep.subr.bf16.mxu0 0
        %1027 = vmatpush2.bf16.xpose.msra.mxu0 0
        %1028 = vmatprep.subr.bf16.mxu0 0
        %1029 = vmatpush2.bf16.xpose.msra.mxu0 0
        %1030 = vmatprep.subr.bf16.mxu0 0
        %1031 = vmatpush2.bf16.xpose.msra.mxu0 0
        %1032 = vmatprep.subr.bf16.mxu0 0
        %1033 = vmatpush2.bf16.xpose.msra.mxu0 0
        %1034 = vmatprep.subr.bf16.mxu0 0
        %1035 = vmatpush2.bf16.xpose.msra.mxu0 0
        %1036 = vmatprep.subr.bf16.mxu0 0
        %1037 = vmatpush2.bf16.xpose.msra.mxu0 0
        %1038 = vmatprep.subr.bf16.mxu0 0
        %1039 = vmatpush2.bf16.xpose.msra.mxu0 0
        %1040 = vmatprep.mubr.bf16.mxu0 0
        %1041 = vmatmul.mubr.bf16.gmra.mxu0 %v985
        %v1042 = vpop.f32.mrf.mxu0
        %v1043 = vadd.f32 0.0, %v1042
        %v1044 = vpop.f32.mrf.mxu0
        %v1045 = vpop.f32.mrf.mxu0
        %v1046 = vadd.f32 0.0, %v1045
        %v1047 = vpop.f32.mrf.mxu0
        %1048 = vmatprep.mubr.bf16.mxu0 0
        %1049 = vmatmul.mubr.bf16.gmra.mxu0 %v988
        %v1050 = vpop.f32.mrf.mxu0
        %v1051 = vadd.f32 0.0, %v1050
        %v1052 = vpop.f32.mrf.mxu0
        %v1053 = vpop.f32.mrf.mxu0
        %v1054 = vadd.f32 0.0, %v1053
        %v1055 = vpop.f32.mrf.mxu0
        %1056 = vmatprep.mubr.bf16.mxu0 0
        %1057 = vmatmul.mubr.bf16.gmra.mxu0 %v991
        %v1058 = vpop.f32.mrf.mxu0
        %v1059 = vadd.f32 0.0, %v1058
        %v1060 = vpop.f32.mrf.mxu0
        %v1061 = vpop.f32.mrf.mxu0
        %v1062 = vadd.f32 0.0, %v1061
        %v1063 = vpop.f32.mrf.mxu0
        %1064 = vmatprep.mubr.bf16.mxu0 0
        %1065 = vmatmul.mubr.bf16.gmra.mxu0 %v994
        %v1066 = vpop.f32.mrf.mxu0
        %v1067 = vadd.f32 0.0, %v1066
        %v1068 = vpop.f32.mrf.mxu0
        %v1069 = vpop.f32.mrf.mxu0
        %v1070 = vadd.f32 0.0, %v1069
        %v1071 = vpop.f32.mrf.mxu0
        %1072 = vdwg.mxu0
        %vm1073 = vcmask 523264
        %v1074 = vsel %vm1073, %v1043, -inf
        %1075 = vmax.xlane.f32.xlu0 %v1074
        %v1076 = vpop.xlane.xlu0 %1075
        %v1077 = vsel %vm1073, %v1046, -inf
        %1078 = vmax.xlane.f32.xlu0 %v1077
        %v1079 = vpop.xlane.xlu0 %1078
        %v1080 = vsel %vm1073, %v1051, -inf
        %1081 = vmax.xlane.f32.xlu0 %v1080
        %v1082 = vpop.xlane.xlu0 %1081
        %v1083 = vsel %vm1073, %v1054, -inf
        %1084 = vmax.xlane.f32.xlu0 %v1083
        %v1085 = vpop.xlane.xlu0 %1084
        %v1086 = vsel %vm1073, %v1059, -inf
        %1087 = vmax.xlane.f32.xlu0 %v1086
        %v1088 = vpop.xlane.xlu0 %1087
        %v1089 = vsel %vm1073, %v1062, -inf
        %1090 = vmax.xlane.f32.xlu0 %v1089
        %v1091 = vpop.xlane.xlu0 %1090
        %v1092 = vsel %vm1073, %v1067, -inf
        %1093 = vmax.xlane.f32.xlu0 %v1092
        %v1094 = vpop.xlane.xlu0 %1093
        %v1095 = vsel %vm1073, %v1070, -inf
        %1096 = vmax.xlane.f32.xlu0 %v1095
        %v1097 = vpop.xlane.xlu0 %1096
        %v1098 = vsub.f32 %v1043, %v1076
        %v1099 = vsub.f32 %v1046, %v1079
        %v1100 = vsub.f32 %v1051, %v1082
        %v1101 = vsub.f32 %v1054, %v1085
        %v1102 = vsub.f32 %v1059, %v1088
        %v1103 = vsub.f32 %v1062, %v1091
        %v1104 = vsub.f32 %v1067, %v1094
        %v1105 = vsub.f32 %v1070, %v1097
        %v1106 = vmul.f32 %v1098, 1.442695
        %v1107 = vpow.pop %v1106
        %v1108 = vmul.f32 %v1099, 1.442695
        %v1109 = vpow.pop %v1108
        %v1110 = vmul.f32 %v1100, 1.442695
        %v1111 = vpow.pop %v1110
        %v1112 = vmul.f32 %v1101, 1.442695
        %v1113 = vpow.pop %v1112
        %v1114 = vmul.f32 %v1102, 1.442695
        %v1115 = vpow.pop %v1114
        %v1116 = vmul.f32 %v1103, 1.442695
        %v1117 = vpow.pop %v1116
        %v1118 = vmul.f32 %v1104, 1.442695
        %v1119 = vpow.pop %v1118
        %v1120 = vmul.f32 %v1105, 1.442695
        %v1121 = vpow.pop %v1120
        %v1122 = vsel %vm1073, %v1107, 0.0
        %1123 = vadd.xlane.f32.xlu0 %v1122
        %v1124 = vpop.xlane.xlu0 %1123
        %v1125 = vsel %vm1073, %v1109, 0.0
        %1126 = vadd.xlane.f32.xlu0 %v1125
        %v1127 = vpop.xlane.xlu0 %1126
        %v1128 = vsel %vm1073, %v1111, 0.0
        %1129 = vadd.xlane.f32.xlu0 %v1128
        %v1130 = vpop.xlane.xlu0 %1129
        %v1131 = vsel %vm1073, %v1113, 0.0
        %1132 = vadd.xlane.f32.xlu0 %v1131
        %v1133 = vpop.xlane.xlu0 %1132
        %v1134 = vsel %vm1073, %v1115, 0.0
        %1135 = vadd.xlane.f32.xlu0 %v1134
        %v1136 = vpop.xlane.xlu0 %1135
        %v1137 = vsel %vm1073, %v1117, 0.0
        %1138 = vadd.xlane.f32.xlu0 %v1137
        %v1139 = vpop.xlane.xlu0 %1138
        %v1140 = vsel %vm1073, %v1119, 0.0
        %1141 = vadd.xlane.f32.xlu0 %v1140
        %v1142 = vpop.xlane.xlu0 %1141
        %v1143 = vsel %vm1073, %v1121, 0.0
        %1144 = vadd.xlane.f32.xlu0 %v1143
        %v1145 = vpop.xlane.xlu0 %1144
        %v1146 = vrcp.pop %v1124
        %v1147 = vrcp.pop %v1127
        %v1148 = vrcp.pop %v1130
        %v1149 = vrcp.pop %v1133
        %v1150 = vrcp.pop %v1136
        %v1151 = vrcp.pop %v1139
        %v1152 = vrcp.pop %v1142
        %v1153 = vrcp.pop %v1145
        %v1154 = vmul.f32 %v1107, %v1146
        %v1155 = vmul.f32 %v1109, %v1147
        %v1156 = vmul.f32 %v1111, %v1148
        %v1157 = vmul.f32 %v1113, %v1149
        %v1158 = vmul.f32 %v1115, %v1150
        %v1159 = vmul.f32 %v1117, %v1151
        %v1160 = vmul.f32 %v1119, %v1152
        %v1161 = vmul.f32 %v1121, %v1153
        %v1162 = vpack.c.bf16 %v1155, %v1154
        %v1163 = vpack.c.bf16 %v1157, %v1156
        %v1164 = vpack.c.bf16 %v1159, %v1158
        %v1165 = vpack.c.bf16 %v1161, %v1160
        %v1174 = vunpack.c.l.b16 %v935
        %v1175 = vunpack.c.l.b16 %v936
        %v1176 = vunpack.c.l.b16 %v937
        %v1177 = vunpack.c.l.b16 %v938
        %v1178 = vunpack.c.l.b16 %v939
        %v1179 = vunpack.c.l.b16 %v940
        %v1180 = vunpack.c.l.b16 %v941
        %v1181 = vunpack.c.l.b16 %v942
        %v1182 = vpack.c.b16 %v1175, %v1174
        %v1183 = vpack.c.b16 %v1177, %v1176
        %v1184 = vpack.c.b16 %v1179, %v1178
        %v1185 = vpack.c.b16 %v1181, %v1180
        %v1191 = vsel %vm1073, %v1162, 0
        %v1194 = vsel %vm1073, %v1163, 0
        %v1197 = vsel %vm1073, %v1164, 0
        %v1200 = vsel %vm1073, %v1165, 0
        %1202 = vmatprep.subr.bf16.mxu0 0
        %1203 = vmatpush1.bf16.msra.mxu0 0
        %1204 = vmatprep.subr.bf16.mxu0 0
        %1205 = vmatpush1.bf16.msra.mxu0 0
        %1206 = vmatprep.subr.bf16.mxu0 0
        %1207 = vmatpush1.bf16.msra.mxu0 0
        %1208 = vmatprep.subr.bf16.mxu0 0
        %1209 = vmatpush1.bf16.msra.mxu0 0
        %1210 = vmatprep.subr.bf16.mxu0 0
        %1211 = vmatpush1.bf16.msra.mxu0 %v1185
        %1212 = vmatprep.subr.bf16.mxu0 0
        %1213 = vmatpush1.bf16.msra.mxu0 %v1184
        %1214 = vmatprep.subr.bf16.mxu0 0
        %1215 = vmatpush1.bf16.msra.mxu0 %v1183
        %1216 = vmatprep.subr.bf16.mxu0 0
        %1217 = vmatpush1.bf16.msra.mxu0 %v1182
        %1218 = vmatprep.subr.bf16.mxu0 0
        %1219 = vmatpush2.bf16.msra.mxu0 0
        %1220 = vmatprep.subr.bf16.mxu0 0
        %1221 = vmatpush2.bf16.msra.mxu0 0
        %1222 = vmatprep.subr.bf16.mxu0 0
        %1223 = vmatpush2.bf16.msra.mxu0 0
        %1224 = vmatprep.subr.bf16.mxu0 0
        %1225 = vmatpush2.bf16.msra.mxu0 0
        %1226 = vmatprep.subr.bf16.mxu0 0
        %1227 = vmatpush2.bf16.msra.mxu0 0
        %1228 = vmatprep.subr.bf16.mxu0 0
        %1229 = vmatpush2.bf16.msra.mxu0 0
        %1230 = vmatprep.subr.bf16.mxu0 0
        %1231 = vmatpush2.bf16.msra.mxu0 0
        %1232 = vmatprep.subr.bf16.mxu0 0
        %1233 = vmatpush2.bf16.msra.mxu0 0
        %1234 = vmatprep.mubr.bf16.mxu0 0
        %1235 = vmatmul.mubr.bf16.gmra.mxu0 %v1191
        %v1236 = vpop.f32.mrf.mxu0
        %v1237 = vadd.f32 0.0, %v1236
        %v1238 = vpop.f32.mrf.mxu0
        %v1239 = vpop.f32.mrf.mxu0
        %v1240 = vadd.f32 0.0, %v1239
        %v1241 = vpop.f32.mrf.mxu0
        %1242 = vmatprep.mubr.bf16.mxu0 0
        %1243 = vmatmul.mubr.bf16.gmra.mxu0 %v1194
        %v1244 = vpop.f32.mrf.mxu0
        %v1245 = vadd.f32 0.0, %v1244
        %v1246 = vpop.f32.mrf.mxu0
        %v1247 = vpop.f32.mrf.mxu0
        %v1248 = vadd.f32 0.0, %v1247
        %v1249 = vpop.f32.mrf.mxu0
        %1250 = vmatprep.mubr.bf16.mxu0 0
        %1251 = vmatmul.mubr.bf16.gmra.mxu0 %v1197
        %v1252 = vpop.f32.mrf.mxu0
        %v1253 = vadd.f32 0.0, %v1252
        %v1254 = vpop.f32.mrf.mxu0
        %v1255 = vpop.f32.mrf.mxu0
        %v1256 = vadd.f32 0.0, %v1255
        %v1257 = vpop.f32.mrf.mxu0
        %1258 = vmatprep.mubr.bf16.mxu0 0
        %1259 = vmatmul.mubr.bf16.gmra.mxu0 %v1200
        %v1260 = vpop.f32.mrf.mxu0
        %v1261 = vadd.f32 0.0, %v1260
        %v1262 = vpop.f32.mrf.mxu0
        %v1263 = vpop.f32.mrf.mxu0
        %v1264 = vadd.f32 0.0, %v1263
        %v1265 = vpop.f32.mrf.mxu0
        %1266 = vdwg.mxu0
        %v1267 = vpack.c.bf16 %v1240, %v1237
        %v1268 = vpack.c.bf16 %v1248, %v1245
        %v1269 = vpack.c.bf16 %v1256, %v1253
        %v1270 = vpack.c.bf16 %v1264, %v1261
        %v1275 = vunpack.c.l.b16 %v1267
        %v1276 = vunpack.c.h.b16 %v1267
        %v1277 = vunpack.c.l.b16 %v1268
        %v1278 = vunpack.c.h.b16 %v1268
        %v1279 = vunpack.c.l.b16 %v1269
        %v1280 = vunpack.c.h.b16 %v1269
        %v1281 = vunpack.c.l.b16 %v1270
        %v1282 = vunpack.c.h.b16 %v1270
        %v1283 = vpack.c.b16 %v1275, %v1275
        %v1284 = vpack.c.b16 %v1276, %v1276
        %v1285 = vpack.c.b16 %v1277, %v1277
        %v1286 = vpack.c.b16 %v1278, %v1278
        %v1287 = vpack.c.b16 %v1279, %v1279
        %v1288 = vpack.c.b16 %v1280, %v1280
        %v1289 = vpack.c.b16 %v1281, %v1281
        %v1290 = vpack.c.b16 %v1282, %v1282
        %vm1299 = vcmask 257024
        %1300 = vst.msk [vmem:[#allocation3] sm:$0xf] %vm1299, %v1283
        %1301 = vst.msk [vmem:[#allocation3 + $0x4] sm:$0xf] %vm1299, %v1284
        %1302 = vst.msk [vmem:[#allocation3 + $0x8] sm:$0xf] %vm1299, %v1285
        %1303 = vst.msk [vmem:[#allocation3 + $0xc] sm:$0xf] %vm1299, %v1286
        %1304 = vst.msk [vmem:[#allocation3 + $0x10] sm:$0xf] %vm1299, %v1287
        %1305 = vst.msk [vmem:[#allocation3 + $0x14] sm:$0xf] %vm1299, %v1288
        %1306 = vst.msk [vmem:[#allocation3 + $0x18] sm:$0xf] %vm1299, %v1289
        %1307 = vst.msk [vmem:[#allocation3 + $0x1c] sm:$0xf] %vm1299, %v1290
        %v1308 = vld [vmem:[#allocation2] sm:$0xf]
        %v1309 = vld [vmem:[#allocation2 + $0xc] sm:$0xf]
        %v1310 = vld [vmem:[#allocation2 + $0x18] sm:$0xf]
        %v1311 = vld [vmem:[#allocation2 + $0x24] sm:$0xf]
        %v1312 = vld [vmem:[#allocation2 + $0x30] sm:$0xf]
        %v1313 = vld [vmem:[#allocation2 + $0x3c] sm:$0xf]
        %v1314 = vld [vmem:[#allocation2 + $0x48] sm:$0xf]
        %v1315 = vld [vmem:[#allocation2 + $0x54] sm:$0xf]
        %v1316 = vld [vmem:[#allocation2 + $0x4] sm:$0xf]
        %v1317 = vld [vmem:[#allocation2 + $0x10] sm:$0xf]
        %v1318 = vld [vmem:[#allocation2 + $0x1c] sm:$0xf]
        %v1319 = vld [vmem:[#allocation2 + $0x28] sm:$0xf]
        %v1320 = vld [vmem:[#allocation2 + $0x34] sm:$0xf]
        %v1321 = vld [vmem:[#allocation2 + $0x40] sm:$0xf]
        %v1322 = vld [vmem:[#allocation2 + $0x4c] sm:$0xf]
        %v1323 = vld [vmem:[#allocation2 + $0x58] sm:$0xf]
        %v1324 = vld [vmem:[#allocation2 + $0x8] sm:$0xf]
        %v1325 = vld [vmem:[#allocation2 + $0x14] sm:$0xf]
        %v1326 = vld [vmem:[#allocation2 + $0x20] sm:$0xf]
        %v1327 = vld [vmem:[#allocation2 + $0x2c] sm:$0xf]
        %v1328 = vld [vmem:[#allocation2 + $0x38] sm:$0xf]
        %v1329 = vld [vmem:[#allocation2 + $0x44] sm:$0xf]
        %v1330 = vld [vmem:[#allocation2 + $0x50] sm:$0xf]
        %v1331 = vld [vmem:[#allocation2 + $0x5c] sm:$0xf]
        %v1340 = vunpack.c.l.b16 %v1308
        %v1341 = vunpack.c.l.b16 %v1309
        %v1342 = vunpack.c.l.b16 %v1310
        %v1343 = vunpack.c.l.b16 %v1311
        %v1344 = vunpack.c.l.b16 %v1312
        %v1345 = vunpack.c.l.b16 %v1313
        %v1346 = vunpack.c.l.b16 %v1314
        %v1347 = vunpack.c.l.b16 %v1315
        %v1348 = vpack.c.b16 %v1341, %v1340
        %v1349 = vpack.c.b16 %v1343, %v1342
        %v1350 = vpack.c.b16 %v1345, %v1344
        %v1351 = vpack.c.b16 %v1347, %v1346
        %1352 = vrot.lane.b32.xlu0 %v1348, 96
        %v1353 = vpop.permute.xlu0 %1352
        %1354 = vrot.lane.b32.xlu0 %v1349, 96
        %v1355 = vpop.permute.xlu0 %1354
        %1356 = vrot.lane.b32.xlu0 %v1350, 96
        %v1357 = vpop.permute.xlu0 %1356
        %1358 = vrot.lane.b32.xlu0 %v1351, 96
        %v1359 = vpop.permute.xlu0 %1358
        %v1368 = vunpack.c.l.b16 %v1316
        %v1369 = vunpack.c.l.b16 %v1317
        %v1370 = vunpack.c.l.b16 %v1318
        %v1371 = vunpack.c.l.b16 %v1319
        %v1372 = vunpack.c.l.b16 %v1320
        %v1373 = vunpack.c.l.b16 %v1321
        %v1374 = vunpack.c.l.b16 %v1322
        %v1375 = vunpack.c.l.b16 %v1323
        %v1376 = vpack.c.b16 %v1369, %v1368
        %v1377 = vpack.c.b16 %v1371, %v1370
        %v1378 = vpack.c.b16 %v1373, %v1372
        %v1379 = vpack.c.b16 %v1375, %v1374
        %1380 = vrot.lane.b32.xlu0 %v1376, 96
        %v1381 = vpop.permute.xlu0 %1380
        %1382 = vrot.lane.b32.xlu0 %v1377, 96
        %v1383 = vpop.permute.xlu0 %1382
        %1384 = vrot.lane.b32.xlu0 %v1378, 96
        %v1385 = vpop.permute.xlu0 %1384
        %1386 = vrot.lane.b32.xlu0 %v1379, 96
        %v1387 = vpop.permute.xlu0 %1386
        %v1389 = vsel %vm983, %v1353, 0
        %v1392 = vsel %vm983, %v1355, 0
        %v1395 = vsel %vm983, %v1357, 0
        %v1398 = vsel %vm983, %v1359, 0
        %v1401 = vsel %vm983, %v1381, 0
        %v1404 = vsel %vm983, %v1383, 0
        %v1407 = vsel %vm983, %v1385, 0
        %v1410 = vsel %vm983, %v1387, 0
        %1412 = vmatprep.subr.bf16.mxu0 0
        %1413 = vmatpush1.bf16.xpose.msra.mxu0 0
        %1414 = vmatprep.subr.bf16.mxu0 0
        %1415 = vmatpush1.bf16.xpose.msra.mxu0 0
        %1416 = vmatprep.subr.bf16.mxu0 0
        %1417 = vmatpush1.bf16.xpose.msra.mxu0 0
        %1418 = vmatprep.subr.bf16.mxu0 0
        %1419 = vmatpush1.bf16.xpose.msra.mxu0 0
        %1420 = vmatprep.subr.bf16.mxu0 0
        %1421 = vmatpush1.bf16.xpose.msra.mxu0 %v1410
        %1422 = vmatprep.subr.bf16.mxu0 0
        %1423 = vmatpush1.bf16.xpose.msra.mxu0 %v1407
        %1424 = vmatprep.subr.bf16.mxu0 0
        %1425 = vmatpush1.bf16.xpose.msra.mxu0 %v1404
        %1426 = vmatprep.subr.bf16.mxu0 0
        %1427 = vmatpush1.bf16.xpose.msra.mxu0 %v1401
        %1428 = vmatprep.subr.bf16.mxu0 0
        %1429 = vmatpush2.bf16.xpose.msra.mxu0 0
        %1430 = vmatprep.subr.bf16.mxu0 0
        %1431 = vmatpush2.bf16.xpose.msra.mxu0 0
        %1432 = vmatprep.subr.bf16.mxu0 0
        %1433 = vmatpush2.bf16.xpose.msra.mxu0 0
        %1434 = vmatprep.subr.bf16.mxu0 0
        %1435 = vmatpush2.bf16.xpose.msra.mxu0 0
        %1436 = vmatprep.subr.bf16.mxu0 0
        %1437 = vmatpush2.bf16.xpose.msra.mxu0 0
        %1438 = vmatprep.subr.bf16.mxu0 0
        %1439 = vmatpush2.bf16.xpose.msra.mxu0 0
        %1440 = vmatprep.subr.bf16.mxu0 0
        %1441 = vmatpush2.bf16.xpose.msra.mxu0 0
        %1442 = vmatprep.subr.bf16.mxu0 0
        %1443 = vmatpush2.bf16.xpose.msra.mxu0 0
        %1444 = vmatprep.mubr.bf16.mxu0 0
        %1445 = vmatmul.mubr.bf16.gmra.mxu0 %v1389
        %v1446 = vpop.f32.mrf.mxu0
        %v1447 = vadd.f32 0.0, %v1446
        %v1448 = vpop.f32.mrf.mxu0
        %v1449 = vpop.f32.mrf.mxu0
        %v1450 = vadd.f32 0.0, %v1449
        %v1451 = vpop.f32.mrf.mxu0
        %1452 = vmatprep.mubr.bf16.mxu0 0
        %1453 = vmatmul.mubr.bf16.gmra.mxu0 %v1392
        %v1454 = vpop.f32.mrf.mxu0
        %v1455 = vadd.f32 0.0, %v1454
        %v1456 = vpop.f32.mrf.mxu0
        %v1457 = vpop.f32.mrf.mxu0
        %v1458 = vadd.f32 0.0, %v1457
        %v1459 = vpop.f32.mrf.mxu0
        %1460 = vmatprep.mubr.bf16.mxu0 0
        %1461 = vmatmul.mubr.bf16.gmra.mxu0 %v1395
        %v1462 = vpop.f32.mrf.mxu0
        %v1463 = vadd.f32 0.0, %v1462
        %v1464 = vpop.f32.mrf.mxu0
        %v1465 = vpop.f32.mrf.mxu0
        %v1466 = vadd.f32 0.0, %v1465
        %v1467 = vpop.f32.mrf.mxu0
        %1468 = vmatprep.mubr.bf16.mxu0 0
        %1469 = vmatmul.mubr.bf16.gmra.mxu0 %v1398
        %v1470 = vpop.f32.mrf.mxu0
        %v1471 = vadd.f32 0.0, %v1470
        %v1472 = vpop.f32.mrf.mxu0
        %v1473 = vpop.f32.mrf.mxu0
        %v1474 = vadd.f32 0.0, %v1473
        %v1475 = vpop.f32.mrf.mxu0
        %1476 = vdwg.mxu0
        %v1477 = vsel %vm1073, %v1447, -inf
        %1478 = vmax.xlane.f32.xlu0 %v1477
        %v1479 = vpop.xlane.xlu0 %1478
        %v1480 = vsel %vm1073, %v1450, -inf
        %1481 = vmax.xlane.f32.xlu0 %v1480
        %v1482 = vpop.xlane.xlu0 %1481
        %v1483 = vsel %vm1073, %v1455, -inf
        %1484 = vmax.xlane.f32.xlu0 %v1483
        %v1485 = vpop.xlane.xlu0 %1484
        %v1486 = vsel %vm1073, %v1458, -inf
        %1487 = vmax.xlane.f32.xlu0 %v1486
        %v1488 = vpop.xlane.xlu0 %1487
        %v1489 = vsel %vm1073, %v1463, -inf
        %1490 = vmax.xlane.f32.xlu0 %v1489
        %v1491 = vpop.xlane.xlu0 %1490
        %v1492 = vsel %vm1073, %v1466, -inf
        %1493 = vmax.xlane.f32.xlu0 %v1492
        %v1494 = vpop.xlane.xlu0 %1493
        %v1495 = vsel %vm1073, %v1471, -inf
        %1496 = vmax.xlane.f32.xlu0 %v1495
        %v1497 = vpop.xlane.xlu0 %1496
        %v1498 = vsel %vm1073, %v1474, -inf
        %1499 = vmax.xlane.f32.xlu0 %v1498
        %v1500 = vpop.xlane.xlu0 %1499
        %v1501 = vsub.f32 %v1447, %v1479
        %v1502 = vsub.f32 %v1450, %v1482
        %v1503 = vsub.f32 %v1455, %v1485
        %v1504 = vsub.f32 %v1458, %v1488
        %v1505 = vsub.f32 %v1463, %v1491
        %v1506 = vsub.f32 %v1466, %v1494
        %v1507 = vsub.f32 %v1471, %v1497
        %v1508 = vsub.f32 %v1474, %v1500
        %v1509 = vmul.f32 %v1501, 1.442695
        %v1510 = vpow.pop %v1509
        %v1511 = vmul.f32 %v1502, 1.442695
        %v1512 = vpow.pop %v1511
        %v1513 = vmul.f32 %v1503, 1.442695
        %v1514 = vpow.pop %v1513
        %v1515 = vmul.f32 %v1504, 1.442695
        %v1516 = vpow.pop %v1515
        %v1517 = vmul.f32 %v1505, 1.442695
        %v1518 = vpow.pop %v1517
        %v1519 = vmul.f32 %v1506, 1.442695
        %v1520 = vpow.pop %v1519
        %v1521 = vmul.f32 %v1507, 1.442695
        %v1522 = vpow.pop %v1521
        %v1523 = vmul.f32 %v1508, 1.442695
        %v1524 = vpow.pop %v1523
        %v1525 = vsel %vm1073, %v1510, 0.0
        %1526 = vadd.xlane.f32.xlu0 %v1525
        %v1527 = vpop.xlane.xlu0 %1526
        %v1528 = vsel %vm1073, %v1512, 0.0
        %1529 = vadd.xlane.f32.xlu0 %v1528
        %v1530 = vpop.xlane.xlu0 %1529
        %v1531 = vsel %vm1073, %v1514, 0.0
        %1532 = vadd.xlane.f32.xlu0 %v1531
        %v1533 = vpop.xlane.xlu0 %1532
        %v1534 = vsel %vm1073, %v1516, 0.0
        %1535 = vadd.xlane.f32.xlu0 %v1534
        %v1536 = vpop.xlane.xlu0 %1535
        %v1537 = vsel %vm1073, %v1518, 0.0
        %1538 = vadd.xlane.f32.xlu0 %v1537
        %v1539 = vpop.xlane.xlu0 %1538
        %v1540 = vsel %vm1073, %v1520, 0.0
        %1541 = vadd.xlane.f32.xlu0 %v1540
        %v1542 = vpop.xlane.xlu0 %1541
        %v1543 = vsel %vm1073, %v1522, 0.0
        %1544 = vadd.xlane.f32.xlu0 %v1543
        %v1545 = vpop.xlane.xlu0 %1544
        %v1546 = vsel %vm1073, %v1524, 0.0
        %1547 = vadd.xlane.f32.xlu0 %v1546
        %v1548 = vpop.xlane.xlu0 %1547
        %v1549 = vrcp.pop %v1527
        %v1550 = vrcp.pop %v1530
        %v1551 = vrcp.pop %v1533
        %v1552 = vrcp.pop %v1536
        %v1553 = vrcp.pop %v1539
        %v1554 = vrcp.pop %v1542
        %v1555 = vrcp.pop %v1545
        %v1556 = vrcp.pop %v1548
        %v1557 = vmul.f32 %v1510, %v1549
        %v1558 = vmul.f32 %v1512, %v1550
        %v1559 = vmul.f32 %v1514, %v1551
        %v1560 = vmul.f32 %v1516, %v1552
        %v1561 = vmul.f32 %v1518, %v1553
        %v1562 = vmul.f32 %v1520, %v1554
        %v1563 = vmul.f32 %v1522, %v1555
        %v1564 = vmul.f32 %v1524, %v1556
        %v1565 = vpack.c.bf16 %v1558, %v1557
        %v1566 = vpack.c.bf16 %v1560, %v1559
        %v1567 = vpack.c.bf16 %v1562, %v1561
        %v1568 = vpack.c.bf16 %v1564, %v1563
        %v1577 = vunpack.c.l.b16 %v1324
        %v1578 = vunpack.c.l.b16 %v1325
        %v1579 = vunpack.c.l.b16 %v1326
        %v1580 = vunpack.c.l.b16 %v1327
        %v1581 = vunpack.c.l.b16 %v1328
        %v1582 = vunpack.c.l.b16 %v1329
        %v1583 = vunpack.c.l.b16 %v1330
        %v1584 = vunpack.c.l.b16 %v1331
        %v1585 = vpack.c.b16 %v1578, %v1577
        %v1586 = vpack.c.b16 %v1580, %v1579
        %v1587 = vpack.c.b16 %v1582, %v1581
        %v1588 = vpack.c.b16 %v1584, %v1583
        %1589 = vrot.lane.b32.xlu0 %v1585, 96
        %v1590 = vpop.permute.xlu0 %1589
        %1591 = vrot.lane.b32.xlu0 %v1586, 96
        %v1592 = vpop.permute.xlu0 %1591
        %1593 = vrot.lane.b32.xlu0 %v1587, 96
        %v1594 = vpop.permute.xlu0 %1593
        %1595 = vrot.lane.b32.xlu0 %v1588, 96
        %v1596 = vpop.permute.xlu0 %1595
        %v1602 = vsel %vm1073, %v1565, 0
        %v1605 = vsel %vm1073, %v1566, 0
        %v1608 = vsel %vm1073, %v1567, 0
        %v1611 = vsel %vm1073, %v1568, 0
        %1613 = vmatprep.subr.bf16.mxu0 0
        %1614 = vmatpush1.bf16.msra.mxu0 0
        %1615 = vmatprep.subr.bf16.mxu0 0
        %1616 = vmatpush1.bf16.msra.mxu0 0
        %1617 = vmatprep.subr.bf16.mxu0 0
        %1618 = vmatpush1.bf16.msra.mxu0 0
        %1619 = vmatprep.subr.bf16.mxu0 0
        %1620 = vmatpush1.bf16.msra.mxu0 0
        %1621 = vmatprep.subr.bf16.mxu0 0
        %1622 = vmatpush1.bf16.msra.mxu0 %v1596
        %1623 = vmatprep.subr.bf16.mxu0 0
        %1624 = vmatpush1.bf16.msra.mxu0 %v1594
        %1625 = vmatprep.subr.bf16.mxu0 0
        %1626 = vmatpush1.bf16.msra.mxu0 %v1592
        %1627 = vmatprep.subr.bf16.mxu0 0
        %1628 = vmatpush1.bf16.msra.mxu0 %v1590
        %1629 = vmatprep.subr.bf16.mxu0 0
        %1630 = vmatpush2.bf16.msra.mxu0 0
        %1631 = vmatprep.subr.bf16.mxu0 0
        %1632 = vmatpush2.bf16.msra.mxu0 0
        %1633 = vmatprep.subr.bf16.mxu0 0
        %1634 = vmatpush2.bf16.msra.mxu0 0
        %1635 = vmatprep.subr.bf16.mxu0 0
        %1636 = vmatpush2.bf16.msra.mxu0 0
        %1637 = vmatprep.subr.bf16.mxu0 0
        %1638 = vmatpush2.bf16.msra.mxu0 0
        %1639 = vmatprep.subr.bf16.mxu0 0
        %1640 = vmatpush2.bf16.msra.mxu0 0
        %1641 = vmatprep.subr.bf16.mxu0 0
        %1642 = vmatpush2.bf16.msra.mxu0 0
        %1643 = vmatprep.subr.bf16.mxu0 0
        %1644 = vmatpush2.bf16.msra.mxu0 0
        %1645 = vmatprep.mubr.bf16.mxu0 0
        %1646 = vmatmul.mubr.bf16.gmra.mxu0 %v1602
        %v1647 = vpop.f32.mrf.mxu0
        %v1648 = vadd.f32 0.0, %v1647
        %v1649 = vpop.f32.mrf.mxu0
        %v1650 = vpop.f32.mrf.mxu0
        %v1651 = vadd.f32 0.0, %v1650
        %v1652 = vpop.f32.mrf.mxu0
        %1653 = vmatprep.mubr.bf16.mxu0 0
        %1654 = vmatmul.mubr.bf16.gmra.mxu0 %v1605
        %v1655 = vpop.f32.mrf.mxu0
        %v1656 = vadd.f32 0.0, %v1655
        %v1657 = vpop.f32.mrf.mxu0
        %v1658 = vpop.f32.mrf.mxu0
        %v1659 = vadd.f32 0.0, %v1658
        %v1660 = vpop.f32.mrf.mxu0
        %1661 = vmatprep.mubr.bf16.mxu0 0
        %1662 = vmatmul.mubr.bf16.gmra.mxu0 %v1608
        %v1663 = vpop.f32.mrf.mxu0
        %v1664 = vadd.f32 0.0, %v1663
        %v1665 = vpop.f32.mrf.mxu0
        %v1666 = vpop.f32.mrf.mxu0
        %v1667 = vadd.f32 0.0, %v1666
        %v1668 = vpop.f32.mrf.mxu0
        %1669 = vmatprep.mubr.bf16.mxu0 0
        %1670 = vmatmul.mubr.bf16.gmra.mxu0 %v1611
        %v1671 = vpop.f32.mrf.mxu0
        %v1672 = vadd.f32 0.0, %v1671
        %v1673 = vpop.f32.mrf.mxu0
        %v1674 = vpop.f32.mrf.mxu0
        %v1675 = vadd.f32 0.0, %v1674
        %v1676 = vpop.f32.mrf.mxu0
        %1677 = vdwg.mxu0
        %v1678 = vpack.c.bf16 %v1651, %v1648
        %v1679 = vpack.c.bf16 %v1659, %v1656
        %v1680 = vpack.c.bf16 %v1667, %v1664
        %v1681 = vpack.c.bf16 %v1675, %v1672
        %v1686 = vunpack.c.l.b16 %v1678
        %v1687 = vunpack.c.h.b16 %v1678
        %v1688 = vunpack.c.l.b16 %v1679
        %v1689 = vunpack.c.h.b16 %v1679
        %v1690 = vunpack.c.l.b16 %v1680
        %v1691 = vunpack.c.h.b16 %v1680
        %v1692 = vunpack.c.l.b16 %v1681
        %v1693 = vunpack.c.h.b16 %v1681
        %v1694 = vpack.c.b16 %v1686, %v1686
        %v1695 = vpack.c.b16 %v1687, %v1687
        %v1696 = vpack.c.b16 %v1688, %v1688
        %v1697 = vpack.c.b16 %v1689, %v1689
        %v1698 = vpack.c.b16 %v1690, %v1690
        %v1699 = vpack.c.b16 %v1691, %v1691
        %v1700 = vpack.c.b16 %v1692, %v1692
        %v1701 = vpack.c.b16 %v1693, %v1693
        %1702 = vrot.lane.b32.xlu0 %v1694, 32
        %v1703 = vpop.permute.xlu0 %1702
        %1704 = vrot.lane.b32.xlu0 %v1695, 32
        %v1705 = vpop.permute.xlu0 %1704
        %1706 = vrot.lane.b32.xlu0 %v1696, 32
        %v1707 = vpop.permute.xlu0 %1706
        %1708 = vrot.lane.b32.xlu0 %v1697, 32
        %v1709 = vpop.permute.xlu0 %1708
        %1710 = vrot.lane.b32.xlu0 %v1698, 32
        %v1711 = vpop.permute.xlu0 %1710
        %1712 = vrot.lane.b32.xlu0 %v1699, 32
        %v1713 = vpop.permute.xlu0 %1712
        %1714 = vrot.lane.b32.xlu0 %v1700, 32
        %v1715 = vpop.permute.xlu0 %1714
        %1716 = vrot.lane.b32.xlu0 %v1701, 32
        %v1717 = vpop.permute.xlu0 %1716
        %vm1726 = vcmask 519424
        %1727 = vst.msk [vmem:[#allocation3] sm:$0xf] %vm1726, %v1703
        %1728 = vst.msk [vmem:[#allocation3 + $0x4] sm:$0xf] %vm1726, %v1705
        %1729 = vst.msk [vmem:[#allocation3 + $0x8] sm:$0xf] %vm1726, %v1707
        %1730 = vst.msk [vmem:[#allocation3 + $0xc] sm:$0xf] %vm1726, %v1709
        %1731 = vst.msk [vmem:[#allocation3 + $0x10] sm:$0xf] %vm1726, %v1711
        %1732 = vst.msk [vmem:[#allocation3 + $0x14] sm:$0xf] %vm1726, %v1713
        %1733 = vst.msk [vmem:[#allocation3 + $0x18] sm:$0xf] %vm1726, %v1715
        %1734 = vst.msk [vmem:[#allocation3 + $0x1c] sm:$0xf] %vm1726, %v1717
        %v1735 = vld [vmem:[#allocation2] sm:$0xf]
        %v1736 = vld [vmem:[#allocation2 + $0xc] sm:$0xf]
        %v1737 = vld [vmem:[#allocation2 + $0x18] sm:$0xf]
        %v1738 = vld [vmem:[#allocation2 + $0x24] sm:$0xf]
        %v1739 = vld [vmem:[#allocation2 + $0x30] sm:$0xf]
        %v1740 = vld [vmem:[#allocation2 + $0x3c] sm:$0xf]
        %v1741 = vld [vmem:[#allocation2 + $0x48] sm:$0xf]
        %v1742 = vld [vmem:[#allocation2 + $0x54] sm:$0xf]
        %v1743 = vld [vmem:[#allocation2 + $0x4] sm:$0xf]
        %v1744 = vld [vmem:[#allocation2 + $0x10] sm:$0xf]
        %v1745 = vld [vmem:[#allocation2 + $0x1c] sm:$0xf]
        %v1746 = vld [vmem:[#allocation2 + $0x28] sm:$0xf]
        %v1747 = vld [vmem:[#allocation2 + $0x34] sm:$0xf]
        %v1748 = vld [vmem:[#allocation2 + $0x40] sm:$0xf]
        %v1749 = vld [vmem:[#allocation2 + $0x4c] sm:$0xf]
        %v1750 = vld [vmem:[#allocation2 + $0x58] sm:$0xf]
        %v1751 = vld [vmem:[#allocation2 + $0x8] sm:$0xf]
        %v1752 = vld [vmem:[#allocation2 + $0x14] sm:$0xf]
        %v1753 = vld [vmem:[#allocation2 + $0x20] sm:$0xf]
        %v1754 = vld [vmem:[#allocation2 + $0x2c] sm:$0xf]
        %v1755 = vld [vmem:[#allocation2 + $0x38] sm:$0xf]
        %v1756 = vld [vmem:[#allocation2 + $0x44] sm:$0xf]
        %v1757 = vld [vmem:[#allocation2 + $0x50] sm:$0xf]
        %v1758 = vld [vmem:[#allocation2 + $0x5c] sm:$0xf]
        %v1767 = vunpack.c.l.b16 %v1735
        %v1768 = vunpack.c.l.b16 %v1736
        %v1769 = vunpack.c.l.b16 %v1737
        %v1770 = vunpack.c.l.b16 %v1738
        %v1771 = vunpack.c.l.b16 %v1739
        %v1772 = vunpack.c.l.b16 %v1740
        %v1773 = vunpack.c.l.b16 %v1741
        %v1774 = vunpack.c.l.b16 %v1742
        %v1775 = vpack.c.b16 %v1768, %v1767
        %v1776 = vpack.c.b16 %v1770, %v1769
        %v1777 = vpack.c.b16 %v1772, %v1771
        %v1778 = vpack.c.b16 %v1774, %v1773
        %1779 = vrot.lane.b32.xlu0 %v1775, 64
        %v1780 = vpop.permute.xlu0 %1779
        %1781 = vrot.lane.b32.xlu0 %v1776, 64
        %v1782 = vpop.permute.xlu0 %1781
        %1783 = vrot.lane.b32.xlu0 %v1777, 64
        %v1784 = vpop.permute.xlu0 %1783
        %1785 = vrot.lane.b32.xlu0 %v1778, 64
        %v1786 = vpop.permute.xlu0 %1785
        %v1795 = vunpack.c.l.b16 %v1743
        %v1796 = vunpack.c.l.b16 %v1744
        %v1797 = vunpack.c.l.b16 %v1745
        %v1798 = vunpack.c.l.b16 %v1746
        %v1799 = vunpack.c.l.b16 %v1747
        %v1800 = vunpack.c.l.b16 %v1748
        %v1801 = vunpack.c.l.b16 %v1749
        %v1802 = vunpack.c.l.b16 %v1750
        %v1803 = vpack.c.b16 %v1796, %v1795
        %v1804 = vpack.c.b16 %v1798, %v1797
        %v1805 = vpack.c.b16 %v1800, %v1799
        %v1806 = vpack.c.b16 %v1802, %v1801
        %1807 = vrot.lane.b32.xlu0 %v1803, 64
        %v1808 = vpop.permute.xlu0 %1807
        %1809 = vrot.lane.b32.xlu0 %v1804, 64
        %v1810 = vpop.permute.xlu0 %1809
        %1811 = vrot.lane.b32.xlu0 %v1805, 64
        %v1812 = vpop.permute.xlu0 %1811
        %1813 = vrot.lane.b32.xlu0 %v1806, 64
        %v1814 = vpop.permute.xlu0 %1813
        %v1816 = vsel %vm983, %v1780, 0
        %v1819 = vsel %vm983, %v1782, 0
        %v1822 = vsel %vm983, %v1784, 0
        %v1825 = vsel %vm983, %v1786, 0
        %v1828 = vsel %vm983, %v1808, 0
        %v1831 = vsel %vm983, %v1810, 0
        %v1834 = vsel %vm983, %v1812, 0
        %v1837 = vsel %vm983, %v1814, 0
        %1839 = vmatprep.subr.bf16.mxu0 0
        %1840 = vmatpush1.bf16.xpose.msra.mxu0 0
        %1841 = vmatprep.subr.bf16.mxu0 0
        %1842 = vmatpush1.bf16.xpose.msra.mxu0 0
        %1843 = vmatprep.subr.bf16.mxu0 0
        %1844 = vmatpush1.bf16.xpose.msra.mxu0 0
        %1845 = vmatprep.subr.bf16.mxu0 0
        %1846 = vmatpush1.bf16.xpose.msra.mxu0 0
        %1847 = vmatprep.subr.bf16.mxu0 0
        %1848 = vmatpush1.bf16.xpose.msra.mxu0 %v1837
        %1849 = vmatprep.subr.bf16.mxu0 0
        %1850 = vmatpush1.bf16.xpose.msra.mxu0 %v1834
        %1851 = vmatprep.subr.bf16.mxu0 0
        %1852 = vmatpush1.bf16.xpose.msra.mxu0 %v1831
        %1853 = vmatprep.subr.bf16.mxu0 0
        %1854 = vmatpush1.bf16.xpose.msra.mxu0 %v1828
        %1855 = vmatprep.subr.bf16.mxu0 0
        %1856 = vmatpush2.bf16.xpose.msra.mxu0 0
        %1857 = vmatprep.subr.bf16.mxu0 0
        %1858 = vmatpush2.bf16.xpose.msra.mxu0 0
        %1859 = vmatprep.subr.bf16.mxu0 0
        %1860 = vmatpush2.bf16.xpose.msra.mxu0 0
        %1861 = vmatprep.subr.bf16.mxu0 0
        %1862 = vmatpush2.bf16.xpose.msra.mxu0 0
        %1863 = vmatprep.subr.bf16.mxu0 0
        %1864 = vmatpush2.bf16.xpose.msra.mxu0 0
        %1865 = vmatprep.subr.bf16.mxu0 0
        %1866 = vmatpush2.bf16.xpose.msra.mxu0 0
        %1867 = vmatprep.subr.bf16.mxu0 0
        %1868 = vmatpush2.bf16.xpose.msra.mxu0 0
        %1869 = vmatprep.subr.bf16.mxu0 0
        %1870 = vmatpush2.bf16.xpose.msra.mxu0 0
        %1871 = vmatprep.mubr.bf16.mxu0 0
        %1872 = vmatmul.mubr.bf16.gmra.mxu0 %v1816
        %v1873 = vpop.f32.mrf.mxu0
        %v1874 = vadd.f32 0.0, %v1873
        %v1875 = vpop.f32.mrf.mxu0
        %v1876 = vpop.f32.mrf.mxu0
        %v1877 = vadd.f32 0.0, %v1876
        %v1878 = vpop.f32.mrf.mxu0
        %1879 = vmatprep.mubr.bf16.mxu0 0
        %1880 = vmatmul.mubr.bf16.gmra.mxu0 %v1819
        %v1881 = vpop.f32.mrf.mxu0
        %v1882 = vadd.f32 0.0, %v1881
        %v1883 = vpop.f32.mrf.mxu0
        %v1884 = vpop.f32.mrf.mxu0
        %v1885 = vadd.f32 0.0, %v1884
        %v1886 = vpop.f32.mrf.mxu0
        %1887 = vmatprep.mubr.bf16.mxu0 0
        %1888 = vmatmul.mubr.bf16.gmra.mxu0 %v1822
        %v1889 = vpop.f32.mrf.mxu0
        %v1890 = vadd.f32 0.0, %v1889
        %v1891 = vpop.f32.mrf.mxu0
        %v1892 = vpop.f32.mrf.mxu0
        %v1893 = vadd.f32 0.0, %v1892
        %v1894 = vpop.f32.mrf.mxu0
        %1895 = vmatprep.mubr.bf16.mxu0 0
        %1896 = vmatmul.mubr.bf16.gmra.mxu0 %v1825
        %v1897 = vpop.f32.mrf.mxu0
        %v1898 = vadd.f32 0.0, %v1897
        %v1899 = vpop.f32.mrf.mxu0
        %v1900 = vpop.f32.mrf.mxu0
        %v1901 = vadd.f32 0.0, %v1900
        %v1902 = vpop.f32.mrf.mxu0
        %1903 = vdwg.mxu0
        %v1904 = vsel %vm1073, %v1874, -inf
        %1905 = vmax.xlane.f32.xlu0 %v1904
        %v1906 = vpop.xlane.xlu0 %1905
        %v1907 = vsel %vm1073, %v1877, -inf
        %1908 = vmax.xlane.f32.xlu0 %v1907
        %v1909 = vpop.xlane.xlu0 %1908
        %v1910 = vsel %vm1073, %v1882, -inf
        %1911 = vmax.xlane.f32.xlu0 %v1910
        %v1912 = vpop.xlane.xlu0 %1911
        %v1913 = vsel %vm1073, %v1885, -inf
        %1914 = vmax.xlane.f32.xlu0 %v1913
        %v1915 = vpop.xlane.xlu0 %1914
        %v1916 = vsel %vm1073, %v1890, -inf
        %1917 = vmax.xlane.f32.xlu0 %v1916
        %v1918 = vpop.xlane.xlu0 %1917
        %v1919 = vsel %vm1073, %v1893, -inf
        %1920 = vmax.xlane.f32.xlu0 %v1919
        %v1921 = vpop.xlane.xlu0 %1920
        %v1922 = vsel %vm1073, %v1898, -inf
        %1923 = vmax.xlane.f32.xlu0 %v1922
        %v1924 = vpop.xlane.xlu0 %1923
        %v1925 = vsel %vm1073, %v1901, -inf
        %1926 = vmax.xlane.f32.xlu0 %v1925
        %v1927 = vpop.xlane.xlu0 %1926
        %v1928 = vsub.f32 %v1874, %v1906
        %v1929 = vsub.f32 %v1877, %v1909
        %v1930 = vsub.f32 %v1882, %v1912
        %v1931 = vsub.f32 %v1885, %v1915
        %v1932 = vsub.f32 %v1890, %v1918
        %v1933 = vsub.f32 %v1893, %v1921
        %v1934 = vsub.f32 %v1898, %v1924
        %v1935 = vsub.f32 %v1901, %v1927
        %v1936 = vmul.f32 %v1928, 1.442695
        %v1937 = vpow.pop %v1936
        %v1938 = vmul.f32 %v1929, 1.442695
        %v1939 = vpow.pop %v1938
        %v1940 = vmul.f32 %v1930, 1.442695
        %v1941 = vpow.pop %v1940
        %v1942 = vmul.f32 %v1931, 1.442695
        %v1943 = vpow.pop %v1942
        %v1944 = vmul.f32 %v1932, 1.442695
        %v1945 = vpow.pop %v1944
        %v1946 = vmul.f32 %v1933, 1.442695
        %v1947 = vpow.pop %v1946
        %v1948 = vmul.f32 %v1934, 1.442695
        %v1949 = vpow.pop %v1948
        %v1950 = vmul.f32 %v1935, 1.442695
        %v1951 = vpow.pop %v1950
        %v1952 = vsel %vm1073, %v1937, 0.0
        %1953 = vadd.xlane.f32.xlu0 %v1952
        %v1954 = vpop.xlane.xlu0 %1953
        %v1955 = vsel %vm1073, %v1939, 0.0
        %1956 = vadd.xlane.f32.xlu0 %v1955
        %v1957 = vpop.xlane.xlu0 %1956
        %v1958 = vsel %vm1073, %v1941, 0.0
        %1959 = vadd.xlane.f32.xlu0 %v1958
        %v1960 = vpop.xlane.xlu0 %1959
        %v1961 = vsel %vm1073, %v1943, 0.0
        %1962 = vadd.xlane.f32.xlu0 %v1961
        %v1963 = vpop.xlane.xlu0 %1962
        %v1964 = vsel %vm1073, %v1945, 0.0
        %1965 = vadd.xlane.f32.xlu0 %v1964
        %v1966 = vpop.xlane.xlu0 %1965
        %v1967 = vsel %vm1073, %v1947, 0.0
        %1968 = vadd.xlane.f32.xlu0 %v1967
        %v1969 = vpop.xlane.xlu0 %1968
        %v1970 = vsel %vm1073, %v1949, 0.0
        %1971 = vadd.xlane.f32.xlu0 %v1970
        %v1972 = vpop.xlane.xlu0 %1971
        %v1973 = vsel %vm1073, %v1951, 0.0
        %1974 = vadd.xlane.f32.xlu0 %v1973
        %v1975 = vpop.xlane.xlu0 %1974
        %v1976 = vrcp.pop %v1954
        %v1977 = vrcp.pop %v1957
        %v1978 = vrcp.pop %v1960
        %v1979 = vrcp.pop %v1963
        %v1980 = vrcp.pop %v1966
        %v1981 = vrcp.pop %v1969
        %v1982 = vrcp.pop %v1972
        %v1983 = vrcp.pop %v1975
        %v1984 = vmul.f32 %v1937, %v1976
        %v1985 = vmul.f32 %v1939, %v1977
        %v1986 = vmul.f32 %v1941, %v1978
        %v1987 = vmul.f32 %v1943, %v1979
        %v1988 = vmul.f32 %v1945, %v1980
        %v1989 = vmul.f32 %v1947, %v1981
        %v1990 = vmul.f32 %v1949, %v1982
        %v1991 = vmul.f32 %v1951, %v1983
        %v1992 = vpack.c.bf16 %v1985, %v1984
        %v1993 = vpack.c.bf16 %v1987, %v1986
        %v1994 = vpack.c.bf16 %v1989, %v1988
        %v1995 = vpack.c.bf16 %v1991, %v1990
        %v2004 = vunpack.c.l.b16 %v1751
        %v2005 = vunpack.c.l.b16 %v1752
        %v2006 = vunpack.c.l.b16 %v1753
        %v2007 = vunpack.c.l.b16 %v1754
        %v2008 = vunpack.c.l.b16 %v1755
        %v2009 = vunpack.c.l.b16 %v1756
        %v2010 = vunpack.c.l.b16 %v1757
        %v2011 = vunpack.c.l.b16 %v1758
        %v2012 = vpack.c.b16 %v2005, %v2004
        %v2013 = vpack.c.b16 %v2007, %v2006
        %v2014 = vpack.c.b16 %v2009, %v2008
        %v2015 = vpack.c.b16 %v2011, %v2010
        %2016 = vrot.lane.b32.xlu0 %v2012, 64
        %v2017 = vpop.permute.xlu0 %2016
        %2018 = vrot.lane.b32.xlu0 %v2013, 64
        %v2019 = vpop.permute.xlu0 %2018
        %2020 = vrot.lane.b32.xlu0 %v2014, 64
        %v2021 = vpop.permute.xlu0 %2020
        %2022 = vrot.lane.b32.xlu0 %v2015, 64
        %v2023 = vpop.permute.xlu0 %2022
        %v2029 = vsel %vm1073, %v1992, 0
        %v2032 = vsel %vm1073, %v1993, 0
        %v2035 = vsel %vm1073, %v1994, 0
        %v2038 = vsel %vm1073, %v1995, 0
        %2040 = vmatprep.subr.bf16.mxu0 0
        %2041 = vmatpush1.bf16.msra.mxu0 0
        %2042 = vmatprep.subr.bf16.mxu0 0
        %2043 = vmatpush1.bf16.msra.mxu0 0
        %2044 = vmatprep.subr.bf16.mxu0 0
        %2045 = vmatpush1.bf16.msra.mxu0 0
        %2046 = vmatprep.subr.bf16.mxu0 0
        %2047 = vmatpush1.bf16.msra.mxu0 0
        %2048 = vmatprep.subr.bf16.mxu0 0
        %2049 = vmatpush1.bf16.msra.mxu0 %v2023
        %2050 = vmatprep.subr.bf16.mxu0 0
        %2051 = vmatpush1.bf16.msra.mxu0 %v2021
        %2052 = vmatprep.subr.bf16.mxu0 0
        %2053 = vmatpush1.bf16.msra.mxu0 %v2019
        %2054 = vmatprep.subr.bf16.mxu0 0
        %2055 = vmatpush1.bf16.msra.mxu0 %v2017
        %2056 = vmatprep.subr.bf16.mxu0 0
        %2057 = vmatpush2.bf16.msra.mxu0 0
        %2058 = vmatprep.subr.bf16.mxu0 0
        %2059 = vmatpush2.bf16.msra.mxu0 0
        %2060 = vmatprep.subr.bf16.mxu0 0
        %2061 = vmatpush2.bf16.msra.mxu0 0
        %2062 = vmatprep.subr.bf16.mxu0 0
        %2063 = vmatpush2.bf16.msra.mxu0 0
        %2064 = vmatprep.subr.bf16.mxu0 0
        %2065 = vmatpush2.bf16.msra.mxu0 0
        %2066 = vmatprep.subr.bf16.mxu0 0
        %2067 = vmatpush2.bf16.msra.mxu0 0
        %2068 = vmatprep.subr.bf16.mxu0 0
        %2069 = vmatpush2.bf16.msra.mxu0 0
        %2070 = vmatprep.subr.bf16.mxu0 0
        %2071 = vmatpush2.bf16.msra.mxu0 0
        %2072 = vmatprep.mubr.bf16.mxu0 0
        %2073 = vmatmul.mubr.bf16.gmra.mxu0 %v2029
        %v2074 = vpop.f32.mrf.mxu0
        %v2075 = vadd.f32 0.0, %v2074
        %v2076 = vpop.f32.mrf.mxu0
        %v2077 = vpop.f32.mrf.mxu0
        %v2078 = vadd.f32 0.0, %v2077
        %v2079 = vpop.f32.mrf.mxu0
        %2080 = vmatprep.mubr.bf16.mxu0 0
        %2081 = vmatmul.mubr.bf16.gmra.mxu0 %v2032
        %v2082 = vpop.f32.mrf.mxu0
        %v2083 = vadd.f32 0.0, %v2082
        %v2084 = vpop.f32.mrf.mxu0
        %v2085 = vpop.f32.mrf.mxu0
        %v2086 = vadd.f32 0.0, %v2085
        %v2087 = vpop.f32.mrf.mxu0
        %2088 = vmatprep.mubr.bf16.mxu0 0
        %2089 = vmatmul.mubr.bf16.gmra.mxu0 %v2035
        %v2090 = vpop.f32.mrf.mxu0
        %v2091 = vadd.f32 0.0, %v2090
        %v2092 = vpop.f32.mrf.mxu0
        %v2093 = vpop.f32.mrf.mxu0
        %v2094 = vadd.f32 0.0, %v2093
        %v2095 = vpop.f32.mrf.mxu0
        %2096 = vmatprep.mubr.bf16.mxu0 0
        %2097 = vmatmul.mubr.bf16.gmra.mxu0 %v2038
        %v2098 = vpop.f32.mrf.mxu0
        %v2099 = vadd.f32 0.0, %v2098
        %v2100 = vpop.f32.mrf.mxu0
        %v2101 = vpop.f32.mrf.mxu0
        %v2102 = vadd.f32 0.0, %v2101
        %v2103 = vpop.f32.mrf.mxu0
        %2104 = vdwg.mxu0
        %v2105 = vpack.c.bf16 %v2078, %v2075
        %v2106 = vpack.c.bf16 %v2086, %v2083
        %v2107 = vpack.c.bf16 %v2094, %v2091
        %v2108 = vpack.c.bf16 %v2102, %v2099
        %v2113 = vunpack.c.l.b16 %v2105
        %v2114 = vunpack.c.h.b16 %v2105
        %v2115 = vunpack.c.l.b16 %v2106
        %v2116 = vunpack.c.h.b16 %v2106
        %v2117 = vunpack.c.l.b16 %v2107
        %v2118 = vunpack.c.h.b16 %v2107
        %v2119 = vunpack.c.l.b16 %v2108
        %v2120 = vunpack.c.h.b16 %v2108
        %v2121 = vpack.c.b16 %v2113, %v2113
        %v2122 = vpack.c.b16 %v2114, %v2114
        %v2123 = vpack.c.b16 %v2115, %v2115
        %v2124 = vpack.c.b16 %v2116, %v2116
        %v2125 = vpack.c.b16 %v2117, %v2117
        %v2126 = vpack.c.b16 %v2118, %v2118
        %v2127 = vpack.c.b16 %v2119, %v2119
        %v2128 = vpack.c.b16 %v2120, %v2120
        %2129 = vrot.lane.b32.xlu0 %v2121, 64
        %v2130 = vpop.permute.xlu0 %2129
        %2131 = vrot.lane.b32.xlu0 %v2122, 64
        %v2132 = vpop.permute.xlu0 %2131
        %2133 = vrot.lane.b32.xlu0 %v2123, 64
        %v2134 = vpop.permute.xlu0 %2133
        %2135 = vrot.lane.b32.xlu0 %v2124, 64
        %v2136 = vpop.permute.xlu0 %2135
        %2137 = vrot.lane.b32.xlu0 %v2125, 64
        %v2138 = vpop.permute.xlu0 %2137
        %2139 = vrot.lane.b32.xlu0 %v2126, 64
        %v2140 = vpop.permute.xlu0 %2139
        %2141 = vrot.lane.b32.xlu0 %v2127, 64
        %v2142 = vpop.permute.xlu0 %2141
        %2143 = vrot.lane.b32.xlu0 %v2128, 64
        %v2144 = vpop.permute.xlu0 %2143
        %vm2153 = vcmask 781824
        %2154 = vst.msk [vmem:[#allocation3] sm:$0xf] %vm2153, %v2130
        %2155 = vst.msk [vmem:[#allocation3 + $0x4] sm:$0xf] %vm2153, %v2132
        %2156 = vst.msk [vmem:[#allocation3 + $0x8] sm:$0xf] %vm2153, %v2134
        %2157 = vst.msk [vmem:[#allocation3 + $0xc] sm:$0xf] %vm2153, %v2136
        %2158 = vst.msk [vmem:[#allocation3 + $0x10] sm:$0xf] %vm2153, %v2138
        %2159 = vst.msk [vmem:[#allocation3 + $0x14] sm:$0xf] %vm2153, %v2140
        %2160 = vst.msk [vmem:[#allocation3 + $0x18] sm:$0xf] %vm2153, %v2142
        %2161 = vst.msk [vmem:[#allocation3 + $0x1c] sm:$0xf] %vm2153, %v2144
        %v2162 = vld [vmem:[#allocation2] sm:$0xf]
        %v2163 = vld [vmem:[#allocation2 + $0xc] sm:$0xf]
        %v2164 = vld [vmem:[#allocation2 + $0x18] sm:$0xf]
        %v2165 = vld [vmem:[#allocation2 + $0x24] sm:$0xf]
        %v2166 = vld [vmem:[#allocation2 + $0x30] sm:$0xf]
        %v2167 = vld [vmem:[#allocation2 + $0x3c] sm:$0xf]
        %v2168 = vld [vmem:[#allocation2 + $0x48] sm:$0xf]
        %v2169 = vld [vmem:[#allocation2 + $0x54] sm:$0xf]
        %v2170 = vld [vmem:[#allocation2 + $0x4] sm:$0xf]
        %v2171 = vld [vmem:[#allocation2 + $0x10] sm:$0xf]
        %v2172 = vld [vmem:[#allocation2 + $0x1c] sm:$0xf]
        %v2173 = vld [vmem:[#allocation2 + $0x28] sm:$0xf]
        %v2174 = vld [vmem:[#allocation2 + $0x34] sm:$0xf]
        %v2175 = vld [vmem:[#allocation2 + $0x40] sm:$0xf]
        %v2176 = vld [vmem:[#allocation2 + $0x4c] sm:$0xf]
        %v2177 = vld [vmem:[#allocation2 + $0x58] sm:$0xf]
        %v2178 = vld [vmem:[#allocation2 + $0x8] sm:$0xf]
        %v2179 = vld [vmem:[#allocation2 + $0x14] sm:$0xf]
        %v2180 = vld [vmem:[#allocation2 + $0x20] sm:$0xf]
        %v2181 = vld [vmem:[#allocation2 + $0x2c] sm:$0xf]
        %v2182 = vld [vmem:[#allocation2 + $0x38] sm:$0xf]
        %v2183 = vld [vmem:[#allocation2 + $0x44] sm:$0xf]
        %v2184 = vld [vmem:[#allocation2 + $0x50] sm:$0xf]
        %v2185 = vld [vmem:[#allocation2 + $0x5c] sm:$0xf]
        %v2194 = vunpack.c.l.b16 %v2162
        %v2195 = vunpack.c.l.b16 %v2163
        %v2196 = vunpack.c.l.b16 %v2164
        %v2197 = vunpack.c.l.b16 %v2165
        %v2198 = vunpack.c.l.b16 %v2166
        %v2199 = vunpack.c.l.b16 %v2167
        %v2200 = vunpack.c.l.b16 %v2168
        %v2201 = vunpack.c.l.b16 %v2169
        %v2202 = vpack.c.b16 %v2195, %v2194
        %v2203 = vpack.c.b16 %v2197, %v2196
        %v2204 = vpack.c.b16 %v2199, %v2198
        %v2205 = vpack.c.b16 %v2201, %v2200
        %2206 = vrot.lane.b32.xlu0 %v2202, 32
        %v2207 = vpop.permute.xlu0 %2206
        %2208 = vrot.lane.b32.xlu0 %v2203, 32
        %v2209 = vpop.permute.xlu0 %2208
        %2210 = vrot.lane.b32.xlu0 %v2204, 32
        %v2211 = vpop.permute.xlu0 %2210
        %2212 = vrot.lane.b32.xlu0 %v2205, 32
        %v2213 = vpop.permute.xlu0 %2212
        %v2222 = vunpack.c.l.b16 %v2170
        %v2223 = vunpack.c.l.b16 %v2171
        %v2224 = vunpack.c.l.b16 %v2172
        %v2225 = vunpack.c.l.b16 %v2173
        %v2226 = vunpack.c.l.b16 %v2174
        %v2227 = vunpack.c.l.b16 %v2175
        %v2228 = vunpack.c.l.b16 %v2176
        %v2229 = vunpack.c.l.b16 %v2177
        %v2230 = vpack.c.b16 %v2223, %v2222
        %v2231 = vpack.c.b16 %v2225, %v2224
        %v2232 = vpack.c.b16 %v2227, %v2226
        %v2233 = vpack.c.b16 %v2229, %v2228
        %2234 = vrot.lane.b32.xlu0 %v2230, 32
        %v2235 = vpop.permute.xlu0 %2234
        %2236 = vrot.lane.b32.xlu0 %v2231, 32
        %v2237 = vpop.permute.xlu0 %2236
        %2238 = vrot.lane.b32.xlu0 %v2232, 32
        %v2239 = vpop.permute.xlu0 %2238
        %2240 = vrot.lane.b32.xlu0 %v2233, 32
        %v2241 = vpop.permute.xlu0 %2240
        %v2243 = vsel %vm983, %v2207, 0
        %v2246 = vsel %vm983, %v2209, 0
        %v2249 = vsel %vm983, %v2211, 0
        %v2252 = vsel %vm983, %v2213, 0
        %v2255 = vsel %vm983, %v2235, 0
        %v2258 = vsel %vm983, %v2237, 0
        %v2261 = vsel %vm983, %v2239, 0
        %v2264 = vsel %vm983, %v2241, 0
        %2266 = vmatprep.subr.bf16.mxu0 0
        %2267 = vmatpush1.bf16.xpose.msra.mxu0 0
        %2268 = vmatprep.subr.bf16.mxu0 0
        %2269 = vmatpush1.bf16.xpose.msra.mxu0 0
        %2270 = vmatprep.subr.bf16.mxu0 0
        %2271 = vmatpush1.bf16.xpose.msra.mxu0 0
        %2272 = vmatprep.subr.bf16.mxu0 0
        %2273 = vmatpush1.bf16.xpose.msra.mxu0 0
        %2274 = vmatprep.subr.bf16.mxu0 0
        %2275 = vmatpush1.bf16.xpose.msra.mxu0 %v2264
        %2276 = vmatprep.subr.bf16.mxu0 0
        %2277 = vmatpush1.bf16.xpose.msra.mxu0 %v2261
        %2278 = vmatprep.subr.bf16.mxu0 0
        %2279 = vmatpush1.bf16.xpose.msra.mxu0 %v2258
        %2280 = vmatprep.subr.bf16.mxu0 0
        %2281 = vmatpush1.bf16.xpose.msra.mxu0 %v2255
        %2282 = vmatprep.subr.bf16.mxu0 0
        %2283 = vmatpush2.bf16.xpose.msra.mxu0 0
        %2284 = vmatprep.subr.bf16.mxu0 0
        %2285 = vmatpush2.bf16.xpose.msra.mxu0 0
        %2286 = vmatprep.subr.bf16.mxu0 0
        %2287 = vmatpush2.bf16.xpose.msra.mxu0 0
        %2288 = vmatprep.subr.bf16.mxu0 0
        %2289 = vmatpush2.bf16.xpose.msra.mxu0 0
        %2290 = vmatprep.subr.bf16.mxu0 0
        %2291 = vmatpush2.bf16.xpose.msra.mxu0 0
        %2292 = vmatprep.subr.bf16.mxu0 0
        %2293 = vmatpush2.bf16.xpose.msra.mxu0 0
        %2294 = vmatprep.subr.bf16.mxu0 0
        %2295 = vmatpush2.bf16.xpose.msra.mxu0 0
        %2296 = vmatprep.subr.bf16.mxu0 0
        %2297 = vmatpush2.bf16.xpose.msra.mxu0 0
        %2298 = vmatprep.mubr.bf16.mxu0 0
        %2299 = vmatmul.mubr.bf16.gmra.mxu0 %v2243
        %v2300 = vpop.f32.mrf.mxu0
        %v2301 = vadd.f32 0.0, %v2300
        %v2302 = vpop.f32.mrf.mxu0
        %v2303 = vpop.f32.mrf.mxu0
        %v2304 = vadd.f32 0.0, %v2303
        %v2305 = vpop.f32.mrf.mxu0
        %2306 = vmatprep.mubr.bf16.mxu0 0
        %2307 = vmatmul.mubr.bf16.gmra.mxu0 %v2246
        %v2308 = vpop.f32.mrf.mxu0
        %v2309 = vadd.f32 0.0, %v2308
        %v2310 = vpop.f32.mrf.mxu0
        %v2311 = vpop.f32.mrf.mxu0
        %v2312 = vadd.f32 0.0, %v2311
        %v2313 = vpop.f32.mrf.mxu0
        %2314 = vmatprep.mubr.bf16.mxu0 0
        %2315 = vmatmul.mubr.bf16.gmra.mxu0 %v2249
        %v2316 = vpop.f32.mrf.mxu0
        %v2317 = vadd.f32 0.0, %v2316
        %v2318 = vpop.f32.mrf.mxu0
        %v2319 = vpop.f32.mrf.mxu0
        %v2320 = vadd.f32 0.0, %v2319
        %v2321 = vpop.f32.mrf.mxu0
        %2322 = vmatprep.mubr.bf16.mxu0 0
        %2323 = vmatmul.mubr.bf16.gmra.mxu0 %v2252
        %v2324 = vpop.f32.mrf.mxu0
        %v2325 = vadd.f32 0.0, %v2324
        %v2326 = vpop.f32.mrf.mxu0
        %v2327 = vpop.f32.mrf.mxu0
        %v2328 = vadd.f32 0.0, %v2327
        %v2329 = vpop.f32.mrf.mxu0
        %2330 = vdwg.mxu0
        %v2331 = vsel %vm1073, %v2301, -inf
        %2332 = vmax.xlane.f32.xlu0 %v2331
        %v2333 = vpop.xlane.xlu0 %2332
        %v2334 = vsel %vm1073, %v2304, -inf
        %2335 = vmax.xlane.f32.xlu0 %v2334
        %v2336 = vpop.xlane.xlu0 %2335
        %v2337 = vsel %vm1073, %v2309, -inf
        %2338 = vmax.xlane.f32.xlu0 %v2337
        %v2339 = vpop.xlane.xlu0 %2338
        %v2340 = vsel %vm1073, %v2312, -inf
        %2341 = vmax.xlane.f32.xlu0 %v2340
        %v2342 = vpop.xlane.xlu0 %2341
        %v2343 = vsel %vm1073, %v2317, -inf
        %2344 = vmax.xlane.f32.xlu0 %v2343
        %v2345 = vpop.xlane.xlu0 %2344
        %v2346 = vsel %vm1073, %v2320, -inf
        %2347 = vmax.xlane.f32.xlu0 %v2346
        %v2348 = vpop.xlane.xlu0 %2347
        %v2349 = vsel %vm1073, %v2325, -inf
        %2350 = vmax.xlane.f32.xlu0 %v2349
        %v2351 = vpop.xlane.xlu0 %2350
        %v2352 = vsel %vm1073, %v2328, -inf
        %2353 = vmax.xlane.f32.xlu0 %v2352
        %v2354 = vpop.xlane.xlu0 %2353
        %v2355 = vsub.f32 %v2301, %v2333
        %v2356 = vsub.f32 %v2304, %v2336
        %v2357 = vsub.f32 %v2309, %v2339
        %v2358 = vsub.f32 %v2312, %v2342
        %v2359 = vsub.f32 %v2317, %v2345
        %v2360 = vsub.f32 %v2320, %v2348
        %v2361 = vsub.f32 %v2325, %v2351
        %v2362 = vsub.f32 %v2328, %v2354
        %v2363 = vmul.f32 %v2355, 1.442695
        %v2364 = vpow.pop %v2363
        %v2365 = vmul.f32 %v2356, 1.442695
        %v2366 = vpow.pop %v2365
        %v2367 = vmul.f32 %v2357, 1.442695
        %v2368 = vpow.pop %v2367
        %v2369 = vmul.f32 %v2358, 1.442695
        %v2370 = vpow.pop %v2369
        %v2371 = vmul.f32 %v2359, 1.442695
        %v2372 = vpow.pop %v2371
        %v2373 = vmul.f32 %v2360, 1.442695
        %v2374 = vpow.pop %v2373
        %v2375 = vmul.f32 %v2361, 1.442695
        %v2376 = vpow.pop %v2375
        %v2377 = vmul.f32 %v2362, 1.442695
        %v2378 = vpow.pop %v2377
        %v2379 = vsel %vm1073, %v2364, 0.0
        %2380 = vadd.xlane.f32.xlu0 %v2379
        %v2381 = vpop.xlane.xlu0 %2380
        %v2382 = vsel %vm1073, %v2366, 0.0
        %2383 = vadd.xlane.f32.xlu0 %v2382
        %v2384 = vpop.xlane.xlu0 %2383
        %v2385 = vsel %vm1073, %v2368, 0.0
        %2386 = vadd.xlane.f32.xlu0 %v2385
        %v2387 = vpop.xlane.xlu0 %2386
        %v2388 = vsel %vm1073, %v2370, 0.0
        %2389 = vadd.xlane.f32.xlu0 %v2388
        %v2390 = vpop.xlane.xlu0 %2389
        %v2391 = vsel %vm1073, %v2372, 0.0
        %2392 = vadd.xlane.f32.xlu0 %v2391
        %v2393 = vpop.xlane.xlu0 %2392
        %v2394 = vsel %vm1073, %v2374, 0.0
        %2395 = vadd.xlane.f32.xlu0 %v2394
        %v2396 = vpop.xlane.xlu0 %2395
        %v2397 = vsel %vm1073, %v2376, 0.0
        %2398 = vadd.xlane.f32.xlu0 %v2397
        %v2399 = vpop.xlane.xlu0 %2398
        %v2400 = vsel %vm1073, %v2378, 0.0
        %2401 = vadd.xlane.f32.xlu0 %v2400
        %v2402 = vpop.xlane.xlu0 %2401
        %v2403 = vrcp.pop %v2381
        %v2404 = vrcp.pop %v2384
        %v2405 = vrcp.pop %v2387
        %v2406 = vrcp.pop %v2390
        %v2407 = vrcp.pop %v2393
        %v2408 = vrcp.pop %v2396
        %v2409 = vrcp.pop %v2399
        %v2410 = vrcp.pop %v2402
        %v2411 = vmul.f32 %v2364, %v2403
        %v2412 = vmul.f32 %v2366, %v2404
        %v2413 = vmul.f32 %v2368, %v2405
        %v2414 = vmul.f32 %v2370, %v2406
        %v2415 = vmul.f32 %v2372, %v2407
        %v2416 = vmul.f32 %v2374, %v2408
        %v2417 = vmul.f32 %v2376, %v2409
        %v2418 = vmul.f32 %v2378, %v2410
        %v2419 = vpack.c.bf16 %v2412, %v2411
        %v2420 = vpack.c.bf16 %v2414, %v2413
        %v2421 = vpack.c.bf16 %v2416, %v2415
        %v2422 = vpack.c.bf16 %v2418, %v2417
        %v2431 = vunpack.c.l.b16 %v2178
        %v2432 = vunpack.c.l.b16 %v2179
        %v2433 = vunpack.c.l.b16 %v2180
        %v2434 = vunpack.c.l.b16 %v2181
        %v2435 = vunpack.c.l.b16 %v2182
        %v2436 = vunpack.c.l.b16 %v2183
        %v2437 = vunpack.c.l.b16 %v2184
        %v2438 = vunpack.c.l.b16 %v2185
        %v2439 = vpack.c.b16 %v2432, %v2431
        %v2440 = vpack.c.b16 %v2434, %v2433
        %v2441 = vpack.c.b16 %v2436, %v2435
        %v2442 = vpack.c.b16 %v2438, %v2437
        %2443 = vrot.lane.b32.xlu0 %v2439, 32
        %v2444 = vpop.permute.xlu0 %2443
        %2445 = vrot.lane.b32.xlu0 %v2440, 32
        %v2446 = vpop.permute.xlu0 %2445
        %2447 = vrot.lane.b32.xlu0 %v2441, 32
        %v2448 = vpop.permute.xlu0 %2447
        %2449 = vrot.lane.b32.xlu0 %v2442, 32
        %v2450 = vpop.permute.xlu0 %2449
        %v2456 = vsel %vm1073, %v2419, 0
        %v2459 = vsel %vm1073, %v2420, 0
        %v2462 = vsel %vm1073, %v2421, 0
        %v2465 = vsel %vm1073, %v2422, 0
        %2467 = vmatprep.subr.bf16.mxu0 0
        %2468 = vmatpush1.bf16.msra.mxu0 0
        %2469 = vmatprep.subr.bf16.mxu0 0
        %2470 = vmatpush1.bf16.msra.mxu0 0
        %2471 = vmatprep.subr.bf16.mxu0 0
        %2472 = vmatpush1.bf16.msra.mxu0 0
        %2473 = vmatprep.subr.bf16.mxu0 0
        %2474 = vmatpush1.bf16.msra.mxu0 0
        %2475 = vmatprep.subr.bf16.mxu0 0
        %2476 = vmatpush1.bf16.msra.mxu0 %v2450
        %2477 = vmatprep.subr.bf16.mxu0 0
        %2478 = vmatpush1.bf16.msra.mxu0 %v2448
        %2479 = vmatprep.subr.bf16.mxu0 0
        %2480 = vmatpush1.bf16.msra.mxu0 %v2446
        %2481 = vmatprep.subr.bf16.mxu0 0
        %2482 = vmatpush1.bf16.msra.mxu0 %v2444
        %2483 = vmatprep.subr.bf16.mxu0 0
        %2484 = vmatpush2.bf16.msra.mxu0 0
        %2485 = vmatprep.subr.bf16.mxu0 0
        %2486 = vmatpush2.bf16.msra.mxu0 0
        %2487 = vmatprep.subr.bf16.mxu0 0
        %2488 = vmatpush2.bf16.msra.mxu0 0
        %2489 = vmatprep.subr.bf16.mxu0 0
        %2490 = vmatpush2.bf16.msra.mxu0 0
        %2491 = vmatprep.subr.bf16.mxu0 0
        %2492 = vmatpush2.bf16.msra.mxu0 0
        %2493 = vmatprep.subr.bf16.mxu0 0
        %2494 = vmatpush2.bf16.msra.mxu0 0
        %2495 = vmatprep.subr.bf16.mxu0 0
        %2496 = vmatpush2.bf16.msra.mxu0 0
        %2497 = vmatprep.subr.bf16.mxu0 0
        %2498 = vmatpush2.bf16.msra.mxu0 0
        %2499 = vmatprep.mubr.bf16.mxu0 0
        %2500 = vmatmul.mubr.bf16.gmra.mxu0 %v2456
        %v2501 = vpop.f32.mrf.mxu0
        %v2502 = vadd.f32 0.0, %v2501
        %v2503 = vpop.f32.mrf.mxu0
        %v2504 = vpop.f32.mrf.mxu0
        %v2505 = vadd.f32 0.0, %v2504
        %v2506 = vpop.f32.mrf.mxu0
        %2507 = vmatprep.mubr.bf16.mxu0 0
        %2508 = vmatmul.mubr.bf16.gmra.mxu0 %v2459
        %v2509 = vpop.f32.mrf.mxu0
        %v2510 = vadd.f32 0.0, %v2509
        %v2511 = vpop.f32.mrf.mxu0
        %v2512 = vpop.f32.mrf.mxu0
        %v2513 = vadd.f32 0.0, %v2512
        %v2514 = vpop.f32.mrf.mxu0
        %2515 = vmatprep.mubr.bf16.mxu0 0
        %2516 = vmatmul.mubr.bf16.gmra.mxu0 %v2462
        %v2517 = vpop.f32.mrf.mxu0
        %v2518 = vadd.f32 0.0, %v2517
        %v2519 = vpop.f32.mrf.mxu0
        %v2520 = vpop.f32.mrf.mxu0
        %v2521 = vadd.f32 0.0, %v2520
        %v2522 = vpop.f32.mrf.mxu0
        %2523 = vmatprep.mubr.bf16.mxu0 0
        %2524 = vmatmul.mubr.bf16.gmra.mxu0 %v2465
        %v2525 = vpop.f32.mrf.mxu0
        %v2526 = vadd.f32 0.0, %v2525
        %v2527 = vpop.f32.mrf.mxu0
        %v2528 = vpop.f32.mrf.mxu0
        %v2529 = vadd.f32 0.0, %v2528
        %v2530 = vpop.f32.mrf.mxu0
        %2531 = vdwg.mxu0
        %v2532 = vpack.c.bf16 %v2505, %v2502
        %v2533 = vpack.c.bf16 %v2513, %v2510
        %v2534 = vpack.c.bf16 %v2521, %v2518
        %v2535 = vpack.c.bf16 %v2529, %v2526
        %v2540 = vunpack.c.l.b16 %v2532
        %v2541 = vunpack.c.h.b16 %v2532
        %v2542 = vunpack.c.l.b16 %v2533
        %v2543 = vunpack.c.h.b16 %v2533
        %v2544 = vunpack.c.l.b16 %v2534
        %v2545 = vunpack.c.h.b16 %v2534
        %v2546 = vunpack.c.l.b16 %v2535
        %v2547 = vunpack.c.h.b16 %v2535
        %v2548 = vpack.c.b16 %v2540, %v2540
        %v2549 = vpack.c.b16 %v2541, %v2541
        %v2550 = vpack.c.b16 %v2542, %v2542
        %v2551 = vpack.c.b16 %v2543, %v2543
        %v2552 = vpack.c.b16 %v2544, %v2544
        %v2553 = vpack.c.b16 %v2545, %v2545
        %v2554 = vpack.c.b16 %v2546, %v2546
        %v2555 = vpack.c.b16 %v2547, %v2547
        %2556 = vrot.lane.b32.xlu0 %v2548, 96
        %v2557 = vpop.permute.xlu0 %2556
        %2558 = vrot.lane.b32.xlu0 %v2549, 96
        %v2559 = vpop.permute.xlu0 %2558
        %2560 = vrot.lane.b32.xlu0 %v2550, 96
        %v2561 = vpop.permute.xlu0 %2560
        %2562 = vrot.lane.b32.xlu0 %v2551, 96
        %v2563 = vpop.permute.xlu0 %2562
        %2564 = vrot.lane.b32.xlu0 %v2552, 96
        %v2565 = vpop.permute.xlu0 %2564
        %2566 = vrot.lane.b32.xlu0 %v2553, 96
        %v2567 = vpop.permute.xlu0 %2566
        %2568 = vrot.lane.b32.xlu0 %v2554, 96
        %v2569 = vpop.permute.xlu0 %2568
        %2570 = vrot.lane.b32.xlu0 %v2555, 96
        %v2571 = vpop.permute.xlu0 %2570
        %vm2580 = vcmask 1044224
        %2581 = vst.msk [vmem:[#allocation3] sm:$0xf] %vm2580, %v2557
        %2582 = vst.msk [vmem:[#allocation3 + $0x4] sm:$0xf] %vm2580, %v2559
        %2583 = vst.msk [vmem:[#allocation3 + $0x8] sm:$0xf] %vm2580, %v2561
        %2584 = vst.msk [vmem:[#allocation3 + $0xc] sm:$0xf] %vm2580, %v2563
        %2585 = vst.msk [vmem:[#allocation3 + $0x10] sm:$0xf] %vm2580, %v2565
        %2586 = vst.msk [vmem:[#allocation3 + $0x14] sm:$0xf] %vm2580, %v2567
        %2587 = vst.msk [vmem:[#allocation3 + $0x18] sm:$0xf] %vm2580, %v2569
        %2588 = vst.msk [vmem:[#allocation3 + $0x1c] sm:$0xf] %vm2580, %v2571
        %v2589 = vld [vmem:[#allocation2 + $0x60] sm:$0xf]
        %v2590 = vld [vmem:[#allocation2 + $0x6c] sm:$0xf]
        %v2591 = vld [vmem:[#allocation2 + $0x78] sm:$0xf]
        %v2592 = vld [vmem:[#allocation2 + $0x84] sm:$0xf]
        %v2593 = vld [vmem:[#allocation2 + $0x90] sm:$0xf]
        %v2594 = vld [vmem:[#allocation2 + $0x9c] sm:$0xf]
        %v2595 = vld [vmem:[#allocation2 + $0xa8] sm:$0xf]
        %v2596 = vld [vmem:[#allocation2 + $0xb4] sm:$0xf]
        %v2597 = vld [vmem:[#allocation2 + $0x64] sm:$0xf]
        %v2598 = vld [vmem:[#allocation2 + $0x70] sm:$0xf]
        %v2599 = vld [vmem:[#allocation2 + $0x7c] sm:$0xf]
        %v2600 = vld [vmem:[#allocation2 + $0x88] sm:$0xf]
        %v2601 = vld [vmem:[#allocation2 + $0x94] sm:$0xf]
        %v2602 = vld [vmem:[#allocation2 + $0xa0] sm:$0xf]
        %v2603 = vld [vmem:[#allocation2 + $0xac] sm:$0xf]
        %v2604 = vld [vmem:[#allocation2 + $0xb8] sm:$0xf]
        %v2605 = vld [vmem:[#allocation2 + $0x68] sm:$0xf]
        %v2606 = vld [vmem:[#allocation2 + $0x74] sm:$0xf]
        %v2607 = vld [vmem:[#allocation2 + $0x80] sm:$0xf]
        %v2608 = vld [vmem:[#allocation2 + $0x8c] sm:$0xf]
        %v2609 = vld [vmem:[#allocation2 + $0x98] sm:$0xf]
        %v2610 = vld [vmem:[#allocation2 + $0xa4] sm:$0xf]
        %v2611 = vld [vmem:[#allocation2 + $0xb0] sm:$0xf]
        %v2612 = vld [vmem:[#allocation2 + $0xbc] sm:$0xf]
        %v2621 = vunpack.c.l.b16 %v2589
        %v2622 = vunpack.c.l.b16 %v2590
        %v2623 = vunpack.c.l.b16 %v2591
        %v2624 = vunpack.c.l.b16 %v2592
        %v2625 = vunpack.c.l.b16 %v2593
        %v2626 = vunpack.c.l.b16 %v2594
        %v2627 = vunpack.c.l.b16 %v2595
        %v2628 = vunpack.c.l.b16 %v2596
        %v2629 = vpack.c.b16 %v2622, %v2621
        %v2630 = vpack.c.b16 %v2624, %v2623
        %v2631 = vpack.c.b16 %v2626, %v2625
        %v2632 = vpack.c.b16 %v2628, %v2627
        %v2641 = vunpack.c.l.b16 %v2597
        %v2642 = vunpack.c.l.b16 %v2598
        %v2643 = vunpack.c.l.b16 %v2599
        %v2644 = vunpack.c.l.b16 %v2600
        %v2645 = vunpack.c.l.b16 %v2601
        %v2646 = vunpack.c.l.b16 %v2602
        %v2647 = vunpack.c.l.b16 %v2603
        %v2648 = vunpack.c.l.b16 %v2604
        %v2649 = vpack.c.b16 %v2642, %v2641
        %v2650 = vpack.c.b16 %v2644, %v2643
        %v2651 = vpack.c.b16 %v2646, %v2645
        %v2652 = vpack.c.b16 %v2648, %v2647
        %v2654 = vsel %vm983, %v2629, 0
        %v2657 = vsel %vm983, %v2630, 0
        %v2660 = vsel %vm983, %v2631, 0
        %v2663 = vsel %vm983, %v2632, 0
        %v2666 = vsel %vm983, %v2649, 0
        %v2669 = vsel %vm983, %v2650, 0
        %v2672 = vsel %vm983, %v2651, 0
        %v2675 = vsel %vm983, %v2652, 0
        %2677 = vmatprep.subr.bf16.mxu0 0
        %2678 = vmatpush1.bf16.xpose.msra.mxu0 0
        %2679 = vmatprep.subr.bf16.mxu0 0
        %2680 = vmatpush1.bf16.xpose.msra.mxu0 0
        %2681 = vmatprep.subr.bf16.mxu0 0
        %2682 = vmatpush1.bf16.xpose.msra.mxu0 0
        %2683 = vmatprep.subr.bf16.mxu0 0
        %2684 = vmatpush1.bf16.xpose.msra.mxu0 0
        %2685 = vmatprep.subr.bf16.mxu0 0
        %2686 = vmatpush1.bf16.xpose.msra.mxu0 %v2675
        %2687 = vmatprep.subr.bf16.mxu0 0
        %2688 = vmatpush1.bf16.xpose.msra.mxu0 %v2672
        %2689 = vmatprep.subr.bf16.mxu0 0
        %2690 = vmatpush1.bf16.xpose.msra.mxu0 %v2669
        %2691 = vmatprep.subr.bf16.mxu0 0
        %2692 = vmatpush1.bf16.xpose.msra.mxu0 %v2666
        %2693 = vmatprep.subr.bf16.mxu0 0
        %2694 = vmatpush2.bf16.xpose.msra.mxu0 0
        %2695 = vmatprep.subr.bf16.mxu0 0
        %2696 = vmatpush2.bf16.xpose.msra.mxu0 0
        %2697 = vmatprep.subr.bf16.mxu0 0
        %2698 = vmatpush2.bf16.xpose.msra.mxu0 0
        %2699 = vmatprep.subr.bf16.mxu0 0
        %2700 = vmatpush2.bf16.xpose.msra.mxu0 0
        %2701 = vmatprep.subr.bf16.mxu0 0
        %2702 = vmatpush2.bf16.xpose.msra.mxu0 0
        %2703 = vmatprep.subr.bf16.mxu0 0
        %2704 = vmatpush2.bf16.xpose.msra.mxu0 0
        %2705 = vmatprep.subr.bf16.mxu0 0
        %2706 = vmatpush2.bf16.xpose.msra.mxu0 0
        %2707 = vmatprep.subr.bf16.mxu0 0
        %2708 = vmatpush2.bf16.xpose.msra.mxu0 0
        %2709 = vmatprep.mubr.bf16.mxu0 0
        %2710 = vmatmul.mubr.bf16.gmra.mxu0 %v2654
        %v2711 = vpop.f32.mrf.mxu0
        %v2712 = vadd.f32 0.0, %v2711
        %v2713 = vpop.f32.mrf.mxu0
        %v2714 = vpop.f32.mrf.mxu0
        %v2715 = vadd.f32 0.0, %v2714
        %v2716 = vpop.f32.mrf.mxu0
        %2717 = vmatprep.mubr.bf16.mxu0 0
        %2718 = vmatmul.mubr.bf16.gmra.mxu0 %v2657
        %v2719 = vpop.f32.mrf.mxu0
        %v2720 = vadd.f32 0.0, %v2719
        %v2721 = vpop.f32.mrf.mxu0
        %v2722 = vpop.f32.mrf.mxu0
        %v2723 = vadd.f32 0.0, %v2722
        %v2724 = vpop.f32.mrf.mxu0
        %2725 = vmatprep.mubr.bf16.mxu0 0
        %2726 = vmatmul.mubr.bf16.gmra.mxu0 %v2660
        %v2727 = vpop.f32.mrf.mxu0
        %v2728 = vadd.f32 0.0, %v2727
        %v2729 = vpop.f32.mrf.mxu0
        %v2730 = vpop.f32.mrf.mxu0
        %v2731 = vadd.f32 0.0, %v2730
        %v2732 = vpop.f32.mrf.mxu0
        %2733 = vmatprep.mubr.bf16.mxu0 0
        %2734 = vmatmul.mubr.bf16.gmra.mxu0 %v2663
        %v2735 = vpop.f32.mrf.mxu0
        %v2736 = vadd.f32 0.0, %v2735
        %v2737 = vpop.f32.mrf.mxu0
        %v2738 = vpop.f32.mrf.mxu0
        %v2739 = vadd.f32 0.0, %v2738
        %v2740 = vpop.f32.mrf.mxu0
        %2741 = vdwg.mxu0
        %v2742 = vsel %vm1073, %v2712, -inf
        %2743 = vmax.xlane.f32.xlu0 %v2742
        %v2744 = vpop.xlane.xlu0 %2743
        %v2745 = vsel %vm1073, %v2715, -inf
        %2746 = vmax.xlane.f32.xlu0 %v2745
        %v2747 = vpop.xlane.xlu0 %2746
        %v2748 = vsel %vm1073, %v2720, -inf
        %2749 = vmax.xlane.f32.xlu0 %v2748
        %v2750 = vpop.xlane.xlu0 %2749
        %v2751 = vsel %vm1073, %v2723, -inf
        %2752 = vmax.xlane.f32.xlu0 %v2751
        %v2753 = vpop.xlane.xlu0 %2752
        %v2754 = vsel %vm1073, %v2728, -inf
        %2755 = vmax.xlane.f32.xlu0 %v2754
        %v2756 = vpop.xlane.xlu0 %2755
        %v2757 = vsel %vm1073, %v2731, -inf
        %2758 = vmax.xlane.f32.xlu0 %v2757
        %v2759 = vpop.xlane.xlu0 %2758
        %v2760 = vsel %vm1073, %v2736, -inf
        %2761 = vmax.xlane.f32.xlu0 %v2760
        %v2762 = vpop.xlane.xlu0 %2761
        %v2763 = vsel %vm1073, %v2739, -inf
        %2764 = vmax.xlane.f32.xlu0 %v2763
        %v2765 = vpop.xlane.xlu0 %2764
        %v2766 = vsub.f32 %v2712, %v2744
        %v2767 = vsub.f32 %v2715, %v2747
        %v2768 = vsub.f32 %v2720, %v2750
        %v2769 = vsub.f32 %v2723, %v2753
        %v2770 = vsub.f32 %v2728, %v2756
        %v2771 = vsub.f32 %v2731, %v2759
        %v2772 = vsub.f32 %v2736, %v2762
        %v2773 = vsub.f32 %v2739, %v2765
        %v2774 = vmul.f32 %v2766, 1.442695
        %v2775 = vpow.pop %v2774
        %v2776 = vmul.f32 %v2767, 1.442695
        %v2777 = vpow.pop %v2776
        %v2778 = vmul.f32 %v2768, 1.442695
        %v2779 = vpow.pop %v2778
        %v2780 = vmul.f32 %v2769, 1.442695
        %v2781 = vpow.pop %v2780
        %v2782 = vmul.f32 %v2770, 1.442695
        %v2783 = vpow.pop %v2782
        %v2784 = vmul.f32 %v2771, 1.442695
        %v2785 = vpow.pop %v2784
        %v2786 = vmul.f32 %v2772, 1.442695
        %v2787 = vpow.pop %v2786
        %v2788 = vmul.f32 %v2773, 1.442695
        %v2789 = vpow.pop %v2788
        %v2790 = vsel %vm1073, %v2775, 0.0
        %2791 = vadd.xlane.f32.xlu0 %v2790
        %v2792 = vpop.xlane.xlu0 %2791
        %v2793 = vsel %vm1073, %v2777, 0.0
        %2794 = vadd.xlane.f32.xlu0 %v2793
        %v2795 = vpop.xlane.xlu0 %2794
        %v2796 = vsel %vm1073, %v2779, 0.0
        %2797 = vadd.xlane.f32.xlu0 %v2796
        %v2798 = vpop.xlane.xlu0 %2797
        %v2799 = vsel %vm1073, %v2781, 0.0
        %2800 = vadd.xlane.f32.xlu0 %v2799
        %v2801 = vpop.xlane.xlu0 %2800
        %v2802 = vsel %vm1073, %v2783, 0.0
        %2803 = vadd.xlane.f32.xlu0 %v2802
        %v2804 = vpop.xlane.xlu0 %2803
        %v2805 = vsel %vm1073, %v2785, 0.0
        %2806 = vadd.xlane.f32.xlu0 %v2805
        %v2807 = vpop.xlane.xlu0 %2806
        %v2808 = vsel %vm1073, %v2787, 0.0
        %2809 = vadd.xlane.f32.xlu0 %v2808
        %v2810 = vpop.xlane.xlu0 %2809
        %v2811 = vsel %vm1073, %v2789, 0.0
        %2812 = vadd.xlane.f32.xlu0 %v2811
        %v2813 = vpop.xlane.xlu0 %2812
        %v2814 = vrcp.pop %v2792
        %v2815 = vrcp.pop %v2795
        %v2816 = vrcp.pop %v2798
        %v2817 = vrcp.pop %v2801
        %v2818 = vrcp.pop %v2804
        %v2819 = vrcp.pop %v2807
        %v2820 = vrcp.pop %v2810
        %v2821 = vrcp.pop %v2813
        %v2822 = vmul.f32 %v2775, %v2814
        %v2823 = vmul.f32 %v2777, %v2815
        %v2824 = vmul.f32 %v2779, %v2816
        %v2825 = vmul.f32 %v2781, %v2817
        %v2826 = vmul.f32 %v2783, %v2818
        %v2827 = vmul.f32 %v2785, %v2819
        %v2828 = vmul.f32 %v2787, %v2820
        %v2829 = vmul.f32 %v2789, %v2821
        %v2830 = vpack.c.bf16 %v2823, %v2822
        %v2831 = vpack.c.bf16 %v2825, %v2824
        %v2832 = vpack.c.bf16 %v2827, %v2826
        %v2833 = vpack.c.bf16 %v2829, %v2828
        %v2842 = vunpack.c.l.b16 %v2605
        %v2843 = vunpack.c.l.b16 %v2606
        %v2844 = vunpack.c.l.b16 %v2607
        %v2845 = vunpack.c.l.b16 %v2608
        %v2846 = vunpack.c.l.b16 %v2609
        %v2847 = vunpack.c.l.b16 %v2610
        %v2848 = vunpack.c.l.b16 %v2611
        %v2849 = vunpack.c.l.b16 %v2612
        %v2850 = vpack.c.b16 %v2843, %v2842
        %v2851 = vpack.c.b16 %v2845, %v2844
        %v2852 = vpack.c.b16 %v2847, %v2846
        %v2853 = vpack.c.b16 %v2849, %v2848
        %v2859 = vsel %vm1073, %v2830, 0
        %v2862 = vsel %vm1073, %v2831, 0
        %v2865 = vsel %vm1073, %v2832, 0
        %v2868 = vsel %vm1073, %v2833, 0
        %2870 = vmatprep.subr.bf16.mxu0 0
        %2871 = vmatpush1.bf16.msra.mxu0 0
        %2872 = vmatprep.subr.bf16.mxu0 0
        %2873 = vmatpush1.bf16.msra.mxu0 0
        %2874 = vmatprep.subr.bf16.mxu0 0
        %2875 = vmatpush1.bf16.msra.mxu0 0
        %2876 = vmatprep.subr.bf16.mxu0 0
        %2877 = vmatpush1.bf16.msra.mxu0 0
        %2878 = vmatprep.subr.bf16.mxu0 0
        %2879 = vmatpush1.bf16.msra.mxu0 %v2853
        %2880 = vmatprep.subr.bf16.mxu0 0
        %2881 = vmatpush1.bf16.msra.mxu0 %v2852
        %2882 = vmatprep.subr.bf16.mxu0 0
        %2883 = vmatpush1.bf16.msra.mxu0 %v2851
        %2884 = vmatprep.subr.bf16.mxu0 0
        %2885 = vmatpush1.bf16.msra.mxu0 %v2850
        %2886 = vmatprep.subr.bf16.mxu0 0
        %2887 = vmatpush2.bf16.msra.mxu0 0
        %2888 = vmatprep.subr.bf16.mxu0 0
        %2889 = vmatpush2.bf16.msra.mxu0 0
        %2890 = vmatprep.subr.bf16.mxu0 0
        %2891 = vmatpush2.bf16.msra.mxu0 0
        %2892 = vmatprep.subr.bf16.mxu0 0
        %2893 = vmatpush2.bf16.msra.mxu0 0
        %2894 = vmatprep.subr.bf16.mxu0 0
        %2895 = vmatpush2.bf16.msra.mxu0 0
        %2896 = vmatprep.subr.bf16.mxu0 0
        %2897 = vmatpush2.bf16.msra.mxu0 0
        %2898 = vmatprep.subr.bf16.mxu0 0
        %2899 = vmatpush2.bf16.msra.mxu0 0
        %2900 = vmatprep.subr.bf16.mxu0 0
        %2901 = vmatpush2.bf16.msra.mxu0 0
        %2902 = vmatprep.mubr.bf16.mxu0 0
        %2903 = vmatmul.mubr.bf16.gmra.mxu0 %v2859
        %v2904 = vpop.f32.mrf.mxu0
        %v2905 = vadd.f32 0.0, %v2904
        %v2906 = vpop.f32.mrf.mxu0
        %v2907 = vpop.f32.mrf.mxu0
        %v2908 = vadd.f32 0.0, %v2907
        %v2909 = vpop.f32.mrf.mxu0
        %2910 = vmatprep.mubr.bf16.mxu0 0
        %2911 = vmatmul.mubr.bf16.gmra.mxu0 %v2862
        %v2912 = vpop.f32.mrf.mxu0
        %v2913 = vadd.f32 0.0, %v2912
        %v2914 = vpop.f32.mrf.mxu0
        %v2915 = vpop.f32.mrf.mxu0
        %v2916 = vadd.f32 0.0, %v2915
        %v2917 = vpop.f32.mrf.mxu0
        %2918 = vmatprep.mubr.bf16.mxu0 0
        %2919 = vmatmul.mubr.bf16.gmra.mxu0 %v2865
        %v2920 = vpop.f32.mrf.mxu0
        %v2921 = vadd.f32 0.0, %v2920
        %v2922 = vpop.f32.mrf.mxu0
        %v2923 = vpop.f32.mrf.mxu0
        %v2924 = vadd.f32 0.0, %v2923
        %v2925 = vpop.f32.mrf.mxu0
        %2926 = vmatprep.mubr.bf16.mxu0 0
        %2927 = vmatmul.mubr.bf16.gmra.mxu0 %v2868
        %v2928 = vpop.f32.mrf.mxu0
        %v2929 = vadd.f32 0.0, %v2928
        %v2930 = vpop.f32.mrf.mxu0
        %v2931 = vpop.f32.mrf.mxu0
        %v2932 = vadd.f32 0.0, %v2931
        %v2933 = vpop.f32.mrf.mxu0
        %2934 = vdwg.mxu0
        %v2935 = vpack.c.bf16 %v2908, %v2905
        %v2936 = vpack.c.bf16 %v2916, %v2913
        %v2937 = vpack.c.bf16 %v2924, %v2921
        %v2938 = vpack.c.bf16 %v2932, %v2929
        %v2943 = vunpack.c.l.b16 %v2935
        %v2944 = vunpack.c.h.b16 %v2935
        %v2945 = vunpack.c.l.b16 %v2936
        %v2946 = vunpack.c.h.b16 %v2936
        %v2947 = vunpack.c.l.b16 %v2937
        %v2948 = vunpack.c.h.b16 %v2937
        %v2949 = vunpack.c.l.b16 %v2938
        %v2950 = vunpack.c.h.b16 %v2938
        %v2951 = vpack.c.b16 %v2943, %v2943
        %v2952 = vpack.c.b16 %v2944, %v2944
        %v2953 = vpack.c.b16 %v2945, %v2945
        %v2954 = vpack.c.b16 %v2946, %v2946
        %v2955 = vpack.c.b16 %v2947, %v2947
        %v2956 = vpack.c.b16 %v2948, %v2948
        %v2957 = vpack.c.b16 %v2949, %v2949
        %v2958 = vpack.c.b16 %v2950, %v2950
        %2967 = vst.msk [vmem:[#allocation3 + $0x20] sm:$0xf] %vm1299, %v2951
        %2968 = vst.msk [vmem:[#allocation3 + $0x24] sm:$0xf] %vm1299, %v2952
        %2969 = vst.msk [vmem:[#allocation3 + $0x28] sm:$0xf] %vm1299, %v2953
        %2970 = vst.msk [vmem:[#allocation3 + $0x2c] sm:$0xf] %vm1299, %v2954
        %2971 = vst.msk [vmem:[#allocation3 + $0x30] sm:$0xf] %vm1299, %v2955
        %2972 = vst.msk [vmem:[#allocation3 + $0x34] sm:$0xf] %vm1299, %v2956
        %2973 = vst.msk [vmem:[#allocation3 + $0x38] sm:$0xf] %vm1299, %v2957
        %2974 = vst.msk [vmem:[#allocation3 + $0x3c] sm:$0xf] %vm1299, %v2958
        %v2975 = vld [vmem:[#allocation2 + $0x60] sm:$0xf]
        %v2976 = vld [vmem:[#allocation2 + $0x6c] sm:$0xf]
        %v2977 = vld [vmem:[#allocation2 + $0x78] sm:$0xf]
        %v2978 = vld [vmem:[#allocation2 + $0x84] sm:$0xf]
        %v2979 = vld [vmem:[#allocation2 + $0x90] sm:$0xf]
        %v2980 = vld [vmem:[#allocation2 + $0x9c] sm:$0xf]
        %v2981 = vld [vmem:[#allocation2 + $0xa8] sm:$0xf]
        %v2982 = vld [vmem:[#allocation2 + $0xb4] sm:$0xf]
        %v2983 = vld [vmem:[#allocation2 + $0x64] sm:$0xf]
        %v2984 = vld [vmem:[#allocation2 + $0x70] sm:$0xf]
        %v2985 = vld [vmem:[#allocation2 + $0x7c] sm:$0xf]
        %v2986 = vld [vmem:[#allocation2 + $0x88] sm:$0xf]
        %v2987 = vld [vmem:[#allocation2 + $0x94] sm:$0xf]
        %v2988 = vld [vmem:[#allocation2 + $0xa0] sm:$0xf]
        %v2989 = vld [vmem:[#allocation2 + $0xac] sm:$0xf]
        %v2990 = vld [vmem:[#allocation2 + $0xb8] sm:$0xf]
        %v2991 = vld [vmem:[#allocation2 + $0x68] sm:$0xf]
        %v2992 = vld [vmem:[#allocation2 + $0x74] sm:$0xf]
        %v2993 = vld [vmem:[#allocation2 + $0x80] sm:$0xf]
        %v2994 = vld [vmem:[#allocation2 + $0x8c] sm:$0xf]
        %v2995 = vld [vmem:[#allocation2 + $0x98] sm:$0xf]
        %v2996 = vld [vmem:[#allocation2 + $0xa4] sm:$0xf]
        %v2997 = vld [vmem:[#allocation2 + $0xb0] sm:$0xf]
        %v2998 = vld [vmem:[#allocation2 + $0xbc] sm:$0xf]
        %v3007 = vunpack.c.l.b16 %v2975
        %v3008 = vunpack.c.l.b16 %v2976
        %v3009 = vunpack.c.l.b16 %v2977
        %v3010 = vunpack.c.l.b16 %v2978
        %v3011 = vunpack.c.l.b16 %v2979
        %v3012 = vunpack.c.l.b16 %v2980
        %v3013 = vunpack.c.l.b16 %v2981
        %v3014 = vunpack.c.l.b16 %v2982
        %v3015 = vpack.c.b16 %v3008, %v3007
        %v3016 = vpack.c.b16 %v3010, %v3009
        %v3017 = vpack.c.b16 %v3012, %v3011
        %v3018 = vpack.c.b16 %v3014, %v3013
        %3019 = vrot.lane.b32.xlu0 %v3015, 96
        %v3020 = vpop.permute.xlu0 %3019
        %3021 = vrot.lane.b32.xlu0 %v3016, 96
        %v3022 = vpop.permute.xlu0 %3021
        %3023 = vrot.lane.b32.xlu0 %v3017, 96
        %v3024 = vpop.permute.xlu0 %3023
        %3025 = vrot.lane.b32.xlu0 %v3018, 96
        %v3026 = vpop.permute.xlu0 %3025
        %v3035 = vunpack.c.l.b16 %v2983
        %v3036 = vunpack.c.l.b16 %v2984
        %v3037 = vunpack.c.l.b16 %v2985
        %v3038 = vunpack.c.l.b16 %v2986
        %v3039 = vunpack.c.l.b16 %v2987
        %v3040 = vunpack.c.l.b16 %v2988
        %v3041 = vunpack.c.l.b16 %v2989
        %v3042 = vunpack.c.l.b16 %v2990
        %v3043 = vpack.c.b16 %v3036, %v3035
        %v3044 = vpack.c.b16 %v3038, %v3037
        %v3045 = vpack.c.b16 %v3040, %v3039
        %v3046 = vpack.c.b16 %v3042, %v3041
        %3047 = vrot.lane.b32.xlu0 %v3043, 96
        %v3048 = vpop.permute.xlu0 %3047
        %3049 = vrot.lane.b32.xlu0 %v3044, 96
        %v3050 = vpop.permute.xlu0 %3049
        %3051 = vrot.lane.b32.xlu0 %v3045, 96
        %v3052 = vpop.permute.xlu0 %3051
        %3053 = vrot.lane.b32.xlu0 %v3046, 96
        %v3054 = vpop.permute.xlu0 %3053
        %v3056 = vsel %vm983, %v3020, 0
        %v3059 = vsel %vm983, %v3022, 0
        %v3062 = vsel %vm983, %v3024, 0
        %v3065 = vsel %vm983, %v3026, 0
        %v3068 = vsel %vm983, %v3048, 0
        %v3071 = vsel %vm983, %v3050, 0
        %v3074 = vsel %vm983, %v3052, 0
        %v3077 = vsel %vm983, %v3054, 0
        %3079 = vmatprep.subr.bf16.mxu0 0
        %3080 = vmatpush1.bf16.xpose.msra.mxu0 0
        %3081 = vmatprep.subr.bf16.mxu0 0
        %3082 = vmatpush1.bf16.xpose.msra.mxu0 0
        %3083 = vmatprep.subr.bf16.mxu0 0
        %3084 = vmatpush1.bf16.xpose.msra.mxu0 0
        %3085 = vmatprep.subr.bf16.mxu0 0
        %3086 = vmatpush1.bf16.xpose.msra.mxu0 0
        %3087 = vmatprep.subr.bf16.mxu0 0
        %3088 = vmatpush1.bf16.xpose.msra.mxu0 %v3077
        %3089 = vmatprep.subr.bf16.mxu0 0
        %3090 = vmatpush1.bf16.xpose.msra.mxu0 %v3074
        %3091 = vmatprep.subr.bf16.mxu0 0
        %3092 = vmatpush1.bf16.xpose.msra.mxu0 %v3071
        %3093 = vmatprep.subr.bf16.mxu0 0
        %3094 = vmatpush1.bf16.xpose.msra.mxu0 %v3068
        %3095 = vmatprep.subr.bf16.mxu0 0
        %3096 = vmatpush2.bf16.xpose.msra.mxu0 0
        %3097 = vmatprep.subr.bf16.mxu0 0
        %3098 = vmatpush2.bf16.xpose.msra.mxu0 0
        %3099 = vmatprep.subr.bf16.mxu0 0
        %3100 = vmatpush2.bf16.xpose.msra.mxu0 0
        %3101 = vmatprep.subr.bf16.mxu0 0
        %3102 = vmatpush2.bf16.xpose.msra.mxu0 0
        %3103 = vmatprep.subr.bf16.mxu0 0
        %3104 = vmatpush2.bf16.xpose.msra.mxu0 0
        %3105 = vmatprep.subr.bf16.mxu0 0
        %3106 = vmatpush2.bf16.xpose.msra.mxu0 0
        %3107 = vmatprep.subr.bf16.mxu0 0
        %3108 = vmatpush2.bf16.xpose.msra.mxu0 0
        %3109 = vmatprep.subr.bf16.mxu0 0
        %3110 = vmatpush2.bf16.xpose.msra.mxu0 0
        %3111 = vmatprep.mubr.bf16.mxu0 0
        %3112 = vmatmul.mubr.bf16.gmra.mxu0 %v3056
        %v3113 = vpop.f32.mrf.mxu0
        %v3114 = vadd.f32 0.0, %v3113
        %v3115 = vpop.f32.mrf.mxu0
        %v3116 = vpop.f32.mrf.mxu0
        %v3117 = vadd.f32 0.0, %v3116
        %v3118 = vpop.f32.mrf.mxu0
        %3119 = vmatprep.mubr.bf16.mxu0 0
        %3120 = vmatmul.mubr.bf16.gmra.mxu0 %v3059
        %v3121 = vpop.f32.mrf.mxu0
        %v3122 = vadd.f32 0.0, %v3121
        %v3123 = vpop.f32.mrf.mxu0
        %v3124 = vpop.f32.mrf.mxu0
        %v3125 = vadd.f32 0.0, %v3124
        %v3126 = vpop.f32.mrf.mxu0
        %3127 = vmatprep.mubr.bf16.mxu0 0
        %3128 = vmatmul.mubr.bf16.gmra.mxu0 %v3062
        %v3129 = vpop.f32.mrf.mxu0
        %v3130 = vadd.f32 0.0, %v3129
        %v3131 = vpop.f32.mrf.mxu0
        %v3132 = vpop.f32.mrf.mxu0
        %v3133 = vadd.f32 0.0, %v3132
        %v3134 = vpop.f32.mrf.mxu0
        %3135 = vmatprep.mubr.bf16.mxu0 0
        %3136 = vmatmul.mubr.bf16.gmra.mxu0 %v3065
        %v3137 = vpop.f32.mrf.mxu0
        %v3138 = vadd.f32 0.0, %v3137
        %v3139 = vpop.f32.mrf.mxu0
        %v3140 = vpop.f32.mrf.mxu0
        %v3141 = vadd.f32 0.0, %v3140
        %v3142 = vpop.f32.mrf.mxu0
        %3143 = vdwg.mxu0
        %v3144 = vsel %vm1073, %v3114, -inf
        %3145 = vmax.xlane.f32.xlu0 %v3144
        %v3146 = vpop.xlane.xlu0 %3145
        %v3147 = vsel %vm1073, %v3117, -inf
        %3148 = vmax.xlane.f32.xlu0 %v3147
        %v3149 = vpop.xlane.xlu0 %3148
        %v3150 = vsel %vm1073, %v3122, -inf
        %3151 = vmax.xlane.f32.xlu0 %v3150
        %v3152 = vpop.xlane.xlu0 %3151
        %v3153 = vsel %vm1073, %v3125, -inf
        %3154 = vmax.xlane.f32.xlu0 %v3153
        %v3155 = vpop.xlane.xlu0 %3154
        %v3156 = vsel %vm1073, %v3130, -inf
        %3157 = vmax.xlane.f32.xlu0 %v3156
        %v3158 = vpop.xlane.xlu0 %3157
        %v3159 = vsel %vm1073, %v3133, -inf
        %3160 = vmax.xlane.f32.xlu0 %v3159
        %v3161 = vpop.xlane.xlu0 %3160
        %v3162 = vsel %vm1073, %v3138, -inf
        %3163 = vmax.xlane.f32.xlu0 %v3162
        %v3164 = vpop.xlane.xlu0 %3163
        %v3165 = vsel %vm1073, %v3141, -inf
        %3166 = vmax.xlane.f32.xlu0 %v3165
        %v3167 = vpop.xlane.xlu0 %3166
        %v3168 = vsub.f32 %v3114, %v3146
        %v3169 = vsub.f32 %v3117, %v3149
        %v3170 = vsub.f32 %v3122, %v3152
        %v3171 = vsub.f32 %v3125, %v3155
        %v3172 = vsub.f32 %v3130, %v3158
        %v3173 = vsub.f32 %v3133, %v3161
        %v3174 = vsub.f32 %v3138, %v3164
        %v3175 = vsub.f32 %v3141, %v3167
        %v3176 = vmul.f32 %v3168, 1.442695
        %v3177 = vpow.pop %v3176
        %v3178 = vmul.f32 %v3169, 1.442695
        %v3179 = vpow.pop %v3178
        %v3180 = vmul.f32 %v3170, 1.442695
        %v3181 = vpow.pop %v3180
        %v3182 = vmul.f32 %v3171, 1.442695
        %v3183 = vpow.pop %v3182
        %v3184 = vmul.f32 %v3172, 1.442695
        %v3185 = vpow.pop %v3184
        %v3186 = vmul.f32 %v3173, 1.442695
        %v3187 = vpow.pop %v3186
        %v3188 = vmul.f32 %v3174, 1.442695
        %v3189 = vpow.pop %v3188
        %v3190 = vmul.f32 %v3175, 1.442695
        %v3191 = vpow.pop %v3190
        %v3192 = vsel %vm1073, %v3177, 0.0
        %3193 = vadd.xlane.f32.xlu0 %v3192
        %v3194 = vpop.xlane.xlu0 %3193
        %v3195 = vsel %vm1073, %v3179, 0.0
        %3196 = vadd.xlane.f32.xlu0 %v3195
        %v3197 = vpop.xlane.xlu0 %3196
        %v3198 = vsel %vm1073, %v3181, 0.0
        %3199 = vadd.xlane.f32.xlu0 %v3198
        %v3200 = vpop.xlane.xlu0 %3199
        %v3201 = vsel %vm1073, %v3183, 0.0
        %3202 = vadd.xlane.f32.xlu0 %v3201
        %v3203 = vpop.xlane.xlu0 %3202
        %v3204 = vsel %vm1073, %v3185, 0.0
        %3205 = vadd.xlane.f32.xlu0 %v3204
        %v3206 = vpop.xlane.xlu0 %3205
        %v3207 = vsel %vm1073, %v3187, 0.0
        %3208 = vadd.xlane.f32.xlu0 %v3207
        %v3209 = vpop.xlane.xlu0 %3208
        %v3210 = vsel %vm1073, %v3189, 0.0
        %3211 = vadd.xlane.f32.xlu0 %v3210
        %v3212 = vpop.xlane.xlu0 %3211
        %v3213 = vsel %vm1073, %v3191, 0.0
        %3214 = vadd.xlane.f32.xlu0 %v3213
        %v3215 = vpop.xlane.xlu0 %3214
        %v3216 = vrcp.pop %v3194
        %v3217 = vrcp.pop %v3197
        %v3218 = vrcp.pop %v3200
        %v3219 = vrcp.pop %v3203
        %v3220 = vrcp.pop %v3206
        %v3221 = vrcp.pop %v3209
        %v3222 = vrcp.pop %v3212
        %v3223 = vrcp.pop %v3215
        %v3224 = vmul.f32 %v3177, %v3216
        %v3225 = vmul.f32 %v3179, %v3217
        %v3226 = vmul.f32 %v3181, %v3218
        %v3227 = vmul.f32 %v3183, %v3219
        %v3228 = vmul.f32 %v3185, %v3220
        %v3229 = vmul.f32 %v3187, %v3221
        %v3230 = vmul.f32 %v3189, %v3222
        %v3231 = vmul.f32 %v3191, %v3223
        %v3232 = vpack.c.bf16 %v3225, %v3224
        %v3233 = vpack.c.bf16 %v3227, %v3226
        %v3234 = vpack.c.bf16 %v3229, %v3228
        %v3235 = vpack.c.bf16 %v3231, %v3230
        %v3244 = vunpack.c.l.b16 %v2991
        %v3245 = vunpack.c.l.b16 %v2992
        %v3246 = vunpack.c.l.b16 %v2993
        %v3247 = vunpack.c.l.b16 %v2994
        %v3248 = vunpack.c.l.b16 %v2995
        %v3249 = vunpack.c.l.b16 %v2996
        %v3250 = vunpack.c.l.b16 %v2997
        %v3251 = vunpack.c.l.b16 %v2998
        %v3252 = vpack.c.b16 %v3245, %v3244
        %v3253 = vpack.c.b16 %v3247, %v3246
        %v3254 = vpack.c.b16 %v3249, %v3248
        %v3255 = vpack.c.b16 %v3251, %v3250
        %3256 = vrot.lane.b32.xlu0 %v3252, 96
        %v3257 = vpop.permute.xlu0 %3256
        %3258 = vrot.lane.b32.xlu0 %v3253, 96
        %v3259 = vpop.permute.xlu0 %3258
        %3260 = vrot.lane.b32.xlu0 %v3254, 96
        %v3261 = vpop.permute.xlu0 %3260
        %3262 = vrot.lane.b32.xlu0 %v3255, 96
        %v3263 = vpop.permute.xlu0 %3262
        %v3269 = vsel %vm1073, %v3232, 0
        %v3272 = vsel %vm1073, %v3233, 0
        %v3275 = vsel %vm1073, %v3234, 0
        %v3278 = vsel %vm1073, %v3235, 0
        %3280 = vmatprep.subr.bf16.mxu0 0
        %3281 = vmatpush1.bf16.msra.mxu0 0
        %3282 = vmatprep.subr.bf16.mxu0 0
        %3283 = vmatpush1.bf16.msra.mxu0 0
        %3284 = vmatprep.subr.bf16.mxu0 0
        %3285 = vmatpush1.bf16.msra.mxu0 0
        %3286 = vmatprep.subr.bf16.mxu0 0
        %3287 = vmatpush1.bf16.msra.mxu0 0
        %3288 = vmatprep.subr.bf16.mxu0 0
        %3289 = vmatpush1.bf16.msra.mxu0 %v3263
        %3290 = vmatprep.subr.bf16.mxu0 0
        %3291 = vmatpush1.bf16.msra.mxu0 %v3261
        %3292 = vmatprep.subr.bf16.mxu0 0
        %3293 = vmatpush1.bf16.msra.mxu0 %v3259
        %3294 = vmatprep.subr.bf16.mxu0 0
        %3295 = vmatpush1.bf16.msra.mxu0 %v3257
        %3296 = vmatprep.subr.bf16.mxu0 0
        %3297 = vmatpush2.bf16.msra.mxu0 0
        %3298 = vmatprep.subr.bf16.mxu0 0
        %3299 = vmatpush2.bf16.msra.mxu0 0
        %3300 = vmatprep.subr.bf16.mxu0 0
        %3301 = vmatpush2.bf16.msra.mxu0 0
        %3302 = vmatprep.subr.bf16.mxu0 0
        %3303 = vmatpush2.bf16.msra.mxu0 0
        %3304 = vmatprep.subr.bf16.mxu0 0
        %3305 = vmatpush2.bf16.msra.mxu0 0
        %3306 = vmatprep.subr.bf16.mxu0 0
        %3307 = vmatpush2.bf16.msra.mxu0 0
        %3308 = vmatprep.subr.bf16.mxu0 0
        %3309 = vmatpush2.bf16.msra.mxu0 0
        %3310 = vmatprep.subr.bf16.mxu0 0
        %3311 = vmatpush2.bf16.msra.mxu0 0
        %3312 = vmatprep.mubr.bf16.mxu0 0
        %3313 = vmatmul.mubr.bf16.gmra.mxu0 %v3269
        %v3314 = vpop.f32.mrf.mxu0
        %v3315 = vadd.f32 0.0, %v3314
        %v3316 = vpop.f32.mrf.mxu0
        %v3317 = vpop.f32.mrf.mxu0
        %v3318 = vadd.f32 0.0, %v3317
        %v3319 = vpop.f32.mrf.mxu0
        %3320 = vmatprep.mubr.bf16.mxu0 0
        %3321 = vmatmul.mubr.bf16.gmra.mxu0 %v3272
        %v3322 = vpop.f32.mrf.mxu0
        %v3323 = vadd.f32 0.0, %v3322
        %v3324 = vpop.f32.mrf.mxu0
        %v3325 = vpop.f32.mrf.mxu0
        %v3326 = vadd.f32 0.0, %v3325
        %v3327 = vpop.f32.mrf.mxu0
        %3328 = vmatprep.mubr.bf16.mxu0 0
        %3329 = vmatmul.mubr.bf16.gmra.mxu0 %v3275
        %v3330 = vpop.f32.mrf.mxu0
        %v3331 = vadd.f32 0.0, %v3330
        %v3332 = vpop.f32.mrf.mxu0
        %v3333 = vpop.f32.mrf.mxu0
        %v3334 = vadd.f32 0.0, %v3333
        %v3335 = vpop.f32.mrf.mxu0
        %3336 = vmatprep.mubr.bf16.mxu0 0
        %3337 = vmatmul.mubr.bf16.gmra.mxu0 %v3278
        %v3338 = vpop.f32.mrf.mxu0
        %v3339 = vadd.f32 0.0, %v3338
        %v3340 = vpop.f32.mrf.mxu0
        %v3341 = vpop.f32.mrf.mxu0
        %v3342 = vadd.f32 0.0, %v3341
        %v3343 = vpop.f32.mrf.mxu0
        %3344 = vdwg.mxu0
        %v3345 = vpack.c.bf16 %v3318, %v3315
        %v3346 = vpack.c.bf16 %v3326, %v3323
        %v3347 = vpack.c.bf16 %v3334, %v3331
        %v3348 = vpack.c.bf16 %v3342, %v3339
        %v3353 = vunpack.c.l.b16 %v3345
        %v3354 = vunpack.c.h.b16 %v3345
        %v3355 = vunpack.c.l.b16 %v3346
        %v3356 = vunpack.c.h.b16 %v3346
        %v3357 = vunpack.c.l.b16 %v3347
        %v3358 = vunpack.c.h.b16 %v3347
        %v3359 = vunpack.c.l.b16 %v3348
        %v3360 = vunpack.c.h.b16 %v3348
        %v3361 = vpack.c.b16 %v3353, %v3353
        %v3362 = vpack.c.b16 %v3354, %v3354
        %v3363 = vpack.c.b16 %v3355, %v3355
        %v3364 = vpack.c.b16 %v3356, %v3356
        %v3365 = vpack.c.b16 %v3357, %v3357
        %v3366 = vpack.c.b16 %v3358, %v3358
        %v3367 = vpack.c.b16 %v3359, %v3359
        %v3368 = vpack.c.b16 %v3360, %v3360
        %3369 = vrot.lane.b32.xlu0 %v3361, 32
        %v3370 = vpop.permute.xlu0 %3369
        %3371 = vrot.lane.b32.xlu0 %v3362, 32
        %v3372 = vpop.permute.xlu0 %3371
        %3373 = vrot.lane.b32.xlu0 %v3363, 32
        %v3374 = vpop.permute.xlu0 %3373
        %3375 = vrot.lane.b32.xlu0 %v3364, 32
        %v3376 = vpop.permute.xlu0 %3375
        %3377 = vrot.lane.b32.xlu0 %v3365, 32
        %v3378 = vpop.permute.xlu0 %3377
        %3379 = vrot.lane.b32.xlu0 %v3366, 32
        %v3380 = vpop.permute.xlu0 %3379
        %3381 = vrot.lane.b32.xlu0 %v3367, 32
        %v3382 = vpop.permute.xlu0 %3381
        %3383 = vrot.lane.b32.xlu0 %v3368, 32
        %v3384 = vpop.permute.xlu0 %3383
        %3393 = vst.msk [vmem:[#allocation3 + $0x20] sm:$0xf] %vm1726, %v3370
        %3394 = vst.msk [vmem:[#allocation3 + $0x24] sm:$0xf] %vm1726, %v3372
        %3395 = vst.msk [vmem:[#allocation3 + $0x28] sm:$0xf] %vm1726, %v3374
        %3396 = vst.msk [vmem:[#allocation3 + $0x2c] sm:$0xf] %vm1726, %v3376
        %3397 = vst.msk [vmem:[#allocation3 + $0x30] sm:$0xf] %vm1726, %v3378
        %3398 = vst.msk [vmem:[#allocation3 + $0x34] sm:$0xf] %vm1726, %v3380
        %3399 = vst.msk [vmem:[#allocation3 + $0x38] sm:$0xf] %vm1726, %v3382
        %3400 = vst.msk [vmem:[#allocation3 + $0x3c] sm:$0xf] %vm1726, %v3384
        %v3401 = vld [vmem:[#allocation2 + $0x60] sm:$0xf]
        %v3402 = vld [vmem:[#allocation2 + $0x6c] sm:$0xf]
        %v3403 = vld [vmem:[#allocation2 + $0x78] sm:$0xf]
        %v3404 = vld [vmem:[#allocation2 + $0x84] sm:$0xf]
        %v3405 = vld [vmem:[#allocation2 + $0x90] sm:$0xf]
        %v3406 = vld [vmem:[#allocation2 + $0x9c] sm:$0xf]
        %v3407 = vld [vmem:[#allocation2 + $0xa8] sm:$0xf]
        %v3408 = vld [vmem:[#allocation2 + $0xb4] sm:$0xf]
        %v3409 = vld [vmem:[#allocation2 + $0x64] sm:$0xf]
        %v3410 = vld [vmem:[#allocation2 + $0x70] sm:$0xf]
        %v3411 = vld [vmem:[#allocation2 + $0x7c] sm:$0xf]
        %v3412 = vld [vmem:[#allocation2 + $0x88] sm:$0xf]
        %v3413 = vld [vmem:[#allocation2 + $0x94] sm:$0xf]
        %v3414 = vld [vmem:[#allocation2 + $0xa0] sm:$0xf]
        %v3415 = vld [vmem:[#allocation2 + $0xac] sm:$0xf]
        %v3416 = vld [vmem:[#allocation2 + $0xb8] sm:$0xf]
        %v3417 = vld [vmem:[#allocation2 + $0x68] sm:$0xf]
        %v3418 = vld [vmem:[#allocation2 + $0x74] sm:$0xf]
        %v3419 = vld [vmem:[#allocation2 + $0x80] sm:$0xf]
        %v3420 = vld [vmem:[#allocation2 + $0x8c] sm:$0xf]
        %v3421 = vld [vmem:[#allocation2 + $0x98] sm:$0xf]
        %v3422 = vld [vmem:[#allocation2 + $0xa4] sm:$0xf]
        %v3423 = vld [vmem:[#allocation2 + $0xb0] sm:$0xf]
        %v3424 = vld [vmem:[#allocation2 + $0xbc] sm:$0xf]
        %v3433 = vunpack.c.l.b16 %v3401
        %v3434 = vunpack.c.l.b16 %v3402
        %v3435 = vunpack.c.l.b16 %v3403
        %v3436 = vunpack.c.l.b16 %v3404
        %v3437 = vunpack.c.l.b16 %v3405
        %v3438 = vunpack.c.l.b16 %v3406
        %v3439 = vunpack.c.l.b16 %v3407
        %v3440 = vunpack.c.l.b16 %v3408
        %v3441 = vpack.c.b16 %v3434, %v3433
        %v3442 = vpack.c.b16 %v3436, %v3435
        %v3443 = vpack.c.b16 %v3438, %v3437
        %v3444 = vpack.c.b16 %v3440, %v3439
        %3445 = vrot.lane.b32.xlu0 %v3441, 64
        %v3446 = vpop.permute.xlu0 %3445
        %3447 = vrot.lane.b32.xlu0 %v3442, 64
        %v3448 = vpop.permute.xlu0 %3447
        %3449 = vrot.lane.b32.xlu0 %v3443, 64
        %v3450 = vpop.permute.xlu0 %3449
        %3451 = vrot.lane.b32.xlu0 %v3444, 64
        %v3452 = vpop.permute.xlu0 %3451
        %v3461 = vunpack.c.l.b16 %v3409
        %v3462 = vunpack.c.l.b16 %v3410
        %v3463 = vunpack.c.l.b16 %v3411
        %v3464 = vunpack.c.l.b16 %v3412
        %v3465 = vunpack.c.l.b16 %v3413
        %v3466 = vunpack.c.l.b16 %v3414
        %v3467 = vunpack.c.l.b16 %v3415
        %v3468 = vunpack.c.l.b16 %v3416
        %v3469 = vpack.c.b16 %v3462, %v3461
        %v3470 = vpack.c.b16 %v3464, %v3463
        %v3471 = vpack.c.b16 %v3466, %v3465
        %v3472 = vpack.c.b16 %v3468, %v3467
        %3473 = vrot.lane.b32.xlu0 %v3469, 64
        %v3474 = vpop.permute.xlu0 %3473
        %3475 = vrot.lane.b32.xlu0 %v3470, 64
        %v3476 = vpop.permute.xlu0 %3475
        %3477 = vrot.lane.b32.xlu0 %v3471, 64
        %v3478 = vpop.permute.xlu0 %3477
        %3479 = vrot.lane.b32.xlu0 %v3472, 64
        %v3480 = vpop.permute.xlu0 %3479
        %v3482 = vsel %vm983, %v3446, 0
        %v3485 = vsel %vm983, %v3448, 0
        %v3488 = vsel %vm983, %v3450, 0
        %v3491 = vsel %vm983, %v3452, 0
        %v3494 = vsel %vm983, %v3474, 0
        %v3497 = vsel %vm983, %v3476, 0
        %v3500 = vsel %vm983, %v3478, 0
        %v3503 = vsel %vm983, %v3480, 0
        %3505 = vmatprep.subr.bf16.mxu0 0
        %3506 = vmatpush1.bf16.xpose.msra.mxu0 0
        %3507 = vmatprep.subr.bf16.mxu0 0
        %3508 = vmatpush1.bf16.xpose.msra.mxu0 0
        %3509 = vmatprep.subr.bf16.mxu0 0
        %3510 = vmatpush1.bf16.xpose.msra.mxu0 0
        %3511 = vmatprep.subr.bf16.mxu0 0
        %3512 = vmatpush1.bf16.xpose.msra.mxu0 0
        %3513 = vmatprep.subr.bf16.mxu0 0
        %3514 = vmatpush1.bf16.xpose.msra.mxu0 %v3503
        %3515 = vmatprep.subr.bf16.mxu0 0
        %3516 = vmatpush1.bf16.xpose.msra.mxu0 %v3500
        %3517 = vmatprep.subr.bf16.mxu0 0
        %3518 = vmatpush1.bf16.xpose.msra.mxu0 %v3497
        %3519 = vmatprep.subr.bf16.mxu0 0
        %3520 = vmatpush1.bf16.xpose.msra.mxu0 %v3494
        %3521 = vmatprep.subr.bf16.mxu0 0
        %3522 = vmatpush2.bf16.xpose.msra.mxu0 0
        %3523 = vmatprep.subr.bf16.mxu0 0
        %3524 = vmatpush2.bf16.xpose.msra.mxu0 0
        %3525 = vmatprep.subr.bf16.mxu0 0
        %3526 = vmatpush2.bf16.xpose.msra.mxu0 0
        %3527 = vmatprep.subr.bf16.mxu0 0
        %3528 = vmatpush2.bf16.xpose.msra.mxu0 0
        %3529 = vmatprep.subr.bf16.mxu0 0
        %3530 = vmatpush2.bf16.xpose.msra.mxu0 0
        %3531 = vmatprep.subr.bf16.mxu0 0
        %3532 = vmatpush2.bf16.xpose.msra.mxu0 0
        %3533 = vmatprep.subr.bf16.mxu0 0
        %3534 = vmatpush2.bf16.xpose.msra.mxu0 0
        %3535 = vmatprep.subr.bf16.mxu0 0
        %3536 = vmatpush2.bf16.xpose.msra.mxu0 0
        %3537 = vmatprep.mubr.bf16.mxu0 0
        %3538 = vmatmul.mubr.bf16.gmra.mxu0 %v3482
        %v3539 = vpop.f32.mrf.mxu0
        %v3540 = vadd.f32 0.0, %v3539
        %v3541 = vpop.f32.mrf.mxu0
        %v3542 = vpop.f32.mrf.mxu0
        %v3543 = vadd.f32 0.0, %v3542
        %v3544 = vpop.f32.mrf.mxu0
        %3545 = vmatprep.mubr.bf16.mxu0 0
        %3546 = vmatmul.mubr.bf16.gmra.mxu0 %v3485
        %v3547 = vpop.f32.mrf.mxu0
        %v3548 = vadd.f32 0.0, %v3547
        %v3549 = vpop.f32.mrf.mxu0
        %v3550 = vpop.f32.mrf.mxu0
        %v3551 = vadd.f32 0.0, %v3550
        %v3552 = vpop.f32.mrf.mxu0
        %3553 = vmatprep.mubr.bf16.mxu0 0
        %3554 = vmatmul.mubr.bf16.gmra.mxu0 %v3488
        %v3555 = vpop.f32.mrf.mxu0
        %v3556 = vadd.f32 0.0, %v3555
        %v3557 = vpop.f32.mrf.mxu0
        %v3558 = vpop.f32.mrf.mxu0
        %v3559 = vadd.f32 0.0, %v3558
        %v3560 = vpop.f32.mrf.mxu0
        %3561 = vmatprep.mubr.bf16.mxu0 0
        %3562 = vmatmul.mubr.bf16.gmra.mxu0 %v3491
        %v3563 = vpop.f32.mrf.mxu0
        %v3564 = vadd.f32 0.0, %v3563
        %v3565 = vpop.f32.mrf.mxu0
        %v3566 = vpop.f32.mrf.mxu0
        %v3567 = vadd.f32 0.0, %v3566
        %v3568 = vpop.f32.mrf.mxu0
        %3569 = vdwg.mxu0
        %v3570 = vsel %vm1073, %v3540, -inf
        %3571 = vmax.xlane.f32.xlu0 %v3570
        %v3572 = vpop.xlane.xlu0 %3571
        %v3573 = vsel %vm1073, %v3543, -inf
        %3574 = vmax.xlane.f32.xlu0 %v3573
        %v3575 = vpop.xlane.xlu0 %3574
        %v3576 = vsel %vm1073, %v3548, -inf
        %3577 = vmax.xlane.f32.xlu0 %v3576
        %v3578 = vpop.xlane.xlu0 %3577
        %v3579 = vsel %vm1073, %v3551, -inf
        %3580 = vmax.xlane.f32.xlu0 %v3579
        %v3581 = vpop.xlane.xlu0 %3580
        %v3582 = vsel %vm1073, %v3556, -inf
        %3583 = vmax.xlane.f32.xlu0 %v3582
        %v3584 = vpop.xlane.xlu0 %3583
        %v3585 = vsel %vm1073, %v3559, -inf
        %3586 = vmax.xlane.f32.xlu0 %v3585
        %v3587 = vpop.xlane.xlu0 %3586
        %v3588 = vsel %vm1073, %v3564, -inf
        %3589 = vmax.xlane.f32.xlu0 %v3588
        %v3590 = vpop.xlane.xlu0 %3589
        %v3591 = vsel %vm1073, %v3567, -inf
        %3592 = vmax.xlane.f32.xlu0 %v3591
        %v3593 = vpop.xlane.xlu0 %3592
        %v3594 = vsub.f32 %v3540, %v3572
        %v3595 = vsub.f32 %v3543, %v3575
        %v3596 = vsub.f32 %v3548, %v3578
        %v3597 = vsub.f32 %v3551, %v3581
        %v3598 = vsub.f32 %v3556, %v3584
        %v3599 = vsub.f32 %v3559, %v3587
        %v3600 = vsub.f32 %v3564, %v3590
        %v3601 = vsub.f32 %v3567, %v3593
        %v3602 = vmul.f32 %v3594, 1.442695
        %v3603 = vpow.pop %v3602
        %v3604 = vmul.f32 %v3595, 1.442695
        %v3605 = vpow.pop %v3604
        %v3606 = vmul.f32 %v3596, 1.442695
        %v3607 = vpow.pop %v3606
        %v3608 = vmul.f32 %v3597, 1.442695
        %v3609 = vpow.pop %v3608
        %v3610 = vmul.f32 %v3598, 1.442695
        %v3611 = vpow.pop %v3610
        %v3612 = vmul.f32 %v3599, 1.442695
        %v3613 = vpow.pop %v3612
        %v3614 = vmul.f32 %v3600, 1.442695
        %v3615 = vpow.pop %v3614
        %v3616 = vmul.f32 %v3601, 1.442695
        %v3617 = vpow.pop %v3616
        %v3618 = vsel %vm1073, %v3603, 0.0
        %3619 = vadd.xlane.f32.xlu0 %v3618
        %v3620 = vpop.xlane.xlu0 %3619
        %v3621 = vsel %vm1073, %v3605, 0.0
        %3622 = vadd.xlane.f32.xlu0 %v3621
        %v3623 = vpop.xlane.xlu0 %3622
        %v3624 = vsel %vm1073, %v3607, 0.0
        %3625 = vadd.xlane.f32.xlu0 %v3624
        %v3626 = vpop.xlane.xlu0 %3625
        %v3627 = vsel %vm1073, %v3609, 0.0
        %3628 = vadd.xlane.f32.xlu0 %v3627
        %v3629 = vpop.xlane.xlu0 %3628
        %v3630 = vsel %vm1073, %v3611, 0.0
        %3631 = vadd.xlane.f32.xlu0 %v3630
        %v3632 = vpop.xlane.xlu0 %3631
        %v3633 = vsel %vm1073, %v3613, 0.0
        %3634 = vadd.xlane.f32.xlu0 %v3633
        %v3635 = vpop.xlane.xlu0 %3634
        %v3636 = vsel %vm1073, %v3615, 0.0
        %3637 = vadd.xlane.f32.xlu0 %v3636
        %v3638 = vpop.xlane.xlu0 %3637
        %v3639 = vsel %vm1073, %v3617, 0.0
        %3640 = vadd.xlane.f32.xlu0 %v3639
        %v3641 = vpop.xlane.xlu0 %3640
        %v3642 = vrcp.pop %v3620
        %v3643 = vrcp.pop %v3623
        %v3644 = vrcp.pop %v3626
        %v3645 = vrcp.pop %v3629
        %v3646 = vrcp.pop %v3632
        %v3647 = vrcp.pop %v3635
        %v3648 = vrcp.pop %v3638
        %v3649 = vrcp.pop %v3641
        %v3650 = vmul.f32 %v3603, %v3642
        %v3651 = vmul.f32 %v3605, %v3643
        %v3652 = vmul.f32 %v3607, %v3644
        %v3653 = vmul.f32 %v3609, %v3645
        %v3654 = vmul.f32 %v3611, %v3646
        %v3655 = vmul.f32 %v3613, %v3647
        %v3656 = vmul.f32 %v3615, %v3648
        %v3657 = vmul.f32 %v3617, %v3649
        %v3658 = vpack.c.bf16 %v3651, %v3650
        %v3659 = vpack.c.bf16 %v3653, %v3652
        %v3660 = vpack.c.bf16 %v3655, %v3654
        %v3661 = vpack.c.bf16 %v3657, %v3656
        %v3670 = vunpack.c.l.b16 %v3417
        %v3671 = vunpack.c.l.b16 %v3418
        %v3672 = vunpack.c.l.b16 %v3419
        %v3673 = vunpack.c.l.b16 %v3420
        %v3674 = vunpack.c.l.b16 %v3421
        %v3675 = vunpack.c.l.b16 %v3422
        %v3676 = vunpack.c.l.b16 %v3423
        %v3677 = vunpack.c.l.b16 %v3424
        %v3678 = vpack.c.b16 %v3671, %v3670
        %v3679 = vpack.c.b16 %v3673, %v3672
        %v3680 = vpack.c.b16 %v3675, %v3674
        %v3681 = vpack.c.b16 %v3677, %v3676
        %3682 = vrot.lane.b32.xlu0 %v3678, 64
        %v3683 = vpop.permute.xlu0 %3682
        %3684 = vrot.lane.b32.xlu0 %v3679, 64
        %v3685 = vpop.permute.xlu0 %3684
        %3686 = vrot.lane.b32.xlu0 %v3680, 64
        %v3687 = vpop.permute.xlu0 %3686
        %3688 = vrot.lane.b32.xlu0 %v3681, 64
        %v3689 = vpop.permute.xlu0 %3688
        %v3695 = vsel %vm1073, %v3658, 0
        %v3698 = vsel %vm1073, %v3659, 0
        %v3701 = vsel %vm1073, %v3660, 0
        %v3704 = vsel %vm1073, %v3661, 0
        %3706 = vmatprep.subr.bf16.mxu0 0
        %3707 = vmatpush1.bf16.msra.mxu0 0
        %3708 = vmatprep.subr.bf16.mxu0 0
        %3709 = vmatpush1.bf16.msra.mxu0 0
        %3710 = vmatprep.subr.bf16.mxu0 0
        %3711 = vmatpush1.bf16.msra.mxu0 0
        %3712 = vmatprep.subr.bf16.mxu0 0
        %3713 = vmatpush1.bf16.msra.mxu0 0
        %3714 = vmatprep.subr.bf16.mxu0 0
        %3715 = vmatpush1.bf16.msra.mxu0 %v3689
        %3716 = vmatprep.subr.bf16.mxu0 0
        %3717 = vmatpush1.bf16.msra.mxu0 %v3687
        %3718 = vmatprep.subr.bf16.mxu0 0
        %3719 = vmatpush1.bf16.msra.mxu0 %v3685
        %3720 = vmatprep.subr.bf16.mxu0 0
        %3721 = vmatpush1.bf16.msra.mxu0 %v3683
        %3722 = vmatprep.subr.bf16.mxu0 0
        %3723 = vmatpush2.bf16.msra.mxu0 0
        %3724 = vmatprep.subr.bf16.mxu0 0
        %3725 = vmatpush2.bf16.msra.mxu0 0
        %3726 = vmatprep.subr.bf16.mxu0 0
        %3727 = vmatpush2.bf16.msra.mxu0 0
        %3728 = vmatprep.subr.bf16.mxu0 0
        %3729 = vmatpush2.bf16.msra.mxu0 0
        %3730 = vmatprep.subr.bf16.mxu0 0
        %3731 = vmatpush2.bf16.msra.mxu0 0
        %3732 = vmatprep.subr.bf16.mxu0 0
        %3733 = vmatpush2.bf16.msra.mxu0 0
        %3734 = vmatprep.subr.bf16.mxu0 0
        %3735 = vmatpush2.bf16.msra.mxu0 0
        %3736 = vmatprep.subr.bf16.mxu0 0
        %3737 = vmatpush2.bf16.msra.mxu0 0
        %3738 = vmatprep.mubr.bf16.mxu0 0
        %3739 = vmatmul.mubr.bf16.gmra.mxu0 %v3695
        %v3740 = vpop.f32.mrf.mxu0
        %v3741 = vadd.f32 0.0, %v3740
        %v3742 = vpop.f32.mrf.mxu0
        %v3743 = vpop.f32.mrf.mxu0
        %v3744 = vadd.f32 0.0, %v3743
        %v3745 = vpop.f32.mrf.mxu0
        %3746 = vmatprep.mubr.bf16.mxu0 0
        %3747 = vmatmul.mubr.bf16.gmra.mxu0 %v3698
        %v3748 = vpop.f32.mrf.mxu0
        %v3749 = vadd.f32 0.0, %v3748
        %v3750 = vpop.f32.mrf.mxu0
        %v3751 = vpop.f32.mrf.mxu0
        %v3752 = vadd.f32 0.0, %v3751
        %v3753 = vpop.f32.mrf.mxu0
        %3754 = vmatprep.mubr.bf16.mxu0 0
        %3755 = vmatmul.mubr.bf16.gmra.mxu0 %v3701
        %v3756 = vpop.f32.mrf.mxu0
        %v3757 = vadd.f32 0.0, %v3756
        %v3758 = vpop.f32.mrf.mxu0
        %v3759 = vpop.f32.mrf.mxu0
        %v3760 = vadd.f32 0.0, %v3759
        %v3761 = vpop.f32.mrf.mxu0
        %3762 = vmatprep.mubr.bf16.mxu0 0
        %3763 = vmatmul.mubr.bf16.gmra.mxu0 %v3704
        %v3764 = vpop.f32.mrf.mxu0
        %v3765 = vadd.f32 0.0, %v3764
        %v3766 = vpop.f32.mrf.mxu0
        %v3767 = vpop.f32.mrf.mxu0
        %v3768 = vadd.f32 0.0, %v3767
        %v3769 = vpop.f32.mrf.mxu0
        %3770 = vdwg.mxu0
        %v3771 = vpack.c.bf16 %v3744, %v3741
        %v3772 = vpack.c.bf16 %v3752, %v3749
        %v3773 = vpack.c.bf16 %v3760, %v3757
        %v3774 = vpack.c.bf16 %v3768, %v3765
        %v3779 = vunpack.c.l.b16 %v3771
        %v3780 = vunpack.c.h.b16 %v3771
        %v3781 = vunpack.c.l.b16 %v3772
        %v3782 = vunpack.c.h.b16 %v3772
        %v3783 = vunpack.c.l.b16 %v3773
        %v3784 = vunpack.c.h.b16 %v3773
        %v3785 = vunpack.c.l.b16 %v3774
        %v3786 = vunpack.c.h.b16 %v3774
        %v3787 = vpack.c.b16 %v3779, %v3779
        %v3788 = vpack.c.b16 %v3780, %v3780
        %v3789 = vpack.c.b16 %v3781, %v3781
        %v3790 = vpack.c.b16 %v3782, %v3782
        %v3791 = vpack.c.b16 %v3783, %v3783
        %v3792 = vpack.c.b16 %v3784, %v3784
        %v3793 = vpack.c.b16 %v3785, %v3785
        %v3794 = vpack.c.b16 %v3786, %v3786
        %3795 = vrot.lane.b32.xlu0 %v3787, 64
        %v3796 = vpop.permute.xlu0 %3795
        %3797 = vrot.lane.b32.xlu0 %v3788, 64
        %v3798 = vpop.permute.xlu0 %3797
        %3799 = vrot.lane.b32.xlu0 %v3789, 64
        %v3800 = vpop.permute.xlu0 %3799
        %3801 = vrot.lane.b32.xlu0 %v3790, 64
        %v3802 = vpop.permute.xlu0 %3801
        %3803 = vrot.lane.b32.xlu0 %v3791, 64
        %v3804 = vpop.permute.xlu0 %3803
        %3805 = vrot.lane.b32.xlu0 %v3792, 64
        %v3806 = vpop.permute.xlu0 %3805
        %3807 = vrot.lane.b32.xlu0 %v3793, 64
        %v3808 = vpop.permute.xlu0 %3807
        %3809 = vrot.lane.b32.xlu0 %v3794, 64
        %v3810 = vpop.permute.xlu0 %3809
        %3819 = vst.msk [vmem:[#allocation3 + $0x20] sm:$0xf] %vm2153, %v3796
        %3820 = vst.msk [vmem:[#allocation3 + $0x24] sm:$0xf] %vm2153, %v3798
        %3821 = vst.msk [vmem:[#allocation3 + $0x28] sm:$0xf] %vm2153, %v3800
        %3822 = vst.msk [vmem:[#allocation3 + $0x2c] sm:$0xf] %vm2153, %v3802
        %3823 = vst.msk [vmem:[#allocation3 + $0x30] sm:$0xf] %vm2153, %v3804
        %3824 = vst.msk [vmem:[#allocation3 + $0x34] sm:$0xf] %vm2153, %v3806
        %3825 = vst.msk [vmem:[#allocation3 + $0x38] sm:$0xf] %vm2153, %v3808
        %3826 = vst.msk [vmem:[#allocation3 + $0x3c] sm:$0xf] %vm2153, %v3810
        %v3827 = vld [vmem:[#allocation2 + $0x60] sm:$0xf]
        %v3828 = vld [vmem:[#allocation2 + $0x6c] sm:$0xf]
        %v3829 = vld [vmem:[#allocation2 + $0x78] sm:$0xf]
        %v3830 = vld [vmem:[#allocation2 + $0x84] sm:$0xf]
        %v3831 = vld [vmem:[#allocation2 + $0x90] sm:$0xf]
        %v3832 = vld [vmem:[#allocation2 + $0x9c] sm:$0xf]
        %v3833 = vld [vmem:[#allocation2 + $0xa8] sm:$0xf]
        %v3834 = vld [vmem:[#allocation2 + $0xb4] sm:$0xf]
        %v3835 = vld [vmem:[#allocation2 + $0x64] sm:$0xf]
        %v3836 = vld [vmem:[#allocation2 + $0x70] sm:$0xf]
        %v3837 = vld [vmem:[#allocation2 + $0x7c] sm:$0xf]
        %v3838 = vld [vmem:[#allocation2 + $0x88] sm:$0xf]
        %v3839 = vld [vmem:[#allocation2 + $0x94] sm:$0xf]
        %v3840 = vld [vmem:[#allocation2 + $0xa0] sm:$0xf]
        %v3841 = vld [vmem:[#allocation2 + $0xac] sm:$0xf]
        %v3842 = vld [vmem:[#allocation2 + $0xb8] sm:$0xf]
        %v3843 = vld [vmem:[#allocation2 + $0x68] sm:$0xf]
        %v3844 = vld [vmem:[#allocation2 + $0x74] sm:$0xf]
        %v3845 = vld [vmem:[#allocation2 + $0x80] sm:$0xf]
        %v3846 = vld [vmem:[#allocation2 + $0x8c] sm:$0xf]
        %v3847 = vld [vmem:[#allocation2 + $0x98] sm:$0xf]
        %v3848 = vld [vmem:[#allocation2 + $0xa4] sm:$0xf]
        %v3849 = vld [vmem:[#allocation2 + $0xb0] sm:$0xf]
        %v3850 = vld [vmem:[#allocation2 + $0xbc] sm:$0xf]
        %v3859 = vunpack.c.l.b16 %v3827
        %v3860 = vunpack.c.l.b16 %v3828
        %v3861 = vunpack.c.l.b16 %v3829
        %v3862 = vunpack.c.l.b16 %v3830
        %v3863 = vunpack.c.l.b16 %v3831
        %v3864 = vunpack.c.l.b16 %v3832
        %v3865 = vunpack.c.l.b16 %v3833
        %v3866 = vunpack.c.l.b16 %v3834
        %v3867 = vpack.c.b16 %v3860, %v3859
        %v3868 = vpack.c.b16 %v3862, %v3861
        %v3869 = vpack.c.b16 %v3864, %v3863
        %v3870 = vpack.c.b16 %v3866, %v3865
        %3871 = vrot.lane.b32.xlu0 %v3867, 32
        %v3872 = vpop.permute.xlu0 %3871
        %3873 = vrot.lane.b32.xlu0 %v3868, 32
        %v3874 = vpop.permute.xlu0 %3873
        %3875 = vrot.lane.b32.xlu0 %v3869, 32
        %v3876 = vpop.permute.xlu0 %3875
        %3877 = vrot.lane.b32.xlu0 %v3870, 32
        %v3878 = vpop.permute.xlu0 %3877
        %v3887 = vunpack.c.l.b16 %v3835
        %v3888 = vunpack.c.l.b16 %v3836
        %v3889 = vunpack.c.l.b16 %v3837
        %v3890 = vunpack.c.l.b16 %v3838
        %v3891 = vunpack.c.l.b16 %v3839
        %v3892 = vunpack.c.l.b16 %v3840
        %v3893 = vunpack.c.l.b16 %v3841
        %v3894 = vunpack.c.l.b16 %v3842
        %v3895 = vpack.c.b16 %v3888, %v3887
        %v3896 = vpack.c.b16 %v3890, %v3889
        %v3897 = vpack.c.b16 %v3892, %v3891
        %v3898 = vpack.c.b16 %v3894, %v3893
        %3899 = vrot.lane.b32.xlu0 %v3895, 32
        %v3900 = vpop.permute.xlu0 %3899
        %3901 = vrot.lane.b32.xlu0 %v3896, 32
        %v3902 = vpop.permute.xlu0 %3901
        %3903 = vrot.lane.b32.xlu0 %v3897, 32
        %v3904 = vpop.permute.xlu0 %3903
        %3905 = vrot.lane.b32.xlu0 %v3898, 32
        %v3906 = vpop.permute.xlu0 %3905
        %v3908 = vsel %vm983, %v3872, 0
        %v3911 = vsel %vm983, %v3874, 0
        %v3914 = vsel %vm983, %v3876, 0
        %v3917 = vsel %vm983, %v3878, 0
        %v3920 = vsel %vm983, %v3900, 0
        %v3923 = vsel %vm983, %v3902, 0
        %v3926 = vsel %vm983, %v3904, 0
        %v3929 = vsel %vm983, %v3906, 0
        %3931 = vmatprep.subr.bf16.mxu0 0
        %3932 = vmatpush1.bf16.xpose.msra.mxu0 0
        %3933 = vmatprep.subr.bf16.mxu0 0
        %3934 = vmatpush1.bf16.xpose.msra.mxu0 0
        %3935 = vmatprep.subr.bf16.mxu0 0
        %3936 = vmatpush1.bf16.xpose.msra.mxu0 0
        %3937 = vmatprep.subr.bf16.mxu0 0
        %3938 = vmatpush1.bf16.xpose.msra.mxu0 0
        %3939 = vmatprep.subr.bf16.mxu0 0
        %3940 = vmatpush1.bf16.xpose.msra.mxu0 %v3929
        %3941 = vmatprep.subr.bf16.mxu0 0
        %3942 = vmatpush1.bf16.xpose.msra.mxu0 %v3926
        %3943 = vmatprep.subr.bf16.mxu0 0
        %3944 = vmatpush1.bf16.xpose.msra.mxu0 %v3923
        %3945 = vmatprep.subr.bf16.mxu0 0
        %3946 = vmatpush1.bf16.xpose.msra.mxu0 %v3920
        %3947 = vmatprep.subr.bf16.mxu0 0
        %3948 = vmatpush2.bf16.xpose.msra.mxu0 0
        %3949 = vmatprep.subr.bf16.mxu0 0
        %3950 = vmatpush2.bf16.xpose.msra.mxu0 0
        %3951 = vmatprep.subr.bf16.mxu0 0
        %3952 = vmatpush2.bf16.xpose.msra.mxu0 0
        %3953 = vmatprep.subr.bf16.mxu0 0
        %3954 = vmatpush2.bf16.xpose.msra.mxu0 0
        %3955 = vmatprep.subr.bf16.mxu0 0
        %3956 = vmatpush2.bf16.xpose.msra.mxu0 0
        %3957 = vmatprep.subr.bf16.mxu0 0
        %3958 = vmatpush2.bf16.xpose.msra.mxu0 0
        %3959 = vmatprep.subr.bf16.mxu0 0
        %3960 = vmatpush2.bf16.xpose.msra.mxu0 0
        %3961 = vmatprep.subr.bf16.mxu0 0
        %3962 = vmatpush2.bf16.xpose.msra.mxu0 0
        %3963 = vmatprep.mubr.bf16.mxu0 0
        %3964 = vmatmul.mubr.bf16.gmra.mxu0 %v3908
        %v3965 = vpop.f32.mrf.mxu0
        %v3966 = vadd.f32 0.0, %v3965
        %v3967 = vpop.f32.mrf.mxu0
        %v3968 = vpop.f32.mrf.mxu0
        %v3969 = vadd.f32 0.0, %v3968
        %v3970 = vpop.f32.mrf.mxu0
        %3971 = vmatprep.mubr.bf16.mxu0 0
        %3972 = vmatmul.mubr.bf16.gmra.mxu0 %v3911
        %v3973 = vpop.f32.mrf.mxu0
        %v3974 = vadd.f32 0.0, %v3973
        %v3975 = vpop.f32.mrf.mxu0
        %v3976 = vpop.f32.mrf.mxu0
        %v3977 = vadd.f32 0.0, %v3976
        %v3978 = vpop.f32.mrf.mxu0
        %3979 = vmatprep.mubr.bf16.mxu0 0
        %3980 = vmatmul.mubr.bf16.gmra.mxu0 %v3914
        %v3981 = vpop.f32.mrf.mxu0
        %v3982 = vadd.f32 0.0, %v3981
        %v3983 = vpop.f32.mrf.mxu0
        %v3984 = vpop.f32.mrf.mxu0
        %v3985 = vadd.f32 0.0, %v3984
        %v3986 = vpop.f32.mrf.mxu0
        %3987 = vmatprep.mubr.bf16.mxu0 0
        %3988 = vmatmul.mubr.bf16.gmra.mxu0 %v3917
        %v3989 = vpop.f32.mrf.mxu0
        %v3990 = vadd.f32 0.0, %v3989
        %v3991 = vpop.f32.mrf.mxu0
        %v3992 = vpop.f32.mrf.mxu0
        %v3993 = vadd.f32 0.0, %v3992
        %v3994 = vpop.f32.mrf.mxu0
        %3995 = vdwg.mxu0
        %v3996 = vsel %vm1073, %v3966, -inf
        %3997 = vmax.xlane.f32.xlu0 %v3996
        %v3998 = vpop.xlane.xlu0 %3997
        %v3999 = vsel %vm1073, %v3969, -inf
        %4000 = vmax.xlane.f32.xlu0 %v3999
        %v4001 = vpop.xlane.xlu0 %4000
        %v4002 = vsel %vm1073, %v3974, -inf
        %4003 = vmax.xlane.f32.xlu0 %v4002
        %v4004 = vpop.xlane.xlu0 %4003
        %v4005 = vsel %vm1073, %v3977, -inf
        %4006 = vmax.xlane.f32.xlu0 %v4005
        %v4007 = vpop.xlane.xlu0 %4006
        %v4008 = vsel %vm1073, %v3982, -inf
        %4009 = vmax.xlane.f32.xlu0 %v4008
        %v4010 = vpop.xlane.xlu0 %4009
        %v4011 = vsel %vm1073, %v3985, -inf
        %4012 = vmax.xlane.f32.xlu0 %v4011
        %v4013 = vpop.xlane.xlu0 %4012
        %v4014 = vsel %vm1073, %v3990, -inf
        %4015 = vmax.xlane.f32.xlu0 %v4014
        %v4016 = vpop.xlane.xlu0 %4015
        %v4017 = vsel %vm1073, %v3993, -inf
        %4018 = vmax.xlane.f32.xlu0 %v4017
        %v4019 = vpop.xlane.xlu0 %4018
        %v4020 = vsub.f32 %v3966, %v3998
        %v4021 = vsub.f32 %v3969, %v4001
        %v4022 = vsub.f32 %v3974, %v4004
        %v4023 = vsub.f32 %v3977, %v4007
        %v4024 = vsub.f32 %v3982, %v4010
        %v4025 = vsub.f32 %v3985, %v4013
        %v4026 = vsub.f32 %v3990, %v4016
        %v4027 = vsub.f32 %v3993, %v4019
        %v4028 = vmul.f32 %v4020, 1.442695
        %v4029 = vpow.pop %v4028
        %v4030 = vmul.f32 %v4021, 1.442695
        %v4031 = vpow.pop %v4030
        %v4032 = vmul.f32 %v4022, 1.442695
        %v4033 = vpow.pop %v4032
        %v4034 = vmul.f32 %v4023, 1.442695
        %v4035 = vpow.pop %v4034
        %v4036 = vmul.f32 %v4024, 1.442695
        %v4037 = vpow.pop %v4036
        %v4038 = vmul.f32 %v4025, 1.442695
        %v4039 = vpow.pop %v4038
        %v4040 = vmul.f32 %v4026, 1.442695
        %v4041 = vpow.pop %v4040
        %v4042 = vmul.f32 %v4027, 1.442695
        %v4043 = vpow.pop %v4042
        %v4044 = vsel %vm1073, %v4029, 0.0
        %4045 = vadd.xlane.f32.xlu0 %v4044
        %v4046 = vpop.xlane.xlu0 %4045
        %v4047 = vsel %vm1073, %v4031, 0.0
        %4048 = vadd.xlane.f32.xlu0 %v4047
        %v4049 = vpop.xlane.xlu0 %4048
        %v4050 = vsel %vm1073, %v4033, 0.0
        %4051 = vadd.xlane.f32.xlu0 %v4050
        %v4052 = vpop.xlane.xlu0 %4051
        %v4053 = vsel %vm1073, %v4035, 0.0
        %4054 = vadd.xlane.f32.xlu0 %v4053
        %v4055 = vpop.xlane.xlu0 %4054
        %v4056 = vsel %vm1073, %v4037, 0.0
        %4057 = vadd.xlane.f32.xlu0 %v4056
        %v4058 = vpop.xlane.xlu0 %4057
        %v4059 = vsel %vm1073, %v4039, 0.0
        %4060 = vadd.xlane.f32.xlu0 %v4059
        %v4061 = vpop.xlane.xlu0 %4060
        %v4062 = vsel %vm1073, %v4041, 0.0
        %4063 = vadd.xlane.f32.xlu0 %v4062
        %v4064 = vpop.xlane.xlu0 %4063
        %v4065 = vsel %vm1073, %v4043, 0.0
        %4066 = vadd.xlane.f32.xlu0 %v4065
        %v4067 = vpop.xlane.xlu0 %4066
        %v4068 = vrcp.pop %v4046
        %v4069 = vrcp.pop %v4049
        %v4070 = vrcp.pop %v4052
        %v4071 = vrcp.pop %v4055
        %v4072 = vrcp.pop %v4058
        %v4073 = vrcp.pop %v4061
        %v4074 = vrcp.pop %v4064
        %v4075 = vrcp.pop %v4067
        %v4076 = vmul.f32 %v4029, %v4068
        %v4077 = vmul.f32 %v4031, %v4069
        %v4078 = vmul.f32 %v4033, %v4070
        %v4079 = vmul.f32 %v4035, %v4071
        %v4080 = vmul.f32 %v4037, %v4072
        %v4081 = vmul.f32 %v4039, %v4073
        %v4082 = vmul.f32 %v4041, %v4074
        %v4083 = vmul.f32 %v4043, %v4075
        %v4084 = vpack.c.bf16 %v4077, %v4076
        %v4085 = vpack.c.bf16 %v4079, %v4078
        %v4086 = vpack.c.bf16 %v4081, %v4080
        %v4087 = vpack.c.bf16 %v4083, %v4082
        %v4096 = vunpack.c.l.b16 %v3843
        %v4097 = vunpack.c.l.b16 %v3844
        %v4098 = vunpack.c.l.b16 %v3845
        %v4099 = vunpack.c.l.b16 %v3846
        %v4100 = vunpack.c.l.b16 %v3847
        %v4101 = vunpack.c.l.b16 %v3848
        %v4102 = vunpack.c.l.b16 %v3849
        %v4103 = vunpack.c.l.b16 %v3850
        %v4104 = vpack.c.b16 %v4097, %v4096
        %v4105 = vpack.c.b16 %v4099, %v4098
        %v4106 = vpack.c.b16 %v4101, %v4100
        %v4107 = vpack.c.b16 %v4103, %v4102
        %4108 = vrot.lane.b32.xlu0 %v4104, 32
        %v4109 = vpop.permute.xlu0 %4108
        %4110 = vrot.lane.b32.xlu0 %v4105, 32
        %v4111 = vpop.permute.xlu0 %4110
        %4112 = vrot.lane.b32.xlu0 %v4106, 32
        %v4113 = vpop.permute.xlu0 %4112
        %4114 = vrot.lane.b32.xlu0 %v4107, 32
        %v4115 = vpop.permute.xlu0 %4114
        %v4121 = vsel %vm1073, %v4084, 0
        %v4124 = vsel %vm1073, %v4085, 0
        %v4127 = vsel %vm1073, %v4086, 0
        %v4130 = vsel %vm1073, %v4087, 0
        %4132 = vmatprep.subr.bf16.mxu0 0
        %4133 = vmatpush1.bf16.msra.mxu0 0
        %4134 = vmatprep.subr.bf16.mxu0 0
        %4135 = vmatpush1.bf16.msra.mxu0 0
        %4136 = vmatprep.subr.bf16.mxu0 0
        %4137 = vmatpush1.bf16.msra.mxu0 0
        %4138 = vmatprep.subr.bf16.mxu0 0
        %4139 = vmatpush1.bf16.msra.mxu0 0
        %4140 = vmatprep.subr.bf16.mxu0 0
        %4141 = vmatpush1.bf16.msra.mxu0 %v4115
        %4142 = vmatprep.subr.bf16.mxu0 0
        %4143 = vmatpush1.bf16.msra.mxu0 %v4113
        %4144 = vmatprep.subr.bf16.mxu0 0
        %4145 = vmatpush1.bf16.msra.mxu0 %v4111
        %4146 = vmatprep.subr.bf16.mxu0 0
        %4147 = vmatpush1.bf16.msra.mxu0 %v4109
        %4148 = vmatprep.subr.bf16.mxu0 0
        %4149 = vmatpush2.bf16.msra.mxu0 0
        %4150 = vmatprep.subr.bf16.mxu0 0
        %4151 = vmatpush2.bf16.msra.mxu0 0
        %4152 = vmatprep.subr.bf16.mxu0 0
        %4153 = vmatpush2.bf16.msra.mxu0 0
        %4154 = vmatprep.subr.bf16.mxu0 0
        %4155 = vmatpush2.bf16.msra.mxu0 0
        %4156 = vmatprep.subr.bf16.mxu0 0
        %4157 = vmatpush2.bf16.msra.mxu0 0
        %4158 = vmatprep.subr.bf16.mxu0 0
        %4159 = vmatpush2.bf16.msra.mxu0 0
        %4160 = vmatprep.subr.bf16.mxu0 0
        %4161 = vmatpush2.bf16.msra.mxu0 0
        %4162 = vmatprep.subr.bf16.mxu0 0
        %4163 = vmatpush2.bf16.msra.mxu0 0
        %4164 = vmatprep.mubr.bf16.mxu0 0
        %4165 = vmatmul.mubr.bf16.gmra.mxu0 %v4121
        %v4166 = vpop.f32.mrf.mxu0
        %v4167 = vadd.f32 0.0, %v4166
        %v4168 = vpop.f32.mrf.mxu0
        %v4169 = vpop.f32.mrf.mxu0
        %v4170 = vadd.f32 0.0, %v4169
        %v4171 = vpop.f32.mrf.mxu0
        %4172 = vmatprep.mubr.bf16.mxu0 0
        %4173 = vmatmul.mubr.bf16.gmra.mxu0 %v4124
        %v4174 = vpop.f32.mrf.mxu0
        %v4175 = vadd.f32 0.0, %v4174
        %v4176 = vpop.f32.mrf.mxu0
        %v4177 = vpop.f32.mrf.mxu0
        %v4178 = vadd.f32 0.0, %v4177
        %v4179 = vpop.f32.mrf.mxu0
        %4180 = vmatprep.mubr.bf16.mxu0 0
        %4181 = vmatmul.mubr.bf16.gmra.mxu0 %v4127
        %v4182 = vpop.f32.mrf.mxu0
        %v4183 = vadd.f32 0.0, %v4182
        %v4184 = vpop.f32.mrf.mxu0
        %v4185 = vpop.f32.mrf.mxu0
        %v4186 = vadd.f32 0.0, %v4185
        %v4187 = vpop.f32.mrf.mxu0
        %4188 = vmatprep.mubr.bf16.mxu0 0
        %4189 = vmatmul.mubr.bf16.gmra.mxu0 %v4130
        %v4190 = vpop.f32.mrf.mxu0
        %v4191 = vadd.f32 0.0, %v4190
        %v4192 = vpop.f32.mrf.mxu0
        %v4193 = vpop.f32.mrf.mxu0
        %v4194 = vadd.f32 0.0, %v4193
        %v4195 = vpop.f32.mrf.mxu0
        %4196 = vdwg.mxu0
        %v4197 = vpack.c.bf16 %v4170, %v4167
        %v4198 = vpack.c.bf16 %v4178, %v4175
        %v4199 = vpack.c.bf16 %v4186, %v4183
        %v4200 = vpack.c.bf16 %v4194, %v4191
        %v4205 = vunpack.c.l.b16 %v4197
        %v4206 = vunpack.c.h.b16 %v4197
        %v4207 = vunpack.c.l.b16 %v4198
        %v4208 = vunpack.c.h.b16 %v4198
        %v4209 = vunpack.c.l.b16 %v4199
        %v4210 = vunpack.c.h.b16 %v4199
        %v4211 = vunpack.c.l.b16 %v4200
        %v4212 = vunpack.c.h.b16 %v4200
        %v4213 = vpack.c.b16 %v4205, %v4205
        %v4214 = vpack.c.b16 %v4206, %v4206
        %v4215 = vpack.c.b16 %v4207, %v4207
        %v4216 = vpack.c.b16 %v4208, %v4208
        %v4217 = vpack.c.b16 %v4209, %v4209
        %v4218 = vpack.c.b16 %v4210, %v4210
        %v4219 = vpack.c.b16 %v4211, %v4211
        %v4220 = vpack.c.b16 %v4212, %v4212
        %4221 = vrot.lane.b32.xlu0 %v4213, 96
        %v4222 = vpop.permute.xlu0 %4221
        %4223 = vrot.lane.b32.xlu0 %v4214, 96
        %v4224 = vpop.permute.xlu0 %4223
        %4225 = vrot.lane.b32.xlu0 %v4215, 96
        %v4226 = vpop.permute.xlu0 %4225
        %4227 = vrot.lane.b32.xlu0 %v4216, 96
        %v4228 = vpop.permute.xlu0 %4227
        %4229 = vrot.lane.b32.xlu0 %v4217, 96
        %v4230 = vpop.permute.xlu0 %4229
        %4231 = vrot.lane.b32.xlu0 %v4218, 96
        %v4232 = vpop.permute.xlu0 %4231
        %4233 = vrot.lane.b32.xlu0 %v4219, 96
        %v4234 = vpop.permute.xlu0 %4233
        %4235 = vrot.lane.b32.xlu0 %v4220, 96
        %v4236 = vpop.permute.xlu0 %4235
        %4245 = vst.msk [vmem:[#allocation3 + $0x20] sm:$0xf] %vm2580, %v4222
        %4246 = vst.msk [vmem:[#allocation3 + $0x24] sm:$0xf] %vm2580, %v4224
        %4247 = vst.msk [vmem:[#allocation3 + $0x28] sm:$0xf] %vm2580, %v4226
        %4248 = vst.msk [vmem:[#allocation3 + $0x2c] sm:$0xf] %vm2580, %v4228
        %4249 = vst.msk [vmem:[#allocation3 + $0x30] sm:$0xf] %vm2580, %v4230
        %4250 = vst.msk [vmem:[#allocation3 + $0x34] sm:$0xf] %vm2580, %v4232
        %4251 = vst.msk [vmem:[#allocation3 + $0x38] sm:$0xf] %vm2580, %v4234
        %4252 = vst.msk [vmem:[#allocation3 + $0x3c] sm:$0xf] %vm2580, %v4236
        %v4253 = vld [vmem:[#allocation3] sm:$0xf]
        %v4254 = vld [vmem:[#allocation3 + $0x4] sm:$0xf]
        %v4255 = vld [vmem:[#allocation3 + $0x8] sm:$0xf]
        %v4256 = vld [vmem:[#allocation3 + $0xc] sm:$0xf]
        %v4257 = vld [vmem:[#allocation3 + $0x10] sm:$0xf]
        %v4258 = vld [vmem:[#allocation3 + $0x14] sm:$0xf]
        %v4259 = vld [vmem:[#allocation3 + $0x18] sm:$0xf]
        %v4260 = vld [vmem:[#allocation3 + $0x1c] sm:$0xf]
        %v4261 = vld [vmem:[#allocation3 + $0x20] sm:$0xf]
        %v4262 = vld [vmem:[#allocation3 + $0x24] sm:$0xf]
        %v4263 = vld [vmem:[#allocation3 + $0x28] sm:$0xf]
        %v4264 = vld [vmem:[#allocation3 + $0x2c] sm:$0xf]
        %v4265 = vld [vmem:[#allocation3 + $0x30] sm:$0xf]
        %v4266 = vld [vmem:[#allocation3 + $0x34] sm:$0xf]
        %v4267 = vld [vmem:[#allocation3 + $0x38] sm:$0xf]
        %v4268 = vld [vmem:[#allocation3 + $0x3c] sm:$0xf]
        %v4269 = vld [vmem:[#allocation9] sm:$0xf]
        %v4270 = vld [vmem:[#allocation9 + $0x4] sm:$0xf]
        %v4271 = vld [vmem:[#allocation9 + $0x8] sm:$0xf]
        %v4272 = vld [vmem:[#allocation9 + $0xc] sm:$0xf]
        %v4273 = vld [vmem:[#allocation9 + $0x10] sm:$0xf]
        %v4274 = vld [vmem:[#allocation9 + $0x14] sm:$0xf]
        %v4275 = vld [vmem:[#allocation9 + $0x18] sm:$0xf]
        %v4276 = vld [vmem:[#allocation9 + $0x1c] sm:$0xf]
        %v4277 = vld [vmem:[#allocation9 + $0x20] sm:$0xf]
        %v4278 = vld [vmem:[#allocation9 + $0x24] sm:$0xf]
        %v4279 = vld [vmem:[#allocation9 + $0x28] sm:$0xf]
        %v4280 = vld [vmem:[#allocation9 + $0x2c] sm:$0xf]
        %v4281 = vld [vmem:[#allocation9 + $0x30] sm:$0xf]
        %v4282 = vld [vmem:[#allocation9 + $0x34] sm:$0xf]
        %v4283 = vld [vmem:[#allocation9 + $0x38] sm:$0xf]
        %v4284 = vld [vmem:[#allocation9 + $0x3c] sm:$0xf]
        %v4285 = vld [vmem:[%s4] sm:$0x1]
        %v4287 = vlaneseq
        %v4288 = vshrl.u32 %v4287, 7
        %v4289 = vsub.s32 0, %v4288
        %v4290 = vrot.slane %v4285, %v4289
        %v4308 = vunpack.c.l.b16 %v4253
        %v4309 = vunpack.c.l.b16 %v4254
        %v4310 = vunpack.c.l.b16 %v4255
        %v4311 = vunpack.c.l.b16 %v4256
        %v4312 = vunpack.c.l.b16 %v4257
        %v4313 = vunpack.c.l.b16 %v4258
        %v4314 = vunpack.c.l.b16 %v4259
        %v4315 = vunpack.c.l.b16 %v4260
        %v4316 = vunpack.c.l.b16 %v4261
        %v4317 = vunpack.c.l.b16 %v4262
        %v4318 = vunpack.c.l.b16 %v4263
        %v4319 = vunpack.c.l.b16 %v4264
        %v4320 = vunpack.c.l.b16 %v4265
        %v4321 = vunpack.c.l.b16 %v4266
        %v4322 = vunpack.c.l.b16 %v4267
        %v4323 = vunpack.c.l.b16 %v4268
        %v4324 = vpack.c.b16 %v4309, %v4308
        %v4325 = vpack.c.b16 %v4311, %v4310
        %v4326 = vpack.c.b16 %v4313, %v4312
        %v4327 = vpack.c.b16 %v4315, %v4314
        %v4328 = vpack.c.b16 %v4317, %v4316
        %v4329 = vpack.c.b16 %v4319, %v4318
        %v4330 = vpack.c.b16 %v4321, %v4320
        %v4331 = vpack.c.b16 %v4323, %v4322
        %v4356 = vunpack.c.l.b16 %v4269
        %v4357 = vunpack.c.l.b16 %v4270
        %v4358 = vunpack.c.l.b16 %v4271
        %v4359 = vunpack.c.l.b16 %v4272
        %v4360 = vunpack.c.l.b16 %v4273
        %v4361 = vunpack.c.l.b16 %v4274
        %v4362 = vunpack.c.l.b16 %v4275
        %v4363 = vunpack.c.l.b16 %v4276
        %v4364 = vunpack.c.l.b16 %v4277
        %v4365 = vunpack.c.l.b16 %v4278
        %v4366 = vunpack.c.l.b16 %v4279
        %v4367 = vunpack.c.l.b16 %v4280
        %v4368 = vunpack.c.l.b16 %v4281
        %v4369 = vunpack.c.l.b16 %v4282
        %v4370 = vunpack.c.l.b16 %v4283
        %v4371 = vunpack.c.l.b16 %v4284
        %v4372 = vpack.c.b16 %v4357, %v4356
        %v4373 = vpack.c.b16 %v4359, %v4358
        %v4374 = vpack.c.b16 %v4361, %v4360
        %v4375 = vpack.c.b16 %v4363, %v4362
        %v4376 = vpack.c.b16 %v4365, %v4364
        %v4377 = vpack.c.b16 %v4367, %v4366
        %v4378 = vpack.c.b16 %v4369, %v4368
        %v4379 = vpack.c.b16 %v4371, %v4370
        %4388 = vmatprep.subr.bf16.mxu0 0
        %4389 = vmatpush1.bf16.msra.mxu0 %v4379
        %4390 = vmatprep.subr.bf16.mxu0 0
        %4391 = vmatpush1.bf16.msra.mxu0 %v4378
        %4392 = vmatprep.subr.bf16.mxu0 0
        %4393 = vmatpush1.bf16.msra.mxu0 %v4377
        %4394 = vmatprep.subr.bf16.mxu0 0
        %4395 = vmatpush1.bf16.msra.mxu0 %v4376
        %4396 = vmatprep.subr.bf16.mxu0 0
        %4397 = vmatpush1.bf16.msra.mxu0 %v4375
        %4398 = vmatprep.subr.bf16.mxu0 0
        %4399 = vmatpush1.bf16.msra.mxu0 %v4374
        %4400 = vmatprep.subr.bf16.mxu0 0
        %4401 = vmatpush1.bf16.msra.mxu0 %v4373
        %4402 = vmatprep.subr.bf16.mxu0 0
        %4403 = vmatpush1.bf16.msra.mxu0 %v4372
        %4404 = vmatprep.subr.bf16.mxu0 0
        %4405 = vmatpush2.bf16.msra.mxu0 0
        %4406 = vmatprep.subr.bf16.mxu0 0
        %4407 = vmatpush2.bf16.msra.mxu0 0
        %4408 = vmatprep.subr.bf16.mxu0 0
        %4409 = vmatpush2.bf16.msra.mxu0 0
        %4410 = vmatprep.subr.bf16.mxu0 0
        %4411 = vmatpush2.bf16.msra.mxu0 0
        %4412 = vmatprep.subr.bf16.mxu0 0
        %4413 = vmatpush2.bf16.msra.mxu0 0
        %4414 = vmatprep.subr.bf16.mxu0 0
        %4415 = vmatpush2.bf16.msra.mxu0 0
        %4416 = vmatprep.subr.bf16.mxu0 0
        %4417 = vmatpush2.bf16.msra.mxu0 0
        %4418 = vmatprep.subr.bf16.mxu0 0
        %4419 = vmatpush2.bf16.msra.mxu0 0
        %4420 = vmatprep.mubr.bf16.mxu0 0
        %4421 = vmatmul.mubr.bf16.gmra.mxu0 %v4324
        %v4422 = vpop.f32.mrf.mxu0
        %v4423 = vadd.f32 %v4290, %v4422
        %v4424 = vpop.f32.mrf.mxu0
        %v4425 = vpop.f32.mrf.mxu0
        %v4426 = vadd.f32 %v4290, %v4425
        %v4427 = vpop.f32.mrf.mxu0
        %4428 = vmatprep.mubr.bf16.mxu0 0
        %4429 = vmatmul.mubr.bf16.gmra.mxu0 %v4325
        %v4430 = vpop.f32.mrf.mxu0
        %v4431 = vadd.f32 %v4290, %v4430
        %v4432 = vpop.f32.mrf.mxu0
        %v4433 = vpop.f32.mrf.mxu0
        %v4434 = vadd.f32 %v4290, %v4433
        %v4435 = vpop.f32.mrf.mxu0
        %4436 = vmatprep.mubr.bf16.mxu0 0
        %4437 = vmatmul.mubr.bf16.gmra.mxu0 %v4326
        %v4438 = vpop.f32.mrf.mxu0
        %v4439 = vadd.f32 %v4290, %v4438
        %v4440 = vpop.f32.mrf.mxu0
        %v4441 = vpop.f32.mrf.mxu0
        %v4442 = vadd.f32 %v4290, %v4441
        %v4443 = vpop.f32.mrf.mxu0
        %4444 = vmatprep.mubr.bf16.mxu0 0
        %4445 = vmatmul.mubr.bf16.gmra.mxu0 %v4327
        %v4446 = vpop.f32.mrf.mxu0
        %v4447 = vadd.f32 %v4290, %v4446
        %v4448 = vpop.f32.mrf.mxu0
        %v4449 = vpop.f32.mrf.mxu0
        %v4450 = vadd.f32 %v4290, %v4449
        %v4451 = vpop.f32.mrf.mxu0
        %4452 = vmatprep.mubr.bf16.mxu0 0
        %4453 = vmatmul.mubr.bf16.gmra.mxu0 %v4328
        %v4454 = vpop.f32.mrf.mxu0
        %v4455 = vadd.f32 %v4290, %v4454
        %v4456 = vpop.f32.mrf.mxu0
        %v4457 = vpop.f32.mrf.mxu0
        %v4458 = vadd.f32 %v4290, %v4457
        %v4459 = vpop.f32.mrf.mxu0
        %4460 = vmatprep.mubr.bf16.mxu0 0
        %4461 = vmatmul.mubr.bf16.gmra.mxu0 %v4329
        %v4462 = vpop.f32.mrf.mxu0
        %v4463 = vadd.f32 %v4290, %v4462
        %v4464 = vpop.f32.mrf.mxu0
        %v4465 = vpop.f32.mrf.mxu0
        %v4466 = vadd.f32 %v4290, %v4465
        %v4467 = vpop.f32.mrf.mxu0
        %4468 = vmatprep.mubr.bf16.mxu0 0
        %4469 = vmatmul.mubr.bf16.gmra.mxu0 %v4330
        %v4470 = vpop.f32.mrf.mxu0
        %v4471 = vadd.f32 %v4290, %v4470
        %v4472 = vpop.f32.mrf.mxu0
        %v4473 = vpop.f32.mrf.mxu0
        %v4474 = vadd.f32 %v4290, %v4473
        %v4475 = vpop.f32.mrf.mxu0
        %4476 = vmatprep.mubr.bf16.mxu0 0
        %4477 = vmatmul.mubr.bf16.gmra.mxu0 %v4331
        %v4478 = vpop.f32.mrf.mxu0
        %v4479 = vadd.f32 %v4290, %v4478
        %v4480 = vpop.f32.mrf.mxu0
        %v4481 = vpop.f32.mrf.mxu0
        %v4482 = vadd.f32 %v4290, %v4481
        %v4483 = vpop.f32.mrf.mxu0
        %4484 = vdwg.mxu0
        %4485 = vst [vmem:[%s272] sm:$0xff] %v4423
        %4486 = vst [vmem:[%s272 + $0x8] sm:$0xff] %v4426
        %4487 = vst [vmem:[%s272 + $0x10] sm:$0xff] %v4431
        %4488 = vst [vmem:[%s272 + $0x18] sm:$0xff] %v4434
        %4489 = vst [vmem:[%s272 + $0x20] sm:$0xff] %v4439
        %4490 = vst [vmem:[%s272 + $0x28] sm:$0xff] %v4442
        %4491 = vst [vmem:[%s272 + $0x30] sm:$0xff] %v4447
        %4492 = vst [vmem:[%s272 + $0x38] sm:$0xff] %v4450
        %4493 = vst [vmem:[%s272 + $0x40] sm:$0xff] %v4455
        %4494 = vst [vmem:[%s272 + $0x48] sm:$0xff] %v4458
        %4495 = vst [vmem:[%s272 + $0x50] sm:$0xff] %v4463
        %4496 = vst [vmem:[%s272 + $0x58] sm:$0xff] %v4466
        %4497 = vst [vmem:[%s272 + $0x60] sm:$0xff] %v4471
        %4498 = vst [vmem:[%s272 + $0x68] sm:$0xff] %v4474
        %4499 = vst [vmem:[%s272 + $0x70] sm:$0xff] %v4479
        %4500 = vst [vmem:[%s272 + $0x78] sm:$0xff] %v4482
        %s4501 = sand.u32 %s141, 1
        %s4502 = scalar_lea.sflag [#allocation6], %s4501
        %s4503 = sand.u32 %s141, 1
        %s4504 = smul.addr %s4503, 128
        %s4505 = scalar_lea.vmem [#allocation10], %s4504
        // Predicated region
        $region53: #{tpu_custom_call.1} parent=39 // pred_check
          %p4506 = pneg %p151
        $region54: #{tpu_custom_call.1} parent=39 // pred_check_branch
          %4508 = sbr.rel (%p4506) target = $region56
        $region55: #{tpu_custom_call.1} parent=39 // pred_region
          %s4509 = smul.u32 2, %s23
          %s4511 = ssub.s32 2048, 2048
          %4512 = vsyncadd %s4502, %s4511
          %s4513 = smul.addr %s4509, 8
          %s4514 = smul.addr %s4513, 128
          %s4515 = scalar_lea.hbm %s5, %s4514
          %s4516 = sshll.u32 %s4505, 4
          %s4517 = int_to_ptr.vmem [resolvable:$true] %s4516
          %4522 = dma.vmem_to_hbm [thread:$0]  %s4517, 2048, %s4515, %s4502, 128, 128, 8
        $region56: #{tpu_custom_call.1} parent=39 // pred_fallthru
          _
      $region40: #{tpu_custom_call.1} parent=5 // pred_fallthru
        _
      %p4523 = scmp.le.s32.totalorder 2, %s18
      // Predicated region
      $region57: #{tpu_custom_call.1} parent=5 // pred_check
        %p4524 = pneg %p4523
      $region58: #{tpu_custom_call.1} parent=5 // pred_check_branch
        %4526 = sbr.rel (%p4524) target = $region60
      $region59: #{tpu_custom_call.1} parent=5 // pred_region
        %s4527 = ssub.s32 %s18, 2
        // Predicated region
        $region61: #{tpu_custom_call.1} parent=59 // pred_check
          %p4528 = pneg %p157
        $region62: #{tpu_custom_call.1} parent=59 // pred_check_branch
          %4530 = sbr.rel (%p4528) target = $region64
        $region63: #{tpu_custom_call.1} parent=59 // pred_region
          %s4531 = sand.u32 %s142, 1
          %s4532 = scalar_lea.sflag [#allocation6], %s4531
          %s4533 = sand.u32 %s142, 1
          %s4534 = smul.addr %s4533, 128
          %s4535 = scalar_lea.vmem [#allocation10], %s4534
          %4536 = dma.done %s4532, 2048
        $region64: #{tpu_custom_call.1} parent=59 // pred_fallthru
          _
      $region60: #{tpu_custom_call.1} parent=5 // pred_fallthru
        _
    $region6: #{tpu_custom_call.1} parent=1 // loop_footer
      %s22 = sadd.s32 1, %s18
    $region7: #{tpu_custom_call.1} parent=1 // loop_footer_branch
      %17 = sbr.rel target = $region3
    $region8: #{tpu_custom_call.1} parent=1 // loop_exit
      _
    %4537 = vsyncpa [#allocation5], 1
    %s4538 = scalar_lea.sflag [#allocation5], 1
    %4539 = vsyncpa %s4538, 1
    %4540 = vsyncpa [#allocation8], 1
    %4541 = vsyncpa [#allocation6], 1
    %s4542 = scalar_lea.sflag [#allocation6], 1
    %4543 = vsyncpa %s4542, 1

// kernel: tpu_custom_call.1
$region0: #{tpu_custom_call.1}
  #allocation0 [shape = 'u32[]', space=smem, size = 0x4, offset = 0x4, fixed_abs, tag = 'smem constant byte address 0x4 - core index']
  #allocation1 [shape = 'u32[144,128]{1,0:T(1,128)}', space=vmem, size = 0x12000, scoped, tag = 'internal scratch']
  #allocation2 [shape = 'bf16[128,384]{1,0:T(8,128)(2,1)}', space=vmem, size = 0x18000, scoped, tag = 'scratch operand']
  #allocation3 [shape = 'bf16[128,128]{1,0:T(8,128)(2,1)}', space=vmem, size = 0x8000, scoped, tag = 'scratch operand']
  %s0 = inlined_call_operand.hbm [shape: bf16[4,64,128], index: 0, kind: input, shape index: {}]
  %s1 = inlined_call_operand.hbm [shape: bf16[128,384], index: 1, kind: input, shape index: {}]
  %s2 = inlined_call_operand.vmem [shape: f32[1,384], index: 2, kind: input, shape index: {}]
  %s3 = inlined_call_operand.hbm [shape: bf16[128,128], index: 3, kind: input, shape index: {}]
  %s4 = inlined_call_operand.vmem [shape: f32[1,128], index: 4, kind: input, shape index: {}]
  %s5 = inlined_call_operand.hbm [shape: f32[4,64,128], index: 5, kind: output, shape index: {}]
  %s6 = sld [smem:[#allocation0]]
  $region65: #{tpu_custom_call.1} parent=0
    _
  %s8 = ssub.s32 1, %s6
  %s9 = scalar_select 0, %s8, %s6
  $region1: #{tpu_custom_call.1} parent=0
    #allocation4 [shape = 'u8[65536]{0}', space=vmem, size = 0x10000, scoped, tag = 'input window, operand 0']
    #allocation5 [shape = 's32[2]{0}', space=sflag, size = 0x8, scoped, tag = 'scoped memory for tpu_custom_call.1']
    #allocation6 [shape = 's32[2]{0}', space=sflag, size = 0x8, scoped, tag = 'scoped memory for tpu_custom_call.1']
    #allocation7 [shape = 'u8[98304]{0}', space=vmem, size = 0x18000, scoped, tag = 'input window, operand 1, single buffered']
    #allocation8 [shape = 's32[1]{0}', space=sflag, size = 0x4, scoped, tag = 'scoped memory for tpu_custom_call.1']
    #allocation9 [shape = 'u8[32768]{0}', space=vmem, size = 0x8000, scoped, tag = 'input window, operand 3, single buffered']
    #allocation10 [shape = 'u8[131072]{0}', space=vmem, size = 0x20000, scoped, tag = 'output window, operand 0']
    %10 = vsyncpa [#allocation5], 0
    %s11 = scalar_lea.sflag [#allocation5], 1
    %12 = vsyncpa %s11, 0
    %13 = vsyncpa [#allocation8], 0
    %14 = vsyncpa [#allocation6], 0
    %s15 = scalar_lea.sflag [#allocation6], 1
    %16 = vsyncpa %s15, 0
    loop: start=0, step=1, limit=4
    $region2: #{tpu_custom_call.1} parent=1 // loop_pre_header
      _
    $region3: #{tpu_custom_call.1} parent=1 // loop_header
      %s18 = sphi 0, %s22
      %p19 = scmp.ge.s32.totalorder %s18, 4
      %s28 = sphi 0, %s30
      %s31 = sphi 0, %s28
      %s32 = sphi 0, %s31
      %s48 = sphi 0, %s32
      %s52 = sphi 0, %s52
      %s54 = sphi 0, %s52
      %s55 = sphi 0, %s54
      %s69 = sphi 0, %s55
      %s73 = sphi 0, %s73
      %s75 = sphi 0, %s73
      %s76 = sphi 0, %s75
      %s90 = sphi 0, %s76
      %s94 = sphi 0, %s94
      %s96 = sphi 0, %s94
      %s97 = sphi 0, %s96
      %s111 = sphi 0, %s97
      %s115 = sphi 0, %s115
      %s117 = sphi 0, %s115
      %s118 = sphi 0, %s117
      %s132 = sphi 0, %s118
      %s138 = sphi 0, %s140
      %s141 = sphi 0, %s138
      %s142 = sphi 0, %s141
      %s158 = sphi 0, %s142
    $region4: #{tpu_custom_call.1} parent=1 // loop_header_branch
      %21 = sbr.rel (%p19) target = $region8
    $region5: #{tpu_custom_call.1} parent=1 // loop_body
      %s23 = ssub.s32 %s18, 1
      %s24 = ssub.s32 %s18, 2
      %s25 = sadd.s32 %s18, 1
      %s26 = ssub.s32 %s18, %s25
      %p27 = scmp.eq.s32.totalorder %s26, 0
      %s29 = sadd.s32 %s28, 1
      %s30 = scalar_select %p27, %s28, %s29
      %p33 = pneg %p27
      %p34 = scmp.eq.s32.totalorder %s18, 1
      %p35 = por %p33, %p34
      %p36 = scmp.ne.s32.totalorder %s28, %s31
      %p37 = scmp.eq.s32.totalorder %s18, 0
      %p38 = por %p36, %p37
      %p39 = scmp.ne.s32.totalorder %s28, %s31
      %p40 = scmp.eq.s32.totalorder %s23, 1
      %p41 = por %p39, %p40
      %p42 = scmp.ne.s32.totalorder %s31, %s32
      %p43 = scmp.eq.s32.totalorder %s23, 0
      %p44 = por %p42, %p43
      %p45 = scmp.ne.s32.totalorder %s31, %s32
      %p46 = scmp.eq.s32.totalorder %s24, 1
      %p47 = por %p45, %p46
      %p49 = scmp.ne.s32.totalorder %s32, %s48
      %p50 = scmp.eq.s32.totalorder %s24, 0
      %p51 = por %p49, %p50
      %s53 = sadd.s32 %s52, 1
      %p56 = scmp.eq.s32.totalorder %s18, 1
      %p57 = scmp.ne.s32.totalorder %s52, %s54
      %p58 = scmp.eq.s32.totalorder %s18, 0
      %p59 = por %p57, %p58
      %p60 = scmp.ne.s32.totalorder %s52, %s54
      %p61 = scmp.eq.s32.totalorder %s23, 1
      %p62 = por %p60, %p61
      %p63 = scmp.ne.s32.totalorder %s54, %s55
      %p64 = scmp.eq.s32.totalorder %s23, 0
      %p65 = por %p63, %p64
      %p66 = scmp.ne.s32.totalorder %s54, %s55
      %p67 = scmp.eq.s32.totalorder %s24, 1
      %p68 = por %p66, %p67
      %p70 = scmp.ne.s32.totalorder %s55, %s69
      %p71 = scmp.eq.s32.totalorder %s24, 0
      %p72 = por %p70, %p71
      %s74 = sadd.s32 %s73, 1
      %p77 = scmp.eq.s32.totalorder %s18, 1
      %p78 = scmp.ne.s32.totalorder %s73, %s75
      %p79 = scmp.eq.s32.totalorder %s18, 0
      %p80 = por %p78, %p79
      %p81 = scmp.ne.s32.totalorder %s73, %s75
      %p82 = scmp.eq.s32.totalorder %s23, 1
      %p83 = por %p81, %p82
      %p84 = scmp.ne.s32.totalorder %s75, %s76
      %p85 = scmp.eq.s32.totalorder %s23, 0
      %p86 = por %p84, %p85
      %p87 = scmp.ne.s32.totalorder %s75, %s76
      %p88 = scmp.eq.s32.totalorder %s24, 1
      %p89 = por %p87, %p88
      %p91 = scmp.ne.s32.totalorder %s76, %s90
      %p92 = scmp.eq.s32.totalorder %s24, 0
      %p93 = por %p91, %p92
      %s95 = sadd.s32 %s94, 1
      %p98 = scmp.eq.s32.totalorder %s18, 1
      %p99 = scmp.ne.s32.totalorder %s94, %s96
      %p100 = scmp.eq.s32.totalorder %s18, 0
      %p101 = por %p99, %p100
      %p102 = scmp.ne.s32.totalorder %s94, %s96
      %p103 = scmp.eq.s32.totalorder %s23, 1
      %p104 = por %p102, %p103
      %p105 = scmp.ne.s32.totalorder %s96, %s97
      %p106 = scmp.eq.s32.totalorder %s23, 0
      %p107 = por %p105, %p106
      %p108 = scmp.ne.s32.totalorder %s96, %s97
      %p109 = scmp.eq.s32.totalorder %s24, 1
      %p110 = por %p108, %p109
      %p112 = scmp.ne.s32.totalorder %s97, %s111
      %p113 = scmp.eq.s32.totalorder %s24, 0
      %p114 = por %p112, %p113
      %s116 = sadd.s32 %s115, 1
      %p119 = scmp.eq.s32.totalorder %s18, 1
      %p120 = scmp.ne.s32.totalorder %s115, %s117
      %p121 = scmp.eq.s32.totalorder %s18, 0
      %p122 = por %p120, %p121
      %p123 = scmp.ne.s32.totalorder %s115, %s117
      %p124 = scmp.eq.s32.totalorder %s23, 1
      %p125 = por %p123, %p124
      %p126 = scmp.ne.s32.totalorder %s117, %s118
      %p127 = scmp.eq.s32.totalorder %s23, 0
      %p128 = por %p126, %p127
      %p129 = scmp.ne.s32.totalorder %s117, %s118
      %p130 = scmp.eq.s32.totalorder %s24, 1
      %p131 = por %p129, %p130
      %p133 = scmp.ne.s32.totalorder %s118, %s132
      %p134 = scmp.eq.s32.totalorder %s24, 0
      %p135 = por %p133, %p134
      %s136 = ssub.s32 %s18, %s25
      %p137 = scmp.eq.s32.totalorder %s136, 0
      %s139 = sadd.s32 %s138, 1
      %s140 = scalar_select %p137, %s138, %s139
      %p143 = pneg %p137
      %p144 = scmp.eq.s32.totalorder %s18, 1
      %p145 = por %p143, %p144
      %p146 = scmp.ne.s32.totalorder %s138, %s141
      %p147 = scmp.eq.s32.totalorder %s18, 0
      %p148 = por %p146, %p147
      %p149 = scmp.ne.s32.totalorder %s138, %s141
      %p150 = scmp.eq.s32.totalorder %s23, 1
      %p151 = por %p149, %p150
      %p152 = scmp.ne.s32.totalorder %s141, %s142
      %p153 = scmp.eq.s32.totalorder %s23, 0
      %p154 = por %p152, %p153
      %p155 = scmp.ne.s32.totalorder %s141, %s142
      %p156 = scmp.eq.s32.totalorder %s24, 1
      %p157 = por %p155, %p156
      %p159 = scmp.ne.s32.totalorder %s142, %s158
      %p160 = scmp.eq.s32.totalorder %s24, 0
      %p161 = por %p159, %p160
      %p162 = scmp.le.s32.totalorder 1, %s18
      %p163 = scmp.lt.s32.totalorder %s18, 3
      %p164 = pnand %p162, %p163
      %p165 = pneg %p164
      // Predicated region
      $region9: #{tpu_custom_call.1} parent=5 // pred_check
        _
      $region10: #{tpu_custom_call.1} parent=5 // pred_check_branch
        %167 = sbr.rel (%p164) target = $region12
      $region11: #{tpu_custom_call.1} parent=5 // pred_region
        %s168 = ssub.s32 %s18, 1
        // Predicated region
        $region13: #{tpu_custom_call.1} parent=11 // pred_check
          %p169 = pneg %p65
        $region14: #{tpu_custom_call.1} parent=11 // pred_check_branch
          %171 = sbr.rel (%p169) target = $region16
        $region15: #{tpu_custom_call.1} parent=11 // pred_region
          %s173 = ssub.s32 3072, 3072
          %174 = vsyncadd [#allocation8], %s173
          %s175 = sshll.u32 [#allocation7], 4
          %s176 = int_to_ptr.vmem [resolvable:$true] %s175
          %181 = dma.hbm_to_vmem [thread:$0]  %s1, 3072, %s176, [#allocation8], 192, 192, 12
        $region16: #{tpu_custom_call.1} parent=11 // pred_fallthru
          _
        // Predicated region
        $region17: #{tpu_custom_call.1} parent=11 // pred_check
          %p182 = pneg %p86
        $region18: #{tpu_custom_call.1} parent=11 // pred_check_branch
          %184 = sbr.rel (%p182) target = $region20
        $region19: #{tpu_custom_call.1} parent=11 // pred_region
          _
        $region20: #{tpu_custom_call.1} parent=11 // pred_fallthru
          _
        // Predicated region
        $region21: #{tpu_custom_call.1} parent=11 // pred_check
          %p185 = pneg %p107
        $region22: #{tpu_custom_call.1} parent=11 // pred_check_branch
          %187 = sbr.rel (%p185) target = $region24
        $region23: #{tpu_custom_call.1} parent=11 // pred_region
          %s189 = ssub.s32 1024, 1024
          %190 = vsyncadd [#allocation8], %s189
          %s191 = sshll.u32 [#allocation9], 4
          %s192 = int_to_ptr.vmem [resolvable:$true] %s191
          %197 = dma.hbm_to_vmem [thread:$0]  %s3, 1024, %s192, [#allocation8], 64, 64, 4
        $region24: #{tpu_custom_call.1} parent=11 // pred_fallthru
          _
        // Predicated region
        $region25: #{tpu_custom_call.1} parent=11 // pred_check
          %p198 = pneg %p128
        $region26: #{tpu_custom_call.1} parent=11 // pred_check_branch
          %200 = sbr.rel (%p198) target = $region28
        $region27: #{tpu_custom_call.1} parent=11 // pred_region
          _
        $region28: #{tpu_custom_call.1} parent=11 // pred_fallthru
          _
      $region12: #{tpu_custom_call.1} parent=5 // pred_fallthru
        _
      %p201 = scmp.lt.s32.totalorder %s18, 2
      // Predicated region
      $region29: #{tpu_custom_call.1} parent=5 // pred_check
        %p202 = pneg %p201
      $region30: #{tpu_custom_call.1} parent=5 // pred_check_branch
        %204 = sbr.rel (%p202) target = $region32
      $region31: #{tpu_custom_call.1} parent=5 // pred_region
        // Predicated region
        $region33: #{tpu_custom_call.1} parent=31 // pred_check
          %p205 = pneg %p38
        $region34: #{tpu_custom_call.1} parent=31 // pred_check_branch
          %207 = sbr.rel (%p205) target = $region36
        $region35: #{tpu_custom_call.1} parent=31 // pred_region
          %s208 = sand.u32 %s28, 1
          %s209 = scalar_lea.sflag [#allocation5], %s208
          %s210 = sand.u32 %s28, 1
          %s211 = smul.addr %s210, 64
          %s212 = scalar_lea.vmem [#allocation4], %s211
          %s213 = smul.u32 2, %s18
          %s215 = ssub.s32 1024, 1024
          %216 = vsyncadd %s209, %s215
          %s217 = smul.addr %s213, 8
          %s218 = smul.addr %s217, 64
          %s219 = scalar_lea.hbm %s0, %s218
          %s220 = sshll.u32 %s212, 4
          %s221 = int_to_ptr.vmem [resolvable:$true] %s220
          %226 = dma.hbm_to_vmem [thread:$0]  %s219, 1024, %s221, %s209, 64, 64, 4
        $region36: #{tpu_custom_call.1} parent=31 // pred_fallthru
          _
      $region32: #{tpu_custom_call.1} parent=5 // pred_fallthru
        _
      %p227 = scmp.le.s32.totalorder 1, %s18
      %p228 = scmp.lt.s32.totalorder %s18, 3
      %p229 = pnand %p227, %p228
      %p230 = pneg %p229
      // Predicated region
      $region37: #{tpu_custom_call.1} parent=5 // pred_check
        _
      $region38: #{tpu_custom_call.1} parent=5 // pred_check_branch
        %232 = sbr.rel (%p229) target = $region40
      $region39: #{tpu_custom_call.1} parent=5 // pred_region
        %s233 = ssub.s32 %s18, 1
        %s234 = sand.u32 %s31, 1
        %s235 = scalar_lea.sflag [#allocation5], %s234
        %s236 = sand.u32 %s31, 1
        %s237 = smul.addr %s236, 64
        %s238 = scalar_lea.vmem [#allocation4], %s237
        // Predicated region
        $region41: #{tpu_custom_call.1} parent=39 // pred_check
          %p239 = pneg %p44
        $region42: #{tpu_custom_call.1} parent=39 // pred_check_branch
          %241 = sbr.rel (%p239) target = $region44
        $region43: #{tpu_custom_call.1} parent=39 // pred_region
          %242 = dma.done %s235, 1024
        $region44: #{tpu_custom_call.1} parent=39 // pred_fallthru
          _
        // Predicated region
        $region45: #{tpu_custom_call.1} parent=39 // pred_check
          %p243 = pneg %p65
        $region46: #{tpu_custom_call.1} parent=39 // pred_check_branch
          %245 = sbr.rel (%p243) target = $region48
        $region47: #{tpu_custom_call.1} parent=39 // pred_region
          %246 = dma.done [#allocation8], 3072
        $region48: #{tpu_custom_call.1} parent=39 // pred_fallthru
          _
        // Predicated region
        $region49: #{tpu_custom_call.1} parent=39 // pred_check
          %p247 = pneg %p107
        $region50: #{tpu_custom_call.1} parent=39 // pred_check_branch
          %249 = sbr.rel (%p247) target = $region52
        $region51: #{tpu_custom_call.1} parent=39 // pred_region
          %250 = dma.done [#allocation8], 1024
        $region52: #{tpu_custom_call.1} parent=39 // pred_fallthru
          _
        %s251 = sand.u32 %s31, 1
        %s252 = scalar_lea.sflag [#allocation5], %s251
        %s253 = sand.u32 %s31, 1
        %s254 = smul.addr %s253, 64
        %s255 = scalar_lea.vmem [#allocation4], %s254
        %p256 = pneg %p44
        %p257 = pneg %p41
        %p258 = pneg %p65
        %p259 = pneg %p62
        %p260 = pneg %p86
        %p261 = pneg %p83
        %p262 = pneg %p107
        %p263 = pneg %p104
        %p264 = pneg %p128
        %p265 = pneg %p125
        %p266 = pneg %p154
        %p267 = pneg %p151
        %s268 = sand.u32 %s141, 1
        %s269 = scalar_lea.sflag [#allocation6], %s268
        %s270 = sand.u32 %s141, 1
        %s271 = smul.addr %s270, 128
        %s272 = scalar_lea.vmem [#allocation10], %s271
        %s273 = smul.u32 2, %s23
        %s274 = smul.u32 2, %s23
        %v276 = vld [vmem:[%s238] sm:$0xf]
        %v277 = vld [vmem:[%s238 + $0x4] sm:$0xf]
        %v278 = vld [vmem:[%s238 + $0x8] sm:$0xf]
        %v279 = vld [vmem:[%s238 + $0xc] sm:$0xf]
        %v280 = vld [vmem:[%s238 + $0x10] sm:$0xf]
        %v281 = vld [vmem:[%s238 + $0x14] sm:$0xf]
        %v282 = vld [vmem:[%s238 + $0x18] sm:$0xf]
        %v283 = vld [vmem:[%s238 + $0x1c] sm:$0xf]
        %v284 = vld [vmem:[%s238 + $0x20] sm:$0xf]
        %v285 = vld [vmem:[%s238 + $0x24] sm:$0xf]
        %v286 = vld [vmem:[%s238 + $0x28] sm:$0xf]
        %v287 = vld [vmem:[%s238 + $0x2c] sm:$0xf]
        %v288 = vld [vmem:[%s238 + $0x30] sm:$0xf]
        %v289 = vld [vmem:[%s238 + $0x34] sm:$0xf]
        %v290 = vld [vmem:[%s238 + $0x38] sm:$0xf]
        %v291 = vld [vmem:[%s238 + $0x3c] sm:$0xf]
        %v292 = vld [vmem:[#allocation7] sm:$0xff]
        %v293 = vld [vmem:[#allocation7 + $0x8] sm:$0xf]
        %v294 = vld [vmem:[#allocation7 + $0xc] sm:$0xff]
        %v295 = vld [vmem:[#allocation7 + $0x14] sm:$0xf]
        %v296 = vld [vmem:[#allocation7 + $0x18] sm:$0xff]
        %v297 = vld [vmem:[#allocation7 + $0x20] sm:$0xf]
        %v298 = vld [vmem:[#allocation7 + $0x24] sm:$0xff]
        %v299 = vld [vmem:[#allocation7 + $0x2c] sm:$0xf]
        %v300 = vld [vmem:[#allocation7 + $0x30] sm:$0xff]
        %v301 = vld [vmem:[#allocation7 + $0x38] sm:$0xf]
        %v302 = vld [vmem:[#allocation7 + $0x3c] sm:$0xff]
        %v303 = vld [vmem:[#allocation7 + $0x44] sm:$0xf]
        %v304 = vld [vmem:[#allocation7 + $0x48] sm:$0xff]
        %v305 = vld [vmem:[#allocation7 + $0x50] sm:$0xf]
        %v306 = vld [vmem:[#allocation7 + $0x54] sm:$0xff]
        %v307 = vld [vmem:[#allocation7 + $0x5c] sm:$0xf]
        %v308 = vld [vmem:[#allocation7 + $0x60] sm:$0xff]
        %v309 = vld [vmem:[#allocation7 + $0x68] sm:$0xf]
        %v310 = vld [vmem:[#allocation7 + $0x6c] sm:$0xff]
        %v311 = vld [vmem:[#allocation7 + $0x74] sm:$0xf]
        %v312 = vld [vmem:[#allocation7 + $0x78] sm:$0xff]
        %v313 = vld [vmem:[#allocation7 + $0x80] sm:$0xf]
        %v314 = vld [vmem:[#allocation7 + $0x84] sm:$0xff]
        %v315 = vld [vmem:[#allocation7 + $0x8c] sm:$0xf]
        %v316 = vld [vmem:[#allocation7 + $0x90] sm:$0xff]
        %v317 = vld [vmem:[#allocation7 + $0x98] sm:$0xf]
        %v318 = vld [vmem:[#allocation7 + $0x9c] sm:$0xff]
        %v319 = vld [vmem:[#allocation7 + $0xa4] sm:$0xf]
        %v320 = vld [vmem:[#allocation7 + $0xa8] sm:$0xff]
        %v321 = vld [vmem:[#allocation7 + $0xb0] sm:$0xf]
        %v322 = vld [vmem:[#allocation7 + $0xb4] sm:$0xff]
        %v323 = vld [vmem:[#allocation7 + $0xbc] sm:$0xf]
        %v324 = vld [vmem:[%s2] sm:$0x7]
        %v326 = vlaneseq
        %v327 = vshrl.u32 %v326, 7
        %v328 = vsub.s32 0, %v327
        %v329 = vrot.slane %v324, %v328
        %v330 = vlaneseq
        %v331 = vshrl.u32 %v330, 7
        %v332 = vsub.s32 1, %v331
        %v333 = vrot.slane %v324, %v332
        %v334 = vlaneseq
        %v335 = vshrl.u32 %v334, 7
        %v336 = vsub.s32 2, %v335
        %v337 = vrot.slane %v324, %v336
        %v357 = vunpack.c.l.b16 %v276
        %v358 = vunpack.c.l.b16 %v277
        %v359 = vunpack.c.l.b16 %v278
        %v360 = vunpack.c.l.b16 %v279
        %v361 = vunpack.c.l.b16 %v280
        %v362 = vunpack.c.l.b16 %v281
        %v363 = vunpack.c.l.b16 %v282
        %v364 = vunpack.c.l.b16 %v283
        %v365 = vunpack.c.l.b16 %v284
        %v366 = vunpack.c.l.b16 %v285
        %v367 = vunpack.c.l.b16 %v286
        %v368 = vunpack.c.l.b16 %v287
        %v369 = vunpack.c.l.b16 %v288
        %v370 = vunpack.c.l.b16 %v289
        %v371 = vunpack.c.l.b16 %v290
        %v372 = vunpack.c.l.b16 %v291
        %v373 = vpack.c.b16 %v358, %v357
        %v374 = vpack.c.b16 %v360, %v359
        %v375 = vpack.c.b16 %v362, %v361
        %v376 = vpack.c.b16 %v364, %v363
        %v377 = vpack.c.b16 %v366, %v365
        %v378 = vpack.c.b16 %v368, %v367
        %v379 = vpack.c.b16 %v370, %v369
        %v380 = vpack.c.b16 %v372, %v371
        %v421 = vunpack.c.l.b16 %v292
        %v422 = vunpack.c.h.b16 %v292
        %v423 = vunpack.c.l.b16 %v293
        %v424 = vunpack.c.l.b16 %v294
        %v425 = vunpack.c.h.b16 %v294
        %v426 = vunpack.c.l.b16 %v295
        %v427 = vunpack.c.l.b16 %v296
        %v428 = vunpack.c.h.b16 %v296
        %v429 = vunpack.c.l.b16 %v297
        %v430 = vunpack.c.l.b16 %v298
        %v431 = vunpack.c.h.b16 %v298
        %v432 = vunpack.c.l.b16 %v299
        %v433 = vunpack.c.l.b16 %v300
        %v434 = vunpack.c.h.b16 %v300
        %v435 = vunpack.c.l.b16 %v301
        %v436 = vunpack.c.l.b16 %v302
        %v437 = vunpack.c.h.b16 %v302
        %v438 = vunpack.c.l.b16 %v303
        %v439 = vunpack.c.l.b16 %v304
        %v440 = vunpack.c.h.b16 %v304
        %v441 = vunpack.c.l.b16 %v305
        %v442 = vunpack.c.l.b16 %v306
        %v443 = vunpack.c.h.b16 %v306
        %v444 = vunpack.c.l.b16 %v307
        %v445 = vunpack.c.l.b16 %v308
        %v446 = vunpack.c.h.b16 %v308
        %v447 = vunpack.c.l.b16 %v309
        %v448 = vunpack.c.l.b16 %v310
        %v449 = vunpack.c.h.b16 %v310
        %v450 = vunpack.c.l.b16 %v311
        %v451 = vunpack.c.l.b16 %v312
        %v452 = vunpack.c.h.b16 %v312
        %v453 = vunpack.c.l.b16 %v313
        %v454 = vunpack.c.l.b16 %v314
        %v455 = vunpack.c.h.b16 %v314
        %v456 = vunpack.c.l.b16 %v315
        %v457 = vunpack.c.l.b16 %v316
        %v458 = vunpack.c.h.b16 %v316
        %v459 = vunpack.c.l.b16 %v317
        %v460 = vunpack.c.l.b16 %v318
        %v461 = vunpack.c.h.b16 %v318
        %v462 = vunpack.c.l.b16 %v319
        %v463 = vunpack.c.l.b16 %v320
        %v464 = vunpack.c.h.b16 %v320
        %v465 = vunpack.c.l.b16 %v321
        %v466 = vunpack.c.l.b16 %v322
        %v467 = vunpack.c.h.b16 %v322
        %v468 = vunpack.c.l.b16 %v323
        %v469 = vpack.c.b16 %v424, %v421
        %v470 = vpack.c.b16 %v425, %v422
        %v471 = vpack.c.b16 %v426, %v423
        %v472 = vpack.c.b16 %v430, %v427
        %v473 = vpack.c.b16 %v431, %v428
        %v474 = vpack.c.b16 %v432, %v429
        %v475 = vpack.c.b16 %v436, %v433
        %v476 = vpack.c.b16 %v437, %v434
        %v477 = vpack.c.b16 %v438, %v435
        %v478 = vpack.c.b16 %v442, %v439
        %v479 = vpack.c.b16 %v443, %v440
        %v480 = vpack.c.b16 %v444, %v441
        %v481 = vpack.c.b16 %v448, %v445
        %v482 = vpack.c.b16 %v449, %v446
        %v483 = vpack.c.b16 %v450, %v447
        %v484 = vpack.c.b16 %v454, %v451
        %v485 = vpack.c.b16 %v455, %v452
        %v486 = vpack.c.b16 %v456, %v453
        %v487 = vpack.c.b16 %v460, %v457
        %v488 = vpack.c.b16 %v461, %v458
        %v489 = vpack.c.b16 %v462, %v459
        %v490 = vpack.c.b16 %v466, %v463
        %v491 = vpack.c.b16 %v467, %v464
        %v492 = vpack.c.b16 %v468, %v465
        %517 = vmatprep.subr.bf16.mxu0 %v491
        %518 = vmatpush1.bf16.msra.mxu0 %v490
        %519 = vmatprep.subr.bf16.mxu0 %v488
        %520 = vmatpush1.bf16.msra.mxu0 %v487
        %521 = vmatprep.subr.bf16.mxu0 %v485
        %522 = vmatpush1.bf16.msra.mxu0 %v484
        %523 = vmatprep.subr.bf16.mxu0 %v482
        %524 = vmatpush1.bf16.msra.mxu0 %v481
        %525 = vmatprep.subr.bf16.mxu0 %v479
        %526 = vmatpush1.bf16.msra.mxu0 %v478
        %527 = vmatprep.subr.bf16.mxu0 %v476
        %528 = vmatpush1.bf16.msra.mxu0 %v475
        %529 = vmatprep.subr.bf16.mxu0 %v473
        %530 = vmatpush1.bf16.msra.mxu0 %v472
        %531 = vmatprep.subr.bf16.mxu0 %v470
        %532 = vmatpush1.bf16.msra.mxu0 %v469
        %533 = vmatprep.subr.bf16.mxu0 0
        %534 = vmatpush2.bf16.msra.mxu0 0
        %535 = vmatprep.subr.bf16.mxu0 0
        %536 = vmatpush2.bf16.msra.mxu0 0
        %537 = vmatprep.subr.bf16.mxu0 0
        %538 = vmatpush2.bf16.msra.mxu0 0
        %539 = vmatprep.subr.bf16.mxu0 0
        %540 = vmatpush2.bf16.msra.mxu0 0
        %541 = vmatprep.subr.bf16.mxu0 0
        %542 = vmatpush2.bf16.msra.mxu0 0
        %543 = vmatprep.subr.bf16.mxu0 0
        %544 = vmatpush2.bf16.msra.mxu0 0
        %545 = vmatprep.subr.bf16.mxu0 0
        %546 = vmatpush2.bf16.msra.mxu0 0
        %547 = vmatprep.subr.bf16.mxu0 0
        %548 = vmatpush2.bf16.msra.mxu0 0
        %549 = vmatprep.mubr.bf16.mxu0 0
        %550 = vmatmul.mubr.bf16.gmra.mxu0 %v373
        %v551 = vpop.f32.mrf.mxu0
        %v552 = vadd.f32 %v329, %v551
        %v553 = vpop.f32.mrf.mxu0
        %v554 = vadd.f32 %v333, %v553
        %v555 = vpop.f32.mrf.mxu0
        %v556 = vadd.f32 %v329, %v555
        %v557 = vpop.f32.mrf.mxu0
        %v558 = vadd.f32 %v333, %v557
        %559 = vmatprep.mubr.bf16.mxu0 0
        %560 = vmatmul.mubr.bf16.gmra.mxu0 %v374
        %v561 = vpop.f32.mrf.mxu0
        %v562 = vadd.f32 %v329, %v561
        %v563 = vpop.f32.mrf.mxu0
        %v564 = vadd.f32 %v333, %v563
        %v565 = vpop.f32.mrf.mxu0
        %v566 = vadd.f32 %v329, %v565
        %v567 = vpop.f32.mrf.mxu0
        %v568 = vadd.f32 %v333, %v567
        %569 = vmatprep.mubr.bf16.mxu0 0
        %570 = vmatmul.mubr.bf16.gmra.mxu0 %v375
        %v571 = vpop.f32.mrf.mxu0
        %v572 = vadd.f32 %v329, %v571
        %v573 = vpop.f32.mrf.mxu0
        %v574 = vadd.f32 %v333, %v573
        %v575 = vpop.f32.mrf.mxu0
        %v576 = vadd.f32 %v329, %v575
        %v577 = vpop.f32.mrf.mxu0
        %v578 = vadd.f32 %v333, %v577
        %579 = vmatprep.mubr.bf16.mxu0 0
        %580 = vmatmul.mubr.bf16.gmra.mxu0 %v376
        %v581 = vpop.f32.mrf.mxu0
        %v582 = vadd.f32 %v329, %v581
        %v583 = vpop.f32.mrf.mxu0
        %v584 = vadd.f32 %v333, %v583
        %v585 = vpop.f32.mrf.mxu0
        %v586 = vadd.f32 %v329, %v585
        %v587 = vpop.f32.mrf.mxu0
        %v588 = vadd.f32 %v333, %v587
        %589 = vmatprep.mubr.bf16.mxu0 0
        %590 = vmatmul.mubr.bf16.gmra.mxu0 %v377
        %v591 = vpop.f32.mrf.mxu0
        %v592 = vadd.f32 %v329, %v591
        %v593 = vpop.f32.mrf.mxu0
        %v594 = vadd.f32 %v333, %v593
        %v595 = vpop.f32.mrf.mxu0
        %v596 = vadd.f32 %v329, %v595
        %v597 = vpop.f32.mrf.mxu0
        %v598 = vadd.f32 %v333, %v597
        %599 = vmatprep.mubr.bf16.mxu0 0
        %600 = vmatmul.mubr.bf16.gmra.mxu0 %v378
        %v601 = vpop.f32.mrf.mxu0
        %v602 = vadd.f32 %v329, %v601
        %v603 = vpop.f32.mrf.mxu0
        %v604 = vadd.f32 %v333, %v603
        %v605 = vpop.f32.mrf.mxu0
        %v606 = vadd.f32 %v329, %v605
        %v607 = vpop.f32.mrf.mxu0
        %v608 = vadd.f32 %v333, %v607
        %609 = vmatprep.mubr.bf16.mxu0 0
        %610 = vmatmul.mubr.bf16.gmra.mxu0 %v379
        %v611 = vpop.f32.mrf.mxu0
        %v612 = vadd.f32 %v329, %v611
        %v613 = vpop.f32.mrf.mxu0
        %v614 = vadd.f32 %v333, %v613
        %v615 = vpop.f32.mrf.mxu0
        %v616 = vadd.f32 %v329, %v615
        %v617 = vpop.f32.mrf.mxu0
        %v618 = vadd.f32 %v333, %v617
        %619 = vmatprep.mubr.bf16.mxu0 0
        %620 = vmatmul.mubr.bf16.gmra.mxu0 %v380
        %v621 = vpop.f32.mrf.mxu0
        %v622 = vadd.f32 %v329, %v621
        %v623 = vpop.f32.mrf.mxu0
        %v624 = vadd.f32 %v333, %v623
        %v625 = vpop.f32.mrf.mxu0
        %v626 = vadd.f32 %v329, %v625
        %v627 = vpop.f32.mrf.mxu0
        %v628 = vadd.f32 %v333, %v627
        %629 = vdwg.mxu0
        %630 = vmatprep.subr.bf16.mxu0 0
        %631 = vmatpush1.bf16.msra.mxu0 %v492
        %632 = vmatprep.subr.bf16.mxu0 0
        %633 = vmatpush1.bf16.msra.mxu0 %v489
        %634 = vmatprep.subr.bf16.mxu0 0
        %635 = vmatpush1.bf16.msra.mxu0 %v486
        %636 = vmatprep.subr.bf16.mxu0 0
        %637 = vmatpush1.bf16.msra.mxu0 %v483
        %638 = vmatprep.subr.bf16.mxu0 0
        %639 = vmatpush1.bf16.msra.mxu0 %v480
        %640 = vmatprep.subr.bf16.mxu0 0
        %641 = vmatpush1.bf16.msra.mxu0 %v477
        %642 = vmatprep.subr.bf16.mxu0 0
        %643 = vmatpush1.bf16.msra.mxu0 %v474
        %644 = vmatprep.subr.bf16.mxu0 0
        %645 = vmatpush1.bf16.msra.mxu0 %v471
        %646 = vmatprep.subr.bf16.mxu0 0
        %647 = vmatpush2.bf16.msra.mxu0 0
        %648 = vmatprep.subr.bf16.mxu0 0
        %649 = vmatpush2.bf16.msra.mxu0 0
        %650 = vmatprep.subr.bf16.mxu0 0
        %651 = vmatpush2.bf16.msra.mxu0 0
        %652 = vmatprep.subr.bf16.mxu0 0
        %653 = vmatpush2.bf16.msra.mxu0 0
        %654 = vmatprep.subr.bf16.mxu0 0
        %655 = vmatpush2.bf16.msra.mxu0 0
        %656 = vmatprep.subr.bf16.mxu0 0
        %657 = vmatpush2.bf16.msra.mxu0 0
        %658 = vmatprep.subr.bf16.mxu0 0
        %659 = vmatpush2.bf16.msra.mxu0 0
        %660 = vmatprep.subr.bf16.mxu0 0
        %661 = vmatpush2.bf16.msra.mxu0 0
        %662 = vmatprep.mubr.bf16.mxu0 0
        %663 = vmatmul.mubr.bf16.gmra.mxu0 %v373
        %v664 = vpop.f32.mrf.mxu0
        %v665 = vadd.f32 %v337, %v664
        %v666 = vpop.f32.mrf.mxu0
        %v667 = vpop.f32.mrf.mxu0
        %v668 = vadd.f32 %v337, %v667
        %v669 = vpop.f32.mrf.mxu0
        %670 = vmatprep.mubr.bf16.mxu0 0
        %671 = vmatmul.mubr.bf16.gmra.mxu0 %v374
        %v672 = vpop.f32.mrf.mxu0
        %v673 = vadd.f32 %v337, %v672
        %v674 = vpop.f32.mrf.mxu0
        %v675 = vpop.f32.mrf.mxu0
        %v676 = vadd.f32 %v337, %v675
        %v677 = vpop.f32.mrf.mxu0
        %678 = vmatprep.mubr.bf16.mxu0 0
        %679 = vmatmul.mubr.bf16.gmra.mxu0 %v375
        %v680 = vpop.f32.mrf.mxu0
        %v681 = vadd.f32 %v337, %v680
        %v682 = vpop.f32.mrf.mxu0
        %v683 = vpop.f32.mrf.mxu0
        %v684 = vadd.f32 %v337, %v683
        %v685 = vpop.f32.mrf.mxu0
        %686 = vmatprep.mubr.bf16.mxu0 0
        %687 = vmatmul.mubr.bf16.gmra.mxu0 %v376
        %v688 = vpop.f32.mrf.mxu0
        %v689 = vadd.f32 %v337, %v688
        %v690 = vpop.f32.mrf.mxu0
        %v691 = vpop.f32.mrf.mxu0
        %v692 = vadd.f32 %v337, %v691
        %v693 = vpop.f32.mrf.mxu0
        %694 = vmatprep.mubr.bf16.mxu0 0
        %695 = vmatmul.mubr.bf16.gmra.mxu0 %v377
        %v696 = vpop.f32.mrf.mxu0
        %v697 = vadd.f32 %v337, %v696
        %v698 = vpop.f32.mrf.mxu0
        %v699 = vpop.f32.mrf.mxu0
        %v700 = vadd.f32 %v337, %v699
        %v701 = vpop.f32.mrf.mxu0
        %702 = vmatprep.mubr.bf16.mxu0 0
        %703 = vmatmul.mubr.bf16.gmra.mxu0 %v378
        %v704 = vpop.f32.mrf.mxu0
        %v705 = vadd.f32 %v337, %v704
        %v706 = vpop.f32.mrf.mxu0
        %v707 = vpop.f32.mrf.mxu0
        %v708 = vadd.f32 %v337, %v707
        %v709 = vpop.f32.mrf.mxu0
        %710 = vmatprep.mubr.bf16.mxu0 0
        %711 = vmatmul.mubr.bf16.gmra.mxu0 %v379
        %v712 = vpop.f32.mrf.mxu0
        %v713 = vadd.f32 %v337, %v712
        %v714 = vpop.f32.mrf.mxu0
        %v715 = vpop.f32.mrf.mxu0
        %v716 = vadd.f32 %v337, %v715
        %v717 = vpop.f32.mrf.mxu0
        %718 = vmatprep.mubr.bf16.mxu0 0
        %719 = vmatmul.mubr.bf16.gmra.mxu0 %v380
        %v720 = vpop.f32.mrf.mxu0
        %v721 = vadd.f32 %v337, %v720
        %v722 = vpop.f32.mrf.mxu0
        %v723 = vpop.f32.mrf.mxu0
        %v724 = vadd.f32 %v337, %v723
        %v725 = vpop.f32.mrf.mxu0
        %726 = vdwg.mxu0
        %v727 = vpack.c.bf16 %v556, %v552
        %v728 = vpack.c.bf16 %v558, %v554
        %v729 = vpack.c.bf16 %v668, %v665
        %v730 = vpack.c.bf16 %v566, %v562
        %v731 = vpack.c.bf16 %v568, %v564
        %v732 = vpack.c.bf16 %v676, %v673
        %v733 = vpack.c.bf16 %v576, %v572
        %v734 = vpack.c.bf16 %v578, %v574
        %v735 = vpack.c.bf16 %v684, %v681
        %v736 = vpack.c.bf16 %v586, %v582
        %v737 = vpack.c.bf16 %v588, %v584
        %v738 = vpack.c.bf16 %v692, %v689
        %v739 = vpack.c.bf16 %v596, %v592
        %v740 = vpack.c.bf16 %v598, %v594
        %v741 = vpack.c.bf16 %v700, %v697
        %v742 = vpack.c.bf16 %v606, %v602
        %v743 = vpack.c.bf16 %v608, %v604
        %v744 = vpack.c.bf16 %v708, %v705
        %v745 = vpack.c.bf16 %v616, %v612
        %v746 = vpack.c.bf16 %v618, %v614
        %v747 = vpack.c.bf16 %v716, %v713
        %v748 = vpack.c.bf16 %v626, %v622
        %v749 = vpack.c.bf16 %v628, %v624
        %v750 = vpack.c.bf16 %v724, %v721
        %v775 = vunpack.c.l.b16 %v727
        %v776 = vunpack.c.l.b16 %v728
        %v777 = vunpack.c.l.b16 %v729
        %v778 = vunpack.c.h.b16 %v727
        %v779 = vunpack.c.h.b16 %v728
        %v780 = vunpack.c.h.b16 %v729
        %v781 = vunpack.c.l.b16 %v730
        %v782 = vunpack.c.l.b16 %v731
        %v783 = vunpack.c.l.b16 %v732
        %v784 = vunpack.c.h.b16 %v730
        %v785 = vunpack.c.h.b16 %v731
        %v786 = vunpack.c.h.b16 %v732
        %v787 = vunpack.c.l.b16 %v733
        %v788 = vunpack.c.l.b16 %v734
        %v789 = vunpack.c.l.b16 %v735
        %v790 = vunpack.c.h.b16 %v733
        %v791 = vunpack.c.h.b16 %v734
        %v792 = vunpack.c.h.b16 %v735
        %v793 = vunpack.c.l.b16 %v736
        %v794 = vunpack.c.l.b16 %v737
        %v795 = vunpack.c.l.b16 %v738
        %v796 = vunpack.c.h.b16 %v736
        %v797 = vunpack.c.h.b16 %v737
        %v798 = vunpack.c.h.b16 %v738
        %v799 = vunpack.c.l.b16 %v739
        %v800 = vunpack.c.l.b16 %v740
        %v801 = vunpack.c.l.b16 %v741
        %v802 = vunpack.c.h.b16 %v739
        %v803 = vunpack.c.h.b16 %v740
        %v804 = vunpack.c.h.b16 %v741
        %v805 = vunpack.c.l.b16 %v742
        %v806 = vunpack.c.l.b16 %v743
        %v807 = vunpack.c.l.b16 %v744
        %v808 = vunpack.c.h.b16 %v742
        %v809 = vunpack.c.h.b16 %v743
        %v810 = vunpack.c.h.b16 %v744
        %v811 = vunpack.c.l.b16 %v745
        %v812 = vunpack.c.l.b16 %v746
        %v813 = vunpack.c.l.b16 %v747
        %v814 = vunpack.c.h.b16 %v745
        %v815 = vunpack.c.h.b16 %v746
        %v816 = vunpack.c.h.b16 %v747
        %v817 = vunpack.c.l.b16 %v748
        %v818 = vunpack.c.l.b16 %v749
        %v819 = vunpack.c.l.b16 %v750
        %v820 = vunpack.c.h.b16 %v748
        %v821 = vunpack.c.h.b16 %v749
        %v822 = vunpack.c.h.b16 %v750
        %v823 = vpack.c.b16 %v776, %v775
        %v824 = vpack.c.b16 %v777, %v777
        %v825 = vpack.c.b16 %v779, %v778
        %v826 = vpack.c.b16 %v780, %v780
        %v827 = vpack.c.b16 %v782, %v781
        %v828 = vpack.c.b16 %v783, %v783
        %v829 = vpack.c.b16 %v785, %v784
        %v830 = vpack.c.b16 %v786, %v786
        %v831 = vpack.c.b16 %v788, %v787
        %v832 = vpack.c.b16 %v789, %v789
        %v833 = vpack.c.b16 %v791, %v790
        %v834 = vpack.c.b16 %v792, %v792
        %v835 = vpack.c.b16 %v794, %v793
        %v836 = vpack.c.b16 %v795, %v795
        %v837 = vpack.c.b16 %v797, %v796
        %v838 = vpack.c.b16 %v798, %v798
        %v839 = vpack.c.b16 %v800, %v799
        %v840 = vpack.c.b16 %v801, %v801
        %v841 = vpack.c.b16 %v803, %v802
        %v842 = vpack.c.b16 %v804, %v804
        %v843 = vpack.c.b16 %v806, %v805
        %v844 = vpack.c.b16 %v807, %v807
        %v845 = vpack.c.b16 %v809, %v808
        %v846 = vpack.c.b16 %v810, %v810
        %v847 = vpack.c.b16 %v812, %v811
        %v848 = vpack.c.b16 %v813, %v813
        %v849 = vpack.c.b16 %v815, %v814
        %v850 = vpack.c.b16 %v816, %v816
        %v851 = vpack.c.b16 %v818, %v817
        %v852 = vpack.c.b16 %v819, %v819
        %v853 = vpack.c.b16 %v821, %v820
        %v854 = vpack.c.b16 %v822, %v822
        %887 = vst [vmem:[#allocation2] sm:$0xff] %v823
        %888 = vst [vmem:[#allocation2 + $0x8] sm:$0xf] %v824
        %889 = vst [vmem:[#allocation2 + $0xc] sm:$0xff] %v825
        %890 = vst [vmem:[#allocation2 + $0x14] sm:$0xf] %v826
        %891 = vst [vmem:[#allocation2 + $0x18] sm:$0xff] %v827
        %892 = vst [vmem:[#allocation2 + $0x20] sm:$0xf] %v828
        %893 = vst [vmem:[#allocation2 + $0x24] sm:$0xff] %v829
        %894 = vst [vmem:[#allocation2 + $0x2c] sm:$0xf] %v830
        %895 = vst [vmem:[#allocation2 + $0x30] sm:$0xff] %v831
        %896 = vst [vmem:[#allocation2 + $0x38] sm:$0xf] %v832
        %897 = vst [vmem:[#allocation2 + $0x3c] sm:$0xff] %v833
        %898 = vst [vmem:[#allocation2 + $0x44] sm:$0xf] %v834
        %899 = vst [vmem:[#allocation2 + $0x48] sm:$0xff] %v835
        %900 = vst [vmem:[#allocation2 + $0x50] sm:$0xf] %v836
        %901 = vst [vmem:[#allocation2 + $0x54] sm:$0xff] %v837
        %902 = vst [vmem:[#allocation2 + $0x5c] sm:$0xf] %v838
        %903 = vst [vmem:[#allocation2 + $0x60] sm:$0xff] %v839
        %904 = vst [vmem:[#allocation2 + $0x68] sm:$0xf] %v840
        %905 = vst [vmem:[#allocation2 + $0x6c] sm:$0xff] %v841
        %906 = vst [vmem:[#allocation2 + $0x74] sm:$0xf] %v842
        %907 = vst [vmem:[#allocation2 + $0x78] sm:$0xff] %v843
        %908 = vst [vmem:[#allocation2 + $0x80] sm:$0xf] %v844
        %909 = vst [vmem:[#allocation2 + $0x84] sm:$0xff] %v845
        %910 = vst [vmem:[#allocation2 + $0x8c] sm:$0xf] %v846
        %911 = vst [vmem:[#allocation2 + $0x90] sm:$0xff] %v847
        %912 = vst [vmem:[#allocation2 + $0x98] sm:$0xf] %v848
        %913 = vst [vmem:[#allocation2 + $0x9c] sm:$0xff] %v849
        %914 = vst [vmem:[#allocation2 + $0xa4] sm:$0xf] %v850
        %915 = vst [vmem:[#allocation2 + $0xa8] sm:$0xff] %v851
        %916 = vst [vmem:[#allocation2 + $0xb0] sm:$0xf] %v852
        %917 = vst [vmem:[#allocation2 + $0xb4] sm:$0xff] %v853
        %918 = vst [vmem:[#allocation2 + $0xbc] sm:$0xf] %v854
        %v919 = vld [vmem:[#allocation2] sm:$0xf]
        %v920 = vld [vmem:[#allocation2 + $0xc] sm:$0xf]
        %v921 = vld [vmem:[#allocation2 + $0x18] sm:$0xf]
        %v922 = vld [vmem:[#allocation2 + $0x24] sm:$0xf]
        %v923 = vld [vmem:[#allocation2 + $0x30] sm:$0xf]
        %v924 = vld [vmem:[#allocation2 + $0x3c] sm:$0xf]
        %v925 = vld [vmem:[#allocation2 + $0x48] sm:$0xf]
        %v926 = vld [vmem:[#allocation2 + $0x54] sm:$0xf]
        %v927 = vld [vmem:[#allocation2 + $0x4] sm:$0xf]
        %v928 = vld [vmem:[#allocation2 + $0x10] sm:$0xf]
        %v929 = vld [vmem:[#allocation2 + $0x1c] sm:$0xf]
        %v930 = vld [vmem:[#allocation2 + $0x28] sm:$0xf]
        %v931 = vld [vmem:[#allocation2 + $0x34] sm:$0xf]
        %v932 = vld [vmem:[#allocation2 + $0x40] sm:$0xf]
        %v933 = vld [vmem:[#allocation2 + $0x4c] sm:$0xf]
        %v934 = vld [vmem:[#allocation2 + $0x58] sm:$0xf]
        %v935 = vld [vmem:[#allocation2 + $0x8] sm:$0xf]
        %v936 = vld [vmem:[#allocation2 + $0x14] sm:$0xf]
        %v937 = vld [vmem:[#allocation2 + $0x20] sm:$0xf]
        %v938 = vld [vmem:[#allocation2 + $0x2c] sm:$0xf]
        %v939 = vld [vmem:[#allocation2 + $0x38] sm:$0xf]
        %v940 = vld [vmem:[#allocation2 + $0x44] sm:$0xf]
        %v941 = vld [vmem:[#allocation2 + $0x50] sm:$0xf]
        %v942 = vld [vmem:[#allocation2 + $0x5c] sm:$0xf]
        %v951 = vunpack.c.l.b16 %v919
        %v952 = vunpack.c.l.b16 %v920
        %v953 = vunpack.c.l.b16 %v921
        %v954 = vunpack.c.l.b16 %v922
        %v955 = vunpack.c.l.b16 %v923
        %v956 = vunpack.c.l.b16 %v924
        %v957 = vunpack.c.l.b16 %v925
        %v958 = vunpack.c.l.b16 %v926
        %v959 = vpack.c.b16 %v952, %v951
        %v960 = vpack.c.b16 %v954, %v953
        %v961 = vpack.c.b16 %v956, %v955
        %v962 = vpack.c.b16 %v958, %v957
        %v971 = vunpack.c.l.b16 %v927
        %v972 = vunpack.c.l.b16 %v928
        %v973 = vunpack.c.l.b16 %v929
        %v974 = vunpack.c.l.b16 %v930
        %v975 = vunpack.c.l.b16 %v931
        %v976 = vunpack.c.l.b16 %v932
        %v977 = vunpack.c.l.b16 %v933
        %v978 = vunpack.c.l.b16 %v934
        %v979 = vpack.c.b16 %v972, %v971
        %v980 = vpack.c.b16 %v974, %v973
        %v981 = vpack.c.b16 %v976, %v975
        %v982 = vpack.c.b16 %v978, %v977
        %vm983 = vcmask 261120
        %v985 = vsel %vm983, %v959, 0
        %v988 = vsel %vm983, %v960, 0
        %v991 = vsel %vm983, %v961, 0
        %v994 = vsel %vm983, %v962, 0
        %v997 = vsel %vm983, %v979, 0
        %v1000 = vsel %vm983, %v980, 0
        %v1003 = vsel %vm983, %v981, 0
        %v1006 = vsel %vm983, %v982, 0
        %1008 = vmatprep.subr.bf16.mxu0 0
        %1009 = vmatpush1.bf16.xpose.msra.mxu0 0
        %1010 = vmatprep.subr.bf16.mxu0 0
        %1011 = vmatpush1.bf16.xpose.msra.mxu0 0
        %1012 = vmatprep.subr.bf16.mxu0 0
        %1013 = vmatpush1.bf16.xpose.msra.mxu0 0
        %1014 = vmatprep.subr.bf16.mxu0 0
        %1015 = vmatpush1.bf16.xpose.msra.mxu0 0
        %1016 = vmatprep.subr.bf16.mxu0 0
        %1017 = vmatpush1.bf16.xpose.msra.mxu0 %v1006
        %1018 = vmatprep.subr.bf16.mxu0 0
        %1019 = vmatpush1.bf16.xpose.msra.mxu0 %v1003
        %1020 = vmatprep.subr.bf16.mxu0 0
        %1021 = vmatpush1.bf16.xpose.msra.mxu0 %v1000
        %1022 = vmatprep.subr.bf16.mxu0 0
        %1023 = vmatpush1.bf16.xpose.msra.mxu0 %v997
        %1024 = vmatprep.subr.bf16.mxu0 0
        %1025 = vmatpush2.bf16.xpose.msra.mxu0 0
        %1026 = vmatprep.subr.bf16.mxu0 0
        %1027 = vmatpush2.bf16.xpose.msra.mxu0 0
        %1028 = vmatprep.subr.bf16.mxu0 0
        %1029 = vmatpush2.bf16.xpose.msra.mxu0 0
        %1030 = vmatprep.subr.bf16.mxu0 0
        %1031 = vmatpush2.bf16.xpose.msra.mxu0 0
        %1032 = vmatprep.subr.bf16.mxu0 0
        %1033 = vmatpush2.bf16.xpose.msra.mxu0 0
        %1034 = vmatprep.subr.bf16.mxu0 0
        %1035 = vmatpush2.bf16.xpose.msra.mxu0 0
        %1036 = vmatprep.subr.bf16.mxu0 0
        %1037 = vmatpush2.bf16.xpose.msra.mxu0 0
        %1038 = vmatprep.subr.bf16.mxu0 0
        %1039 = vmatpush2.bf16.xpose.msra.mxu0 0
        %1040 = vmatprep.mubr.bf16.mxu0 0
        %1041 = vmatmul.mubr.bf16.gmra.mxu0 %v985
        %v1042 = vpop.f32.mrf.mxu0
        %v1043 = vadd.f32 0.0, %v1042
        %v1044 = vpop.f32.mrf.mxu0
        %v1045 = vpop.f32.mrf.mxu0
        %v1046 = vadd.f32 0.0, %v1045
        %v1047 = vpop.f32.mrf.mxu0
        %1048 = vmatprep.mubr.bf16.mxu0 0
        %1049 = vmatmul.mubr.bf16.gmra.mxu0 %v988
        %v1050 = vpop.f32.mrf.mxu0
        %v1051 = vadd.f32 0.0, %v1050
        %v1052 = vpop.f32.mrf.mxu0
        %v1053 = vpop.f32.mrf.mxu0
        %v1054 = vadd.f32 0.0, %v1053
        %v1055 = vpop.f32.mrf.mxu0
        %1056 = vmatprep.mubr.bf16.mxu0 0
        %1057 = vmatmul.mubr.bf16.gmra.mxu0 %v991
        %v1058 = vpop.f32.mrf.mxu0
        %v1059 = vadd.f32 0.0, %v1058
        %v1060 = vpop.f32.mrf.mxu0
        %v1061 = vpop.f32.mrf.mxu0
        %v1062 = vadd.f32 0.0, %v1061
        %v1063 = vpop.f32.mrf.mxu0
        %1064 = vmatprep.mubr.bf16.mxu0 0
        %1065 = vmatmul.mubr.bf16.gmra.mxu0 %v994
        %v1066 = vpop.f32.mrf.mxu0
        %v1067 = vadd.f32 0.0, %v1066
        %v1068 = vpop.f32.mrf.mxu0
        %v1069 = vpop.f32.mrf.mxu0
        %v1070 = vadd.f32 0.0, %v1069
        %v1071 = vpop.f32.mrf.mxu0
        %1072 = vdwg.mxu0
        %vm1073 = vcmask 523264
        %v1074 = vsel %vm1073, %v1043, -inf
        %1075 = vmax.xlane.f32.xlu0 %v1074
        %v1076 = vpop.xlane.xlu0 %1075
        %v1077 = vsel %vm1073, %v1046, -inf
        %1078 = vmax.xlane.f32.xlu0 %v1077
        %v1079 = vpop.xlane.xlu0 %1078
        %v1080 = vsel %vm1073, %v1051, -inf
        %1081 = vmax.xlane.f32.xlu0 %v1080
        %v1082 = vpop.xlane.xlu0 %1081
        %v1083 = vsel %vm1073, %v1054, -inf
        %1084 = vmax.xlane.f32.xlu0 %v1083
        %v1085 = vpop.xlane.xlu0 %1084
        %v1086 = vsel %vm1073, %v1059, -inf
        %1087 = vmax.xlane.f32.xlu0 %v1086
        %v1088 = vpop.xlane.xlu0 %1087
        %v1089 = vsel %vm1073, %v1062, -inf
        %1090 = vmax.xlane.f32.xlu0 %v1089
        %v1091 = vpop.xlane.xlu0 %1090
        %v1092 = vsel %vm1073, %v1067, -inf
        %1093 = vmax.xlane.f32.xlu0 %v1092
        %v1094 = vpop.xlane.xlu0 %1093
        %v1095 = vsel %vm1073, %v1070, -inf
        %1096 = vmax.xlane.f32.xlu0 %v1095
        %v1097 = vpop.xlane.xlu0 %1096
        %v1098 = vsub.f32 %v1043, %v1076
        %v1099 = vsub.f32 %v1046, %v1079
        %v1100 = vsub.f32 %v1051, %v1082
        %v1101 = vsub.f32 %v1054, %v1085
        %v1102 = vsub.f32 %v1059, %v1088
        %v1103 = vsub.f32 %v1062, %v1091
        %v1104 = vsub.f32 %v1067, %v1094
        %v1105 = vsub.f32 %v1070, %v1097
        %v1106 = vmul.f32 %v1098, 1.442695
        %v1107 = vpow.pop %v1106
        %v1108 = vmul.f32 %v1099, 1.442695
        %v1109 = vpow.pop %v1108
        %v1110 = vmul.f32 %v1100, 1.442695
        %v1111 = vpow.pop %v1110
        %v1112 = vmul.f32 %v1101, 1.442695
        %v1113 = vpow.pop %v1112
        %v1114 = vmul.f32 %v1102, 1.442695
        %v1115 = vpow.pop %v1114
        %v1116 = vmul.f32 %v1103, 1.442695
        %v1117 = vpow.pop %v1116
        %v1118 = vmul.f32 %v1104, 1.442695
        %v1119 = vpow.pop %v1118
        %v1120 = vmul.f32 %v1105, 1.442695
        %v1121 = vpow.pop %v1120
        %v1122 = vsel %vm1073, %v1107, 0.0
        %1123 = vadd.xlane.f32.xlu0 %v1122
        %v1124 = vpop.xlane.xlu0 %1123
        %v1125 = vsel %vm1073, %v1109, 0.0
        %1126 = vadd.xlane.f32.xlu0 %v1125
        %v1127 = vpop.xlane.xlu0 %1126
        %v1128 = vsel %vm1073, %v1111, 0.0
        %1129 = vadd.xlane.f32.xlu0 %v1128
        %v1130 = vpop.xlane.xlu0 %1129
        %v1131 = vsel %vm1073, %v1113, 0.0
        %1132 = vadd.xlane.f32.xlu0 %v1131
        %v1133 = vpop.xlane.xlu0 %1132
        %v1134 = vsel %vm1073, %v1115, 0.0
        %1135 = vadd.xlane.f32.xlu0 %v1134
        %v1136 = vpop.xlane.xlu0 %1135
        %v1137 = vsel %vm1073, %v1117, 0.0
        %1138 = vadd.xlane.f32.xlu0 %v1137
        %v1139 = vpop.xlane.xlu0 %1138
        %v1140 = vsel %vm1073, %v1119, 0.0
        %1141 = vadd.xlane.f32.xlu0 %v1140
        %v1142 = vpop.xlane.xlu0 %1141
        %v1143 = vsel %vm1073, %v1121, 0.0
        %1144 = vadd.xlane.f32.xlu0 %v1143
        %v1145 = vpop.xlane.xlu0 %1144
        %v1146 = vrcp.pop %v1124
        %v1147 = vrcp.pop %v1127
        %v1148 = vrcp.pop %v1130
        %v1149 = vrcp.pop %v1133
        %v1150 = vrcp.pop %v1136
        %v1151 = vrcp.pop %v1139
        %v1152 = vrcp.pop %v1142
        %v1153 = vrcp.pop %v1145
        %v1154 = vmul.f32 %v1107, %v1146
        %v1155 = vmul.f32 %v1109, %v1147
        %v1156 = vmul.f32 %v1111, %v1148
        %v1157 = vmul.f32 %v1113, %v1149
        %v1158 = vmul.f32 %v1115, %v1150
        %v1159 = vmul.f32 %v1117, %v1151
        %v1160 = vmul.f32 %v1119, %v1152
        %v1161 = vmul.f32 %v1121, %v1153
        %v1162 = vpack.c.bf16 %v1155, %v1154
        %v1163 = vpack.c.bf16 %v1157, %v1156
        %v1164 = vpack.c.bf16 %v1159, %v1158
        %v1165 = vpack.c.bf16 %v1161, %v1160
        %v1174 = vunpack.c.l.b16 %v935
        %v1175 = vunpack.c.l.b16 %v936
        %v1176 = vunpack.c.l.b16 %v937
        %v1177 = vunpack.c.l.b16 %v938
        %v1178 = vunpack.c.l.b16 %v939
        %v1179 = vunpack.c.l.b16 %v940
        %v1180 = vunpack.c.l.b16 %v941
        %v1181 = vunpack.c.l.b16 %v942
        %v1182 = vpack.c.b16 %v1175, %v1174
        %v1183 = vpack.c.b16 %v1177, %v1176
        %v1184 = vpack.c.b16 %v1179, %v1178
        %v1185 = vpack.c.b16 %v1181, %v1180
        %v1191 = vsel %vm1073, %v1162, 0
        %v1194 = vsel %vm1073, %v1163, 0
        %v1197 = vsel %vm1073, %v1164, 0
        %v1200 = vsel %vm1073, %v1165, 0
        %1202 = vmatprep.subr.bf16.mxu0 0
        %1203 = vmatpush1.bf16.msra.mxu0 0
        %1204 = vmatprep.subr.bf16.mxu0 0
        %1205 = vmatpush1.bf16.msra.mxu0 0
        %1206 = vmatprep.subr.bf16.mxu0 0
        %1207 = vmatpush1.bf16.msra.mxu0 0
        %1208 = vmatprep.subr.bf16.mxu0 0
        %1209 = vmatpush1.bf16.msra.mxu0 0
        %1210 = vmatprep.subr.bf16.mxu0 0
        %1211 = vmatpush1.bf16.msra.mxu0 %v1185
        %1212 = vmatprep.subr.bf16.mxu0 0
        %1213 = vmatpush1.bf16.msra.mxu0 %v1184
        %1214 = vmatprep.subr.bf16.mxu0 0
        %1215 = vmatpush1.bf16.msra.mxu0 %v1183
        %1216 = vmatprep.subr.bf16.mxu0 0
        %1217 = vmatpush1.bf16.msra.mxu0 %v1182
        %1218 = vmatprep.subr.bf16.mxu0 0
        %1219 = vmatpush2.bf16.msra.mxu0 0
        %1220 = vmatprep.subr.bf16.mxu0 0
        %1221 = vmatpush2.bf16.msra.mxu0 0
        %1222 = vmatprep.subr.bf16.mxu0 0
        %1223 = vmatpush2.bf16.msra.mxu0 0
        %1224 = vmatprep.subr.bf16.mxu0 0
        %1225 = vmatpush2.bf16.msra.mxu0 0
        %1226 = vmatprep.subr.bf16.mxu0 0
        %1227 = vmatpush2.bf16.msra.mxu0 0
        %1228 = vmatprep.subr.bf16.mxu0 0
        %1229 = vmatpush2.bf16.msra.mxu0 0
        %1230 = vmatprep.subr.bf16.mxu0 0
        %1231 = vmatpush2.bf16.msra.mxu0 0
        %1232 = vmatprep.subr.bf16.mxu0 0
        %1233 = vmatpush2.bf16.msra.mxu0 0
        %1234 = vmatprep.mubr.bf16.mxu0 0
        %1235 = vmatmul.mubr.bf16.gmra.mxu0 %v1191
        %v1236 = vpop.f32.mrf.mxu0
        %v1237 = vadd.f32 0.0, %v1236
        %v1238 = vpop.f32.mrf.mxu0
        %v1239 = vpop.f32.mrf.mxu0
        %v1240 = vadd.f32 0.0, %v1239
        %v1241 = vpop.f32.mrf.mxu0
        %1242 = vmatprep.mubr.bf16.mxu0 0
        %1243 = vmatmul.mubr.bf16.gmra.mxu0 %v1194
        %v1244 = vpop.f32.mrf.mxu0
        %v1245 = vadd.f32 0.0, %v1244
        %v1246 = vpop.f32.mrf.mxu0
        %v1247 = vpop.f32.mrf.mxu0
        %v1248 = vadd.f32 0.0, %v1247
        %v1249 = vpop.f32.mrf.mxu0
        %1250 = vmatprep.mubr.bf16.mxu0 0
        %1251 = vmatmul.mubr.bf16.gmra.mxu0 %v1197
        %v1252 = vpop.f32.mrf.mxu0
        %v1253 = vadd.f32 0.0, %v1252
        %v1254 = vpop.f32.mrf.mxu0
        %v1255 = vpop.f32.mrf.mxu0
        %v1256 = vadd.f32 0.0, %v1255
        %v1257 = vpop.f32.mrf.mxu0
        %1258 = vmatprep.mubr.bf16.mxu0 0
        %1259 = vmatmul.mubr.bf16.gmra.mxu0 %v1200
        %v1260 = vpop.f32.mrf.mxu0
        %v1261 = vadd.f32 0.0, %v1260
        %v1262 = vpop.f32.mrf.mxu0
        %v1263 = vpop.f32.mrf.mxu0
        %v1264 = vadd.f32 0.0, %v1263
        %v1265 = vpop.f32.mrf.mxu0
        %1266 = vdwg.mxu0
        %v1267 = vpack.c.bf16 %v1240, %v1237
        %v1268 = vpack.c.bf16 %v1248, %v1245
        %v1269 = vpack.c.bf16 %v1256, %v1253
        %v1270 = vpack.c.bf16 %v1264, %v1261
        %v1275 = vunpack.c.l.b16 %v1267
        %v1276 = vunpack.c.h.b16 %v1267
        %v1277 = vunpack.c.l.b16 %v1268
        %v1278 = vunpack.c.h.b16 %v1268
        %v1279 = vunpack.c.l.b16 %v1269
        %v1280 = vunpack.c.h.b16 %v1269
        %v1281 = vunpack.c.l.b16 %v1270
        %v1282 = vunpack.c.h.b16 %v1270
        %v1283 = vpack.c.b16 %v1275, %v1275
        %v1284 = vpack.c.b16 %v1276, %v1276
        %v1285 = vpack.c.b16 %v1277, %v1277
        %v1286 = vpack.c.b16 %v1278, %v1278
        %v1287 = vpack.c.b16 %v1279, %v1279
        %v1288 = vpack.c.b16 %v1280, %v1280
        %v1289 = vpack.c.b16 %v1281, %v1281
        %v1290 = vpack.c.b16 %v1282, %v1282
        %vm1299 = vcmask 257024
        %1300 = vst.msk [vmem:[#allocation3] sm:$0xf] %vm1299, %v1283
        %1301 = vst.msk [vmem:[#allocation3 + $0x4] sm:$0xf] %vm1299, %v1284
        %1302 = vst.msk [vmem:[#allocation3 + $0x8] sm:$0xf] %vm1299, %v1285
        %1303 = vst.msk [vmem:[#allocation3 + $0xc] sm:$0xf] %vm1299, %v1286
        %1304 = vst.msk [vmem:[#allocation3 + $0x10] sm:$0xf] %vm1299, %v1287
        %1305 = vst.msk [vmem:[#allocation3 + $0x14] sm:$0xf] %vm1299, %v1288
        %1306 = vst.msk [vmem:[#allocation3 + $0x18] sm:$0xf] %vm1299, %v1289
        %1307 = vst.msk [vmem:[#allocation3 + $0x1c] sm:$0xf] %vm1299, %v1290
        %v1308 = vld [vmem:[#allocation2] sm:$0xf]
        %v1309 = vld [vmem:[#allocation2 + $0xc] sm:$0xf]
        %v1310 = vld [vmem:[#allocation2 + $0x18] sm:$0xf]
        %v1311 = vld [vmem:[#allocation2 + $0x24] sm:$0xf]
        %v1312 = vld [vmem:[#allocation2 + $0x30] sm:$0xf]
        %v1313 = vld [vmem:[#allocation2 + $0x3c] sm:$0xf]
        %v1314 = vld [vmem:[#allocation2 + $0x48] sm:$0xf]
        %v1315 = vld [vmem:[#allocation2 + $0x54] sm:$0xf]
        %v1316 = vld [vmem:[#allocation2 + $0x4] sm:$0xf]
        %v1317 = vld [vmem:[#allocation2 + $0x10] sm:$0xf]
        %v1318 = vld [vmem:[#allocation2 + $0x1c] sm:$0xf]
        %v1319 = vld [vmem:[#allocation2 + $0x28] sm:$0xf]
        %v1320 = vld [vmem:[#allocation2 + $0x34] sm:$0xf]
        %v1321 = vld [vmem:[#allocation2 + $0x40] sm:$0xf]
        %v1322 = vld [vmem:[#allocation2 + $0x4c] sm:$0xf]
        %v1323 = vld [vmem:[#allocation2 + $0x58] sm:$0xf]
        %v1324 = vld [vmem:[#allocation2 + $0x8] sm:$0xf]
        %v1325 = vld [vmem:[#allocation2 + $0x14] sm:$0xf]
        %v1326 = vld [vmem:[#allocation2 + $0x20] sm:$0xf]
        %v1327 = vld [vmem:[#allocation2 + $0x2c] sm:$0xf]
        %v1328 = vld [vmem:[#allocation2 + $0x38] sm:$0xf]
        %v1329 = vld [vmem:[#allocation2 + $0x44] sm:$0xf]
        %v1330 = vld [vmem:[#allocation2 + $0x50] sm:$0xf]
        %v1331 = vld [vmem:[#allocation2 + $0x5c] sm:$0xf]
        %v1340 = vunpack.c.l.b16 %v1308
        %v1341 = vunpack.c.l.b16 %v1309
        %v1342 = vunpack.c.l.b16 %v1310
        %v1343 = vunpack.c.l.b16 %v1311
        %v1344 = vunpack.c.l.b16 %v1312
        %v1345 = vunpack.c.l.b16 %v1313
        %v1346 = vunpack.c.l.b16 %v1314
        %v1347 = vunpack.c.l.b16 %v1315
        %v1348 = vpack.c.b16 %v1341, %v1340
        %v1349 = vpack.c.b16 %v1343, %v1342
        %v1350 = vpack.c.b16 %v1345, %v1344
        %v1351 = vpack.c.b16 %v1347, %v1346
        %1352 = vrot.lane.b32.xlu0 %v1348, 96
        %v1353 = vpop.permute.xlu0 %1352
        %1354 = vrot.lane.b32.xlu0 %v1349, 96
        %v1355 = vpop.permute.xlu0 %1354
        %1356 = vrot.lane.b32.xlu0 %v1350, 96
        %v1357 = vpop.permute.xlu0 %1356
        %1358 = vrot.lane.b32.xlu0 %v1351, 96
        %v1359 = vpop.permute.xlu0 %1358
        %v1368 = vunpack.c.l.b16 %v1316
        %v1369 = vunpack.c.l.b16 %v1317
        %v1370 = vunpack.c.l.b16 %v1318
        %v1371 = vunpack.c.l.b16 %v1319
        %v1372 = vunpack.c.l.b16 %v1320
        %v1373 = vunpack.c.l.b16 %v1321
        %v1374 = vunpack.c.l.b16 %v1322
        %v1375 = vunpack.c.l.b16 %v1323
        %v1376 = vpack.c.b16 %v1369, %v1368
        %v1377 = vpack.c.b16 %v1371, %v1370
        %v1378 = vpack.c.b16 %v1373, %v1372
        %v1379 = vpack.c.b16 %v1375, %v1374
        %1380 = vrot.lane.b32.xlu0 %v1376, 96
        %v1381 = vpop.permute.xlu0 %1380
        %1382 = vrot.lane.b32.xlu0 %v1377, 96
        %v1383 = vpop.permute.xlu0 %1382
        %1384 = vrot.lane.b32.xlu0 %v1378, 96
        %v1385 = vpop.permute.xlu0 %1384
        %1386 = vrot.lane.b32.xlu0 %v1379, 96
        %v1387 = vpop.permute.xlu0 %1386
        %v1389 = vsel %vm983, %v1353, 0
        %v1392 = vsel %vm983, %v1355, 0
        %v1395 = vsel %vm983, %v1357, 0
        %v1398 = vsel %vm983, %v1359, 0
        %v1401 = vsel %vm983, %v1381, 0
        %v1404 = vsel %vm983, %v1383, 0
        %v1407 = vsel %vm983, %v1385, 0
        %v1410 = vsel %vm983, %v1387, 0
        %1412 = vmatprep.subr.bf16.mxu0 0
        %1413 = vmatpush1.bf16.xpose.msra.mxu0 0
        %1414 = vmatprep.subr.bf16.mxu0 0
        %1415 = vmatpush1.bf16.xpose.msra.mxu0 0
        %1416 = vmatprep.subr.bf16.mxu0 0
        %1417 = vmatpush1.bf16.xpose.msra.mxu0 0
        %1418 = vmatprep.subr.bf16.mxu0 0
        %1419 = vmatpush1.bf16.xpose.msra.mxu0 0
        %1420 = vmatprep.subr.bf16.mxu0 0
        %1421 = vmatpush1.bf16.xpose.msra.mxu0 %v1410
        %1422 = vmatprep.subr.bf16.mxu0 0
        %1423 = vmatpush1.bf16.xpose.msra.mxu0 %v1407
        %1424 = vmatprep.subr.bf16.mxu0 0
        %1425 = vmatpush1.bf16.xpose.msra.mxu0 %v1404
        %1426 = vmatprep.subr.bf16.mxu0 0
        %1427 = vmatpush1.bf16.xpose.msra.mxu0 %v1401
        %1428 = vmatprep.subr.bf16.mxu0 0
        %1429 = vmatpush2.bf16.xpose.msra.mxu0 0
        %1430 = vmatprep.subr.bf16.mxu0 0
        %1431 = vmatpush2.bf16.xpose.msra.mxu0 0
        %1432 = vmatprep.subr.bf16.mxu0 0
        %1433 = vmatpush2.bf16.xpose.msra.mxu0 0
        %1434 = vmatprep.subr.bf16.mxu0 0
        %1435 = vmatpush2.bf16.xpose.msra.mxu0 0
        %1436 = vmatprep.subr.bf16.mxu0 0
        %1437 = vmatpush2.bf16.xpose.msra.mxu0 0
        %1438 = vmatprep.subr.bf16.mxu0 0
        %1439 = vmatpush2.bf16.xpose.msra.mxu0 0
        %1440 = vmatprep.subr.bf16.mxu0 0
        %1441 = vmatpush2.bf16.xpose.msra.mxu0 0
        %1442 = vmatprep.subr.bf16.mxu0 0
        %1443 = vmatpush2.bf16.xpose.msra.mxu0 0
        %1444 = vmatprep.mubr.bf16.mxu0 0
        %1445 = vmatmul.mubr.bf16.gmra.mxu0 %v1389
        %v1446 = vpop.f32.mrf.mxu0
        %v1447 = vadd.f32 0.0, %v1446
        %v1448 = vpop.f32.mrf.mxu0
        %v1449 = vpop.f32.mrf.mxu0
        %v1450 = vadd.f32 0.0, %v1449
        %v1451 = vpop.f32.mrf.mxu0
        %1452 = vmatprep.mubr.bf16.mxu0 0
        %1453 = vmatmul.mubr.bf16.gmra.mxu0 %v1392
        %v1454 = vpop.f32.mrf.mxu0
        %v1455 = vadd.f32 0.0, %v1454
        %v1456 = vpop.f32.mrf.mxu0
        %v1457 = vpop.f32.mrf.mxu0
        %v1458 = vadd.f32 0.0, %v1457
        %v1459 = vpop.f32.mrf.mxu0
        %1460 = vmatprep.mubr.bf16.mxu0 0
        %1461 = vmatmul.mubr.bf16.gmra.mxu0 %v1395
        %v1462 = vpop.f32.mrf.mxu0
        %v1463 = vadd.f32 0.0, %v1462
        %v1464 = vpop.f32.mrf.mxu0
        %v1465 = vpop.f32.mrf.mxu0
        %v1466 = vadd.f32 0.0, %v1465
        %v1467 = vpop.f32.mrf.mxu0
        %1468 = vmatprep.mubr.bf16.mxu0 0
        %1469 = vmatmul.mubr.bf16.gmra.mxu0 %v1398
        %v1470 = vpop.f32.mrf.mxu0
        %v1471 = vadd.f32 0.0, %v1470
        %v1472 = vpop.f32.mrf.mxu0
        %v1473 = vpop.f32.mrf.mxu0
        %v1474 = vadd.f32 0.0, %v1473
        %v1475 = vpop.f32.mrf.mxu0
        %1476 = vdwg.mxu0
        %v1477 = vsel %vm1073, %v1447, -inf
        %1478 = vmax.xlane.f32.xlu0 %v1477
        %v1479 = vpop.xlane.xlu0 %1478
        %v1480 = vsel %vm1073, %v1450, -inf
        %1481 = vmax.xlane.f32.xlu0 %v1480
        %v1482 = vpop.xlane.xlu0 %1481
        %v1483 = vsel %vm1073, %v1455, -inf
        %1484 = vmax.xlane.f32.xlu0 %v1483
        %v1485 = vpop.xlane.xlu0 %1484
        %v1486 = vsel %vm1073, %v1458, -inf
        %1487 = vmax.xlane.f32.xlu0 %v1486
        %v1488 = vpop.xlane.xlu0 %1487
        %v1489 = vsel %vm1073, %v1463, -inf
        %1490 = vmax.xlane.f32.xlu0 %v1489
        %v1491 = vpop.xlane.xlu0 %1490
        %v1492 = vsel %vm1073, %v1466, -inf
        %1493 = vmax.xlane.f32.xlu0 %v1492
        %v1494 = vpop.xlane.xlu0 %1493
        %v1495 = vsel %vm1073, %v1471, -inf
        %1496 = vmax.xlane.f32.xlu0 %v1495
        %v1497 = vpop.xlane.xlu0 %1496
        %v1498 = vsel %vm1073, %v1474, -inf
        %1499 = vmax.xlane.f32.xlu0 %v1498
        %v1500 = vpop.xlane.xlu0 %1499
        %v1501 = vsub.f32 %v1447, %v1479
        %v1502 = vsub.f32 %v1450, %v1482
        %v1503 = vsub.f32 %v1455, %v1485
        %v1504 = vsub.f32 %v1458, %v1488
        %v1505 = vsub.f32 %v1463, %v1491
        %v1506 = vsub.f32 %v1466, %v1494
        %v1507 = vsub.f32 %v1471, %v1497
        %v1508 = vsub.f32 %v1474, %v1500
        %v1509 = vmul.f32 %v1501, 1.442695
        %v1510 = vpow.pop %v1509
        %v1511 = vmul.f32 %v1502, 1.442695
        %v1512 = vpow.pop %v1511
        %v1513 = vmul.f32 %v1503, 1.442695
        %v1514 = vpow.pop %v1513
        %v1515 = vmul.f32 %v1504, 1.442695
        %v1516 = vpow.pop %v1515
        %v1517 = vmul.f32 %v1505, 1.442695
        %v1518 = vpow.pop %v1517
        %v1519 = vmul.f32 %v1506, 1.442695
        %v1520 = vpow.pop %v1519
        %v1521 = vmul.f32 %v1507, 1.442695
        %v1522 = vpow.pop %v1521
        %v1523 = vmul.f32 %v1508, 1.442695
        %v1524 = vpow.pop %v1523
        %v1525 = vsel %vm1073, %v1510, 0.0
        %1526 = vadd.xlane.f32.xlu0 %v1525
        %v1527 = vpop.xlane.xlu0 %1526
        %v1528 = vsel %vm1073, %v1512, 0.0
        %1529 = vadd.xlane.f32.xlu0 %v1528
        %v1530 = vpop.xlane.xlu0 %1529
        %v1531 = vsel %vm1073, %v1514, 0.0
        %1532 = vadd.xlane.f32.xlu0 %v1531
        %v1533 = vpop.xlane.xlu0 %1532
        %v1534 = vsel %vm1073, %v1516, 0.0
        %1535 = vadd.xlane.f32.xlu0 %v1534
        %v1536 = vpop.xlane.xlu0 %1535
        %v1537 = vsel %vm1073, %v1518, 0.0
        %1538 = vadd.xlane.f32.xlu0 %v1537
        %v1539 = vpop.xlane.xlu0 %1538
        %v1540 = vsel %vm1073, %v1520, 0.0
        %1541 = vadd.xlane.f32.xlu0 %v1540
        %v1542 = vpop.xlane.xlu0 %1541
        %v1543 = vsel %vm1073, %v1522, 0.0
        %1544 = vadd.xlane.f32.xlu0 %v1543
        %v1545 = vpop.xlane.xlu0 %1544
        %v1546 = vsel %vm1073, %v1524, 0.0
        %1547 = vadd.xlane.f32.xlu0 %v1546
        %v1548 = vpop.xlane.xlu0 %1547
        %v1549 = vrcp.pop %v1527
        %v1550 = vrcp.pop %v1530
        %v1551 = vrcp.pop %v1533
        %v1552 = vrcp.pop %v1536
        %v1553 = vrcp.pop %v1539
        %v1554 = vrcp.pop %v1542
        %v1555 = vrcp.pop %v1545
        %v1556 = vrcp.pop %v1548
        %v1557 = vmul.f32 %v1510, %v1549
        %v1558 = vmul.f32 %v1512, %v1550
        %v1559 = vmul.f32 %v1514, %v1551
        %v1560 = vmul.f32 %v1516, %v1552
        %v1561 = vmul.f32 %v1518, %v1553
        %v1562 = vmul.f32 %v1520, %v1554
        %v1563 = vmul.f32 %v1522, %v1555
        %v1564 = vmul.f32 %v1524, %v1556
        %v1565 = vpack.c.bf16 %v1558, %v1557
        %v1566 = vpack.c.bf16 %v1560, %v1559
        %v1567 = vpack.c.bf16 %v1562, %v1561
        %v1568 = vpack.c.bf16 %v1564, %v1563
        %v1577 = vunpack.c.l.b16 %v1324
        %v1578 = vunpack.c.l.b16 %v1325
        %v1579 = vunpack.c.l.b16 %v1326
        %v1580 = vunpack.c.l.b16 %v1327
        %v1581 = vunpack.c.l.b16 %v1328
        %v1582 = vunpack.c.l.b16 %v1329
        %v1583 = vunpack.c.l.b16 %v1330
        %v1584 = vunpack.c.l.b16 %v1331
        %v1585 = vpack.c.b16 %v1578, %v1577
        %v1586 = vpack.c.b16 %v1580, %v1579
        %v1587 = vpack.c.b16 %v1582, %v1581
        %v1588 = vpack.c.b16 %v1584, %v1583
        %1589 = vrot.lane.b32.xlu0 %v1585, 96
        %v1590 = vpop.permute.xlu0 %1589
        %1591 = vrot.lane.b32.xlu0 %v1586, 96
        %v1592 = vpop.permute.xlu0 %1591
        %1593 = vrot.lane.b32.xlu0 %v1587, 96
        %v1594 = vpop.permute.xlu0 %1593
        %1595 = vrot.lane.b32.xlu0 %v1588, 96
        %v1596 = vpop.permute.xlu0 %1595
        %v1602 = vsel %vm1073, %v1565, 0
        %v1605 = vsel %vm1073, %v1566, 0
        %v1608 = vsel %vm1073, %v1567, 0
        %v1611 = vsel %vm1073, %v1568, 0
        %1613 = vmatprep.subr.bf16.mxu0 0
        %1614 = vmatpush1.bf16.msra.mxu0 0
        %1615 = vmatprep.subr.bf16.mxu0 0
        %1616 = vmatpush1.bf16.msra.mxu0 0
        %1617 = vmatprep.subr.bf16.mxu0 0
        %1618 = vmatpush1.bf16.msra.mxu0 0
        %1619 = vmatprep.subr.bf16.mxu0 0
        %1620 = vmatpush1.bf16.msra.mxu0 0
        %1621 = vmatprep.subr.bf16.mxu0 0
        %1622 = vmatpush1.bf16.msra.mxu0 %v1596
        %1623 = vmatprep.subr.bf16.mxu0 0
        %1624 = vmatpush1.bf16.msra.mxu0 %v1594
        %1625 = vmatprep.subr.bf16.mxu0 0
        %1626 = vmatpush1.bf16.msra.mxu0 %v1592
        %1627 = vmatprep.subr.bf16.mxu0 0
        %1628 = vmatpush1.bf16.msra.mxu0 %v1590
        %1629 = vmatprep.subr.bf16.mxu0 0
        %1630 = vmatpush2.bf16.msra.mxu0 0
        %1631 = vmatprep.subr.bf16.mxu0 0
        %1632 = vmatpush2.bf16.msra.mxu0 0
        %1633 = vmatprep.subr.bf16.mxu0 0
        %1634 = vmatpush2.bf16.msra.mxu0 0
        %1635 = vmatprep.subr.bf16.mxu0 0
        %1636 = vmatpush2.bf16.msra.mxu0 0
        %1637 = vmatprep.subr.bf16.mxu0 0
        %1638 = vmatpush2.bf16.msra.mxu0 0
        %1639 = vmatprep.subr.bf16.mxu0 0
        %1640 = vmatpush2.bf16.msra.mxu0 0
        %1641 = vmatprep.subr.bf16.mxu0 0
        %1642 = vmatpush2.bf16.msra.mxu0 0
        %1643 = vmatprep.subr.bf16.mxu0 0
        %1644 = vmatpush2.bf16.msra.mxu0 0
        %1645 = vmatprep.mubr.bf16.mxu0 0
        %1646 = vmatmul.mubr.bf16.gmra.mxu0 %v1602
        %v1647 = vpop.f32.mrf.mxu0
        %v1648 = vadd.f32 0.0, %v1647
        %v1649 = vpop.f32.mrf.mxu0
        %v1650 = vpop.f32.mrf.mxu0
        %v1651 = vadd.f32 0.0, %v1650
        %v1652 = vpop.f32.mrf.mxu0
        %1653 = vmatprep.mubr.bf16.mxu0 0
        %1654 = vmatmul.mubr.bf16.gmra.mxu0 %v1605
        %v1655 = vpop.f32.mrf.mxu0
        %v1656 = vadd.f32 0.0, %v1655
        %v1657 = vpop.f32.mrf.mxu0
        %v1658 = vpop.f32.mrf.mxu0
        %v1659 = vadd.f32 0.0, %v1658
        %v1660 = vpop.f32.mrf.mxu0
        %1661 = vmatprep.mubr.bf16.mxu0 0
        %1662 = vmatmul.mubr.bf16.gmra.mxu0 %v1608
        %v1663 = vpop.f32.mrf.mxu0
        %v1664 = vadd.f32 0.0, %v1663
        %v1665 = vpop.f32.mrf.mxu0
        %v1666 = vpop.f32.mrf.mxu0
        %v1667 = vadd.f32 0.0, %v1666
        %v1668 = vpop.f32.mrf.mxu0
        %1669 = vmatprep.mubr.bf16.mxu0 0
        %1670 = vmatmul.mubr.bf16.gmra.mxu0 %v1611
        %v1671 = vpop.f32.mrf.mxu0
        %v1672 = vadd.f32 0.0, %v1671
        %v1673 = vpop.f32.mrf.mxu0
        %v1674 = vpop.f32.mrf.mxu0
        %v1675 = vadd.f32 0.0, %v1674
        %v1676 = vpop.f32.mrf.mxu0
        %1677 = vdwg.mxu0
        %v1678 = vpack.c.bf16 %v1651, %v1648
        %v1679 = vpack.c.bf16 %v1659, %v1656
        %v1680 = vpack.c.bf16 %v1667, %v1664
        %v1681 = vpack.c.bf16 %v1675, %v1672
        %v1686 = vunpack.c.l.b16 %v1678
        %v1687 = vunpack.c.h.b16 %v1678
        %v1688 = vunpack.c.l.b16 %v1679
        %v1689 = vunpack.c.h.b16 %v1679
        %v1690 = vunpack.c.l.b16 %v1680
        %v1691 = vunpack.c.h.b16 %v1680
        %v1692 = vunpack.c.l.b16 %v1681
        %v1693 = vunpack.c.h.b16 %v1681
        %v1694 = vpack.c.b16 %v1686, %v1686
        %v1695 = vpack.c.b16 %v1687, %v1687
        %v1696 = vpack.c.b16 %v1688, %v1688
        %v1697 = vpack.c.b16 %v1689, %v1689
        %v1698 = vpack.c.b16 %v1690, %v1690
        %v1699 = vpack.c.b16 %v1691, %v1691
        %v1700 = vpack.c.b16 %v1692, %v1692
        %v1701 = vpack.c.b16 %v1693, %v1693
        %1702 = vrot.lane.b32.xlu0 %v1694, 32
        %v1703 = vpop.permute.xlu0 %1702
        %1704 = vrot.lane.b32.xlu0 %v1695, 32
        %v1705 = vpop.permute.xlu0 %1704
        %1706 = vrot.lane.b32.xlu0 %v1696, 32
        %v1707 = vpop.permute.xlu0 %1706
        %1708 = vrot.lane.b32.xlu0 %v1697, 32
        %v1709 = vpop.permute.xlu0 %1708
        %1710 = vrot.lane.b32.xlu0 %v1698, 32
        %v1711 = vpop.permute.xlu0 %1710
        %1712 = vrot.lane.b32.xlu0 %v1699, 32
        %v1713 = vpop.permute.xlu0 %1712
        %1714 = vrot.lane.b32.xlu0 %v1700, 32
        %v1715 = vpop.permute.xlu0 %1714
        %1716 = vrot.lane.b32.xlu0 %v1701, 32
        %v1717 = vpop.permute.xlu0 %1716
        %vm1726 = vcmask 519424
        %1727 = vst.msk [vmem:[#allocation3] sm:$0xf] %vm1726, %v1703
        %1728 = vst.msk [vmem:[#allocation3 + $0x4] sm:$0xf] %vm1726, %v1705
        %1729 = vst.msk [vmem:[#allocation3 + $0x8] sm:$0xf] %vm1726, %v1707
        %1730 = vst.msk [vmem:[#allocation3 + $0xc] sm:$0xf] %vm1726, %v1709
        %1731 = vst.msk [vmem:[#allocation3 + $0x10] sm:$0xf] %vm1726, %v1711
        %1732 = vst.msk [vmem:[#allocation3 + $0x14] sm:$0xf] %vm1726, %v1713
        %1733 = vst.msk [vmem:[#allocation3 + $0x18] sm:$0xf] %vm1726, %v1715
        %1734 = vst.msk [vmem:[#allocation3 + $0x1c] sm:$0xf] %vm1726, %v1717
        %v1735 = vld [vmem:[#allocation2] sm:$0xf]
        %v1736 = vld [vmem:[#allocation2 + $0xc] sm:$0xf]
        %v1737 = vld [vmem:[#allocation2 + $0x18] sm:$0xf]
        %v1738 = vld [vmem:[#allocation2 + $0x24] sm:$0xf]
        %v1739 = vld [vmem:[#allocation2 + $0x30] sm:$0xf]
        %v1740 = vld [vmem:[#allocation2 + $0x3c] sm:$0xf]
        %v1741 = vld [vmem:[#allocation2 + $0x48] sm:$0xf]
        %v1742 = vld [vmem:[#allocation2 + $0x54] sm:$0xf]
        %v1743 = vld [vmem:[#allocation2 + $0x4] sm:$0xf]
        %v1744 = vld [vmem:[#allocation2 + $0x10] sm:$0xf]
        %v1745 = vld [vmem:[#allocation2 + $0x1c] sm:$0xf]
        %v1746 = vld [vmem:[#allocation2 + $0x28] sm:$0xf]
        %v1747 = vld [vmem:[#allocation2 + $0x34] sm:$0xf]
        %v1748 = vld [vmem:[#allocation2 + $0x40] sm:$0xf]
        %v1749 = vld [vmem:[#allocation2 + $0x4c] sm:$0xf]
        %v1750 = vld [vmem:[#allocation2 + $0x58] sm:$0xf]
        %v1751 = vld [vmem:[#allocation2 + $0x8] sm:$0xf]
        %v1752 = vld [vmem:[#allocation2 + $0x14] sm:$0xf]
        %v1753 = vld [vmem:[#allocation2 + $0x20] sm:$0xf]
        %v1754 = vld [vmem:[#allocation2 + $0x2c] sm:$0xf]
        %v1755 = vld [vmem:[#allocation2 + $0x38] sm:$0xf]
        %v1756 = vld [vmem:[#allocation2 + $0x44] sm:$0xf]
        %v1757 = vld [vmem:[#allocation2 + $0x50] sm:$0xf]
        %v1758 = vld [vmem:[#allocation2 + $0x5c] sm:$0xf]
        %v1767 = vunpack.c.l.b16 %v1735
        %v1768 = vunpack.c.l.b16 %v1736
        %v1769 = vunpack.c.l.b16 %v1737
        %v1770 = vunpack.c.l.b16 %v1738
        %v1771 = vunpack.c.l.b16 %v1739
        %v1772 = vunpack.c.l.b16 %v1740
        %v1773 = vunpack.c.l.b16 %v1741
        %v1774 = vunpack.c.l.b16 %v1742
        %v1775 = vpack.c.b16 %v1768, %v1767
        %v1776 = vpack.c.b16 %v1770, %v1769
        %v1777 = vpack.c.b16 %v1772, %v1771
        %v1778 = vpack.c.b16 %v1774, %v1773
        %1779 = vrot.lane.b32.xlu0 %v1775, 64
        %v1780 = vpop.permute.xlu0 %1779
        %1781 = vrot.lane.b32.xlu0 %v1776, 64
        %v1782 = vpop.permute.xlu0 %1781
        %1783 = vrot.lane.b32.xlu0 %v1777, 64
        %v1784 = vpop.permute.xlu0 %1783
        %1785 = vrot.lane.b32.xlu0 %v1778, 64
        %v1786 = vpop.permute.xlu0 %1785
        %v1795 = vunpack.c.l.b16 %v1743
        %v1796 = vunpack.c.l.b16 %v1744
        %v1797 = vunpack.c.l.b16 %v1745
        %v1798 = vunpack.c.l.b16 %v1746
        %v1799 = vunpack.c.l.b16 %v1747
        %v1800 = vunpack.c.l.b16 %v1748
        %v1801 = vunpack.c.l.b16 %v1749
        %v1802 = vunpack.c.l.b16 %v1750
        %v1803 = vpack.c.b16 %v1796, %v1795
        %v1804 = vpack.c.b16 %v1798, %v1797
        %v1805 = vpack.c.b16 %v1800, %v1799
        %v1806 = vpack.c.b16 %v1802, %v1801
        %1807 = vrot.lane.b32.xlu0 %v1803, 64
        %v1808 = vpop.permute.xlu0 %1807
        %1809 = vrot.lane.b32.xlu0 %v1804, 64
        %v1810 = vpop.permute.xlu0 %1809
        %1811 = vrot.lane.b32.xlu0 %v1805, 64
        %v1812 = vpop.permute.xlu0 %1811
        %1813 = vrot.lane.b32.xlu0 %v1806, 64
        %v1814 = vpop.permute.xlu0 %1813
        %v1816 = vsel %vm983, %v1780, 0
        %v1819 = vsel %vm983, %v1782, 0
        %v1822 = vsel %vm983, %v1784, 0
        %v1825 = vsel %vm983, %v1786, 0
        %v1828 = vsel %vm983, %v1808, 0
        %v1831 = vsel %vm983, %v1810, 0
        %v1834 = vsel %vm983, %v1812, 0
        %v1837 = vsel %vm983, %v1814, 0
        %1839 = vmatprep.subr.bf16.mxu0 0
        %1840 = vmatpush1.bf16.xpose.msra.mxu0 0
        %1841 = vmatprep.subr.bf16.mxu0 0
        %1842 = vmatpush1.bf16.xpose.msra.mxu0 0
        %1843 = vmatprep.subr.bf16.mxu0 0
        %1844 = vmatpush1.bf16.xpose.msra.mxu0 0
        %1845 = vmatprep.subr.bf16.mxu0 0
        %1846 = vmatpush1.bf16.xpose.msra.mxu0 0
        %1847 = vmatprep.subr.bf16.mxu0 0
        %1848 = vmatpush1.bf16.xpose.msra.mxu0 %v1837
        %1849 = vmatprep.subr.bf16.mxu0 0
        %1850 = vmatpush1.bf16.xpose.msra.mxu0 %v1834
        %1851 = vmatprep.subr.bf16.mxu0 0
        %1852 = vmatpush1.bf16.xpose.msra.mxu0 %v1831
        %1853 = vmatprep.subr.bf16.mxu0 0
        %1854 = vmatpush1.bf16.xpose.msra.mxu0 %v1828
        %1855 = vmatprep.subr.bf16.mxu0 0
        %1856 = vmatpush2.bf16.xpose.msra.mxu0 0
        %1857 = vmatprep.subr.bf16.mxu0 0
        %1858 = vmatpush2.bf16.xpose.msra.mxu0 0
        %1859 = vmatprep.subr.bf16.mxu0 0
        %1860 = vmatpush2.bf16.xpose.msra.mxu0 0
        %1861 = vmatprep.subr.bf16.mxu0 0
        %1862 = vmatpush2.bf16.xpose.msra.mxu0 0
        %1863 = vmatprep.subr.bf16.mxu0 0
        %1864 = vmatpush2.bf16.xpose.msra.mxu0 0
        %1865 = vmatprep.subr.bf16.mxu0 0
        %1866 = vmatpush2.bf16.xpose.msra.mxu0 0
        %1867 = vmatprep.subr.bf16.mxu0 0
        %1868 = vmatpush2.bf16.xpose.msra.mxu0 0
        %1869 = vmatprep.subr.bf16.mxu0 0
        %1870 = vmatpush2.bf16.xpose.msra.mxu0 0
        %1871 = vmatprep.mubr.bf16.mxu0 0
        %1872 = vmatmul.mubr.bf16.gmra.mxu0 %v1816
        %v1873 = vpop.f32.mrf.mxu0
        %v1874 = vadd.f32 0.0, %v1873
        %v1875 = vpop.f32.mrf.mxu0
        %v1876 = vpop.f32.mrf.mxu0
        %v1877 = vadd.f32 0.0, %v1876
        %v1878 = vpop.f32.mrf.mxu0
        %1879 = vmatprep.mubr.bf16.mxu0 0
        %1880 = vmatmul.mubr.bf16.gmra.mxu0 %v1819
        %v1881 = vpop.f32.mrf.mxu0
        %v1882 = vadd.f32 0.0, %v1881
        %v1883 = vpop.f32.mrf.mxu0
        %v1884 = vpop.f32.mrf.mxu0
        %v1885 = vadd.f32 0.0, %v1884
        %v1886 = vpop.f32.mrf.mxu0
        %1887 = vmatprep.mubr.bf16.mxu0 0
        %1888 = vmatmul.mubr.bf16.gmra.mxu0 %v1822
        %v1889 = vpop.f32.mrf.mxu0
        %v1890 = vadd.f32 0.0, %v1889
        %v1891 = vpop.f32.mrf.mxu0
        %v1892 = vpop.f32.mrf.mxu0
        %v1893 = vadd.f32 0.0, %v1892
        %v1894 = vpop.f32.mrf.mxu0
        %1895 = vmatprep.mubr.bf16.mxu0 0
        %1896 = vmatmul.mubr.bf16.gmra.mxu0 %v1825
        %v1897 = vpop.f32.mrf.mxu0
        %v1898 = vadd.f32 0.0, %v1897
        %v1899 = vpop.f32.mrf.mxu0
        %v1900 = vpop.f32.mrf.mxu0
        %v1901 = vadd.f32 0.0, %v1900
        %v1902 = vpop.f32.mrf.mxu0
        %1903 = vdwg.mxu0
        %v1904 = vsel %vm1073, %v1874, -inf
        %1905 = vmax.xlane.f32.xlu0 %v1904
        %v1906 = vpop.xlane.xlu0 %1905
        %v1907 = vsel %vm1073, %v1877, -inf
        %1908 = vmax.xlane.f32.xlu0 %v1907
        %v1909 = vpop.xlane.xlu0 %1908
        %v1910 = vsel %vm1073, %v1882, -inf
        %1911 = vmax.xlane.f32.xlu0 %v1910
        %v1912 = vpop.xlane.xlu0 %1911
        %v1913 = vsel %vm1073, %v1885, -inf
        %1914 = vmax.xlane.f32.xlu0 %v1913
        %v1915 = vpop.xlane.xlu0 %1914
        %v1916 = vsel %vm1073, %v1890, -inf
        %1917 = vmax.xlane.f32.xlu0 %v1916
        %v1918 = vpop.xlane.xlu0 %1917
        %v1919 = vsel %vm1073, %v1893, -inf
        %1920 = vmax.xlane.f32.xlu0 %v1919
        %v1921 = vpop.xlane.xlu0 %1920
        %v1922 = vsel %vm1073, %v1898, -inf
        %1923 = vmax.xlane.f32.xlu0 %v1922
        %v1924 = vpop.xlane.xlu0 %1923
        %v1925 = vsel %vm1073, %v1901, -inf
        %1926 = vmax.xlane.f32.xlu0 %v1925
        %v1927 = vpop.xlane.xlu0 %1926
        %v1928 = vsub.f32 %v1874, %v1906
        %v1929 = vsub.f32 %v1877, %v1909
        %v1930 = vsub.f32 %v1882, %v1912
        %v1931 = vsub.f32 %v1885, %v1915
        %v1932 = vsub.f32 %v1890, %v1918
        %v1933 = vsub.f32 %v1893, %v1921
        %v1934 = vsub.f32 %v1898, %v1924
        %v1935 = vsub.f32 %v1901, %v1927
        %v1936 = vmul.f32 %v1928, 1.442695
        %v1937 = vpow.pop %v1936
        %v1938 = vmul.f32 %v1929, 1.442695
        %v1939 = vpow.pop %v1938
        %v1940 = vmul.f32 %v1930, 1.442695
        %v1941 = vpow.pop %v1940
        %v1942 = vmul.f32 %v1931, 1.442695
        %v1943 = vpow.pop %v1942
        %v1944 = vmul.f32 %v1932, 1.442695
        %v1945 = vpow.pop %v1944
        %v1946 = vmul.f32 %v1933, 1.442695
        %v1947 = vpow.pop %v1946
        %v1948 = vmul.f32 %v1934, 1.442695
        %v1949 = vpow.pop %v1948
        %v1950 = vmul.f32 %v1935, 1.442695
        %v1951 = vpow.pop %v1950
        %v1952 = vsel %vm1073, %v1937, 0.0
        %1953 = vadd.xlane.f32.xlu0 %v1952
        %v1954 = vpop.xlane.xlu0 %1953
        %v1955 = vsel %vm1073, %v1939, 0.0
        %1956 = vadd.xlane.f32.xlu0 %v1955
        %v1957 = vpop.xlane.xlu0 %1956
        %v1958 = vsel %vm1073, %v1941, 0.0
        %1959 = vadd.xlane.f32.xlu0 %v1958
        %v1960 = vpop.xlane.xlu0 %1959
        %v1961 = vsel %vm1073, %v1943, 0.0
        %1962 = vadd.xlane.f32.xlu0 %v1961
        %v1963 = vpop.xlane.xlu0 %1962
        %v1964 = vsel %vm1073, %v1945, 0.0
        %1965 = vadd.xlane.f32.xlu0 %v1964
        %v1966 = vpop.xlane.xlu0 %1965
        %v1967 = vsel %vm1073, %v1947, 0.0
        %1968 = vadd.xlane.f32.xlu0 %v1967
        %v1969 = vpop.xlane.xlu0 %1968
        %v1970 = vsel %vm1073, %v1949, 0.0
        %1971 = vadd.xlane.f32.xlu0 %v1970
        %v1972 = vpop.xlane.xlu0 %1971
        %v1973 = vsel %vm1073, %v1951, 0.0
        %1974 = vadd.xlane.f32.xlu0 %v1973
        %v1975 = vpop.xlane.xlu0 %1974
        %v1976 = vrcp.pop %v1954
        %v1977 = vrcp.pop %v1957
        %v1978 = vrcp.pop %v1960
        %v1979 = vrcp.pop %v1963
        %v1980 = vrcp.pop %v1966
        %v1981 = vrcp.pop %v1969
        %v1982 = vrcp.pop %v1972
        %v1983 = vrcp.pop %v1975
        %v1984 = vmul.f32 %v1937, %v1976
        %v1985 = vmul.f32 %v1939, %v1977
        %v1986 = vmul.f32 %v1941, %v1978
        %v1987 = vmul.f32 %v1943, %v1979
        %v1988 = vmul.f32 %v1945, %v1980
        %v1989 = vmul.f32 %v1947, %v1981
        %v1990 = vmul.f32 %v1949, %v1982
        %v1991 = vmul.f32 %v1951, %v1983
        %v1992 = vpack.c.bf16 %v1985, %v1984
        %v1993 = vpack.c.bf16 %v1987, %v1986
        %v1994 = vpack.c.bf16 %v1989, %v1988
        %v1995 = vpack.c.bf16 %v1991, %v1990
        %v2004 = vunpack.c.l.b16 %v1751
        %v2005 = vunpack.c.l.b16 %v1752
        %v2006 = vunpack.c.l.b16 %v1753
        %v2007 = vunpack.c.l.b16 %v1754
        %v2008 = vunpack.c.l.b16 %v1755
        %v2009 = vunpack.c.l.b16 %v1756
        %v2010 = vunpack.c.l.b16 %v1757
        %v2011 = vunpack.c.l.b16 %v1758
        %v2012 = vpack.c.b16 %v2005, %v2004
        %v2013 = vpack.c.b16 %v2007, %v2006
        %v2014 = vpack.c.b16 %v2009, %v2008
        %v2015 = vpack.c.b16 %v2011, %v2010
        %2016 = vrot.lane.b32.xlu0 %v2012, 64
        %v2017 = vpop.permute.xlu0 %2016
        %2018 = vrot.lane.b32.xlu0 %v2013, 64
        %v2019 = vpop.permute.xlu0 %2018
        %2020 = vrot.lane.b32.xlu0 %v2014, 64
        %v2021 = vpop.permute.xlu0 %2020
        %2022 = vrot.lane.b32.xlu0 %v2015, 64
        %v2023 = vpop.permute.xlu0 %2022
        %v2029 = vsel %vm1073, %v1992, 0
        %v2032 = vsel %vm1073, %v1993, 0
        %v2035 = vsel %vm1073, %v1994, 0
        %v2038 = vsel %vm1073, %v1995, 0
        %2040 = vmatprep.subr.bf16.mxu0 0
        %2041 = vmatpush1.bf16.msra.mxu0 0
        %2042 = vmatprep.subr.bf16.mxu0 0
        %2043 = vmatpush1.bf16.msra.mxu0 0
        %2044 = vmatprep.subr.bf16.mxu0 0
        %2045 = vmatpush1.bf16.msra.mxu0 0
        %2046 = vmatprep.subr.bf16.mxu0 0
        %2047 = vmatpush1.bf16.msra.mxu0 0
        %2048 = vmatprep.subr.bf16.mxu0 0
        %2049 = vmatpush1.bf16.msra.mxu0 %v2023
        %2050 = vmatprep.subr.bf16.mxu0 0
        %2051 = vmatpush1.bf16.msra.mxu0 %v2021
        %2052 = vmatprep.subr.bf16.mxu0 0
        %2053 = vmatpush1.bf16.msra.mxu0 %v2019
        %2054 = vmatprep.subr.bf16.mxu0 0
        %2055 = vmatpush1.bf16.msra.mxu0 %v2017
        %2056 = vmatprep.subr.bf16.mxu0 0
        %2057 = vmatpush2.bf16.msra.mxu0 0
        %2058 = vmatprep.subr.bf16.mxu0 0
        %2059 = vmatpush2.bf16.msra.mxu0 0
        %2060 = vmatprep.subr.bf16.mxu0 0
        %2061 = vmatpush2.bf16.msra.mxu0 0
        %2062 = vmatprep.subr.bf16.mxu0 0
        %2063 = vmatpush2.bf16.msra.mxu0 0
        %2064 = vmatprep.subr.bf16.mxu0 0
        %2065 = vmatpush2.bf16.msra.mxu0 0
        %2066 = vmatprep.subr.bf16.mxu0 0
        %2067 = vmatpush2.bf16.msra.mxu0 0
        %2068 = vmatprep.subr.bf16.mxu0 0
        %2069 = vmatpush2.bf16.msra.mxu0 0
        %2070 = vmatprep.subr.bf16.mxu0 0
        %2071 = vmatpush2.bf16.msra.mxu0 0
        %2072 = vmatprep.mubr.bf16.mxu0 0
        %2073 = vmatmul.mubr.bf16.gmra.mxu0 %v2029
        %v2074 = vpop.f32.mrf.mxu0
        %v2075 = vadd.f32 0.0, %v2074
        %v2076 = vpop.f32.mrf.mxu0
        %v2077 = vpop.f32.mrf.mxu0
        %v2078 = vadd.f32 0.0, %v2077
        %v2079 = vpop.f32.mrf.mxu0
        %2080 = vmatprep.mubr.bf16.mxu0 0
        %2081 = vmatmul.mubr.bf16.gmra.mxu0 %v2032
        %v2082 = vpop.f32.mrf.mxu0
        %v2083 = vadd.f32 0.0, %v2082
        %v2084 = vpop.f32.mrf.mxu0
        %v2085 = vpop.f32.mrf.mxu0
        %v2086 = vadd.f32 0.0, %v2085
        %v2087 = vpop.f32.mrf.mxu0
        %2088 = vmatprep.mubr.bf16.mxu0 0
        %2089 = vmatmul.mubr.bf16.gmra.mxu0 %v2035
        %v2090 = vpop.f32.mrf.mxu0
        %v2091 = vadd.f32 0.0, %v2090
        %v2092 = vpop.f32.mrf.mxu0
        %v2093 = vpop.f32.mrf.mxu0
        %v2094 = vadd.f32 0.0, %v2093
        %v2095 = vpop.f32.mrf.mxu0
        %2096 = vmatprep.mubr.bf16.mxu0 0
        %2097 = vmatmul.mubr.bf16.gmra.mxu0 %v2038
        %v2098 = vpop.f32.mrf.mxu0
        %v2099 = vadd.f32 0.0, %v2098
        %v2100 = vpop.f32.mrf.mxu0
        %v2101 = vpop.f32.mrf.mxu0
        %v2102 = vadd.f32 0.0, %v2101
        %v2103 = vpop.f32.mrf.mxu0
        %2104 = vdwg.mxu0
        %v2105 = vpack.c.bf16 %v2078, %v2075
        %v2106 = vpack.c.bf16 %v2086, %v2083
        %v2107 = vpack.c.bf16 %v2094, %v2091
        %v2108 = vpack.c.bf16 %v2102, %v2099
        %v2113 = vunpack.c.l.b16 %v2105
        %v2114 = vunpack.c.h.b16 %v2105
        %v2115 = vunpack.c.l.b16 %v2106
        %v2116 = vunpack.c.h.b16 %v2106
        %v2117 = vunpack.c.l.b16 %v2107
        %v2118 = vunpack.c.h.b16 %v2107
        %v2119 = vunpack.c.l.b16 %v2108
        %v2120 = vunpack.c.h.b16 %v2108
        %v2121 = vpack.c.b16 %v2113, %v2113
        %v2122 = vpack.c.b16 %v2114, %v2114
        %v2123 = vpack.c.b16 %v2115, %v2115
        %v2124 = vpack.c.b16 %v2116, %v2116
        %v2125 = vpack.c.b16 %v2117, %v2117
        %v2126 = vpack.c.b16 %v2118, %v2118
        %v2127 = vpack.c.b16 %v2119, %v2119
        %v2128 = vpack.c.b16 %v2120, %v2120
        %2129 = vrot.lane.b32.xlu0 %v2121, 64
        %v2130 = vpop.permute.xlu0 %2129
        %2131 = vrot.lane.b32.xlu0 %v2122, 64
        %v2132 = vpop.permute.xlu0 %2131
        %2133 = vrot.lane.b32.xlu0 %v2123, 64
        %v2134 = vpop.permute.xlu0 %2133
        %2135 = vrot.lane.b32.xlu0 %v2124, 64
        %v2136 = vpop.permute.xlu0 %2135
        %2137 = vrot.lane.b32.xlu0 %v2125, 64
        %v2138 = vpop.permute.xlu0 %2137
        %2139 = vrot.lane.b32.xlu0 %v2126, 64
        %v2140 = vpop.permute.xlu0 %2139
        %2141 = vrot.lane.b32.xlu0 %v2127, 64
        %v2142 = vpop.permute.xlu0 %2141
        %2143 = vrot.lane.b32.xlu0 %v2128, 64
        %v2144 = vpop.permute.xlu0 %2143
        %vm2153 = vcmask 781824
        %2154 = vst.msk [vmem:[#allocation3] sm:$0xf] %vm2153, %v2130
        %2155 = vst.msk [vmem:[#allocation3 + $0x4] sm:$0xf] %vm2153, %v2132
        %2156 = vst.msk [vmem:[#allocation3 + $0x8] sm:$0xf] %vm2153, %v2134
        %2157 = vst.msk [vmem:[#allocation3 + $0xc] sm:$0xf] %vm2153, %v2136
        %2158 = vst.msk [vmem:[#allocation3 + $0x10] sm:$0xf] %vm2153, %v2138
        %2159 = vst.msk [vmem:[#allocation3 + $0x14] sm:$0xf] %vm2153, %v2140
        %2160 = vst.msk [vmem:[#allocation3 + $0x18] sm:$0xf] %vm2153, %v2142
        %2161 = vst.msk [vmem:[#allocation3 + $0x1c] sm:$0xf] %vm2153, %v2144
        %v2162 = vld [vmem:[#allocation2] sm:$0xf]
        %v2163 = vld [vmem:[#allocation2 + $0xc] sm:$0xf]
        %v2164 = vld [vmem:[#allocation2 + $0x18] sm:$0xf]
        %v2165 = vld [vmem:[#allocation2 + $0x24] sm:$0xf]
        %v2166 = vld [vmem:[#allocation2 + $0x30] sm:$0xf]
        %v2167 = vld [vmem:[#allocation2 + $0x3c] sm:$0xf]
        %v2168 = vld [vmem:[#allocation2 + $0x48] sm:$0xf]
        %v2169 = vld [vmem:[#allocation2 + $0x54] sm:$0xf]
        %v2170 = vld [vmem:[#allocation2 + $0x4] sm:$0xf]
        %v2171 = vld [vmem:[#allocation2 + $0x10] sm:$0xf]
        %v2172 = vld [vmem:[#allocation2 + $0x1c] sm:$0xf]
        %v2173 = vld [vmem:[#allocation2 + $0x28] sm:$0xf]
        %v2174 = vld [vmem:[#allocation2 + $0x34] sm:$0xf]
        %v2175 = vld [vmem:[#allocation2 + $0x40] sm:$0xf]
        %v2176 = vld [vmem:[#allocation2 + $0x4c] sm:$0xf]
        %v2177 = vld [vmem:[#allocation2 + $0x58] sm:$0xf]
        %v2178 = vld [vmem:[#allocation2 + $0x8] sm:$0xf]
        %v2179 = vld [vmem:[#allocation2 + $0x14] sm:$0xf]
        %v2180 = vld [vmem:[#allocation2 + $0x20] sm:$0xf]
        %v2181 = vld [vmem:[#allocation2 + $0x2c] sm:$0xf]
        %v2182 = vld [vmem:[#allocation2 + $0x38] sm:$0xf]
        %v2183 = vld [vmem:[#allocation2 + $0x44] sm:$0xf]
        %v2184 = vld [vmem:[#allocation2 + $0x50] sm:$0xf]
        %v2185 = vld [vmem:[#allocation2 + $0x5c] sm:$0xf]
        %v2194 = vunpack.c.l.b16 %v2162
        %v2195 = vunpack.c.l.b16 %v2163
        %v2196 = vunpack.c.l.b16 %v2164
        %v2197 = vunpack.c.l.b16 %v2165
        %v2198 = vunpack.c.l.b16 %v2166
        %v2199 = vunpack.c.l.b16 %v2167
        %v2200 = vunpack.c.l.b16 %v2168
        %v2201 = vunpack.c.l.b16 %v2169
        %v2202 = vpack.c.b16 %v2195, %v2194
        %v2203 = vpack.c.b16 %v2197, %v2196
        %v2204 = vpack.c.b16 %v2199, %v2198
        %v2205 = vpack.c.b16 %v2201, %v2200
        %2206 = vrot.lane.b32.xlu0 %v2202, 32
        %v2207 = vpop.permute.xlu0 %2206
        %2208 = vrot.lane.b32.xlu0 %v2203, 32
        %v2209 = vpop.permute.xlu0 %2208
        %2210 = vrot.lane.b32.xlu0 %v2204, 32
        %v2211 = vpop.permute.xlu0 %2210
        %2212 = vrot.lane.b32.xlu0 %v2205, 32
        %v2213 = vpop.permute.xlu0 %2212
        %v2222 = vunpack.c.l.b16 %v2170
        %v2223 = vunpack.c.l.b16 %v2171
        %v2224 = vunpack.c.l.b16 %v2172
        %v2225 = vunpack.c.l.b16 %v2173
        %v2226 = vunpack.c.l.b16 %v2174
        %v2227 = vunpack.c.l.b16 %v2175
        %v2228 = vunpack.c.l.b16 %v2176
        %v2229 = vunpack.c.l.b16 %v2177
        %v2230 = vpack.c.b16 %v2223, %v2222
        %v2231 = vpack.c.b16 %v2225, %v2224
        %v2232 = vpack.c.b16 %v2227, %v2226
        %v2233 = vpack.c.b16 %v2229, %v2228
        %2234 = vrot.lane.b32.xlu0 %v2230, 32
        %v2235 = vpop.permute.xlu0 %2234
        %2236 = vrot.lane.b32.xlu0 %v2231, 32
        %v2237 = vpop.permute.xlu0 %2236
        %2238 = vrot.lane.b32.xlu0 %v2232, 32
        %v2239 = vpop.permute.xlu0 %2238
        %2240 = vrot.lane.b32.xlu0 %v2233, 32
        %v2241 = vpop.permute.xlu0 %2240
        %v2243 = vsel %vm983, %v2207, 0
        %v2246 = vsel %vm983, %v2209, 0
        %v2249 = vsel %vm983, %v2211, 0
        %v2252 = vsel %vm983, %v2213, 0
        %v2255 = vsel %vm983, %v2235, 0
        %v2258 = vsel %vm983, %v2237, 0
        %v2261 = vsel %vm983, %v2239, 0
        %v2264 = vsel %vm983, %v2241, 0
        %2266 = vmatprep.subr.bf16.mxu0 0
        %2267 = vmatpush1.bf16.xpose.msra.mxu0 0
        %2268 = vmatprep.subr.bf16.mxu0 0
        %2269 = vmatpush1.bf16.xpose.msra.mxu0 0
        %2270 = vmatprep.subr.bf16.mxu0 0
        %2271 = vmatpush1.bf16.xpose.msra.mxu0 0
        %2272 = vmatprep.subr.bf16.mxu0 0
        %2273 = vmatpush1.bf16.xpose.msra.mxu0 0
        %2274 = vmatprep.subr.bf16.mxu0 0
        %2275 = vmatpush1.bf16.xpose.msra.mxu0 %v2264
        %2276 = vmatprep.subr.bf16.mxu0 0
        %2277 = vmatpush1.bf16.xpose.msra.mxu0 %v2261
        %2278 = vmatprep.subr.bf16.mxu0 0
        %2279 = vmatpush1.bf16.xpose.msra.mxu0 %v2258
        %2280 = vmatprep.subr.bf16.mxu0 0
        %2281 = vmatpush1.bf16.xpose.msra.mxu0 %v2255
        %2282 = vmatprep.subr.bf16.mxu0 0
        %2283 = vmatpush2.bf16.xpose.msra.mxu0 0
        %2284 = vmatprep.subr.bf16.mxu0 0
        %2285 = vmatpush2.bf16.xpose.msra.mxu0 0
        %2286 = vmatprep.subr.bf16.mxu0 0
        %2287 = vmatpush2.bf16.xpose.msra.mxu0 0
        %2288 = vmatprep.subr.bf16.mxu0 0
        %2289 = vmatpush2.bf16.xpose.msra.mxu0 0
        %2290 = vmatprep.subr.bf16.mxu0 0
        %2291 = vmatpush2.bf16.xpose.msra.mxu0 0
        %2292 = vmatprep.subr.bf16.mxu0 0
        %2293 = vmatpush2.bf16.xpose.msra.mxu0 0
        %2294 = vmatprep.subr.bf16.mxu0 0
        %2295 = vmatpush2.bf16.xpose.msra.mxu0 0
        %2296 = vmatprep.subr.bf16.mxu0 0
        %2297 = vmatpush2.bf16.xpose.msra.mxu0 0
        %2298 = vmatprep.mubr.bf16.mxu0 0
        %2299 = vmatmul.mubr.bf16.gmra.mxu0 %v2243
        %v2300 = vpop.f32.mrf.mxu0
        %v2301 = vadd.f32 0.0, %v2300
        %v2302 = vpop.f32.mrf.mxu0
        %v2303 = vpop.f32.mrf.mxu0
        %v2304 = vadd.f32 0.0, %v2303
        %v2305 = vpop.f32.mrf.mxu0
        %2306 = vmatprep.mubr.bf16.mxu0 0
        %2307 = vmatmul.mubr.bf16.gmra.mxu0 %v2246
        %v2308 = vpop.f32.mrf.mxu0
        %v2309 = vadd.f32 0.0, %v2308
        %v2310 = vpop.f32.mrf.mxu0
        %v2311 = vpop.f32.mrf.mxu0
        %v2312 = vadd.f32 0.0, %v2311
        %v2313 = vpop.f32.mrf.mxu0
        %2314 = vmatprep.mubr.bf16.mxu0 0
        %2315 = vmatmul.mubr.bf16.gmra.mxu0 %v2249
        %v2316 = vpop.f32.mrf.mxu0
        %v2317 = vadd.f32 0.0, %v2316
        %v2318 = vpop.f32.mrf.mxu0
        %v2319 = vpop.f32.mrf.mxu0
        %v2320 = vadd.f32 0.0, %v2319
        %v2321 = vpop.f32.mrf.mxu0
        %2322 = vmatprep.mubr.bf16.mxu0 0
        %2323 = vmatmul.mubr.bf16.gmra.mxu0 %v2252
        %v2324 = vpop.f32.mrf.mxu0
        %v2325 = vadd.f32 0.0, %v2324
        %v2326 = vpop.f32.mrf.mxu0
        %v2327 = vpop.f32.mrf.mxu0
        %v2328 = vadd.f32 0.0, %v2327
        %v2329 = vpop.f32.mrf.mxu0
        %2330 = vdwg.mxu0
        %v2331 = vsel %vm1073, %v2301, -inf
        %2332 = vmax.xlane.f32.xlu0 %v2331
        %v2333 = vpop.xlane.xlu0 %2332
        %v2334 = vsel %vm1073, %v2304, -inf
        %2335 = vmax.xlane.f32.xlu0 %v2334
        %v2336 = vpop.xlane.xlu0 %2335
        %v2337 = vsel %vm1073, %v2309, -inf
        %2338 = vmax.xlane.f32.xlu0 %v2337
        %v2339 = vpop.xlane.xlu0 %2338
        %v2340 = vsel %vm1073, %v2312, -inf
        %2341 = vmax.xlane.f32.xlu0 %v2340
        %v2342 = vpop.xlane.xlu0 %2341
        %v2343 = vsel %vm1073, %v2317, -inf
        %2344 = vmax.xlane.f32.xlu0 %v2343
        %v2345 = vpop.xlane.xlu0 %2344
        %v2346 = vsel %vm1073, %v2320, -inf
        %2347 = vmax.xlane.f32.xlu0 %v2346
        %v2348 = vpop.xlane.xlu0 %2347
        %v2349 = vsel %vm1073, %v2325, -inf
        %2350 = vmax.xlane.f32.xlu0 %v2349
        %v2351 = vpop.xlane.xlu0 %2350
        %v2352 = vsel %vm1073, %v2328, -inf
        %2353 = vmax.xlane.f32.xlu0 %v2352
        %v2354 = vpop.xlane.xlu0 %2353
        %v2355 = vsub.f32 %v2301, %v2333
        %v2356 = vsub.f32 %v2304, %v2336
        %v2357 = vsub.f32 %v2309, %v2339
        %v2358 = vsub.f32 %v2312, %v2342
        %v2359 = vsub.f32 %v2317, %v2345
        %v2360 = vsub.f32 %v2320, %v2348
        %v2361 = vsub.f32 %v2325, %v2351
        %v2362 = vsub.f32 %v2328, %v2354
        %v2363 = vmul.f32 %v2355, 1.442695
        %v2364 = vpow.pop %v2363
        %v2365 = vmul.f32 %v2356, 1.442695
        %v2366 = vpow.pop %v2365
        %v2367 = vmul.f32 %v2357, 1.442695
        %v2368 = vpow.pop %v2367
        %v2369 = vmul.f32 %v2358, 1.442695
        %v2370 = vpow.pop %v2369
        %v2371 = vmul.f32 %v2359, 1.442695
        %v2372 = vpow.pop %v2371
        %v2373 = vmul.f32 %v2360, 1.442695
        %v2374 = vpow.pop %v2373
        %v2375 = vmul.f32 %v2361, 1.442695
        %v2376 = vpow.pop %v2375
        %v2377 = vmul.f32 %v2362, 1.442695
        %v2378 = vpow.pop %v2377
        %v2379 = vsel %vm1073, %v2364, 0.0
        %2380 = vadd.xlane.f32.xlu0 %v2379
        %v2381 = vpop.xlane.xlu0 %2380
        %v2382 = vsel %vm1073, %v2366, 0.0
        %2383 = vadd.xlane.f32.xlu0 %v2382
        %v2384 = vpop.xlane.xlu0 %2383
        %v2385 = vsel %vm1073, %v2368, 0.0
        %2386 = vadd.xlane.f32.xlu0 %v2385
        %v2387 = vpop.xlane.xlu0 %2386
        %v2388 = vsel %vm1073, %v2370, 0.0
        %2389 = vadd.xlane.f32.xlu0 %v2388
        %v2390 = vpop.xlane.xlu0 %2389
        %v2391 = vsel %vm1073, %v2372, 0.0
        %2392 = vadd.xlane.f32.xlu0 %v2391
        %v2393 = vpop.xlane.xlu0 %2392
        %v2394 = vsel %vm1073, %v2374, 0.0
        %2395 = vadd.xlane.f32.xlu0 %v2394
        %v2396 = vpop.xlane.xlu0 %2395
        %v2397 = vsel %vm1073, %v2376, 0.0
        %2398 = vadd.xlane.f32.xlu0 %v2397
        %v2399 = vpop.xlane.xlu0 %2398
        %v2400 = vsel %vm1073, %v2378, 0.0
        %2401 = vadd.xlane.f32.xlu0 %v2400
        %v2402 = vpop.xlane.xlu0 %2401
        %v2403 = vrcp.pop %v2381
        %v2404 = vrcp.pop %v2384
        %v2405 = vrcp.pop %v2387
        %v2406 = vrcp.pop %v2390
        %v2407 = vrcp.pop %v2393
        %v2408 = vrcp.pop %v2396
        %v2409 = vrcp.pop %v2399
        %v2410 = vrcp.pop %v2402
        %v2411 = vmul.f32 %v2364, %v2403
        %v2412 = vmul.f32 %v2366, %v2404
        %v2413 = vmul.f32 %v2368, %v2405
        %v2414 = vmul.f32 %v2370, %v2406
        %v2415 = vmul.f32 %v2372, %v2407
        %v2416 = vmul.f32 %v2374, %v2408
        %v2417 = vmul.f32 %v2376, %v2409
        %v2418 = vmul.f32 %v2378, %v2410
        %v2419 = vpack.c.bf16 %v2412, %v2411
        %v2420 = vpack.c.bf16 %v2414, %v2413
        %v2421 = vpack.c.bf16 %v2416, %v2415
        %v2422 = vpack.c.bf16 %v2418, %v2417
        %v2431 = vunpack.c.l.b16 %v2178
        %v2432 = vunpack.c.l.b16 %v2179
        %v2433 = vunpack.c.l.b16 %v2180
        %v2434 = vunpack.c.l.b16 %v2181
        %v2435 = vunpack.c.l.b16 %v2182
        %v2436 = vunpack.c.l.b16 %v2183
        %v2437 = vunpack.c.l.b16 %v2184
        %v2438 = vunpack.c.l.b16 %v2185
        %v2439 = vpack.c.b16 %v2432, %v2431
        %v2440 = vpack.c.b16 %v2434, %v2433
        %v2441 = vpack.c.b16 %v2436, %v2435
        %v2442 = vpack.c.b16 %v2438, %v2437
        %2443 = vrot.lane.b32.xlu0 %v2439, 32
        %v2444 = vpop.permute.xlu0 %2443
        %2445 = vrot.lane.b32.xlu0 %v2440, 32
        %v2446 = vpop.permute.xlu0 %2445
        %2447 = vrot.lane.b32.xlu0 %v2441, 32
        %v2448 = vpop.permute.xlu0 %2447
        %2449 = vrot.lane.b32.xlu0 %v2442, 32
        %v2450 = vpop.permute.xlu0 %2449
        %v2456 = vsel %vm1073, %v2419, 0
        %v2459 = vsel %vm1073, %v2420, 0
        %v2462 = vsel %vm1073, %v2421, 0
        %v2465 = vsel %vm1073, %v2422, 0
        %2467 = vmatprep.subr.bf16.mxu0 0
        %2468 = vmatpush1.bf16.msra.mxu0 0
        %2469 = vmatprep.subr.bf16.mxu0 0
        %2470 = vmatpush1.bf16.msra.mxu0 0
        %2471 = vmatprep.subr.bf16.mxu0 0
        %2472 = vmatpush1.bf16.msra.mxu0 0
        %2473 = vmatprep.subr.bf16.mxu0 0
        %2474 = vmatpush1.bf16.msra.mxu0 0
        %2475 = vmatprep.subr.bf16.mxu0 0
        %2476 = vmatpush1.bf16.msra.mxu0 %v2450
        %2477 = vmatprep.subr.bf16.mxu0 0
        %2478 = vmatpush1.bf16.msra.mxu0 %v2448
        %2479 = vmatprep.subr.bf16.mxu0 0
        %2480 = vmatpush1.bf16.msra.mxu0 %v2446
        %2481 = vmatprep.subr.bf16.mxu0 0
        %2482 = vmatpush1.bf16.msra.mxu0 %v2444
        %2483 = vmatprep.subr.bf16.mxu0 0
        %2484 = vmatpush2.bf16.msra.mxu0 0
        %2485 = vmatprep.subr.bf16.mxu0 0
        %2486 = vmatpush2.bf16.msra.mxu0 0
        %2487 = vmatprep.subr.bf16.mxu0 0
        %2488 = vmatpush2.bf16.msra.mxu0 0
        %2489 = vmatprep.subr.bf16.mxu0 0
        %2490 = vmatpush2.bf16.msra.mxu0 0
        %2491 = vmatprep.subr.bf16.mxu0 0
        %2492 = vmatpush2.bf16.msra.mxu0 0
        %2493 = vmatprep.subr.bf16.mxu0 0
        %2494 = vmatpush2.bf16.msra.mxu0 0
        %2495 = vmatprep.subr.bf16.mxu0 0
        %2496 = vmatpush2.bf16.msra.mxu0 0
        %2497 = vmatprep.subr.bf16.mxu0 0
        %2498 = vmatpush2.bf16.msra.mxu0 0
        %2499 = vmatprep.mubr.bf16.mxu0 0
        %2500 = vmatmul.mubr.bf16.gmra.mxu0 %v2456
        %v2501 = vpop.f32.mrf.mxu0
        %v2502 = vadd.f32 0.0, %v2501
        %v2503 = vpop.f32.mrf.mxu0
        %v2504 = vpop.f32.mrf.mxu0
        %v2505 = vadd.f32 0.0, %v2504
        %v2506 = vpop.f32.mrf.mxu0
        %2507 = vmatprep.mubr.bf16.mxu0 0
        %2508 = vmatmul.mubr.bf16.gmra.mxu0 %v2459
        %v2509 = vpop.f32.mrf.mxu0
        %v2510 = vadd.f32 0.0, %v2509
        %v2511 = vpop.f32.mrf.mxu0
        %v2512 = vpop.f32.mrf.mxu0
        %v2513 = vadd.f32 0.0, %v2512
        %v2514 = vpop.f32.mrf.mxu0
        %2515 = vmatprep.mubr.bf16.mxu0 0
        %2516 = vmatmul.mubr.bf16.gmra.mxu0 %v2462
        %v2517 = vpop.f32.mrf.mxu0
        %v2518 = vadd.f32 0.0, %v2517
        %v2519 = vpop.f32.mrf.mxu0
        %v2520 = vpop.f32.mrf.mxu0
        %v2521 = vadd.f32 0.0, %v2520
        %v2522 = vpop.f32.mrf.mxu0
        %2523 = vmatprep.mubr.bf16.mxu0 0
        %2524 = vmatmul.mubr.bf16.gmra.mxu0 %v2465
        %v2525 = vpop.f32.mrf.mxu0
        %v2526 = vadd.f32 0.0, %v2525
        %v2527 = vpop.f32.mrf.mxu0
        %v2528 = vpop.f32.mrf.mxu0
        %v2529 = vadd.f32 0.0, %v2528
        %v2530 = vpop.f32.mrf.mxu0
        %2531 = vdwg.mxu0
        %v2532 = vpack.c.bf16 %v2505, %v2502
        %v2533 = vpack.c.bf16 %v2513, %v2510
        %v2534 = vpack.c.bf16 %v2521, %v2518
        %v2535 = vpack.c.bf16 %v2529, %v2526
        %v2540 = vunpack.c.l.b16 %v2532
        %v2541 = vunpack.c.h.b16 %v2532
        %v2542 = vunpack.c.l.b16 %v2533
        %v2543 = vunpack.c.h.b16 %v2533
        %v2544 = vunpack.c.l.b16 %v2534
        %v2545 = vunpack.c.h.b16 %v2534
        %v2546 = vunpack.c.l.b16 %v2535
        %v2547 = vunpack.c.h.b16 %v2535
        %v2548 = vpack.c.b16 %v2540, %v2540
        %v2549 = vpack.c.b16 %v2541, %v2541
        %v2550 = vpack.c.b16 %v2542, %v2542
        %v2551 = vpack.c.b16 %v2543, %v2543
        %v2552 = vpack.c.b16 %v2544, %v2544
        %v2553 = vpack.c.b16 %v2545, %v2545
        %v2554 = vpack.c.b16 %v2546, %v2546
        %v2555 = vpack.c.b16 %v2547, %v2547
        %2556 = vrot.lane.b32.xlu0 %v2548, 96
        %v2557 = vpop.permute.xlu0 %2556
        %2558 = vrot.lane.b32.xlu0 %v2549, 96
        %v2559 = vpop.permute.xlu0 %2558
        %2560 = vrot.lane.b32.xlu0 %v2550, 96
        %v2561 = vpop.permute.xlu0 %2560
        %2562 = vrot.lane.b32.xlu0 %v2551, 96
        %v2563 = vpop.permute.xlu0 %2562
        %2564 = vrot.lane.b32.xlu0 %v2552, 96
        %v2565 = vpop.permute.xlu0 %2564
        %2566 = vrot.lane.b32.xlu0 %v2553, 96
        %v2567 = vpop.permute.xlu0 %2566
        %2568 = vrot.lane.b32.xlu0 %v2554, 96
        %v2569 = vpop.permute.xlu0 %2568
        %2570 = vrot.lane.b32.xlu0 %v2555, 96
        %v2571 = vpop.permute.xlu0 %2570
        %vm2580 = vcmask 1044224
        %2581 = vst.msk [vmem:[#allocation3] sm:$0xf] %vm2580, %v2557
        %2582 = vst.msk [vmem:[#allocation3 + $0x4] sm:$0xf] %vm2580, %v2559
        %2583 = vst.msk [vmem:[#allocation3 + $0x8] sm:$0xf] %vm2580, %v2561
        %2584 = vst.msk [vmem:[#allocation3 + $0xc] sm:$0xf] %vm2580, %v2563
        %2585 = vst.msk [vmem:[#allocation3 + $0x10] sm:$0xf] %vm2580, %v2565
        %2586 = vst.msk [vmem:[#allocation3 + $0x14] sm:$0xf] %vm2580, %v2567
        %2587 = vst.msk [vmem:[#allocation3 + $0x18] sm:$0xf] %vm2580, %v2569
        %2588 = vst.msk [vmem:[#allocation3 + $0x1c] sm:$0xf] %vm2580, %v2571
        %v2589 = vld [vmem:[#allocation2 + $0x60] sm:$0xf]
        %v2590 = vld [vmem:[#allocation2 + $0x6c] sm:$0xf]
        %v2591 = vld [vmem:[#allocation2 + $0x78] sm:$0xf]
        %v2592 = vld [vmem:[#allocation2 + $0x84] sm:$0xf]
        %v2593 = vld [vmem:[#allocation2 + $0x90] sm:$0xf]
        %v2594 = vld [vmem:[#allocation2 + $0x9c] sm:$0xf]
        %v2595 = vld [vmem:[#allocation2 + $0xa8] sm:$0xf]
        %v2596 = vld [vmem:[#allocation2 + $0xb4] sm:$0xf]
        %v2597 = vld [vmem:[#allocation2 + $0x64] sm:$0xf]
        %v2598 = vld [vmem:[#allocation2 + $0x70] sm:$0xf]
        %v2599 = vld [vmem:[#allocation2 + $0x7c] sm:$0xf]
        %v2600 = vld [vmem:[#allocation2 + $0x88] sm:$0xf]
        %v2601 = vld [vmem:[#allocation2 + $0x94] sm:$0xf]
        %v2602 = vld [vmem:[#allocation2 + $0xa0] sm:$0xf]
        %v2603 = vld [vmem:[#allocation2 + $0xac] sm:$0xf]
        %v2604 = vld [vmem:[#allocation2 + $0xb8] sm:$0xf]
        %v2605 = vld [vmem:[#allocation2 + $0x68] sm:$0xf]
        %v2606 = vld [vmem:[#allocation2 + $0x74] sm:$0xf]
        %v2607 = vld [vmem:[#allocation2 + $0x80] sm:$0xf]
        %v2608 = vld [vmem:[#allocation2 + $0x8c] sm:$0xf]
        %v2609 = vld [vmem:[#allocation2 + $0x98] sm:$0xf]
        %v2610 = vld [vmem:[#allocation2 + $0xa4] sm:$0xf]
        %v2611 = vld [vmem:[#allocation2 + $0xb0] sm:$0xf]
        %v2612 = vld [vmem:[#allocation2 + $0xbc] sm:$0xf]
        %v2621 = vunpack.c.l.b16 %v2589
        %v2622 = vunpack.c.l.b16 %v2590
        %v2623 = vunpack.c.l.b16 %v2591
        %v2624 = vunpack.c.l.b16 %v2592
        %v2625 = vunpack.c.l.b16 %v2593
        %v2626 = vunpack.c.l.b16 %v2594
        %v2627 = vunpack.c.l.b16 %v2595
        %v2628 = vunpack.c.l.b16 %v2596
        %v2629 = vpack.c.b16 %v2622, %v2621
        %v2630 = vpack.c.b16 %v2624, %v2623
        %v2631 = vpack.c.b16 %v2626, %v2625
        %v2632 = vpack.c.b16 %v2628, %v2627
        %v2641 = vunpack.c.l.b16 %v2597
        %v2642 = vunpack.c.l.b16 %v2598
        %v2643 = vunpack.c.l.b16 %v2599
        %v2644 = vunpack.c.l.b16 %v2600
        %v2645 = vunpack.c.l.b16 %v2601
        %v2646 = vunpack.c.l.b16 %v2602
        %v2647 = vunpack.c.l.b16 %v2603
        %v2648 = vunpack.c.l.b16 %v2604
        %v2649 = vpack.c.b16 %v2642, %v2641
        %v2650 = vpack.c.b16 %v2644, %v2643
        %v2651 = vpack.c.b16 %v2646, %v2645
        %v2652 = vpack.c.b16 %v2648, %v2647
        %v2654 = vsel %vm983, %v2629, 0
        %v2657 = vsel %vm983, %v2630, 0
        %v2660 = vsel %vm983, %v2631, 0
        %v2663 = vsel %vm983, %v2632, 0
        %v2666 = vsel %vm983, %v2649, 0
        %v2669 = vsel %vm983, %v2650, 0
        %v2672 = vsel %vm983, %v2651, 0
        %v2675 = vsel %vm983, %v2652, 0
        %2677 = vmatprep.subr.bf16.mxu0 0
        %2678 = vmatpush1.bf16.xpose.msra.mxu0 0
        %2679 = vmatprep.subr.bf16.mxu0 0
        %2680 = vmatpush1.bf16.xpose.msra.mxu0 0
        %2681 = vmatprep.subr.bf16.mxu0 0
        %2682 = vmatpush1.bf16.xpose.msra.mxu0 0
        %2683 = vmatprep.subr.bf16.mxu0 0
        %2684 = vmatpush1.bf16.xpose.msra.mxu0 0
        %2685 = vmatprep.subr.bf16.mxu0 0
        %2686 = vmatpush1.bf16.xpose.msra.mxu0 %v2675
        %2687 = vmatprep.subr.bf16.mxu0 0
        %2688 = vmatpush1.bf16.xpose.msra.mxu0 %v2672
        %2689 = vmatprep.subr.bf16.mxu0 0
        %2690 = vmatpush1.bf16.xpose.msra.mxu0 %v2669
        %2691 = vmatprep.subr.bf16.mxu0 0
        %2692 = vmatpush1.bf16.xpose.msra.mxu0 %v2666
        %2693 = vmatprep.subr.bf16.mxu0 0
        %2694 = vmatpush2.bf16.xpose.msra.mxu0 0
        %2695 = vmatprep.subr.bf16.mxu0 0
        %2696 = vmatpush2.bf16.xpose.msra.mxu0 0
        %2697 = vmatprep.subr.bf16.mxu0 0
        %2698 = vmatpush2.bf16.xpose.msra.mxu0 0
        %2699 = vmatprep.subr.bf16.mxu0 0
        %2700 = vmatpush2.bf16.xpose.msra.mxu0 0
        %2701 = vmatprep.subr.bf16.mxu0 0
        %2702 = vmatpush2.bf16.xpose.msra.mxu0 0
        %2703 = vmatprep.subr.bf16.mxu0 0
        %2704 = vmatpush2.bf16.xpose.msra.mxu0 0
        %2705 = vmatprep.subr.bf16.mxu0 0
        %2706 = vmatpush2.bf16.xpose.msra.mxu0 0
        %2707 = vmatprep.subr.bf16.mxu0 0
        %2708 = vmatpush2.bf16.xpose.msra.mxu0 0
        %2709 = vmatprep.mubr.bf16.mxu0 0
        %2710 = vmatmul.mubr.bf16.gmra.mxu0 %v2654
        %v2711 = vpop.f32.mrf.mxu0
        %v2712 = vadd.f32 0.0, %v2711
        %v2713 = vpop.f32.mrf.mxu0
        %v2714 = vpop.f32.mrf.mxu0
        %v2715 = vadd.f32 0.0, %v2714
        %v2716 = vpop.f32.mrf.mxu0
        %2717 = vmatprep.mubr.bf16.mxu0 0
        %2718 = vmatmul.mubr.bf16.gmra.mxu0 %v2657
        %v2719 = vpop.f32.mrf.mxu0
        %v2720 = vadd.f32 0.0, %v2719
        %v2721 = vpop.f32.mrf.mxu0
        %v2722 = vpop.f32.mrf.mxu0
        %v2723 = vadd.f32 0.0, %v2722
        %v2724 = vpop.f32.mrf.mxu0
        %2725 = vmatprep.mubr.bf16.mxu0 0
        %2726 = vmatmul.mubr.bf16.gmra.mxu0 %v2660
        %v2727 = vpop.f32.mrf.mxu0
        %v2728 = vadd.f32 0.0, %v2727
        %v2729 = vpop.f32.mrf.mxu0
        %v2730 = vpop.f32.mrf.mxu0
        %v2731 = vadd.f32 0.0, %v2730
        %v2732 = vpop.f32.mrf.mxu0
        %2733 = vmatprep.mubr.bf16.mxu0 0
        %2734 = vmatmul.mubr.bf16.gmra.mxu0 %v2663
        %v2735 = vpop.f32.mrf.mxu0
        %v2736 = vadd.f32 0.0, %v2735
        %v2737 = vpop.f32.mrf.mxu0
        %v2738 = vpop.f32.mrf.mxu0
        %v2739 = vadd.f32 0.0, %v2738
        %v2740 = vpop.f32.mrf.mxu0
        %2741 = vdwg.mxu0
        %v2742 = vsel %vm1073, %v2712, -inf
        %2743 = vmax.xlane.f32.xlu0 %v2742
        %v2744 = vpop.xlane.xlu0 %2743
        %v2745 = vsel %vm1073, %v2715, -inf
        %2746 = vmax.xlane.f32.xlu0 %v2745
        %v2747 = vpop.xlane.xlu0 %2746
        %v2748 = vsel %vm1073, %v2720, -inf
        %2749 = vmax.xlane.f32.xlu0 %v2748
        %v2750 = vpop.xlane.xlu0 %2749
        %v2751 = vsel %vm1073, %v2723, -inf
        %2752 = vmax.xlane.f32.xlu0 %v2751
        %v2753 = vpop.xlane.xlu0 %2752
        %v2754 = vsel %vm1073, %v2728, -inf
        %2755 = vmax.xlane.f32.xlu0 %v2754
        %v2756 = vpop.xlane.xlu0 %2755
        %v2757 = vsel %vm1073, %v2731, -inf
        %2758 = vmax.xlane.f32.xlu0 %v2757
        %v2759 = vpop.xlane.xlu0 %2758
        %v2760 = vsel %vm1073, %v2736, -inf
        %2761 = vmax.xlane.f32.xlu0 %v2760
        %v2762 = vpop.xlane.xlu0 %2761
        %v2763 = vsel %vm1073, %v2739, -inf
        %2764 = vmax.xlane.f32.xlu0 %v2763
        %v2765 = vpop.xlane.xlu0 %2764
        %v2766 = vsub.f32 %v2712, %v2744
        %v2767 = vsub.f32 %v2715, %v2747
        %v2768 = vsub.f32 %v2720, %v2750
        %v2769 = vsub.f32 %v2723, %v2753
        %v2770 = vsub.f32 %v2728, %v2756
        %v2771 = vsub.f32 %v2731, %v2759
        %v2772 = vsub.f32 %v2736, %v2762
        %v2773 = vsub.f32 %v2739, %v2765
        %v2774 = vmul.f32 %v2766, 1.442695
        %v2775 = vpow.pop %v2774
        %v2776 = vmul.f32 %v2767, 1.442695
        %v2777 = vpow.pop %v2776
        %v2778 = vmul.f32 %v2768, 1.442695
        %v2779 = vpow.pop %v2778
        %v2780 = vmul.f32 %v2769, 1.442695
        %v2781 = vpow.pop %v2780
        %v2782 = vmul.f32 %v2770, 1.442695
        %v2783 = vpow.pop %v2782
        %v2784 = vmul.f32 %v2771, 1.442695
        %v2785 = vpow.pop %v2784
        %v2786 = vmul.f32 %v2772, 1.442695
        %v2787 = vpow.pop %v2786
        %v2788 = vmul.f32 %v2773, 1.442695
        %v2789 = vpow.pop %v2788
        %v2790 = vsel %vm1073, %v2775, 0.0
        %2791 = vadd.xlane.f32.xlu0 %v2790
        %v2792 = vpop.xlane.xlu0 %2791
        %v2793 = vsel %vm1073, %v2777, 0.0
        %2794 = vadd.xlane.f32.xlu0 %v2793
        %v2795 = vpop.xlane.xlu0 %2794
        %v2796 = vsel %vm1073, %v2779, 0.0
        %2797 = vadd.xlane.f32.xlu0 %v2796
        %v2798 = vpop.xlane.xlu0 %2797
        %v2799 = vsel %vm1073, %v2781, 0.0
        %2800 = vadd.xlane.f32.xlu0 %v2799
        %v2801 = vpop.xlane.xlu0 %2800
        %v2802 = vsel %vm1073, %v2783, 0.0
        %2803 = vadd.xlane.f32.xlu0 %v2802
        %v2804 = vpop.xlane.xlu0 %2803
        %v2805 = vsel %vm1073, %v2785, 0.0
        %2806 = vadd.xlane.f32.xlu0 %v2805
        %v2807 = vpop.xlane.xlu0 %2806
        %v2808 = vsel %vm1073, %v2787, 0.0
        %2809 = vadd.xlane.f32.xlu0 %v2808
        %v2810 = vpop.xlane.xlu0 %2809
        %v2811 = vsel %vm1073, %v2789, 0.0
        %2812 = vadd.xlane.f32.xlu0 %v2811
        %v2813 = vpop.xlane.xlu0 %2812
        %v2814 = vrcp.pop %v2792
        %v2815 = vrcp.pop %v2795
        %v2816 = vrcp.pop %v2798
        %v2817 = vrcp.pop %v2801
        %v2818 = vrcp.pop %v2804
        %v2819 = vrcp.pop %v2807
        %v2820 = vrcp.pop %v2810
        %v2821 = vrcp.pop %v2813
        %v2822 = vmul.f32 %v2775, %v2814
        %v2823 = vmul.f32 %v2777, %v2815
        %v2824 = vmul.f32 %v2779, %v2816
        %v2825 = vmul.f32 %v2781, %v2817
        %v2826 = vmul.f32 %v2783, %v2818
        %v2827 = vmul.f32 %v2785, %v2819
        %v2828 = vmul.f32 %v2787, %v2820
        %v2829 = vmul.f32 %v2789, %v2821
        %v2830 = vpack.c.bf16 %v2823, %v2822
        %v2831 = vpack.c.bf16 %v2825, %v2824
        %v2832 = vpack.c.bf16 %v2827, %v2826
        %v2833 = vpack.c.bf16 %v2829, %v2828
        %v2842 = vunpack.c.l.b16 %v2605
        %v2843 = vunpack.c.l.b16 %v2606
        %v2844 = vunpack.c.l.b16 %v2607
        %v2845 = vunpack.c.l.b16 %v2608
        %v2846 = vunpack.c.l.b16 %v2609
        %v2847 = vunpack.c.l.b16 %v2610
        %v2848 = vunpack.c.l.b16 %v2611
        %v2849 = vunpack.c.l.b16 %v2612
        %v2850 = vpack.c.b16 %v2843, %v2842
        %v2851 = vpack.c.b16 %v2845, %v2844
        %v2852 = vpack.c.b16 %v2847, %v2846
        %v2853 = vpack.c.b16 %v2849, %v2848
        %v2859 = vsel %vm1073, %v2830, 0
        %v2862 = vsel %vm1073, %v2831, 0
        %v2865 = vsel %vm1073, %v2832, 0
        %v2868 = vsel %vm1073, %v2833, 0
        %2870 = vmatprep.subr.bf16.mxu0 0
        %2871 = vmatpush1.bf16.msra.mxu0 0
        %2872 = vmatprep.subr.bf16.mxu0 0
        %2873 = vmatpush1.bf16.msra.mxu0 0
        %2874 = vmatprep.subr.bf16.mxu0 0
        %2875 = vmatpush1.bf16.msra.mxu0 0
        %2876 = vmatprep.subr.bf16.mxu0 0
        %2877 = vmatpush1.bf16.msra.mxu0 0
        %2878 = vmatprep.subr.bf16.mxu0 0
        %2879 = vmatpush1.bf16.msra.mxu0 %v2853
        %2880 = vmatprep.subr.bf16.mxu0 0
        %2881 = vmatpush1.bf16.msra.mxu0 %v2852
        %2882 = vmatprep.subr.bf16.mxu0 0
        %2883 = vmatpush1.bf16.msra.mxu0 %v2851
        %2884 = vmatprep.subr.bf16.mxu0 0
        %2885 = vmatpush1.bf16.msra.mxu0 %v2850
        %2886 = vmatprep.subr.bf16.mxu0 0
        %2887 = vmatpush2.bf16.msra.mxu0 0
        %2888 = vmatprep.subr.bf16.mxu0 0
        %2889 = vmatpush2.bf16.msra.mxu0 0
        %2890 = vmatprep.subr.bf16.mxu0 0
        %2891 = vmatpush2.bf16.msra.mxu0 0
        %2892 = vmatprep.subr.bf16.mxu0 0
        %2893 = vmatpush2.bf16.msra.mxu0 0
        %2894 = vmatprep.subr.bf16.mxu0 0
        %2895 = vmatpush2.bf16.msra.mxu0 0
        %2896 = vmatprep.subr.bf16.mxu0 0
        %2897 = vmatpush2.bf16.msra.mxu0 0
        %2898 = vmatprep.subr.bf16.mxu0 0
        %2899 = vmatpush2.bf16.msra.mxu0 0
        %2900 = vmatprep.subr.bf16.mxu0 0
        %2901 = vmatpush2.bf16.msra.mxu0 0
        %2902 = vmatprep.mubr.bf16.mxu0 0
        %2903 = vmatmul.mubr.bf16.gmra.mxu0 %v2859
        %v2904 = vpop.f32.mrf.mxu0
        %v2905 = vadd.f32 0.0, %v2904
        %v2906 = vpop.f32.mrf.mxu0
        %v2907 = vpop.f32.mrf.mxu0
        %v2908 = vadd.f32 0.0, %v2907
        %v2909 = vpop.f32.mrf.mxu0
        %2910 = vmatprep.mubr.bf16.mxu0 0
        %2911 = vmatmul.mubr.bf16.gmra.mxu0 %v2862
        %v2912 = vpop.f32.mrf.mxu0
        %v2913 = vadd.f32 0.0, %v2912
        %v2914 = vpop.f32.mrf.mxu0
        %v2915 = vpop.f32.mrf.mxu0
        %v2916 = vadd.f32 0.0, %v2915
        %v2917 = vpop.f32.mrf.mxu0
        %2918 = vmatprep.mubr.bf16.mxu0 0
        %2919 = vmatmul.mubr.bf16.gmra.mxu0 %v2865
        %v2920 = vpop.f32.mrf.mxu0
        %v2921 = vadd.f32 0.0, %v2920
        %v2922 = vpop.f32.mrf.mxu0
        %v2923 = vpop.f32.mrf.mxu0
        %v2924 = vadd.f32 0.0, %v2923
        %v2925 = vpop.f32.mrf.mxu0
        %2926 = vmatprep.mubr.bf16.mxu0 0
        %2927 = vmatmul.mubr.bf16.gmra.mxu0 %v2868
        %v2928 = vpop.f32.mrf.mxu0
        %v2929 = vadd.f32 0.0, %v2928
        %v2930 = vpop.f32.mrf.mxu0
        %v2931 = vpop.f32.mrf.mxu0
        %v2932 = vadd.f32 0.0, %v2931
        %v2933 = vpop.f32.mrf.mxu0
        %2934 = vdwg.mxu0
        %v2935 = vpack.c.bf16 %v2908, %v2905
        %v2936 = vpack.c.bf16 %v2916, %v2913
        %v2937 = vpack.c.bf16 %v2924, %v2921
        %v2938 = vpack.c.bf16 %v2932, %v2929
        %v2943 = vunpack.c.l.b16 %v2935
        %v2944 = vunpack.c.h.b16 %v2935
        %v2945 = vunpack.c.l.b16 %v2936
        %v2946 = vunpack.c.h.b16 %v2936
        %v2947 = vunpack.c.l.b16 %v2937
        %v2948 = vunpack.c.h.b16 %v2937
        %v2949 = vunpack.c.l.b16 %v2938
        %v2950 = vunpack.c.h.b16 %v2938
        %v2951 = vpack.c.b16 %v2943, %v2943
        %v2952 = vpack.c.b16 %v2944, %v2944
        %v2953 = vpack.c.b16 %v2945, %v2945
        %v2954 = vpack.c.b16 %v2946, %v2946
        %v2955 = vpack.c.b16 %v2947, %v2947
        %v2956 = vpack.c.b16 %v2948, %v2948
        %v2957 = vpack.c.b16 %v2949, %v2949
        %v2958 = vpack.c.b16 %v2950, %v2950
        %2967 = vst.msk [vmem:[#allocation3 + $0x20] sm:$0xf] %vm1299, %v2951
        %2968 = vst.msk [vmem:[#allocation3 + $0x24] sm:$0xf] %vm1299, %v2952
        %2969 = vst.msk [vmem:[#allocation3 + $0x28] sm:$0xf] %vm1299, %v2953
        %2970 = vst.msk [vmem:[#allocation3 + $0x2c] sm:$0xf] %vm1299, %v2954
        %2971 = vst.msk [vmem:[#allocation3 + $0x30] sm:$0xf] %vm1299, %v2955
        %2972 = vst.msk [vmem:[#allocation3 + $0x34] sm:$0xf] %vm1299, %v2956
        %2973 = vst.msk [vmem:[#allocation3 + $0x38] sm:$0xf] %vm1299, %v2957
        %2974 = vst.msk [vmem:[#allocation3 + $0x3c] sm:$0xf] %vm1299, %v2958
        %v2975 = vld [vmem:[#allocation2 + $0x60] sm:$0xf]
        %v2976 = vld [vmem:[#allocation2 + $0x6c] sm:$0xf]
        %v2977 = vld [vmem:[#allocation2 + $0x78] sm:$0xf]
        %v2978 = vld [vmem:[#allocation2 + $0x84] sm:$0xf]
        %v2979 = vld [vmem:[#allocation2 + $0x90] sm:$0xf]
        %v2980 = vld [vmem:[#allocation2 + $0x9c] sm:$0xf]
        %v2981 = vld [vmem:[#allocation2 + $0xa8] sm:$0xf]
        %v2982 = vld [vmem:[#allocation2 + $0xb4] sm:$0xf]
        %v2983 = vld [vmem:[#allocation2 + $0x64] sm:$0xf]
        %v2984 = vld [vmem:[#allocation2 + $0x70] sm:$0xf]
        %v2985 = vld [vmem:[#allocation2 + $0x7c] sm:$0xf]
        %v2986 = vld [vmem:[#allocation2 + $0x88] sm:$0xf]
        %v2987 = vld [vmem:[#allocation2 + $0x94] sm:$0xf]
        %v2988 = vld [vmem:[#allocation2 + $0xa0] sm:$0xf]
        %v2989 = vld [vmem:[#allocation2 + $0xac] sm:$0xf]
        %v2990 = vld [vmem:[#allocation2 + $0xb8] sm:$0xf]
        %v2991 = vld [vmem:[#allocation2 + $0x68] sm:$0xf]
        %v2992 = vld [vmem:[#allocation2 + $0x74] sm:$0xf]
        %v2993 = vld [vmem:[#allocation2 + $0x80] sm:$0xf]
        %v2994 = vld [vmem:[#allocation2 + $0x8c] sm:$0xf]
        %v2995 = vld [vmem:[#allocation2 + $0x98] sm:$0xf]
        %v2996 = vld [vmem:[#allocation2 + $0xa4] sm:$0xf]
        %v2997 = vld [vmem:[#allocation2 + $0xb0] sm:$0xf]
        %v2998 = vld [vmem:[#allocation2 + $0xbc] sm:$0xf]
        %v3007 = vunpack.c.l.b16 %v2975
        %v3008 = vunpack.c.l.b16 %v2976
        %v3009 = vunpack.c.l.b16 %v2977
        %v3010 = vunpack.c.l.b16 %v2978
        %v3011 = vunpack.c.l.b16 %v2979
        %v3012 = vunpack.c.l.b16 %v2980
        %v3013 = vunpack.c.l.b16 %v2981
        %v3014 = vunpack.c.l.b16 %v2982
        %v3015 = vpack.c.b16 %v3008, %v3007
        %v3016 = vpack.c.b16 %v3010, %v3009
        %v3017 = vpack.c.b16 %v3012, %v3011
        %v3018 = vpack.c.b16 %v3014, %v3013
        %3019 = vrot.lane.b32.xlu0 %v3015, 96
        %v3020 = vpop.permute.xlu0 %3019
        %3021 = vrot.lane.b32.xlu0 %v3016, 96
        %v3022 = vpop.permute.xlu0 %3021
        %3023 = vrot.lane.b32.xlu0 %v3017, 96
        %v3024 = vpop.permute.xlu0 %3023
        %3025 = vrot.lane.b32.xlu0 %v3018, 96
        %v3026 = vpop.permute.xlu0 %3025
        %v3035 = vunpack.c.l.b16 %v2983
        %v3036 = vunpack.c.l.b16 %v2984
        %v3037 = vunpack.c.l.b16 %v2985
        %v3038 = vunpack.c.l.b16 %v2986
        %v3039 = vunpack.c.l.b16 %v2987
        %v3040 = vunpack.c.l.b16 %v2988
        %v3041 = vunpack.c.l.b16 %v2989
        %v3042 = vunpack.c.l.b16 %v2990
        %v3043 = vpack.c.b16 %v3036, %v3035
        %v3044 = vpack.c.b16 %v3038, %v3037
        %v3045 = vpack.c.b16 %v3040, %v3039
        %v3046 = vpack.c.b16 %v3042, %v3041
        %3047 = vrot.lane.b32.xlu0 %v3043, 96
        %v3048 = vpop.permute.xlu0 %3047
        %3049 = vrot.lane.b32.xlu0 %v3044, 96
        %v3050 = vpop.permute.xlu0 %3049
        %3051 = vrot.lane.b32.xlu0 %v3045, 96
        %v3052 = vpop.permute.xlu0 %3051
        %3053 = vrot.lane.b32.xlu0 %v3046, 96
        %v3054 = vpop.permute.xlu0 %3053
        %v3056 = vsel %vm983, %v3020, 0
        %v3059 = vsel %vm983, %v3022, 0
        %v3062 = vsel %vm983, %v3024, 0
        %v3065 = vsel %vm983, %v3026, 0
        %v3068 = vsel %vm983, %v3048, 0
        %v3071 = vsel %vm983, %v3050, 0
        %v3074 = vsel %vm983, %v3052, 0
        %v3077 = vsel %vm983, %v3054, 0
        %3079 = vmatprep.subr.bf16.mxu0 0
        %3080 = vmatpush1.bf16.xpose.msra.mxu0 0
        %3081 = vmatprep.subr.bf16.mxu0 0
        %3082 = vmatpush1.bf16.xpose.msra.mxu0 0
        %3083 = vmatprep.subr.bf16.mxu0 0
        %3084 = vmatpush1.bf16.xpose.msra.mxu0 0
        %3085 = vmatprep.subr.bf16.mxu0 0
        %3086 = vmatpush1.bf16.xpose.msra.mxu0 0
        %3087 = vmatprep.subr.bf16.mxu0 0
        %3088 = vmatpush1.bf16.xpose.msra.mxu0 %v3077
        %3089 = vmatprep.subr.bf16.mxu0 0
        %3090 = vmatpush1.bf16.xpose.msra.mxu0 %v3074
        %3091 = vmatprep.subr.bf16.mxu0 0
        %3092 = vmatpush1.bf16.xpose.msra.mxu0 %v3071
        %3093 = vmatprep.subr.bf16.mxu0 0
        %3094 = vmatpush1.bf16.xpose.msra.mxu0 %v3068
        %3095 = vmatprep.subr.bf16.mxu0 0
        %3096 = vmatpush2.bf16.xpose.msra.mxu0 0
        %3097 = vmatprep.subr.bf16.mxu0 0
        %3098 = vmatpush2.bf16.xpose.msra.mxu0 0
        %3099 = vmatprep.subr.bf16.mxu0 0
        %3100 = vmatpush2.bf16.xpose.msra.mxu0 0
        %3101 = vmatprep.subr.bf16.mxu0 0
        %3102 = vmatpush2.bf16.xpose.msra.mxu0 0
        %3103 = vmatprep.subr.bf16.mxu0 0
        %3104 = vmatpush2.bf16.xpose.msra.mxu0 0
        %3105 = vmatprep.subr.bf16.mxu0 0
        %3106 = vmatpush2.bf16.xpose.msra.mxu0 0
        %3107 = vmatprep.subr.bf16.mxu0 0
        %3108 = vmatpush2.bf16.xpose.msra.mxu0 0
        %3109 = vmatprep.subr.bf16.mxu0 0
        %3110 = vmatpush2.bf16.xpose.msra.mxu0 0
        %3111 = vmatprep.mubr.bf16.mxu0 0
        %3112 = vmatmul.mubr.bf16.gmra.mxu0 %v3056
        %v3113 = vpop.f32.mrf.mxu0
        %v3114 = vadd.f32 0.0, %v3113
        %v3115 = vpop.f32.mrf.mxu0
        %v3116 = vpop.f32.mrf.mxu0
        %v3117 = vadd.f32 0.0, %v3116
        %v3118 = vpop.f32.mrf.mxu0
        %3119 = vmatprep.mubr.bf16.mxu0 0
        %3120 = vmatmul.mubr.bf16.gmra.mxu0 %v3059
        %v3121 = vpop.f32.mrf.mxu0
        %v3122 = vadd.f32 0.0, %v3121
        %v3123 = vpop.f32.mrf.mxu0
        %v3124 = vpop.f32.mrf.mxu0
        %v3125 = vadd.f32 0.0, %v3124
        %v3126 = vpop.f32.mrf.mxu0
        %3127 = vmatprep.mubr.bf16.mxu0 0
        %3128 = vmatmul.mubr.bf16.gmra.mxu0 %v3062
        %v3129 = vpop.f32.mrf.mxu0
        %v3130 = vadd.f32 0.0, %v3129
        %v3131 = vpop.f32.mrf.mxu0
        %v3132 = vpop.f32.mrf.mxu0
        %v3133 = vadd.f32 0.0, %v3132
        %v3134 = vpop.f32.mrf.mxu0
        %3135 = vmatprep.mubr.bf16.mxu0 0
        %3136 = vmatmul.mubr.bf16.gmra.mxu0 %v3065
        %v3137 = vpop.f32.mrf.mxu0
        %v3138 = vadd.f32 0.0, %v3137
        %v3139 = vpop.f32.mrf.mxu0
        %v3140 = vpop.f32.mrf.mxu0
        %v3141 = vadd.f32 0.0, %v3140
        %v3142 = vpop.f32.mrf.mxu0
        %3143 = vdwg.mxu0
        %v3144 = vsel %vm1073, %v3114, -inf
        %3145 = vmax.xlane.f32.xlu0 %v3144
        %v3146 = vpop.xlane.xlu0 %3145
        %v3147 = vsel %vm1073, %v3117, -inf
        %3148 = vmax.xlane.f32.xlu0 %v3147
        %v3149 = vpop.xlane.xlu0 %3148
        %v3150 = vsel %vm1073, %v3122, -inf
        %3151 = vmax.xlane.f32.xlu0 %v3150
        %v3152 = vpop.xlane.xlu0 %3151
        %v3153 = vsel %vm1073, %v3125, -inf
        %3154 = vmax.xlane.f32.xlu0 %v3153
        %v3155 = vpop.xlane.xlu0 %3154
        %v3156 = vsel %vm1073, %v3130, -inf
        %3157 = vmax.xlane.f32.xlu0 %v3156
        %v3158 = vpop.xlane.xlu0 %3157
        %v3159 = vsel %vm1073, %v3133, -inf
        %3160 = vmax.xlane.f32.xlu0 %v3159
        %v3161 = vpop.xlane.xlu0 %3160
        %v3162 = vsel %vm1073, %v3138, -inf
        %3163 = vmax.xlane.f32.xlu0 %v3162
        %v3164 = vpop.xlane.xlu0 %3163
        %v3165 = vsel %vm1073, %v3141, -inf
        %3166 = vmax.xlane.f32.xlu0 %v3165
        %v3167 = vpop.xlane.xlu0 %3166
        %v3168 = vsub.f32 %v3114, %v3146
        %v3169 = vsub.f32 %v3117, %v3149
        %v3170 = vsub.f32 %v3122, %v3152
        %v3171 = vsub.f32 %v3125, %v3155
        %v3172 = vsub.f32 %v3130, %v3158
        %v3173 = vsub.f32 %v3133, %v3161
        %v3174 = vsub.f32 %v3138, %v3164
        %v3175 = vsub.f32 %v3141, %v3167
        %v3176 = vmul.f32 %v3168, 1.442695
        %v3177 = vpow.pop %v3176
        %v3178 = vmul.f32 %v3169, 1.442695
        %v3179 = vpow.pop %v3178
        %v3180 = vmul.f32 %v3170, 1.442695
        %v3181 = vpow.pop %v3180
        %v3182 = vmul.f32 %v3171, 1.442695
        %v3183 = vpow.pop %v3182
        %v3184 = vmul.f32 %v3172, 1.442695
        %v3185 = vpow.pop %v3184
        %v3186 = vmul.f32 %v3173, 1.442695
        %v3187 = vpow.pop %v3186
        %v3188 = vmul.f32 %v3174, 1.442695
        %v3189 = vpow.pop %v3188
        %v3190 = vmul.f32 %v3175, 1.442695
        %v3191 = vpow.pop %v3190
        %v3192 = vsel %vm1073, %v3177, 0.0
        %3193 = vadd.xlane.f32.xlu0 %v3192
        %v3194 = vpop.xlane.xlu0 %3193
        %v3195 = vsel %vm1073, %v3179, 0.0
        %3196 = vadd.xlane.f32.xlu0 %v3195
        %v3197 = vpop.xlane.xlu0 %3196
        %v3198 = vsel %vm1073, %v3181, 0.0
        %3199 = vadd.xlane.f32.xlu0 %v3198
        %v3200 = vpop.xlane.xlu0 %3199
        %v3201 = vsel %vm1073, %v3183, 0.0
        %3202 = vadd.xlane.f32.xlu0 %v3201
        %v3203 = vpop.xlane.xlu0 %3202
        %v3204 = vsel %vm1073, %v3185, 0.0
        %3205 = vadd.xlane.f32.xlu0 %v3204
        %v3206 = vpop.xlane.xlu0 %3205
        %v3207 = vsel %vm1073, %v3187, 0.0
        %3208 = vadd.xlane.f32.xlu0 %v3207
        %v3209 = vpop.xlane.xlu0 %3208
        %v3210 = vsel %vm1073, %v3189, 0.0
        %3211 = vadd.xlane.f32.xlu0 %v3210
        %v3212 = vpop.xlane.xlu0 %3211
        %v3213 = vsel %vm1073, %v3191, 0.0
        %3214 = vadd.xlane.f32.xlu0 %v3213
        %v3215 = vpop.xlane.xlu0 %3214
        %v3216 = vrcp.pop %v3194
        %v3217 = vrcp.pop %v3197
        %v3218 = vrcp.pop %v3200
        %v3219 = vrcp.pop %v3203
        %v3220 = vrcp.pop %v3206
        %v3221 = vrcp.pop %v3209
        %v3222 = vrcp.pop %v3212
        %v3223 = vrcp.pop %v3215
        %v3224 = vmul.f32 %v3177, %v3216
        %v3225 = vmul.f32 %v3179, %v3217
        %v3226 = vmul.f32 %v3181, %v3218
        %v3227 = vmul.f32 %v3183, %v3219
        %v3228 = vmul.f32 %v3185, %v3220
        %v3229 = vmul.f32 %v3187, %v3221
        %v3230 = vmul.f32 %v3189, %v3222
        %v3231 = vmul.f32 %v3191, %v3223
        %v3232 = vpack.c.bf16 %v3225, %v3224
        %v3233 = vpack.c.bf16 %v3227, %v3226
        %v3234 = vpack.c.bf16 %v3229, %v3228
        %v3235 = vpack.c.bf16 %v3231, %v3230
        %v3244 = vunpack.c.l.b16 %v2991
        %v3245 = vunpack.c.l.b16 %v2992
        %v3246 = vunpack.c.l.b16 %v2993
        %v3247 = vunpack.c.l.b16 %v2994
        %v3248 = vunpack.c.l.b16 %v2995
        %v3249 = vunpack.c.l.b16 %v2996
        %v3250 = vunpack.c.l.b16 %v2997
        %v3251 = vunpack.c.l.b16 %v2998
        %v3252 = vpack.c.b16 %v3245, %v3244
        %v3253 = vpack.c.b16 %v3247, %v3246
        %v3254 = vpack.c.b16 %v3249, %v3248
        %v3255 = vpack.c.b16 %v3251, %v3250
        %3256 = vrot.lane.b32.xlu0 %v3252, 96
        %v3257 = vpop.permute.xlu0 %3256
        %3258 = vrot.lane.b32.xlu0 %v3253, 96
        %v3259 = vpop.permute.xlu0 %3258
        %3260 = vrot.lane.b32.xlu0 %v3254, 96
        %v3261 = vpop.permute.xlu0 %3260
        %3262 = vrot.lane.b32.xlu0 %v3255, 96
        %v3263 = vpop.permute.xlu0 %3262
        %v3269 = vsel %vm1073, %v3232, 0
        %v3272 = vsel %vm1073, %v3233, 0
        %v3275 = vsel %vm1073, %v3234, 0
        %v3278 = vsel %vm1073, %v3235, 0
        %3280 = vmatprep.subr.bf16.mxu0 0
        %3281 = vmatpush1.bf16.msra.mxu0 0
        %3282 = vmatprep.subr.bf16.mxu0 0
        %3283 = vmatpush1.bf16.msra.mxu0 0
        %3284 = vmatprep.subr.bf16.mxu0 0
        %3285 = vmatpush1.bf16.msra.mxu0 0
        %3286 = vmatprep.subr.bf16.mxu0 0
        %3287 = vmatpush1.bf16.msra.mxu0 0
        %3288 = vmatprep.subr.bf16.mxu0 0
        %3289 = vmatpush1.bf16.msra.mxu0 %v3263
        %3290 = vmatprep.subr.bf16.mxu0 0
        %3291 = vmatpush1.bf16.msra.mxu0 %v3261
        %3292 = vmatprep.subr.bf16.mxu0 0
        %3293 = vmatpush1.bf16.msra.mxu0 %v3259
        %3294 = vmatprep.subr.bf16.mxu0 0
        %3295 = vmatpush1.bf16.msra.mxu0 %v3257
        %3296 = vmatprep.subr.bf16.mxu0 0
        %3297 = vmatpush2.bf16.msra.mxu0 0
        %3298 = vmatprep.subr.bf16.mxu0 0
        %3299 = vmatpush2.bf16.msra.mxu0 0
        %3300 = vmatprep.subr.bf16.mxu0 0
        %3301 = vmatpush2.bf16.msra.mxu0 0
        %3302 = vmatprep.subr.bf16.mxu0 0
        %3303 = vmatpush2.bf16.msra.mxu0 0
        %3304 = vmatprep.subr.bf16.mxu0 0
        %3305 = vmatpush2.bf16.msra.mxu0 0
        %3306 = vmatprep.subr.bf16.mxu0 0
        %3307 = vmatpush2.bf16.msra.mxu0 0
        %3308 = vmatprep.subr.bf16.mxu0 0
        %3309 = vmatpush2.bf16.msra.mxu0 0
        %3310 = vmatprep.subr.bf16.mxu0 0
        %3311 = vmatpush2.bf16.msra.mxu0 0
        %3312 = vmatprep.mubr.bf16.mxu0 0
        %3313 = vmatmul.mubr.bf16.gmra.mxu0 %v3269
        %v3314 = vpop.f32.mrf.mxu0
        %v3315 = vadd.f32 0.0, %v3314
        %v3316 = vpop.f32.mrf.mxu0
        %v3317 = vpop.f32.mrf.mxu0
        %v3318 = vadd.f32 0.0, %v3317
        %v3319 = vpop.f32.mrf.mxu0
        %3320 = vmatprep.mubr.bf16.mxu0 0
        %3321 = vmatmul.mubr.bf16.gmra.mxu0 %v3272
        %v3322 = vpop.f32.mrf.mxu0
        %v3323 = vadd.f32 0.0, %v3322
        %v3324 = vpop.f32.mrf.mxu0
        %v3325 = vpop.f32.mrf.mxu0
        %v3326 = vadd.f32 0.0, %v3325
        %v3327 = vpop.f32.mrf.mxu0
        %3328 = vmatprep.mubr.bf16.mxu0 0
        %3329 = vmatmul.mubr.bf16.gmra.mxu0 %v3275
        %v3330 = vpop.f32.mrf.mxu0
        %v3331 = vadd.f32 0.0, %v3330
        %v3332 = vpop.f32.mrf.mxu0
        %v3333 = vpop.f32.mrf.mxu0
        %v3334 = vadd.f32 0.0, %v3333
        %v3335 = vpop.f32.mrf.mxu0
        %3336 = vmatprep.mubr.bf16.mxu0 0
        %3337 = vmatmul.mubr.bf16.gmra.mxu0 %v3278
        %v3338 = vpop.f32.mrf.mxu0
        %v3339 = vadd.f32 0.0, %v3338
        %v3340 = vpop.f32.mrf.mxu0
        %v3341 = vpop.f32.mrf.mxu0
        %v3342 = vadd.f32 0.0, %v3341
        %v3343 = vpop.f32.mrf.mxu0
        %3344 = vdwg.mxu0
        %v3345 = vpack.c.bf16 %v3318, %v3315
        %v3346 = vpack.c.bf16 %v3326, %v3323
        %v3347 = vpack.c.bf16 %v3334, %v3331
        %v3348 = vpack.c.bf16 %v3342, %v3339
        %v3353 = vunpack.c.l.b16 %v3345
        %v3354 = vunpack.c.h.b16 %v3345
        %v3355 = vunpack.c.l.b16 %v3346
        %v3356 = vunpack.c.h.b16 %v3346
        %v3357 = vunpack.c.l.b16 %v3347
        %v3358 = vunpack.c.h.b16 %v3347
        %v3359 = vunpack.c.l.b16 %v3348
        %v3360 = vunpack.c.h.b16 %v3348
        %v3361 = vpack.c.b16 %v3353, %v3353
        %v3362 = vpack.c.b16 %v3354, %v3354
        %v3363 = vpack.c.b16 %v3355, %v3355
        %v3364 = vpack.c.b16 %v3356, %v3356
        %v3365 = vpack.c.b16 %v3357, %v3357
        %v3366 = vpack.c.b16 %v3358, %v3358
        %v3367 = vpack.c.b16 %v3359, %v3359
        %v3368 = vpack.c.b16 %v3360, %v3360
        %3369 = vrot.lane.b32.xlu0 %v3361, 32
        %v3370 = vpop.permute.xlu0 %3369
        %3371 = vrot.lane.b32.xlu0 %v3362, 32
        %v3372 = vpop.permute.xlu0 %3371
        %3373 = vrot.lane.b32.xlu0 %v3363, 32
        %v3374 = vpop.permute.xlu0 %3373
        %3375 = vrot.lane.b32.xlu0 %v3364, 32
        %v3376 = vpop.permute.xlu0 %3375
        %3377 = vrot.lane.b32.xlu0 %v3365, 32
        %v3378 = vpop.permute.xlu0 %3377
        %3379 = vrot.lane.b32.xlu0 %v3366, 32
        %v3380 = vpop.permute.xlu0 %3379
        %3381 = vrot.lane.b32.xlu0 %v3367, 32
        %v3382 = vpop.permute.xlu0 %3381
        %3383 = vrot.lane.b32.xlu0 %v3368, 32
        %v3384 = vpop.permute.xlu0 %3383
        %3393 = vst.msk [vmem:[#allocation3 + $0x20] sm:$0xf] %vm1726, %v3370
        %3394 = vst.msk [vmem:[#allocation3 + $0x24] sm:$0xf] %vm1726, %v3372
        %3395 = vst.msk [vmem:[#allocation3 + $0x28] sm:$0xf] %vm1726, %v3374
        %3396 = vst.msk [vmem:[#allocation3 + $0x2c] sm:$0xf] %vm1726, %v3376
        %3397 = vst.msk [vmem:[#allocation3 + $0x30] sm:$0xf] %vm1726, %v3378
        %3398 = vst.msk [vmem:[#allocation3 + $0x34] sm:$0xf] %vm1726, %v3380
        %3399 = vst.msk [vmem:[#allocation3 + $0x38] sm:$0xf] %vm1726, %v3382
        %3400 = vst.msk [vmem:[#allocation3 + $0x3c] sm:$0xf] %vm1726, %v3384
        %v3401 = vld [vmem:[#allocation2 + $0x60] sm:$0xf]
        %v3402 = vld [vmem:[#allocation2 + $0x6c] sm:$0xf]
        %v3403 = vld [vmem:[#allocation2 + $0x78] sm:$0xf]
        %v3404 = vld [vmem:[#allocation2 + $0x84] sm:$0xf]
        %v3405 = vld [vmem:[#allocation2 + $0x90] sm:$0xf]
        %v3406 = vld [vmem:[#allocation2 + $0x9c] sm:$0xf]
        %v3407 = vld [vmem:[#allocation2 + $0xa8] sm:$0xf]
        %v3408 = vld [vmem:[#allocation2 + $0xb4] sm:$0xf]
        %v3409 = vld [vmem:[#allocation2 + $0x64] sm:$0xf]
        %v3410 = vld [vmem:[#allocation2 + $0x70] sm:$0xf]
        %v3411 = vld [vmem:[#allocation2 + $0x7c] sm:$0xf]
        %v3412 = vld [vmem:[#allocation2 + $0x88] sm:$0xf]
        %v3413 = vld [vmem:[#allocation2 + $0x94] sm:$0xf]
        %v3414 = vld [vmem:[#allocation2 + $0xa0] sm:$0xf]
        %v3415 = vld [vmem:[#allocation2 + $0xac] sm:$0xf]
        %v3416 = vld [vmem:[#allocation2 + $0xb8] sm:$0xf]
        %v3417 = vld [vmem:[#allocation2 + $0x68] sm:$0xf]
        %v3418 = vld [vmem:[#allocation2 + $0x74] sm:$0xf]
        %v3419 = vld [vmem:[#allocation2 + $0x80] sm:$0xf]
        %v3420 = vld [vmem:[#allocation2 + $0x8c] sm:$0xf]
        %v3421 = vld [vmem:[#allocation2 + $0x98] sm:$0xf]
        %v3422 = vld [vmem:[#allocation2 + $0xa4] sm:$0xf]
        %v3423 = vld [vmem:[#allocation2 + $0xb0] sm:$0xf]
        %v3424 = vld [vmem:[#allocation2 + $0xbc] sm:$0xf]
        %v3433 = vunpack.c.l.b16 %v3401
        %v3434 = vunpack.c.l.b16 %v3402
        %v3435 = vunpack.c.l.b16 %v3403
        %v3436 = vunpack.c.l.b16 %v3404
        %v3437 = vunpack.c.l.b16 %v3405
        %v3438 = vunpack.c.l.b16 %v3406
        %v3439 = vunpack.c.l.b16 %v3407
        %v3440 = vunpack.c.l.b16 %v3408
        %v3441 = vpack.c.b16 %v3434, %v3433
        %v3442 = vpack.c.b16 %v3436, %v3435
        %v3443 = vpack.c.b16 %v3438, %v3437
        %v3444 = vpack.c.b16 %v3440, %v3439
        %3445 = vrot.lane.b32.xlu0 %v3441, 64
        %v3446 = vpop.permute.xlu0 %3445
        %3447 = vrot.lane.b32.xlu0 %v3442, 64
        %v3448 = vpop.permute.xlu0 %3447
        %3449 = vrot.lane.b32.xlu0 %v3443, 64
        %v3450 = vpop.permute.xlu0 %3449
        %3451 = vrot.lane.b32.xlu0 %v3444, 64
        %v3452 = vpop.permute.xlu0 %3451
        %v3461 = vunpack.c.l.b16 %v3409
        %v3462 = vunpack.c.l.b16 %v3410
        %v3463 = vunpack.c.l.b16 %v3411
        %v3464 = vunpack.c.l.b16 %v3412
        %v3465 = vunpack.c.l.b16 %v3413
        %v3466 = vunpack.c.l.b16 %v3414
        %v3467 = vunpack.c.l.b16 %v3415
        %v3468 = vunpack.c.l.b16 %v3416
        %v3469 = vpack.c.b16 %v3462, %v3461
        %v3470 = vpack.c.b16 %v3464, %v3463
        %v3471 = vpack.c.b16 %v3466, %v3465
        %v3472 = vpack.c.b16 %v3468, %v3467
        %3473 = vrot.lane.b32.xlu0 %v3469, 64
        %v3474 = vpop.permute.xlu0 %3473
        %3475 = vrot.lane.b32.xlu0 %v3470, 64
        %v3476 = vpop.permute.xlu0 %3475
        %3477 = vrot.lane.b32.xlu0 %v3471, 64
        %v3478 = vpop.permute.xlu0 %3477
        %3479 = vrot.lane.b32.xlu0 %v3472, 64
        %v3480 = vpop.permute.xlu0 %3479
        %v3482 = vsel %vm983, %v3446, 0
        %v3485 = vsel %vm983, %v3448, 0
        %v3488 = vsel %vm983, %v3450, 0
        %v3491 = vsel %vm983, %v3452, 0
        %v3494 = vsel %vm983, %v3474, 0
        %v3497 = vsel %vm983, %v3476, 0
        %v3500 = vsel %vm983, %v3478, 0
        %v3503 = vsel %vm983, %v3480, 0
        %3505 = vmatprep.subr.bf16.mxu0 0
        %3506 = vmatpush1.bf16.xpose.msra.mxu0 0
        %3507 = vmatprep.subr.bf16.mxu0 0
        %3508 = vmatpush1.bf16.xpose.msra.mxu0 0
        %3509 = vmatprep.subr.bf16.mxu0 0
        %3510 = vmatpush1.bf16.xpose.msra.mxu0 0
        %3511 = vmatprep.subr.bf16.mxu0 0
        %3512 = vmatpush1.bf16.xpose.msra.mxu0 0
        %3513 = vmatprep.subr.bf16.mxu0 0
        %3514 = vmatpush1.bf16.xpose.msra.mxu0 %v3503
        %3515 = vmatprep.subr.bf16.mxu0 0
        %3516 = vmatpush1.bf16.xpose.msra.mxu0 %v3500
        %3517 = vmatprep.subr.bf16.mxu0 0
        %3518 = vmatpush1.bf16.xpose.msra.mxu0 %v3497
        %3519 = vmatprep.subr.bf16.mxu0 0
        %3520 = vmatpush1.bf16.xpose.msra.mxu0 %v3494
        %3521 = vmatprep.subr.bf16.mxu0 0
        %3522 = vmatpush2.bf16.xpose.msra.mxu0 0
        %3523 = vmatprep.subr.bf16.mxu0 0
        %3524 = vmatpush2.bf16.xpose.msra.mxu0 0
        %3525 = vmatprep.subr.bf16.mxu0 0
        %3526 = vmatpush2.bf16.xpose.msra.mxu0 0
        %3527 = vmatprep.subr.bf16.mxu0 0
        %3528 = vmatpush2.bf16.xpose.msra.mxu0 0
        %3529 = vmatprep.subr.bf16.mxu0 0
        %3530 = vmatpush2.bf16.xpose.msra.mxu0 0
        %3531 = vmatprep.subr.bf16.mxu0 0
        %3532 = vmatpush2.bf16.xpose.msra.mxu0 0
        %3533 = vmatprep.subr.bf16.mxu0 0
        %3534 = vmatpush2.bf16.xpose.msra.mxu0 0
        %3535 = vmatprep.subr.bf16.mxu0 0
        %3536 = vmatpush2.bf16.xpose.msra.mxu0 0
        %3537 = vmatprep.mubr.bf16.mxu0 0
        %3538 = vmatmul.mubr.bf16.gmra.mxu0 %v3482
        %v3539 = vpop.f32.mrf.mxu0
        %v3540 = vadd.f32 0.0, %v3539
        %v3541 = vpop.f32.mrf.mxu0
        %v3542 = vpop.f32.mrf.mxu0
        %v3543 = vadd.f32 0.0, %v3542
        %v3544 = vpop.f32.mrf.mxu0
        %3545 = vmatprep.mubr.bf16.mxu0 0
        %3546 = vmatmul.mubr.bf16.gmra.mxu0 %v3485
        %v3547 = vpop.f32.mrf.mxu0
        %v3548 = vadd.f32 0.0, %v3547
        %v3549 = vpop.f32.mrf.mxu0
        %v3550 = vpop.f32.mrf.mxu0
        %v3551 = vadd.f32 0.0, %v3550
        %v3552 = vpop.f32.mrf.mxu0
        %3553 = vmatprep.mubr.bf16.mxu0 0
        %3554 = vmatmul.mubr.bf16.gmra.mxu0 %v3488
        %v3555 = vpop.f32.mrf.mxu0
        %v3556 = vadd.f32 0.0, %v3555
        %v3557 = vpop.f32.mrf.mxu0
        %v3558 = vpop.f32.mrf.mxu0
        %v3559 = vadd.f32 0.0, %v3558
        %v3560 = vpop.f32.mrf.mxu0
        %3561 = vmatprep.mubr.bf16.mxu0 0
        %3562 = vmatmul.mubr.bf16.gmra.mxu0 %v3491
        %v3563 = vpop.f32.mrf.mxu0
        %v3564 = vadd.f32 0.0, %v3563
        %v3565 = vpop.f32.mrf.mxu0
        %v3566 = vpop.f32.mrf.mxu0
        %v3567 = vadd.f32 0.0, %v3566
        %v3568 = vpop.f32.mrf.mxu0
        %3569 = vdwg.mxu0
        %v3570 = vsel %vm1073, %v3540, -inf
        %3571 = vmax.xlane.f32.xlu0 %v3570
        %v3572 = vpop.xlane.xlu0 %3571
        %v3573 = vsel %vm1073, %v3543, -inf
        %3574 = vmax.xlane.f32.xlu0 %v3573
        %v3575 = vpop.xlane.xlu0 %3574
        %v3576 = vsel %vm1073, %v3548, -inf
        %3577 = vmax.xlane.f32.xlu0 %v3576
        %v3578 = vpop.xlane.xlu0 %3577
        %v3579 = vsel %vm1073, %v3551, -inf
        %3580 = vmax.xlane.f32.xlu0 %v3579
        %v3581 = vpop.xlane.xlu0 %3580
        %v3582 = vsel %vm1073, %v3556, -inf
        %3583 = vmax.xlane.f32.xlu0 %v3582
        %v3584 = vpop.xlane.xlu0 %3583
        %v3585 = vsel %vm1073, %v3559, -inf
        %3586 = vmax.xlane.f32.xlu0 %v3585
        %v3587 = vpop.xlane.xlu0 %3586
        %v3588 = vsel %vm1073, %v3564, -inf
        %3589 = vmax.xlane.f32.xlu0 %v3588
        %v3590 = vpop.xlane.xlu0 %3589
        %v3591 = vsel %vm1073, %v3567, -inf
        %3592 = vmax.xlane.f32.xlu0 %v3591
        %v3593 = vpop.xlane.xlu0 %3592
        %v3594 = vsub.f32 %v3540, %v3572
        %v3595 = vsub.f32 %v3543, %v3575
        %v3596 = vsub.f32 %v3548, %v3578
        %v3597 = vsub.f32 %v3551, %v3581
        %v3598 = vsub.f32 %v3556, %v3584
        %v3599 = vsub.f32 %v3559, %v3587
        %v3600 = vsub.f32 %v3564, %v3590
        %v3601 = vsub.f32 %v3567, %v3593
        %v3602 = vmul.f32 %v3594, 1.442695
        %v3603 = vpow.pop %v3602
        %v3604 = vmul.f32 %v3595, 1.442695
        %v3605 = vpow.pop %v3604
        %v3606 = vmul.f32 %v3596, 1.442695
        %v3607 = vpow.pop %v3606
        %v3608 = vmul.f32 %v3597, 1.442695
        %v3609 = vpow.pop %v3608
        %v3610 = vmul.f32 %v3598, 1.442695
        %v3611 = vpow.pop %v3610
        %v3612 = vmul.f32 %v3599, 1.442695
        %v3613 = vpow.pop %v3612
        %v3614 = vmul.f32 %v3600, 1.442695
        %v3615 = vpow.pop %v3614
        %v3616 = vmul.f32 %v3601, 1.442695
        %v3617 = vpow.pop %v3616
        %v3618 = vsel %vm1073, %v3603, 0.0
        %3619 = vadd.xlane.f32.xlu0 %v3618
        %v3620 = vpop.xlane.xlu0 %3619
        %v3621 = vsel %vm1073, %v3605, 0.0
        %3622 = vadd.xlane.f32.xlu0 %v3621
        %v3623 = vpop.xlane.xlu0 %3622
        %v3624 = vsel %vm1073, %v3607, 0.0
        %3625 = vadd.xlane.f32.xlu0 %v3624
        %v3626 = vpop.xlane.xlu0 %3625
        %v3627 = vsel %vm1073, %v3609, 0.0
        %3628 = vadd.xlane.f32.xlu0 %v3627
        %v3629 = vpop.xlane.xlu0 %3628
        %v3630 = vsel %vm1073, %v3611, 0.0
        %3631 = vadd.xlane.f32.xlu0 %v3630
        %v3632 = vpop.xlane.xlu0 %3631
        %v3633 = vsel %vm1073, %v3613, 0.0
        %3634 = vadd.xlane.f32.xlu0 %v3633
        %v3635 = vpop.xlane.xlu0 %3634
        %v3636 = vsel %vm1073, %v3615, 0.0
        %3637 = vadd.xlane.f32.xlu0 %v3636
        %v3638 = vpop.xlane.xlu0 %3637
        %v3639 = vsel %vm1073, %v3617, 0.0
        %3640 = vadd.xlane.f32.xlu0 %v3639
        %v3641 = vpop.xlane.xlu0 %3640
        %v3642 = vrcp.pop %v3620
        %v3643 = vrcp.pop %v3623
        %v3644 = vrcp.pop %v3626
        %v3645 = vrcp.pop %v3629
        %v3646 = vrcp.pop %v3632
        %v3647 = vrcp.pop %v3635
        %v3648 = vrcp.pop %v3638
        %v3649 = vrcp.pop %v3641
        %v3650 = vmul.f32 %v3603, %v3642
        %v3651 = vmul.f32 %v3605, %v3643
        %v3652 = vmul.f32 %v3607, %v3644
        %v3653 = vmul.f32 %v3609, %v3645
        %v3654 = vmul.f32 %v3611, %v3646
        %v3655 = vmul.f32 %v3613, %v3647
        %v3656 = vmul.f32 %v3615, %v3648
        %v3657 = vmul.f32 %v3617, %v3649
        %v3658 = vpack.c.bf16 %v3651, %v3650
        %v3659 = vpack.c.bf16 %v3653, %v3652
        %v3660 = vpack.c.bf16 %v3655, %v3654
        %v3661 = vpack.c.bf16 %v3657, %v3656
        %v3670 = vunpack.c.l.b16 %v3417
        %v3671 = vunpack.c.l.b16 %v3418
        %v3672 = vunpack.c.l.b16 %v3419
        %v3673 = vunpack.c.l.b16 %v3420
        %v3674 = vunpack.c.l.b16 %v3421
        %v3675 = vunpack.c.l.b16 %v3422
        %v3676 = vunpack.c.l.b16 %v3423
        %v3677 = vunpack.c.l.b16 %v3424
        %v3678 = vpack.c.b16 %v3671, %v3670
        %v3679 = vpack.c.b16 %v3673, %v3672
        %v3680 = vpack.c.b16 %v3675, %v3674
        %v3681 = vpack.c.b16 %v3677, %v3676
        %3682 = vrot.lane.b32.xlu0 %v3678, 64
        %v3683 = vpop.permute.xlu0 %3682
        %3684 = vrot.lane.b32.xlu0 %v3679, 64
        %v3685 = vpop.permute.xlu0 %3684
        %3686 = vrot.lane.b32.xlu0 %v3680, 64
        %v3687 = vpop.permute.xlu0 %3686
        %3688 = vrot.lane.b32.xlu0 %v3681, 64
        %v3689 = vpop.permute.xlu0 %3688
        %v3695 = vsel %vm1073, %v3658, 0
        %v3698 = vsel %vm1073, %v3659, 0
        %v3701 = vsel %vm1073, %v3660, 0
        %v3704 = vsel %vm1073, %v3661, 0
        %3706 = vmatprep.subr.bf16.mxu0 0
        %3707 = vmatpush1.bf16.msra.mxu0 0
        %3708 = vmatprep.subr.bf16.mxu0 0
        %3709 = vmatpush1.bf16.msra.mxu0 0
        %3710 = vmatprep.subr.bf16.mxu0 0
        %3711 = vmatpush1.bf16.msra.mxu0 0
        %3712 = vmatprep.subr.bf16.mxu0 0
        %3713 = vmatpush1.bf16.msra.mxu0 0
        %3714 = vmatprep.subr.bf16.mxu0 0
        %3715 = vmatpush1.bf16.msra.mxu0 %v3689
        %3716 = vmatprep.subr.bf16.mxu0 0
        %3717 = vmatpush1.bf16.msra.mxu0 %v3687
        %3718 = vmatprep.subr.bf16.mxu0 0
        %3719 = vmatpush1.bf16.msra.mxu0 %v3685
        %3720 = vmatprep.subr.bf16.mxu0 0
        %3721 = vmatpush1.bf16.msra.mxu0 %v3683
        %3722 = vmatprep.subr.bf16.mxu0 0
        %3723 = vmatpush2.bf16.msra.mxu0 0
        %3724 = vmatprep.subr.bf16.mxu0 0
        %3725 = vmatpush2.bf16.msra.mxu0 0
        %3726 = vmatprep.subr.bf16.mxu0 0
        %3727 = vmatpush2.bf16.msra.mxu0 0
        %3728 = vmatprep.subr.bf16.mxu0 0
        %3729 = vmatpush2.bf16.msra.mxu0 0
        %3730 = vmatprep.subr.bf16.mxu0 0
        %3731 = vmatpush2.bf16.msra.mxu0 0
        %3732 = vmatprep.subr.bf16.mxu0 0
        %3733 = vmatpush2.bf16.msra.mxu0 0
        %3734 = vmatprep.subr.bf16.mxu0 0
        %3735 = vmatpush2.bf16.msra.mxu0 0
        %3736 = vmatprep.subr.bf16.mxu0 0
        %3737 = vmatpush2.bf16.msra.mxu0 0
        %3738 = vmatprep.mubr.bf16.mxu0 0
        %3739 = vmatmul.mubr.bf16.gmra.mxu0 %v3695
        %v3740 = vpop.f32.mrf.mxu0
        %v3741 = vadd.f32 0.0, %v3740
        %v3742 = vpop.f32.mrf.mxu0
        %v3743 = vpop.f32.mrf.mxu0
        %v3744 = vadd.f32 0.0, %v3743
        %v3745 = vpop.f32.mrf.mxu0
        %3746 = vmatprep.mubr.bf16.mxu0 0
        %3747 = vmatmul.mubr.bf16.gmra.mxu0 %v3698
        %v3748 = vpop.f32.mrf.mxu0
        %v3749 = vadd.f32 0.0, %v3748
        %v3750 = vpop.f32.mrf.mxu0
        %v3751 = vpop.f32.mrf.mxu0
        %v3752 = vadd.f32 0.0, %v3751
        %v3753 = vpop.f32.mrf.mxu0
        %3754 = vmatprep.mubr.bf16.mxu0 0
        %3755 = vmatmul.mubr.bf16.gmra.mxu0 %v3701
        %v3756 = vpop.f32.mrf.mxu0
        %v3757 = vadd.f32 0.0, %v3756
        %v3758 = vpop.f32.mrf.mxu0
        %v3759 = vpop.f32.mrf.mxu0
        %v3760 = vadd.f32 0.0, %v3759
        %v3761 = vpop.f32.mrf.mxu0
        %3762 = vmatprep.mubr.bf16.mxu0 0
        %3763 = vmatmul.mubr.bf16.gmra.mxu0 %v3704
        %v3764 = vpop.f32.mrf.mxu0
        %v3765 = vadd.f32 0.0, %v3764
        %v3766 = vpop.f32.mrf.mxu0
        %v3767 = vpop.f32.mrf.mxu0
        %v3768 = vadd.f32 0.0, %v3767
        %v3769 = vpop.f32.mrf.mxu0
        %3770 = vdwg.mxu0
        %v3771 = vpack.c.bf16 %v3744, %v3741
        %v3772 = vpack.c.bf16 %v3752, %v3749
        %v3773 = vpack.c.bf16 %v3760, %v3757
        %v3774 = vpack.c.bf16 %v3768, %v3765
        %v3779 = vunpack.c.l.b16 %v3771
        %v3780 = vunpack.c.h.b16 %v3771
        %v3781 = vunpack.c.l.b16 %v3772
        %v3782 = vunpack.c.h.b16 %v3772
        %v3783 = vunpack.c.l.b16 %v3773
        %v3784 = vunpack.c.h.b16 %v3773
        %v3785 = vunpack.c.l.b16 %v3774
        %v3786 = vunpack.c.h.b16 %v3774
        %v3787 = vpack.c.b16 %v3779, %v3779
        %v3788 = vpack.c.b16 %v3780, %v3780
        %v3789 = vpack.c.b16 %v3781, %v3781
        %v3790 = vpack.c.b16 %v3782, %v3782
        %v3791 = vpack.c.b16 %v3783, %v3783
        %v3792 = vpack.c.b16 %v3784, %v3784
        %v3793 = vpack.c.b16 %v3785, %v3785
        %v3794 = vpack.c.b16 %v3786, %v3786
        %3795 = vrot.lane.b32.xlu0 %v3787, 64
        %v3796 = vpop.permute.xlu0 %3795
        %3797 = vrot.lane.b32.xlu0 %v3788, 64
        %v3798 = vpop.permute.xlu0 %3797
        %3799 = vrot.lane.b32.xlu0 %v3789, 64
        %v3800 = vpop.permute.xlu0 %3799
        %3801 = vrot.lane.b32.xlu0 %v3790, 64
        %v3802 = vpop.permute.xlu0 %3801
        %3803 = vrot.lane.b32.xlu0 %v3791, 64
        %v3804 = vpop.permute.xlu0 %3803
        %3805 = vrot.lane.b32.xlu0 %v3792, 64
        %v3806 = vpop.permute.xlu0 %3805
        %3807 = vrot.lane.b32.xlu0 %v3793, 64
        %v3808 = vpop.permute.xlu0 %3807
        %3809 = vrot.lane.b32.xlu0 %v3794, 64
        %v3810 = vpop.permute.xlu0 %3809
        %3819 = vst.msk [vmem:[#allocation3 + $0x20] sm:$0xf] %vm2153, %v3796
        %3820 = vst.msk [vmem:[#allocation3 + $0x24] sm:$0xf] %vm2153, %v3798
        %3821 = vst.msk [vmem:[#allocation3 + $0x28] sm:$0xf] %vm2153, %v3800
        %3822 = vst.msk [vmem:[#allocation3 + $0x2c] sm:$0xf] %vm2153, %v3802
        %3823 = vst.msk [vmem:[#allocation3 + $0x30] sm:$0xf] %vm2153, %v3804
        %3824 = vst.msk [vmem:[#allocation3 + $0x34] sm:$0xf] %vm2153, %v3806
        %3825 = vst.msk [vmem:[#allocation3 + $0x38] sm:$0xf] %vm2153, %v3808
        %3826 = vst.msk [vmem:[#allocation3 + $0x3c] sm:$0xf] %vm2153, %v3810
        %v3827 = vld [vmem:[#allocation2 + $0x60] sm:$0xf]
        %v3828 = vld [vmem:[#allocation2 + $0x6c] sm:$0xf]
        %v3829 = vld [vmem:[#allocation2 + $0x78] sm:$0xf]
        %v3830 = vld [vmem:[#allocation2 + $0x84] sm:$0xf]
        %v3831 = vld [vmem:[#allocation2 + $0x90] sm:$0xf]
        %v3832 = vld [vmem:[#allocation2 + $0x9c] sm:$0xf]
        %v3833 = vld [vmem:[#allocation2 + $0xa8] sm:$0xf]
        %v3834 = vld [vmem:[#allocation2 + $0xb4] sm:$0xf]
        %v3835 = vld [vmem:[#allocation2 + $0x64] sm:$0xf]
        %v3836 = vld [vmem:[#allocation2 + $0x70] sm:$0xf]
        %v3837 = vld [vmem:[#allocation2 + $0x7c] sm:$0xf]
        %v3838 = vld [vmem:[#allocation2 + $0x88] sm:$0xf]
        %v3839 = vld [vmem:[#allocation2 + $0x94] sm:$0xf]
        %v3840 = vld [vmem:[#allocation2 + $0xa0] sm:$0xf]
        %v3841 = vld [vmem:[#allocation2 + $0xac] sm:$0xf]
        %v3842 = vld [vmem:[#allocation2 + $0xb8] sm:$0xf]
        %v3843 = vld [vmem:[#allocation2 + $0x68] sm:$0xf]
        %v3844 = vld [vmem:[#allocation2 + $0x74] sm:$0xf]
        %v3845 = vld [vmem:[#allocation2 + $0x80] sm:$0xf]
        %v3846 = vld [vmem:[#allocation2 + $0x8c] sm:$0xf]
        %v3847 = vld [vmem:[#allocation2 + $0x98] sm:$0xf]
        %v3848 = vld [vmem:[#allocation2 + $0xa4] sm:$0xf]
        %v3849 = vld [vmem:[#allocation2 + $0xb0] sm:$0xf]
        %v3850 = vld [vmem:[#allocation2 + $0xbc] sm:$0xf]
        %v3859 = vunpack.c.l.b16 %v3827
        %v3860 = vunpack.c.l.b16 %v3828
        %v3861 = vunpack.c.l.b16 %v3829
        %v3862 = vunpack.c.l.b16 %v3830
        %v3863 = vunpack.c.l.b16 %v3831
        %v3864 = vunpack.c.l.b16 %v3832
        %v3865 = vunpack.c.l.b16 %v3833
        %v3866 = vunpack.c.l.b16 %v3834
        %v3867 = vpack.c.b16 %v3860, %v3859
        %v3868 = vpack.c.b16 %v3862, %v3861
        %v3869 = vpack.c.b16 %v3864, %v3863
        %v3870 = vpack.c.b16 %v3866, %v3865
        %3871 = vrot.lane.b32.xlu0 %v3867, 32
        %v3872 = vpop.permute.xlu0 %3871
        %3873 = vrot.lane.b32.xlu0 %v3868, 32
        %v3874 = vpop.permute.xlu0 %3873
        %3875 = vrot.lane.b32.xlu0 %v3869, 32
        %v3876 = vpop.permute.xlu0 %3875
        %3877 = vrot.lane.b32.xlu0 %v3870, 32
        %v3878 = vpop.permute.xlu0 %3877
        %v3887 = vunpack.c.l.b16 %v3835
        %v3888 = vunpack.c.l.b16 %v3836
        %v3889 = vunpack.c.l.b16 %v3837
        %v3890 = vunpack.c.l.b16 %v3838
        %v3891 = vunpack.c.l.b16 %v3839
        %v3892 = vunpack.c.l.b16 %v3840
        %v3893 = vunpack.c.l.b16 %v3841
        %v3894 = vunpack.c.l.b16 %v3842
        %v3895 = vpack.c.b16 %v3888, %v3887
        %v3896 = vpack.c.b16 %v3890, %v3889
        %v3897 = vpack.c.b16 %v3892, %v3891
        %v3898 = vpack.c.b16 %v3894, %v3893
        %3899 = vrot.lane.b32.xlu0 %v3895, 32
        %v3900 = vpop.permute.xlu0 %3899
        %3901 = vrot.lane.b32.xlu0 %v3896, 32
        %v3902 = vpop.permute.xlu0 %3901
        %3903 = vrot.lane.b32.xlu0 %v3897, 32
        %v3904 = vpop.permute.xlu0 %3903
        %3905 = vrot.lane.b32.xlu0 %v3898, 32
        %v3906 = vpop.permute.xlu0 %3905
        %v3908 = vsel %vm983, %v3872, 0
        %v3911 = vsel %vm983, %v3874, 0
        %v3914 = vsel %vm983, %v3876, 0
        %v3917 = vsel %vm983, %v3878, 0
        %v3920 = vsel %vm983, %v3900, 0
        %v3923 = vsel %vm983, %v3902, 0
        %v3926 = vsel %vm983, %v3904, 0
        %v3929 = vsel %vm983, %v3906, 0
        %3931 = vmatprep.subr.bf16.mxu0 0
        %3932 = vmatpush1.bf16.xpose.msra.mxu0 0
        %3933 = vmatprep.subr.bf16.mxu0 0
        %3934 = vmatpush1.bf16.xpose.msra.mxu0 0
        %3935 = vmatprep.subr.bf16.mxu0 0
        %3936 = vmatpush1.bf16.xpose.msra.mxu0 0
        %3937 = vmatprep.subr.bf16.mxu0 0
        %3938 = vmatpush1.bf16.xpose.msra.mxu0 0
        %3939 = vmatprep.subr.bf16.mxu0 0
        %3940 = vmatpush1.bf16.xpose.msra.mxu0 %v3929
        %3941 = vmatprep.subr.bf16.mxu0 0
        %3942 = vmatpush1.bf16.xpose.msra.mxu0 %v3926
        %3943 = vmatprep.subr.bf16.mxu0 0
        %3944 = vmatpush1.bf16.xpose.msra.mxu0 %v3923
        %3945 = vmatprep.subr.bf16.mxu0 0
        %3946 = vmatpush1.bf16.xpose.msra.mxu0 %v3920
        %3947 = vmatprep.subr.bf16.mxu0 0
        %3948 = vmatpush2.bf16.xpose.msra.mxu0 0
        %3949 = vmatprep.subr.bf16.mxu0 0
        %3950 = vmatpush2.bf16.xpose.msra.mxu0 0
        %3951 = vmatprep.subr.bf16.mxu0 0
        %3952 = vmatpush2.bf16.xpose.msra.mxu0 0
        %3953 = vmatprep.subr.bf16.mxu0 0
        %3954 = vmatpush2.bf16.xpose.msra.mxu0 0
        %3955 = vmatprep.subr.bf16.mxu0 0
        %3956 = vmatpush2.bf16.xpose.msra.mxu0 0
        %3957 = vmatprep.subr.bf16.mxu0 0
        %3958 = vmatpush2.bf16.xpose.msra.mxu0 0
        %3959 = vmatprep.subr.bf16.mxu0 0
        %3960 = vmatpush2.bf16.xpose.msra.mxu0 0
        %3961 = vmatprep.subr.bf16.mxu0 0
        %3962 = vmatpush2.bf16.xpose.msra.mxu0 0
        %3963 = vmatprep.mubr.bf16.mxu0 0
        %3964 = vmatmul.mubr.bf16.gmra.mxu0 %v3908
        %v3965 = vpop.f32.mrf.mxu0
        %v3966 = vadd.f32 0.0, %v3965
        %v3967 = vpop.f32.mrf.mxu0
        %v3968 = vpop.f32.mrf.mxu0
        %v3969 = vadd.f32 0.0, %v3968
        %v3970 = vpop.f32.mrf.mxu0
        %3971 = vmatprep.mubr.bf16.mxu0 0
        %3972 = vmatmul.mubr.bf16.gmra.mxu0 %v3911
        %v3973 = vpop.f32.mrf.mxu0
        %v3974 = vadd.f32 0.0, %v3973
        %v3975 = vpop.f32.mrf.mxu0
        %v3976 = vpop.f32.mrf.mxu0
        %v3977 = vadd.f32 0.0, %v3976
        %v3978 = vpop.f32.mrf.mxu0
        %3979 = vmatprep.mubr.bf16.mxu0 0
        %3980 = vmatmul.mubr.bf16.gmra.mxu0 %v3914
        %v3981 = vpop.f32.mrf.mxu0
        %v3982 = vadd.f32 0.0, %v3981
        %v3983 = vpop.f32.mrf.mxu0
        %v3984 = vpop.f32.mrf.mxu0
        %v3985 = vadd.f32 0.0, %v3984
        %v3986 = vpop.f32.mrf.mxu0
        %3987 = vmatprep.mubr.bf16.mxu0 0
        %3988 = vmatmul.mubr.bf16.gmra.mxu0 %v3917
        %v3989 = vpop.f32.mrf.mxu0
        %v3990 = vadd.f32 0.0, %v3989
        %v3991 = vpop.f32.mrf.mxu0
        %v3992 = vpop.f32.mrf.mxu0
        %v3993 = vadd.f32 0.0, %v3992
        %v3994 = vpop.f32.mrf.mxu0
        %3995 = vdwg.mxu0
        %v3996 = vsel %vm1073, %v3966, -inf
        %3997 = vmax.xlane.f32.xlu0 %v3996
        %v3998 = vpop.xlane.xlu0 %3997
        %v3999 = vsel %vm1073, %v3969, -inf
        %4000 = vmax.xlane.f32.xlu0 %v3999
        %v4001 = vpop.xlane.xlu0 %4000
        %v4002 = vsel %vm1073, %v3974, -inf
        %4003 = vmax.xlane.f32.xlu0 %v4002
        %v4004 = vpop.xlane.xlu0 %4003
        %v4005 = vsel %vm1073, %v3977, -inf
        %4006 = vmax.xlane.f32.xlu0 %v4005
        %v4007 = vpop.xlane.xlu0 %4006
        %v4008 = vsel %vm1073, %v3982, -inf
        %4009 = vmax.xlane.f32.xlu0 %v4008
        %v4010 = vpop.xlane.xlu0 %4009
        %v4011 = vsel %vm1073, %v3985, -inf
        %4012 = vmax.xlane.f32.xlu0 %v4011
        %v4013 = vpop.xlane.xlu0 %4012
        %v4014 = vsel %vm1073, %v3990, -inf
        %4015 = vmax.xlane.f32.xlu0 %v4014
        %v4016 = vpop.xlane.xlu0 %4015
        %v4017 = vsel %vm1073, %v3993, -inf
        %4018 = vmax.xlane.f32.xlu0 %v4017
        %v4019 = vpop.xlane.xlu0 %4018
        %v4020 = vsub.f32 %v3966, %v3998
        %v4021 = vsub.f32 %v3969, %v4001
        %v4022 = vsub.f32 %v3974, %v4004
        %v4023 = vsub.f32 %v3977, %v4007
        %v4024 = vsub.f32 %v3982, %v4010
        %v4025 = vsub.f32 %v3985, %v4013
        %v4026 = vsub.f32 %v3990, %v4016
        %v4027 = vsub.f32 %v3993, %v4019
        %v4028 = vmul.f32 %v4020, 1.442695
        %v4029 = vpow.pop %v4028
        %v4030 = vmul.f32 %v4021, 1.442695
        %v4031 = vpow.pop %v4030
        %v4032 = vmul.f32 %v4022, 1.442695
        %v4033 = vpow.pop %v4032
        %v4034 = vmul.f32 %v4023, 1.442695
        %v4035 = vpow.pop %v4034
        %v4036 = vmul.f32 %v4024, 1.442695
        %v4037 = vpow.pop %v4036
        %v4038 = vmul.f32 %v4025, 1.442695
        %v4039 = vpow.pop %v4038
        %v4040 = vmul.f32 %v4026, 1.442695
        %v4041 = vpow.pop %v4040
        %v4042 = vmul.f32 %v4027, 1.442695
        %v4043 = vpow.pop %v4042
        %v4044 = vsel %vm1073, %v4029, 0.0
        %4045 = vadd.xlane.f32.xlu0 %v4044
        %v4046 = vpop.xlane.xlu0 %4045
        %v4047 = vsel %vm1073, %v4031, 0.0
        %4048 = vadd.xlane.f32.xlu0 %v4047
        %v4049 = vpop.xlane.xlu0 %4048
        %v4050 = vsel %vm1073, %v4033, 0.0
        %4051 = vadd.xlane.f32.xlu0 %v4050
        %v4052 = vpop.xlane.xlu0 %4051
        %v4053 = vsel %vm1073, %v4035, 0.0
        %4054 = vadd.xlane.f32.xlu0 %v4053
        %v4055 = vpop.xlane.xlu0 %4054
        %v4056 = vsel %vm1073, %v4037, 0.0
        %4057 = vadd.xlane.f32.xlu0 %v4056
        %v4058 = vpop.xlane.xlu0 %4057
        %v4059 = vsel %vm1073, %v4039, 0.0
        %4060 = vadd.xlane.f32.xlu0 %v4059
        %v4061 = vpop.xlane.xlu0 %4060
        %v4062 = vsel %vm1073, %v4041, 0.0
        %4063 = vadd.xlane.f32.xlu0 %v4062
        %v4064 = vpop.xlane.xlu0 %4063
        %v4065 = vsel %vm1073, %v4043, 0.0
        %4066 = vadd.xlane.f32.xlu0 %v4065
        %v4067 = vpop.xlane.xlu0 %4066
        %v4068 = vrcp.pop %v4046
        %v4069 = vrcp.pop %v4049
        %v4070 = vrcp.pop %v4052
        %v4071 = vrcp.pop %v4055
        %v4072 = vrcp.pop %v4058
        %v4073 = vrcp.pop %v4061
        %v4074 = vrcp.pop %v4064
        %v4075 = vrcp.pop %v4067
        %v4076 = vmul.f32 %v4029, %v4068
        %v4077 = vmul.f32 %v4031, %v4069
        %v4078 = vmul.f32 %v4033, %v4070
        %v4079 = vmul.f32 %v4035, %v4071
        %v4080 = vmul.f32 %v4037, %v4072
        %v4081 = vmul.f32 %v4039, %v4073
        %v4082 = vmul.f32 %v4041, %v4074
        %v4083 = vmul.f32 %v4043, %v4075
        %v4084 = vpack.c.bf16 %v4077, %v4076
        %v4085 = vpack.c.bf16 %v4079, %v4078
        %v4086 = vpack.c.bf16 %v4081, %v4080
        %v4087 = vpack.c.bf16 %v4083, %v4082
        %v4096 = vunpack.c.l.b16 %v3843
        %v4097 = vunpack.c.l.b16 %v3844
        %v4098 = vunpack.c.l.b16 %v3845
        %v4099 = vunpack.c.l.b16 %v3846
        %v4100 = vunpack.c.l.b16 %v3847
        %v4101 = vunpack.c.l.b16 %v3848
        %v4102 = vunpack.c.l.b16 %v3849
        %v4103 = vunpack.c.l.b16 %v3850
        %v4104 = vpack.c.b16 %v4097, %v4096
        %v4105 = vpack.c.b16 %v4099, %v4098
        %v4106 = vpack.c.b16 %v4101, %v4100
        %v4107 = vpack.c.b16 %v4103, %v4102
        %4108 = vrot.lane.b32.xlu0 %v4104, 32
        %v4109 = vpop.permute.xlu0 %4108
        %4110 = vrot.lane.b32.xlu0 %v4105, 32
        %v4111 = vpop.permute.xlu0 %4110
        %4112 = vrot.lane.b32.xlu0 %v4106, 32
        %v4113 = vpop.permute.xlu0 %4112
        %4114 = vrot.lane.b32.xlu0 %v4107, 32
        %v4115 = vpop.permute.xlu0 %4114
        %v4121 = vsel %vm1073, %v4084, 0
        %v4124 = vsel %vm1073, %v4085, 0
        %v4127 = vsel %vm1073, %v4086, 0
        %v4130 = vsel %vm1073, %v4087, 0
        %4132 = vmatprep.subr.bf16.mxu0 0
        %4133 = vmatpush1.bf16.msra.mxu0 0
        %4134 = vmatprep.subr.bf16.mxu0 0
        %4135 = vmatpush1.bf16.msra.mxu0 0
        %4136 = vmatprep.subr.bf16.mxu0 0
        %4137 = vmatpush1.bf16.msra.mxu0 0
        %4138 = vmatprep.subr.bf16.mxu0 0
        %4139 = vmatpush1.bf16.msra.mxu0 0
        %4140 = vmatprep.subr.bf16.mxu0 0
        %4141 = vmatpush1.bf16.msra.mxu0 %v4115
        %4142 = vmatprep.subr.bf16.mxu0 0
        %4143 = vmatpush1.bf16.msra.mxu0 %v4113
        %4144 = vmatprep.subr.bf16.mxu0 0
        %4145 = vmatpush1.bf16.msra.mxu0 %v4111
        %4146 = vmatprep.subr.bf16.mxu0 0
        %4147 = vmatpush1.bf16.msra.mxu0 %v4109
        %4148 = vmatprep.subr.bf16.mxu0 0
        %4149 = vmatpush2.bf16.msra.mxu0 0
        %4150 = vmatprep.subr.bf16.mxu0 0
        %4151 = vmatpush2.bf16.msra.mxu0 0
        %4152 = vmatprep.subr.bf16.mxu0 0
        %4153 = vmatpush2.bf16.msra.mxu0 0
        %4154 = vmatprep.subr.bf16.mxu0 0
        %4155 = vmatpush2.bf16.msra.mxu0 0
        %4156 = vmatprep.subr.bf16.mxu0 0
        %4157 = vmatpush2.bf16.msra.mxu0 0
        %4158 = vmatprep.subr.bf16.mxu0 0
        %4159 = vmatpush2.bf16.msra.mxu0 0
        %4160 = vmatprep.subr.bf16.mxu0 0
        %4161 = vmatpush2.bf16.msra.mxu0 0
        %4162 = vmatprep.subr.bf16.mxu0 0
        %4163 = vmatpush2.bf16.msra.mxu0 0
        %4164 = vmatprep.mubr.bf16.mxu0 0
        %4165 = vmatmul.mubr.bf16.gmra.mxu0 %v4121
        %v4166 = vpop.f32.mrf.mxu0
        %v4167 = vadd.f32 0.0, %v4166
        %v4168 = vpop.f32.mrf.mxu0
        %v4169 = vpop.f32.mrf.mxu0
        %v4170 = vadd.f32 0.0, %v4169
        %v4171 = vpop.f32.mrf.mxu0
        %4172 = vmatprep.mubr.bf16.mxu0 0
        %4173 = vmatmul.mubr.bf16.gmra.mxu0 %v4124
        %v4174 = vpop.f32.mrf.mxu0
        %v4175 = vadd.f32 0.0, %v4174
        %v4176 = vpop.f32.mrf.mxu0
        %v4177 = vpop.f32.mrf.mxu0
        %v4178 = vadd.f32 0.0, %v4177
        %v4179 = vpop.f32.mrf.mxu0
        %4180 = vmatprep.mubr.bf16.mxu0 0
        %4181 = vmatmul.mubr.bf16.gmra.mxu0 %v4127
        %v4182 = vpop.f32.mrf.mxu0
        %v4183 = vadd.f32 0.0, %v4182
        %v4184 = vpop.f32.mrf.mxu0
        %v4185 = vpop.f32.mrf.mxu0
        %v4186 = vadd.f32 0.0, %v4185
        %v4187 = vpop.f32.mrf.mxu0
        %4188 = vmatprep.mubr.bf16.mxu0 0
        %4189 = vmatmul.mubr.bf16.gmra.mxu0 %v4130
        %v4190 = vpop.f32.mrf.mxu0
        %v4191 = vadd.f32 0.0, %v4190
        %v4192 = vpop.f32.mrf.mxu0
        %v4193 = vpop.f32.mrf.mxu0
        %v4194 = vadd.f32 0.0, %v4193
        %v4195 = vpop.f32.mrf.mxu0
        %4196 = vdwg.mxu0
        %v4197 = vpack.c.bf16 %v4170, %v4167
        %v4198 = vpack.c.bf16 %v4178, %v4175
        %v4199 = vpack.c.bf16 %v4186, %v4183
        %v4200 = vpack.c.bf16 %v4194, %v4191
        %v4205 = vunpack.c.l.b16 %v4197
        %v4206 = vunpack.c.h.b16 %v4197
        %v4207 = vunpack.c.l.b16 %v4198
        %v4208 = vunpack.c.h.b16 %v4198
        %v4209 = vunpack.c.l.b16 %v4199
        %v4210 = vunpack.c.h.b16 %v4199
        %v4211 = vunpack.c.l.b16 %v4200
        %v4212 = vunpack.c.h.b16 %v4200
        %v4213 = vpack.c.b16 %v4205, %v4205
        %v4214 = vpack.c.b16 %v4206, %v4206
        %v4215 = vpack.c.b16 %v4207, %v4207
        %v4216 = vpack.c.b16 %v4208, %v4208
        %v4217 = vpack.c.b16 %v4209, %v4209
        %v4218 = vpack.c.b16 %v4210, %v4210
        %v4219 = vpack.c.b16 %v4211, %v4211
        %v4220 = vpack.c.b16 %v4212, %v4212
        %4221 = vrot.lane.b32.xlu0 %v4213, 96
        %v4222 = vpop.permute.xlu0 %4221
        %4223 = vrot.lane.b32.xlu0 %v4214, 96
        %v4224 = vpop.permute.xlu0 %4223
        %4225 = vrot.lane.b32.xlu0 %v4215, 96
        %v4226 = vpop.permute.xlu0 %4225
        %4227 = vrot.lane.b32.xlu0 %v4216, 96
        %v4228 = vpop.permute.xlu0 %4227
        %4229 = vrot.lane.b32.xlu0 %v4217, 96
        %v4230 = vpop.permute.xlu0 %4229
        %4231 = vrot.lane.b32.xlu0 %v4218, 96
        %v4232 = vpop.permute.xlu0 %4231
        %4233 = vrot.lane.b32.xlu0 %v4219, 96
        %v4234 = vpop.permute.xlu0 %4233
        %4235 = vrot.lane.b32.xlu0 %v4220, 96
        %v4236 = vpop.permute.xlu0 %4235
        %4245 = vst.msk [vmem:[#allocation3 + $0x20] sm:$0xf] %vm2580, %v4222
        %4246 = vst.msk [vmem:[#allocation3 + $0x24] sm:$0xf] %vm2580, %v4224
        %4247 = vst.msk [vmem:[#allocation3 + $0x28] sm:$0xf] %vm2580, %v4226
        %4248 = vst.msk [vmem:[#allocation3 + $0x2c] sm:$0xf] %vm2580, %v4228
        %4249 = vst.msk [vmem:[#allocation3 + $0x30] sm:$0xf] %vm2580, %v4230
        %4250 = vst.msk [vmem:[#allocation3 + $0x34] sm:$0xf] %vm2580, %v4232
        %4251 = vst.msk [vmem:[#allocation3 + $0x38] sm:$0xf] %vm2580, %v4234
        %4252 = vst.msk [vmem:[#allocation3 + $0x3c] sm:$0xf] %vm2580, %v4236
        %v4253 = vld [vmem:[#allocation3] sm:$0xf]
        %v4254 = vld [vmem:[#allocation3 + $0x4] sm:$0xf]
        %v4255 = vld [vmem:[#allocation3 + $0x8] sm:$0xf]
        %v4256 = vld [vmem:[#allocation3 + $0xc] sm:$0xf]
        %v4257 = vld [vmem:[#allocation3 + $0x10] sm:$0xf]
        %v4258 = vld [vmem:[#allocation3 + $0x14] sm:$0xf]
        %v4259 = vld [vmem:[#allocation3 + $0x18] sm:$0xf]
        %v4260 = vld [vmem:[#allocation3 + $0x1c] sm:$0xf]
        %v4261 = vld [vmem:[#allocation3 + $0x20] sm:$0xf]
        %v4262 = vld [vmem:[#allocation3 + $0x24] sm:$0xf]
        %v4263 = vld [vmem:[#allocation3 + $0x28] sm:$0xf]
        %v4264 = vld [vmem:[#allocation3 + $0x2c] sm:$0xf]
        %v4265 = vld [vmem:[#allocation3 + $0x30] sm:$0xf]
        %v4266 = vld [vmem:[#allocation3 + $0x34] sm:$0xf]
        %v4267 = vld [vmem:[#allocation3 + $0x38] sm:$0xf]
        %v4268 = vld [vmem:[#allocation3 + $0x3c] sm:$0xf]
        %v4269 = vld [vmem:[#allocation9] sm:$0xf]
        %v4270 = vld [vmem:[#allocation9 + $0x4] sm:$0xf]
        %v4271 = vld [vmem:[#allocation9 + $0x8] sm:$0xf]
        %v4272 = vld [vmem:[#allocation9 + $0xc] sm:$0xf]
        %v4273 = vld [vmem:[#allocation9 + $0x10] sm:$0xf]
        %v4274 = vld [vmem:[#allocation9 + $0x14] sm:$0xf]
        %v4275 = vld [vmem:[#allocation9 + $0x18] sm:$0xf]
        %v4276 = vld [vmem:[#allocation9 + $0x1c] sm:$0xf]
        %v4277 = vld [vmem:[#allocation9 + $0x20] sm:$0xf]
        %v4278 = vld [vmem:[#allocation9 + $0x24] sm:$0xf]
        %v4279 = vld [vmem:[#allocation9 + $0x28] sm:$0xf]
        %v4280 = vld [vmem:[#allocation9 + $0x2c] sm:$0xf]
        %v4281 = vld [vmem:[#allocation9 + $0x30] sm:$0xf]
        %v4282 = vld [vmem:[#allocation9 + $0x34] sm:$0xf]
        %v4283 = vld [vmem:[#allocation9 + $0x38] sm:$0xf]
        %v4284 = vld [vmem:[#allocation9 + $0x3c] sm:$0xf]
        %v4285 = vld [vmem:[%s4] sm:$0x1]
        %v4287 = vlaneseq
        %v4288 = vshrl.u32 %v4287, 7
        %v4289 = vsub.s32 0, %v4288
        %v4290 = vrot.slane %v4285, %v4289
        %v4308 = vunpack.c.l.b16 %v4253
        %v4309 = vunpack.c.l.b16 %v4254
        %v4310 = vunpack.c.l.b16 %v4255
        %v4311 = vunpack.c.l.b16 %v4256
        %v4312 = vunpack.c.l.b16 %v4257
        %v4313 = vunpack.c.l.b16 %v4258
        %v4314 = vunpack.c.l.b16 %v4259
        %v4315 = vunpack.c.l.b16 %v4260
        %v4316 = vunpack.c.l.b16 %v4261
        %v4317 = vunpack.c.l.b16 %v4262
        %v4318 = vunpack.c.l.b16 %v4263
        %v4319 = vunpack.c.l.b16 %v4264
        %v4320 = vunpack.c.l.b16 %v4265
        %v4321 = vunpack.c.l.b16 %v4266
        %v4322 = vunpack.c.l.b16 %v4267
        %v4323 = vunpack.c.l.b16 %v4268
        %v4324 = vpack.c.b16 %v4309, %v4308
        %v4325 = vpack.c.b16 %v4311, %v4310
        %v4326 = vpack.c.b16 %v4313, %v4312
        %v4327 = vpack.c.b16 %v4315, %v4314
        %v4328 = vpack.c.b16 %v4317, %v4316
        %v4329 = vpack.c.b16 %v4319, %v4318
        %v4330 = vpack.c.b16 %v4321, %v4320
        %v4331 = vpack.c.b16 %v4323, %v4322
        %v4356 = vunpack.c.l.b16 %v4269
        %v4357 = vunpack.c.l.b16 %v4270
        %v4358 = vunpack.c.l.b16 %v4271
        %v4359 = vunpack.c.l.b16 %v4272
        %v4360 = vunpack.c.l.b16 %v4273
        %v4361 = vunpack.c.l.b16 %v4274
        %v4362 = vunpack.c.l.b16 %v4275
        %v4363 = vunpack.c.l.b16 %v4276
        %v4364 = vunpack.c.l.b16 %v4277
        %v4365 = vunpack.c.l.b16 %v4278
        %v4366 = vunpack.c.l.b16 %v4279
        %v4367 = vunpack.c.l.b16 %v4280
        %v4368 = vunpack.c.l.b16 %v4281
        %v4369 = vunpack.c.l.b16 %v4282
        %v4370 = vunpack.c.l.b16 %v4283
        %v4371 = vunpack.c.l.b16 %v4284
        %v4372 = vpack.c.b16 %v4357, %v4356
        %v4373 = vpack.c.b16 %v4359, %v4358
        %v4374 = vpack.c.b16 %v4361, %v4360
        %v4375 = vpack.c.b16 %v4363, %v4362
        %v4376 = vpack.c.b16 %v4365, %v4364
        %v4377 = vpack.c.b16 %v4367, %v4366
        %v4378 = vpack.c.b16 %v4369, %v4368
        %v4379 = vpack.c.b16 %v4371, %v4370
        %4388 = vmatprep.subr.bf16.mxu0 0
        %4389 = vmatpush1.bf16.msra.mxu0 %v4379
        %4390 = vmatprep.subr.bf16.mxu0 0
        %4391 = vmatpush1.bf16.msra.mxu0 %v4378
        %4392 = vmatprep.subr.bf16.mxu0 0
        %4393 = vmatpush1.bf16.msra.mxu0 %v4377
        %4394 = vmatprep.subr.bf16.mxu0 0
        %4395 = vmatpush1.bf16.msra.mxu0 %v4376
        %4396 = vmatprep.subr.bf16.mxu0 0
        %4397 = vmatpush1.bf16.msra.mxu0 %v4375
        %4398 = vmatprep.subr.bf16.mxu0 0
        %4399 = vmatpush1.bf16.msra.mxu0 %v4374
        %4400 = vmatprep.subr.bf16.mxu0 0
        %4401 = vmatpush1.bf16.msra.mxu0 %v4373
        %4402 = vmatprep.subr.bf16.mxu0 0
        %4403 = vmatpush1.bf16.msra.mxu0 %v4372
        %4404 = vmatprep.subr.bf16.mxu0 0
        %4405 = vmatpush2.bf16.msra.mxu0 0
        %4406 = vmatprep.subr.bf16.mxu0 0
        %4407 = vmatpush2.bf16.msra.mxu0 0
        %4408 = vmatprep.subr.bf16.mxu0 0
        %4409 = vmatpush2.bf16.msra.mxu0 0
        %4410 = vmatprep.subr.bf16.mxu0 0
        %4411 = vmatpush2.bf16.msra.mxu0 0
        %4412 = vmatprep.subr.bf16.mxu0 0
        %4413 = vmatpush2.bf16.msra.mxu0 0
        %4414 = vmatprep.subr.bf16.mxu0 0
        %4415 = vmatpush2.bf16.msra.mxu0 0
        %4416 = vmatprep.subr.bf16.mxu0 0
        %4417 = vmatpush2.bf16.msra.mxu0 0
        %4418 = vmatprep.subr.bf16.mxu0 0
        %4419 = vmatpush2.bf16.msra.mxu0 0
        %4420 = vmatprep.mubr.bf16.mxu0 0
        %4421 = vmatmul.mubr.bf16.gmra.mxu0 %v4324
        %v4422 = vpop.f32.mrf.mxu0
        %v4423 = vadd.f32 %v4290, %v4422
        %v4424 = vpop.f32.mrf.mxu0
        %v4425 = vpop.f32.mrf.mxu0
        %v4426 = vadd.f32 %v4290, %v4425
        %v4427 = vpop.f32.mrf.mxu0
        %4428 = vmatprep.mubr.bf16.mxu0 0
        %4429 = vmatmul.mubr.bf16.gmra.mxu0 %v4325
        %v4430 = vpop.f32.mrf.mxu0
        %v4431 = vadd.f32 %v4290, %v4430
        %v4432 = vpop.f32.mrf.mxu0
        %v4433 = vpop.f32.mrf.mxu0
        %v4434 = vadd.f32 %v4290, %v4433
        %v4435 = vpop.f32.mrf.mxu0
        %4436 = vmatprep.mubr.bf16.mxu0 0
        %4437 = vmatmul.mubr.bf16.gmra.mxu0 %v4326
        %v4438 = vpop.f32.mrf.mxu0
        %v4439 = vadd.f32 %v4290, %v4438
        %v4440 = vpop.f32.mrf.mxu0
        %v4441 = vpop.f32.mrf.mxu0
        %v4442 = vadd.f32 %v4290, %v4441
        %v4443 = vpop.f32.mrf.mxu0
        %4444 = vmatprep.mubr.bf16.mxu0 0
        %4445 = vmatmul.mubr.bf16.gmra.mxu0 %v4327
        %v4446 = vpop.f32.mrf.mxu0
        %v4447 = vadd.f32 %v4290, %v4446
        %v4448 = vpop.f32.mrf.mxu0
        %v4449 = vpop.f32.mrf.mxu0
        %v4450 = vadd.f32 %v4290, %v4449
        %v4451 = vpop.f32.mrf.mxu0
        %4452 = vmatprep.mubr.bf16.mxu0 0
        %4453 = vmatmul.mubr.bf16.gmra.mxu0 %v4328
        %v4454 = vpop.f32.mrf.mxu0
        %v4455 = vadd.f32 %v4290, %v4454
        %v4456 = vpop.f32.mrf.mxu0
        %v4457 = vpop.f32.mrf.mxu0
        %v4458 = vadd.f32 %v4290, %v4457
        %v4459 = vpop.f32.mrf.mxu0
        %4460 = vmatprep.mubr.bf16.mxu0 0
        %4461 = vmatmul.mubr.bf16.gmra.mxu0 %v4329
        %v4462 = vpop.f32.mrf.mxu0
        %v4463 = vadd.f32 %v4290, %v4462
        %v4464 = vpop.f32.mrf.mxu0
        %v4465 = vpop.f32.mrf.mxu0
        %v4466 = vadd.f32 %v4290, %v4465
        %v4467 = vpop.f32.mrf.mxu0
        %4468 = vmatprep.mubr.bf16.mxu0 0
        %4469 = vmatmul.mubr.bf16.gmra.mxu0 %v4330
        %v4470 = vpop.f32.mrf.mxu0
        %v4471 = vadd.f32 %v4290, %v4470
        %v4472 = vpop.f32.mrf.mxu0
        %v4473 = vpop.f32.mrf.mxu0
        %v4474 = vadd.f32 %v4290, %v4473
        %v4475 = vpop.f32.mrf.mxu0
        %4476 = vmatprep.mubr.bf16.mxu0 0
        %4477 = vmatmul.mubr.bf16.gmra.mxu0 %v4331
        %v4478 = vpop.f32.mrf.mxu0
        %v4479 = vadd.f32 %v4290, %v4478
        %v4480 = vpop.f32.mrf.mxu0
        %v4481 = vpop.f32.mrf.mxu0
        %v4482 = vadd.f32 %v4290, %v4481
        %v4483 = vpop.f32.mrf.mxu0
        %4484 = vdwg.mxu0
        %4485 = vst [vmem:[%s272] sm:$0xff] %v4423
        %4486 = vst [vmem:[%s272 + $0x8] sm:$0xff] %v4426
        %4487 = vst [vmem:[%s272 + $0x10] sm:$0xff] %v4431
        %4488 = vst [vmem:[%s272 + $0x18] sm:$0xff] %v4434
        %4489 = vst [vmem:[%s272 + $0x20] sm:$0xff] %v4439
        %4490 = vst [vmem:[%s272 + $0x28] sm:$0xff] %v4442
        %4491 = vst [vmem:[%s272 + $0x30] sm:$0xff] %v4447
        %4492 = vst [vmem:[%s272 + $0x38] sm:$0xff] %v4450
        %4493 = vst [vmem:[%s272 + $0x40] sm:$0xff] %v4455
        %4494 = vst [vmem:[%s272 + $0x48] sm:$0xff] %v4458
        %4495 = vst [vmem:[%s272 + $0x50] sm:$0xff] %v4463
        %4496 = vst [vmem:[%s272 + $0x58] sm:$0xff] %v4466
        %4497 = vst [vmem:[%s272 + $0x60] sm:$0xff] %v4471
        %4498 = vst [vmem:[%s272 + $0x68] sm:$0xff] %v4474
        %4499 = vst [vmem:[%s272 + $0x70] sm:$0xff] %v4479
        %4500 = vst [vmem:[%s272 + $0x78] sm:$0xff] %v4482
        %s4501 = sand.u32 %s141, 1
        %s4502 = scalar_lea.sflag [#allocation6], %s4501
        %s4503 = sand.u32 %s141, 1
        %s4504 = smul.addr %s4503, 128
        %s4505 = scalar_lea.vmem [#allocation10], %s4504
        // Predicated region
        $region53: #{tpu_custom_call.1} parent=39 // pred_check
          %p4506 = pneg %p151
        $region54: #{tpu_custom_call.1} parent=39 // pred_check_branch
          %4508 = sbr.rel (%p4506) target = $region56
        $region55: #{tpu_custom_call.1} parent=39 // pred_region
          %s4509 = smul.u32 2, %s23
          %s4511 = ssub.s32 2048, 2048
          %4512 = vsyncadd %s4502, %s4511
          %s4513 = smul.addr %s4509, 8
          %s4514 = smul.addr %s4513, 128
          %s4515 = scalar_lea.hbm %s5, %s4514
          %s4516 = sshll.u32 %s4505, 4
          %s4517 = int_to_ptr.vmem [resolvable:$true] %s4516
          %4522 = dma.vmem_to_hbm [thread:$0]  %s4517, 2048, %s4515, %s4502, 128, 128, 8
        $region56: #{tpu_custom_call.1} parent=39 // pred_fallthru
          _
      $region40: #{tpu_custom_call.1} parent=5 // pred_fallthru
        _
      %p4523 = scmp.le.s32.totalorder 2, %s18
      // Predicated region
      $region57: #{tpu_custom_call.1} parent=5 // pred_check
        %p4524 = pneg %p4523
      $region58: #{tpu_custom_call.1} parent=5 // pred_check_branch
        %4526 = sbr.rel (%p4524) target = $region60
      $region59: #{tpu_custom_call.1} parent=5 // pred_region
        %s4527 = ssub.s32 %s18, 2
        // Predicated region
        $region61: #{tpu_custom_call.1} parent=59 // pred_check
          %p4528 = pneg %p157
        $region62: #{tpu_custom_call.1} parent=59 // pred_check_branch
          %4530 = sbr.rel (%p4528) target = $region64
        $region63: #{tpu_custom_call.1} parent=59 // pred_region
          %s4531 = sand.u32 %s142, 1
          %s4532 = scalar_lea.sflag [#allocation6], %s4531
          %s4533 = sand.u32 %s142, 1
          %s4534 = smul.addr %s4533, 128
          %s4535 = scalar_lea.vmem [#allocation10], %s4534
          %4536 = dma.done %s4532, 2048
        $region64: #{tpu_custom_call.1} parent=59 // pred_fallthru
          _
      $region60: #{tpu_custom_call.1} parent=5 // pred_fallthru
        _
    $region6: #{tpu_custom_call.1} parent=1 // loop_footer
      %s22 = sadd.s32 1, %s18
    $region7: #{tpu_custom_call.1} parent=1 // loop_footer_branch
      %17 = sbr.rel target = $region3
    $region8: #{tpu_custom_call.1} parent=1 // loop_exit
      _
    %4537 = vsyncpa [#allocation5], 1
    %s4538 = scalar_lea.sflag [#allocation5], 1
    %4539 = vsyncpa %s4538, 1
    %4540 = vsyncpa [#allocation8], 1
    %4541 = vsyncpa [#allocation6], 1
    %s4542 = scalar_lea.sflag [#allocation6], 1
    %4543 = vsyncpa %s4542, 1

</llo_original>
